<compile_context>
chip_gen: v7x
topology: tpu7x:2x2x1
jax: 0.10.0
libtpu: 0.0.40
codegen_flags: <defaults>
</compile_context>

<pallas_src>
import functools

import jax
import jax.numpy as jnp
from jax.experimental import pallas as pl
from jax.experimental.pallas import tpu as pltpu

EPS = 1e-5


def _round_up(x, m):
    return ((x + m - 1) // m) * m


# ---------------------------------------------------------------------------
# Pallas kernels
# ---------------------------------------------------------------------------
def _mm_bias_act_kernel(a_ref, b_ref, t_ref, o_ref, acc_ref, *, act):
    """bf16 matmul, f32 accumulator, fused shift + activation epilogue."""
    @pl.when(pl.program_id(2) == 0)
    def _():
        acc_ref[...] = jnp.zeros_like(acc_ref)

    acc_ref[...] += jnp.dot(a_ref[...], b_ref[...],
                            preferred_element_type=jnp.float32)

    @pl.when(pl.program_id(2) == pl.num_programs(2) - 1)
    def _():
        y = acc_ref[...] + t_ref[...]
        if act == "relu":
            y = jnp.maximum(y, 0.0)
        elif act == "sigmoid":
            y = jax.nn.sigmoid(y)
        o_ref[...] = y.astype(o_ref.dtype)


def _sa_stats_kernel(l_ref, d_ref, avg_ref, max_ref):
    """Channel-wise mean / max of cat(left, down) (XLU reductions)."""
    l = l_ref[...]
    d = d_ref[...]
    avg_ref[...] = 0.5 * (jnp.mean(l, axis=-1, keepdims=True) +
                          jnp.mean(d, axis=-1, keepdims=True))
    max_ref[...] = jnp.maximum(jnp.max(l, axis=-1, keepdims=True),
                               jnp.max(d, axis=-1, keepdims=True))


def _fuse_sa_kernel(h_ref, v_ref, l_ref, d_ref, s_ref, o_ref, *, c):
    """outFF = cat(fuse+out1h, fuse+out1v) + sigmoid_map * cat(left, down)."""
    h = h_ref[...]
    v = v_ref[...]
    s = s_ref[...]                      # (TM, 1), broadcast over lanes
    fuse = h * v
    o_ref[:, :c] = fuse + h + s * l_ref[...]
    o_ref[:, c:] = fuse + v + s * d_ref[...]


# ---------------------------------------------------------------------------
# Pallas wrappers
# ---------------------------------------------------------------------------
def matmul_bias_act(a, w, shift, *, act=None):
    """(M,K) @ (K,Cout) with fused per-column shift + activation."""
    M, K = a.shape
    Cout = w.shape[1]

    # Adaptive tiles: do not pad tiny M to 128; bigger TN/TK to feed wide MXUs.
    tm = min(256, _round_up(M, 8))
    tn = min(256, _round_up(Cout, 128))
    kp128 = _round_up(K, 128)
    tk = 512 if kp128 % 512 == 0 else (256 if kp128 % 256 == 0 else 128)

    Mp, Kp, Np = _round_up(M, tm), _round_up(K, tk), _round_up(Cout, tn)

    a_p = jnp.pad(a, ((0, Mp - M), (0, Kp - K))).astype(jnp.bfloat16)
    w_p = jnp.pad(w, ((0, Kp - K), (0, Np - Cout))).astype(jnp.bfloat16)
    t_p = jnp.pad(shift.reshape(1, -1).astype(jnp.float32),
                  ((0, 0), (0, Np - Cout)))

    grid = (Mp // tm, Np // tn, Kp // tk)
    cost = pl.CostEstimate(
        flops=2 * Mp * Kp * Np,
        transcendentals=Mp * Np if act == "sigmoid" else 0,
        bytes_accessed=a_p.size * 2 + w_p.size * 2 + Mp * Np * 4 + Np * 4)

    out = pl.pallas_call(
        functools.partial(_mm_bias_act_kernel, act=act),
        out_shape=jax.ShapeDtypeStruct((Mp, Np), jnp.float32),
        grid_spec=pltpu.PrefetchScalarGridSpec(
            num_scalar_prefetch=0,
            grid=grid,
            in_specs=[
                pl.BlockSpec((tm, tk), lambda i, j, k: (i, k)),
                pl.BlockSpec((tk, tn), lambda i, j, k: (k, j)),
                pl.BlockSpec((1, tn), lambda i, j, k: (0, j)),
            ],
            out_specs=pl.BlockSpec((tm, tn), lambda i, j, k: (i, j)),
            scratch_shapes=[pltpu.VMEM((tm, tn), jnp.float32)],
        ),
        compiler_params=pltpu.CompilerParams(
            dimension_semantics=("parallel", "parallel", "arbitrary")),
        cost_estimate=cost,
    )(a_p, w_p, t_p)
    return out[:M, :Cout]


def sa_stats(l_mat, d_mat):
    """Per-pixel channel mean & max of cat(left, down). Inputs/outputs (M, C)/(M, 1)."""
    M, C = l_mat.shape
    tm = min(512, _round_up(M, 8))
    Mp = _round_up(M, tm)
    pad = lambda x: jnp.pad(x, ((0, Mp - M), (0, 0)))
    avg, mx = pl.pallas_call(
        _sa_stats_kernel,
        out_shape=(jax.ShapeDtypeStruct((Mp, 1), jnp.float32),
                   jax.ShapeDtypeStruct((Mp, 1), jnp.float32)),
        grid_spec=pltpu.PrefetchScalarGridSpec(
            num_scalar_prefetch=0,
            grid=(Mp // tm,),
            in_specs=[pl.BlockSpec((tm, C), lambda i: (i, 0)),
                      pl.BlockSpec((tm, C), lambda i: (i, 0))],
            out_specs=[pl.BlockSpec((tm, 1), lambda i: (i, 0)),
                       pl.BlockSpec((tm, 1), lambda i: (i, 0))],
        ),
        compiler_params=pltpu.CompilerParams(
            dimension_semantics=("parallel",)),
    )(pad(l_mat), pad(d_mat))
    return avg[:M], mx[:M]


def fuse_sa(out1h, out1v, l_mat, d_mat, sa_map):
    """Fused: fuse-product, residual adds, SA-weighted skip, channel concat."""
    M, C = out1h.shape
    tm = min(512, _round_up(M, 8))
    Mp = _round_up(M, tm)
    pad = lambda x: jnp.pad(x, ((0, Mp - M), (0, 0)))
    out = pl.pallas_call(
        functools.partial(_fuse_sa_kernel, c=C),
        out_shape=jax.ShapeDtypeStruct((Mp, 2 * C), jnp.float32),
        grid_spec=pltpu.PrefetchScalarGridSpec(
            num_scalar_prefetch=0,
            grid=(Mp // tm,),
            in_specs=[pl.BlockSpec((tm, C), lambda i: (i, 0)),
                      pl.BlockSpec((tm, C), lambda i: (i, 0)),
                      pl.BlockSpec((tm, C), lambda i: (i, 0)),
                      pl.BlockSpec((tm, C), lambda i: (i, 0)),
                      pl.BlockSpec((tm, 1), lambda i: (i, 0))],
            out_specs=pl.BlockSpec((tm, 2 * C), lambda i: (i, 0)),
        ),
        compiler_params=pltpu.CompilerParams(
            dimension_semantics=("parallel",)),
    )(pad(out1h), pad(out1v), pad(l_mat), pad(d_mat), pad(sa_map))
    return out[:M]


# ---------------------------------------------------------------------------
# Plain-JAX glue
# ---------------------------------------------------------------------------
def im2col(x, kh, kw, stride, padding):
    """NHWC -> (N*Ho*Wo, kh*kw*C) patch matrix.
    TODO(synk): fold the kh*kw taps into the matmul K grid axis instead of
    materializing the expanded patch matrix in HBM."""
    N, H, W, C = x.shape
    if kh == 1 and kw == 1 and padding == 0:
        xs = x[:, ::stride, ::stride, :]
        _, Ho, Wo, _ = xs.shape
        return xs.reshape(N * Ho * Wo, C), (N, Ho, Wo)
    xp = jnp.pad(x, ((0, 0), (padding, padding), (padding, padding), (0, 0)))
    Ho = (H + 2 * padding - kh) // stride + 1
    Wo = (W + 2 * padding - kw) // stride + 1
    cols = []
    for i in range(kh):
        for j in range(kw):
            cols.append(xp[:, i:i + stride * (Ho - 1) + 1:stride,
                           j:j + stride * (Wo - 1) + 1:stride, :])
    cols = jnp.concatenate(cols, axis=-1)
    return cols.reshape(N * Ho * Wo, kh * kw * C), (N, Ho, Wo)


# ---------------------------------------------------------------------------
# Parameter construction (weight_init semantics: kaiming conv, zero bias,
# BN gamma=1 / beta=0, running stats (0, 1) -> inference-mode fold)
# ---------------------------------------------------------------------------
def _kaiming(key, k_in, c_out):
    return jax.random.normal(key, (k_in, c_out), jnp.float32) * jnp.sqrt(
        2.0 / k_in)


def init_conv_bn(key, k_in, c_out):
    w = _kaiming(key, k_in, c_out)
    gamma = jnp.ones((c_out,), jnp.float32)
    beta = jnp.zeros((c_out,), jnp.float32)
    mean = jnp.zeros((c_out,), jnp.float32)
    var = jnp.ones((c_out,), jnp.float32)
    scale = gamma / jnp.sqrt(var + EPS)
    shift = beta - mean * scale
    return {"w": w * scale[None, :], "shift": shift}   # BN scale folded into W


def init_conv_bias(key, k_in, c_out):
    w = _kaiming(key, k_in, c_out)
    return {"w": w, "shift": jnp.zeros((c_out,), jnp.float32)}   # zero bias


def init_cfm1(key):
    ks = jax.random.split(key, 4)
    return {
        "conv1h": init_conv_bn(ks[0], 3 * 3 * 256, 256),
        "conv1v": init_conv_bn(ks[1], 3 * 3 * 256, 256),
        # conv3h/bn3h/conv3v/bn3v exist in the module but are unused in
        # CFM1.forward(), so they are omitted.
        "sa": init_conv_bias(ks[2], 7 * 7 * 2, 1),
        "squeeze1": init_conv_bn(ks[3], 2 * 256, 256),
    }


# ---------------------------------------------------------------------------
# Forward pass
# ---------------------------------------------------------------------------
def cfm1_forward(params, left_nchw, down_nchw):
    left = jnp.transpose(left_nchw, (0, 2, 3, 1)).astype(jnp.float32)
    down = jnp.transpose(down_nchw, (0, 2, 3, 1)).astype(jnp.float32)
    N, H, W, C = left.shape
    if down.shape[1:3] != (H, W):
        # F.interpolate(mode='bilinear', align_corners=False) equivalent.
        down = jax.image.resize(down, (down.shape[0], H, W, down.shape[3]),
                                method="bilinear")

    # conv1h / conv1v: 3x3 s1 p1 conv + BN + ReLU (im2col + fused Pallas matmul)
    a_h, _ = im2col(left, 3, 3, 1, 1)
    out1h = matmul_bias_act(a_h, params["conv1h"]["w"],
                            params["conv1h"]["shift"], act="relu")
    a_v, _ = im2col(down, 3, 3, 1, 1)
    out1v = matmul_bias_act(a_v, params["conv1v"]["w"],
                            params["conv1v"]["shift"], act="relu")

    # Spatial attention on cat(left, down): channel mean/max -> 7x7 conv
    # (bias) -> sigmoid (sigmoid fused in the matmul epilogue).
    M = N * H * W
    l_mat = left.reshape(M, C)
    d_mat = down.reshape(M, C)
    avg, mx = sa_stats(l_mat, d_mat)
    sa_in = jnp.concatenate([avg, mx], axis=-1).reshape(N, H, W, 2)
    a_sa, _ = im2col(sa_in, 7, 7, 1, 3)
    sa_map = matmul_bias_act(a_sa, params["sa"]["w"], params["sa"]["shift"],
                             act="sigmoid")                        # (M, 1)

    # fuse = out1h*out1v ; outF = cat(fuse+out1h, fuse+out1v)
    # outFF = outF + sa_map * cat(left, down)   -- one fused Pallas kernel.
    outFF = fuse_sa(out1h, out1v, l_mat, d_mat, sa_map)            # (M, 2C)

    # squeeze1: 1x1 conv 512->256 + BN + ReLU (fused Pallas matmul).
    out = matmul_bias_act(outFF, params["squeeze1"]["w"],
                          params["squeeze1"]["shift"], act="relu")
    out = out.reshape(N, H, W, -1)
    return jnp.transpose(out, (0, 3, 1, 2))   # back to NCHW


if __name__ == "__main__":
    key = jax.random.PRNGKey(0)
    pkey, lkey, dkey = jax.random.split(key, 3)
    params = init_cfm1(pkey)

    # Module fixes channels at 256; small spatial sizes. 'down' is given at
    # half resolution so the bilinear-interpolation branch is exercised.
    left = jax.random.normal(lkey, (2, 256, 16, 16), jnp.float32)
    down = jax.random.normal(dkey, (2, 256, 8, 8), jnp.float32)

    fwd = jax.jit(lambda l, d: cfm1_forward(params, l, d))
    out = jax.block_until_ready(fwd(left, down))

    assert out.shape == (2, 256, 16, 16), out.shape
    assert bool(jnp.all(jnp.isfinite(out)))
    assert bool(jnp.all(out >= 0.0))      # final ReLU epilogue
    print("KERNEL_OK")
</pallas_src>

<mosaic_0001>
module attributes {stable_mosaic.version = 11 : i64} {
  func.func @_sa_stats_kernel(%arg0: i32, %arg1: memref<512x256xf32, #tpu.memory_space<vmem>>, %arg2: memref<512x256xf32, #tpu.memory_space<vmem>>, %arg3: memref<512x1xf32, #tpu.memory_space<vmem>>, %arg4: memref<512x1xf32, #tpu.memory_space<vmem>>) attributes {dimension_semantics = [#tpu.dimension_semantics<parallel>], iteration_bounds = array<i64: 1>, scalar_prefetch = 0 : i64, scratch_operands = 0 : i64, tpu.core_type = #tpu.core_type<tc>, window_params = [{transform_indices = @transform_0, window_bounds = array<i64: 512, 256>}, {transform_indices = @transform_1, window_bounds = array<i64: 512, 256>}, {transform_indices = @transform_2, window_bounds = array<i64: 512, 1>}, {transform_indices = @transform_3, window_bounds = array<i64: 512, 1>}]} {
    %c0 = arith.constant 0 : index
    %c0_0 = arith.constant 0 : index
    %0 = vector.load %arg1[%c0, %c0_0] : memref<512x256xf32, #tpu.memory_space<vmem>>, vector<512x256xf32>
    %c0_1 = arith.constant 0 : index
    %c0_2 = arith.constant 0 : index
    %1 = vector.load %arg2[%c0_1, %c0_2] : memref<512x256xf32, #tpu.memory_space<vmem>>, vector<512x256xf32>
    %cst = arith.constant dense<0.000000e+00> : vector<512xf32>
    %2 = vector.multi_reduction <add>, %0, %cst [1] : vector<512x256xf32> to vector<512xf32>
    %3 = vector.shape_cast %2 : vector<512xf32> to vector<512x1xf32>
    %cst_3 = arith.constant 2.560000e+02 : f32
    %4 = vector.broadcast %cst_3 : f32 to vector<512x1xf32>
    %5 = arith.divf %3, %4 : vector<512x1xf32>
    %cst_4 = arith.constant dense<0.000000e+00> : vector<512xf32>
    %6 = vector.multi_reduction <add>, %1, %cst_4 [1] : vector<512x256xf32> to vector<512xf32>
    %7 = vector.shape_cast %6 : vector<512xf32> to vector<512x1xf32>
    %cst_5 = arith.constant 2.560000e+02 : f32
    %8 = vector.broadcast %cst_5 : f32 to vector<512x1xf32>
    %9 = arith.divf %7, %8 : vector<512x1xf32>
    %10 = arith.addf %5, %9 : vector<512x1xf32>
    %cst_6 = arith.constant 5.000000e-01 : f32
    %11 = vector.broadcast %cst_6 : f32 to vector<512x1xf32>
    %12 = arith.mulf %11, %10 : vector<512x1xf32>
    %c0_7 = arith.constant 0 : index
    %c0_8 = arith.constant 0 : index
    %13 = vector.load %arg3[%c0_7, %c0_8] : memref<512x1xf32, #tpu.memory_space<vmem>>, vector<512x1xf32>
    tpu.vector_store %arg3[%c0_7, %c0_8], %12 {strides = array<i32>} : memref<512x1xf32, #tpu.memory_space<vmem>>, vector<512x1xf32>,
    %cst_9 = arith.constant dense<0xFF800000> : vector<512xf32>
    %14 = vector.multi_reduction <maximumf>, %0, %cst_9 [1] : vector<512x256xf32> to vector<512xf32>
    %15 = vector.shape_cast %14 : vector<512xf32> to vector<512x1xf32>
    %cst_10 = arith.constant dense<0xFF800000> : vector<512xf32>
    %16 = vector.multi_reduction <maximumf>, %1, %cst_10 [1] : vector<512x256xf32> to vector<512xf32>
    %17 = vector.shape_cast %16 : vector<512xf32> to vector<512x1xf32>
    %18 = arith.maximumf %15, %17 : vector<512x1xf32>
    %c0_11 = arith.constant 0 : index
    %c0_12 = arith.constant 0 : index
    %19 = vector.load %arg4[%c0_11, %c0_12] : memref<512x1xf32, #tpu.memory_space<vmem>>, vector<512x1xf32>
    tpu.vector_store %arg4[%c0_11, %c0_12], %18 {strides = array<i32>} : memref<512x1xf32, #tpu.memory_space<vmem>>, vector<512x1xf32>,
    return
  }
  func.func @transform_0(%arg0: i32) -> (i32, i32) {
    %c0_i32 = arith.constant 0 : i32
    %c0_i32_0 = arith.constant 0 : i32
    return %arg0, %c0_i32 : i32, i32
  }
  func.func @transform_1(%arg0: i32) -> (i32, i32) {
    %c0_i32 = arith.constant 0 : i32
    %c0_i32_0 = arith.constant 0 : i32
    return %arg0, %c0_i32 : i32, i32
  }
  func.func @transform_2(%arg0: i32) -> (i32, i32) {
    %c0_i32 = arith.constant 0 : i32
    %c0_i32_0 = arith.constant 0 : i32
    return %arg0, %c0_i32 : i32, i32
  }
  func.func @transform_3(%arg0: i32) -> (i32, i32) {
    %c0_i32 = arith.constant 0 : i32
    %c0_i32_0 = arith.constant 0 : i32
    return %arg0, %c0_i32 : i32, i32
  }
}

module attributes {stable_mosaic.version = 11 : i64} {
  func.func @_mm_bias_act_kernel(%arg0: i32, %arg1: i32, %arg2: i32, %arg3: memref<256x128xbf16, #tpu.memory_space<vmem>>, %arg4: memref<128x128xbf16, #tpu.memory_space<vmem>>, %arg5: memref<1x128xf32, #tpu.memory_space<vmem>>, %arg6: memref<256x128xf32, #tpu.memory_space<vmem>>, %arg7: memref<256x128xf32, #tpu.memory_space<vmem>>) attributes {dimension_semantics = [#tpu.dimension_semantics<parallel>, #tpu.dimension_semantics<parallel>, #tpu.dimension_semantics<arbitrary>], iteration_bounds = array<i64: 2, 1, 1>, scalar_prefetch = 0 : i64, scratch_operands = 1 : i64, tpu.core_type = #tpu.core_type<tc>, window_params = [{transform_indices = @transform_0, window_bounds = array<i64: 256, 128>}, {transform_indices = @transform_1, window_bounds = array<i64: 128, 128>}, {transform_indices = @transform_2, window_bounds = array<i64: 1, 128>}, {transform_indices = @transform_3, window_bounds = array<i64: 256, 128>}]} {
    %c0_i32 = arith.constant 0 : i32
    %0 = arith.cmpi eq, %arg2, %c0_i32 : i32
    %1 = arith.extui %0 : i1 to i32
    %c0_i32_0 = arith.constant 0 : i32
    %2 = arith.cmpi ne, %1, %c0_i32_0 : i32
    scf.if %2 {
      %cst_10 = arith.constant 0.000000e+00 : f32
      %12 = vector.broadcast %cst_10 : f32 to vector<256x128xf32>
      %c0_11 = arith.constant 0 : index
      %c0_12 = arith.constant 0 : index
      %13 = vector.load %arg7[%c0_11, %c0_12] : memref<256x128xf32, #tpu.memory_space<vmem>>, vector<256x128xf32>
      tpu.vector_store %arg7[%c0_11, %c0_12], %12 {strides = array<i32>} : memref<256x128xf32, #tpu.memory_space<vmem>>, vector<256x128xf32>,
    } else {
    }
    %c0 = arith.constant 0 : index
    %c0_1 = arith.constant 0 : index
    %3 = vector.load %arg7[%c0, %c0_1] : memref<256x128xf32, #tpu.memory_space<vmem>>, vector<256x128xf32>
    %c0_2 = arith.constant 0 : index
    %c0_3 = arith.constant 0 : index
    %4 = vector.load %arg3[%c0_2, %c0_3] : memref<256x128xbf16, #tpu.memory_space<vmem>>, vector<256x128xbf16>
    %c0_4 = arith.constant 0 : index
    %c0_5 = arith.constant 0 : index
    %5 = vector.load %arg4[%c0_4, %c0_5] : memref<128x128xbf16, #tpu.memory_space<vmem>>, vector<128x128xbf16>
    %cst = arith.constant dense<0.000000e+00> : vector<256x128xf32>
    %6 = tpu.matmul %4, %5, %cst {dimension_numbers = #tpu.dot_dimension_numbers<[1], [0], [0], [1], [0, 0, 1, 1], [], []>} : vector<256x128xbf16>, vector<128x128xbf16>, vector<256x128xf32> -> vector<256x128xf32>
    %7 = arith.addf %3, %6 : vector<256x128xf32>
    %c0_6 = arith.constant 0 : index
    %c0_7 = arith.constant 0 : index
    %8 = vector.load %arg7[%c0_6, %c0_7] : memref<256x128xf32, #tpu.memory_space<vmem>>, vector<256x128xf32>
    tpu.vector_store %arg7[%c0_6, %c0_7], %7 {strides = array<i32>} : memref<256x128xf32, #tpu.memory_space<vmem>>, vector<256x128xf32>,
    %c0_i32_8 = arith.constant 0 : i32
    %9 = arith.cmpi eq, %arg2, %c0_i32_8 : i32
    %10 = arith.extui %9 : i1 to i32
    %c0_i32_9 = arith.constant 0 : i32
    %11 = arith.cmpi ne, %10, %c0_i32_9 : i32
    scf.if %11 {
      %c0_10 = arith.constant 0 : index
      %c0_11 = arith.constant 0 : index
      %12 = vector.load %arg7[%c0_10, %c0_11] : memref<256x128xf32, #tpu.memory_space<vmem>>, vector<256x128xf32>
      %c0_12 = arith.constant 0 : index
      %c0_13 = arith.constant 0 : index
      %13 = vector.load %arg5[%c0_12, %c0_13] : memref<1x128xf32, #tpu.memory_space<vmem>>, vector<1x128xf32>
      %14 = vector.broadcast %13 : vector<1x128xf32> to vector<256x128xf32>
      %15 = arith.addf %12, %14 : vector<256x128xf32>
      %16 = arith.negf %15 : vector<256x128xf32>
      %17 = math.exp %16 : vector<256x128xf32>
      %cst_14 = arith.constant 1.000000e+00 : f32
      %18 = vector.broadcast %cst_14 : f32 to vector<256x128xf32>
      %19 = arith.addf %18, %17 : vector<256x128xf32>
      %20 = arith.divf %18, %19 : vector<256x128xf32>
      %c0_15 = arith.constant 0 : index
      %c0_16 = arith.constant 0 : index
      %21 = vector.load %arg6[%c0_15, %c0_16] : memref<256x128xf32, #tpu.memory_space<vmem>>, vector<256x128xf32>
      tpu.vector_store %arg6[%c0_15, %c0_16], %20 {strides = array<i32>} : memref<256x128xf32, #tpu.memory_space<vmem>>, vector<256x128xf32>,
    } else {
    }
    return
  }
  func.func @transform_0(%arg0: i32, %arg1: i32, %arg2: i32) -> (i32, i32) {
    %c0_i32 = arith.constant 0 : i32
    return %arg0, %arg2 : i32, i32
  }
  func.func @transform_1(%arg0: i32, %arg1: i32, %arg2: i32) -> (i32, i32) {
    %c0_i32 = arith.constant 0 : i32
    return %arg2, %arg1 : i32, i32
  }
  func.func @transform_2(%arg0: i32, %arg1: i32, %arg2: i32) -> (i32, i32) {
    %c0_i32 = arith.constant 0 : i32
    %c0_i32_0 = arith.constant 0 : i32
    return %c0_i32, %arg1 : i32, i32
  }
  func.func @transform_3(%arg0: i32, %arg1: i32, %arg2: i32) -> (i32, i32) {
    %c0_i32 = arith.constant 0 : i32
    return %arg0, %arg1 : i32, i32
  }
}

module attributes {stable_mosaic.version = 11 : i64} {
  func.func @_mm_bias_act_kernel(%arg0: i32, %arg1: i32, %arg2: i32, %arg3: memref<256x256xbf16, #tpu.memory_space<vmem>>, %arg4: memref<256x256xbf16, #tpu.memory_space<vmem>>, %arg5: memref<1x256xf32, #tpu.memory_space<vmem>>, %arg6: memref<256x256xf32, #tpu.memory_space<vmem>>, %arg7: memref<256x256xf32, #tpu.memory_space<vmem>>) attributes {dimension_semantics = [#tpu.dimension_semantics<parallel>, #tpu.dimension_semantics<parallel>, #tpu.dimension_semantics<arbitrary>], iteration_bounds = array<i64: 2, 1, 9>, scalar_prefetch = 0 : i64, scratch_operands = 1 : i64, tpu.core_type = #tpu.core_type<tc>, window_params = [{transform_indices = @transform_0, window_bounds = array<i64: 256, 256>}, {transform_indices = @transform_1, window_bounds = array<i64: 256, 256>}, {transform_indices = @transform_2, window_bounds = array<i64: 1, 256>}, {transform_indices = @transform_3, window_bounds = array<i64: 256, 256>}]} {
    %c0_i32 = arith.constant 0 : i32
    %0 = arith.cmpi eq, %arg2, %c0_i32 : i32
    %1 = arith.extui %0 : i1 to i32
    %c0_i32_0 = arith.constant 0 : i32
    %2 = arith.cmpi ne, %1, %c0_i32_0 : i32
    scf.if %2 {
      %cst_9 = arith.constant 0.000000e+00 : f32
      %12 = vector.broadcast %cst_9 : f32 to vector<256x256xf32>
      %c0_10 = arith.constant 0 : index
      %c0_11 = arith.constant 0 : index
      %13 = vector.load %arg7[%c0_10, %c0_11] : memref<256x256xf32, #tpu.memory_space<vmem>>, vector<256x256xf32>
      tpu.vector_store %arg7[%c0_10, %c0_11], %12 {strides = array<i32>} : memref<256x256xf32, #tpu.memory_space<vmem>>, vector<256x256xf32>,
    } else {
    }
    %c0 = arith.constant 0 : index
    %c0_1 = arith.constant 0 : index
    %3 = vector.load %arg7[%c0, %c0_1] : memref<256x256xf32, #tpu.memory_space<vmem>>, vector<256x256xf32>
    %c0_2 = arith.constant 0 : index
    %c0_3 = arith.constant 0 : index
    %4 = vector.load %arg3[%c0_2, %c0_3] : memref<256x256xbf16, #tpu.memory_space<vmem>>, vector<256x256xbf16>
    %c0_4 = arith.constant 0 : index
    %c0_5 = arith.constant 0 : index
    %5 = vector.load %arg4[%c0_4, %c0_5] : memref<256x256xbf16, #tpu.memory_space<vmem>>, vector<256x256xbf16>
    %cst = arith.constant dense<0.000000e+00> : vector<256x256xf32>
    %6 = tpu.matmul %4, %5, %cst {dimension_numbers = #tpu.dot_dimension_numbers<[1], [0], [0], [1], [0, 0, 1, 1], [], []>} : vector<256x256xbf16>, vector<256x256xbf16>, vector<256x256xf32> -> vector<256x256xf32>
    %7 = arith.addf %3, %6 : vector<256x256xf32>
    %c0_6 = arith.constant 0 : index
    %c0_7 = arith.constant 0 : index
    %8 = vector.load %arg7[%c0_6, %c0_7] : memref<256x256xf32, #tpu.memory_space<vmem>>, vector<256x256xf32>
    tpu.vector_store %arg7[%c0_6, %c0_7], %7 {strides = array<i32>} : memref<256x256xf32, #tpu.memory_space<vmem>>, vector<256x256xf32>,
    %c8_i32 = arith.constant 8 : i32
    %9 = arith.cmpi eq, %arg2, %c8_i32 : i32
    %10 = arith.extui %9 : i1 to i32
    %c0_i32_8 = arith.constant 0 : i32
    %11 = arith.cmpi ne, %10, %c0_i32_8 : i32
    scf.if %11 {
      %c0_9 = arith.constant 0 : index
      %c0_10 = arith.constant 0 : index
      %12 = vector.load %arg7[%c0_9, %c0_10] : memref<256x256xf32, #tpu.memory_space<vmem>>, vector<256x256xf32>
      %c0_11 = arith.constant 0 : index
      %c0_12 = arith.constant 0 : index
      %13 = vector.load %arg5[%c0_11, %c0_12] : memref<1x256xf32, #tpu.memory_space<vmem>>, vector<1x256xf32>
      %14 = vector.broadcast %13 : vector<1x256xf32> to vector<256x256xf32>
      %15 = arith.addf %12, %14 : vector<256x256xf32>
      %cst_13 = arith.constant 0.000000e+00 : f32
      %16 = vector.broadcast %cst_13 : f32 to vector<256x256xf32>
      %17 = arith.maximumf %15, %16 : vector<256x256xf32>
      %c0_14 = arith.constant 0 : index
      %c0_15 = arith.constant 0 : index
      %18 = vector.load %arg6[%c0_14, %c0_15] : memref<256x256xf32, #tpu.memory_space<vmem>>, vector<256x256xf32>
      tpu.vector_store %arg6[%c0_14, %c0_15], %17 {strides = array<i32>} : memref<256x256xf32, #tpu.memory_space<vmem>>, vector<256x256xf32>,
    } else {
    }
    return
  }
  func.func @transform_0(%arg0: i32, %arg1: i32, %arg2: i32) -> (i32, i32) {
    %c0_i32 = arith.constant 0 : i32
    return %arg0, %arg2 : i32, i32
  }
  func.func @transform_1(%arg0: i32, %arg1: i32, %arg2: i32) -> (i32, i32) {
    %c0_i32 = arith.constant 0 : i32
    return %arg2, %arg1 : i32, i32
  }
  func.func @transform_2(%arg0: i32, %arg1: i32, %arg2: i32) -> (i32, i32) {
    %c0_i32 = arith.constant 0 : i32
    %c0_i32_0 = arith.constant 0 : i32
    return %c0_i32, %arg1 : i32, i32
  }
  func.func @transform_3(%arg0: i32, %arg1: i32, %arg2: i32) -> (i32, i32) {
    %c0_i32 = arith.constant 0 : i32
    return %arg0, %arg1 : i32, i32
  }
}

module attributes {stable_mosaic.version = 11 : i64} {
  func.func @_fuse_sa_kernel(%arg0: i32, %arg1: memref<512x256xf32, #tpu.memory_space<vmem>>, %arg2: memref<512x256xf32, #tpu.memory_space<vmem>>, %arg3: memref<512x256xf32, #tpu.memory_space<vmem>>, %arg4: memref<512x256xf32, #tpu.memory_space<vmem>>, %arg5: memref<512x1xf32, #tpu.memory_space<vmem>>, %arg6: memref<512x512xf32, #tpu.memory_space<vmem>>) attributes {dimension_semantics = [#tpu.dimension_semantics<parallel>], iteration_bounds = array<i64: 1>, scalar_prefetch = 0 : i64, scratch_operands = 0 : i64, tpu.core_type = #tpu.core_type<tc>, window_params = [{transform_indices = @transform_0, window_bounds = array<i64: 512, 256>}, {transform_indices = @transform_1, window_bounds = array<i64: 512, 256>}, {transform_indices = @transform_2, window_bounds = array<i64: 512, 256>}, {transform_indices = @transform_3, window_bounds = array<i64: 512, 256>}, {transform_indices = @transform_4, window_bounds = array<i64: 512, 1>}, {transform_indices = @transform_5, window_bounds = array<i64: 512, 512>}]} {
    %c0 = arith.constant 0 : index
    %c0_0 = arith.constant 0 : index
    %0 = vector.load %arg1[%c0, %c0_0] : memref<512x256xf32, #tpu.memory_space<vmem>>, vector<512x256xf32>
    %c0_1 = arith.constant 0 : index
    %c0_2 = arith.constant 0 : index
    %1 = vector.load %arg2[%c0_1, %c0_2] : memref<512x256xf32, #tpu.memory_space<vmem>>, vector<512x256xf32>
    %c0_3 = arith.constant 0 : index
    %c0_4 = arith.constant 0 : index
    %2 = vector.load %arg5[%c0_3, %c0_4] : memref<512x1xf32, #tpu.memory_space<vmem>>, vector<512x1xf32>
    %3 = arith.mulf %0, %1 : vector<512x256xf32>
    %4 = arith.addf %3, %0 : vector<512x256xf32>
    %c0_5 = arith.constant 0 : index
    %c0_6 = arith.constant 0 : index
    %5 = vector.load %arg3[%c0_5, %c0_6] : memref<512x256xf32, #tpu.memory_space<vmem>>, vector<512x256xf32>
    %6 = vector.broadcast %2 : vector<512x1xf32> to vector<512x256xf32>
    %7 = arith.mulf %6, %5 : vector<512x256xf32>
    %8 = arith.addf %4, %7 : vector<512x256xf32>
    %c0_7 = arith.constant 0 : index
    %c0_8 = arith.constant 0 : index
    %9 = vector.load %arg6[%c0_7, %c0_8] : memref<512x512xf32, #tpu.memory_space<vmem>>, vector<512x256xf32>
    tpu.vector_store %arg6[%c0_7, %c0_8], %8 {strides = array<i32>} : memref<512x512xf32, #tpu.memory_space<vmem>>, vector<512x256xf32>,
    %10 = arith.addf %3, %1 : vector<512x256xf32>
    %c0_9 = arith.constant 0 : index
    %c0_10 = arith.constant 0 : index
    %11 = vector.load %arg4[%c0_9, %c0_10] : memref<512x256xf32, #tpu.memory_space<vmem>>, vector<512x256xf32>
    %12 = vector.broadcast %2 : vector<512x1xf32> to vector<512x256xf32>
    %13 = arith.mulf %12, %11 : vector<512x256xf32>
    %14 = arith.addf %10, %13 : vector<512x256xf32>
    %c0_11 = arith.constant 0 : index
    %c256 = arith.constant 256 : index
    %15 = vector.load %arg6[%c0_11, %c256] : memref<512x512xf32, #tpu.memory_space<vmem>>, vector<512x256xf32>
    tpu.vector_store %arg6[%c0_11, %c256], %14 {strides = array<i32>} : memref<512x512xf32, #tpu.memory_space<vmem>>, vector<512x256xf32>,
    return
  }
  func.func @transform_0(%arg0: i32) -> (i32, i32) {
    %c0_i32 = arith.constant 0 : i32
    %c0_i32_0 = arith.constant 0 : i32
    return %arg0, %c0_i32 : i32, i32
  }
  func.func @transform_1(%arg0: i32) -> (i32, i32) {
    %c0_i32 = arith.constant 0 : i32
    %c0_i32_0 = arith.constant 0 : i32
    return %arg0, %c0_i32 : i32, i32
  }
  func.func @transform_2(%arg0: i32) -> (i32, i32) {
    %c0_i32 = arith.constant 0 : i32
    %c0_i32_0 = arith.constant 0 : i32
    return %arg0, %c0_i32 : i32, i32
  }
  func.func @transform_3(%arg0: i32) -> (i32, i32) {
    %c0_i32 = arith.constant 0 : i32
    %c0_i32_0 = arith.constant 0 : i32
    return %arg0, %c0_i32 : i32, i32
  }
  func.func @transform_4(%arg0: i32) -> (i32, i32) {
    %c0_i32 = arith.constant 0 : i32
    %c0_i32_0 = arith.constant 0 : i32
    return %arg0, %c0_i32 : i32, i32
  }
  func.func @transform_5(%arg0: i32) -> (i32, i32) {
    %c0_i32 = arith.constant 0 : i32
    %c0_i32_0 = arith.constant 0 : i32
    return %arg0, %c0_i32 : i32, i32
  }
}

module attributes {stable_mosaic.version = 11 : i64} {
  func.func @_mm_bias_act_kernel(%arg0: i32, %arg1: i32, %arg2: i32, %arg3: memref<256x512xbf16, #tpu.memory_space<vmem>>, %arg4: memref<512x256xbf16, #tpu.memory_space<vmem>>, %arg5: memref<1x256xf32, #tpu.memory_space<vmem>>, %arg6: memref<256x256xf32, #tpu.memory_space<vmem>>, %arg7: memref<256x256xf32, #tpu.memory_space<vmem>>) attributes {dimension_semantics = [#tpu.dimension_semantics<parallel>, #tpu.dimension_semantics<parallel>, #tpu.dimension_semantics<arbitrary>], iteration_bounds = array<i64: 2, 1, 1>, scalar_prefetch = 0 : i64, scratch_operands = 1 : i64, tpu.core_type = #tpu.core_type<tc>, window_params = [{transform_indices = @transform_0, window_bounds = array<i64: 256, 512>}, {transform_indices = @transform_1, window_bounds = array<i64: 512, 256>}, {transform_indices = @transform_2, window_bounds = array<i64: 1, 256>}, {transform_indices = @transform_3, window_bounds = array<i64: 256, 256>}]} {
    %c0_i32 = arith.constant 0 : i32
    %0 = arith.cmpi eq, %arg2, %c0_i32 : i32
    %1 = arith.extui %0 : i1 to i32
    %c0_i32_0 = arith.constant 0 : i32
    %2 = arith.cmpi ne, %1, %c0_i32_0 : i32
    scf.if %2 {
      %cst_10 = arith.constant 0.000000e+00 : f32
      %12 = vector.broadcast %cst_10 : f32 to vector<256x256xf32>
      %c0_11 = arith.constant 0 : index
      %c0_12 = arith.constant 0 : index
      %13 = vector.load %arg7[%c0_11, %c0_12] : memref<256x256xf32, #tpu.memory_space<vmem>>, vector<256x256xf32>
      tpu.vector_store %arg7[%c0_11, %c0_12], %12 {strides = array<i32>} : memref<256x256xf32, #tpu.memory_space<vmem>>, vector<256x256xf32>,
    } else {
    }
    %c0 = arith.constant 0 : index
    %c0_1 = arith.constant 0 : index
    %3 = vector.load %arg7[%c0, %c0_1] : memref<256x256xf32, #tpu.memory_space<vmem>>, vector<256x256xf32>
    %c0_2 = arith.constant 0 : index
    %c0_3 = arith.constant 0 : index
    %4 = vector.load %arg3[%c0_2, %c0_3] : memref<256x512xbf16, #tpu.memory_space<vmem>>, vector<256x512xbf16>
    %c0_4 = arith.constant 0 : index
    %c0_5 = arith.constant 0 : index
    %5 = vector.load %arg4[%c0_4, %c0_5] : memref<512x256xbf16, #tpu.memory_space<vmem>>, vector<512x256xbf16>
    %cst = arith.constant dense<0.000000e+00> : vector<256x256xf32>
    %6 = tpu.matmul %4, %5, %cst {dimension_numbers = #tpu.dot_dimension_numbers<[1], [0], [0], [1], [0, 0, 1, 1], [], []>} : vector<256x512xbf16>, vector<512x256xbf16>, vector<256x256xf32> -> vector<256x256xf32>
    %7 = arith.addf %3, %6 : vector<256x256xf32>
    %c0_6 = arith.constant 0 : index
    %c0_7 = arith.constant 0 : index
    %8 = vector.load %arg7[%c0_6, %c0_7] : memref<256x256xf32, #tpu.memory_space<vmem>>, vector<256x256xf32>
    tpu.vector_store %arg7[%c0_6, %c0_7], %7 {strides = array<i32>} : memref<256x256xf32, #tpu.memory_space<vmem>>, vector<256x256xf32>,
    %c0_i32_8 = arith.constant 0 : i32
    %9 = arith.cmpi eq, %arg2, %c0_i32_8 : i32
    %10 = arith.extui %9 : i1 to i32
    %c0_i32_9 = arith.constant 0 : i32
    %11 = arith.cmpi ne, %10, %c0_i32_9 : i32
    scf.if %11 {
      %c0_10 = arith.constant 0 : index
      %c0_11 = arith.constant 0 : index
      %12 = vector.load %arg7[%c0_10, %c0_11] : memref<256x256xf32, #tpu.memory_space<vmem>>, vector<256x256xf32>
      %c0_12 = arith.constant 0 : index
      %c0_13 = arith.constant 0 : index
      %13 = vector.load %arg5[%c0_12, %c0_13] : memref<1x256xf32, #tpu.memory_space<vmem>>, vector<1x256xf32>
      %14 = vector.broadcast %13 : vector<1x256xf32> to vector<256x256xf32>
      %15 = arith.addf %12, %14 : vector<256x256xf32>
      %cst_14 = arith.constant 0.000000e+00 : f32
      %16 = vector.broadcast %cst_14 : f32 to vector<256x256xf32>
      %17 = arith.maximumf %15, %16 : vector<256x256xf32>
      %c0_15 = arith.constant 0 : index
      %c0_16 = arith.constant 0 : index
      %18 = vector.load %arg6[%c0_15, %c0_16] : memref<256x256xf32, #tpu.memory_space<vmem>>, vector<256x256xf32>
      tpu.vector_store %arg6[%c0_15, %c0_16], %17 {strides = array<i32>} : memref<256x256xf32, #tpu.memory_space<vmem>>, vector<256x256xf32>,
    } else {
    }
    return
  }
  func.func @transform_0(%arg0: i32, %arg1: i32, %arg2: i32) -> (i32, i32) {
    %c0_i32 = arith.constant 0 : i32
    return %arg0, %arg2 : i32, i32
  }
  func.func @transform_1(%arg0: i32, %arg1: i32, %arg2: i32) -> (i32, i32) {
    %c0_i32 = arith.constant 0 : i32
    return %arg2, %arg1 : i32, i32
  }
  func.func @transform_2(%arg0: i32, %arg1: i32, %arg2: i32) -> (i32, i32) {
    %c0_i32 = arith.constant 0 : i32
    %c0_i32_0 = arith.constant 0 : i32
    return %c0_i32, %arg1 : i32, i32
  }
  func.func @transform_3(%arg0: i32, %arg1: i32, %arg2: i32) -> (i32, i32) {
    %c0_i32 = arith.constant 0 : i32
    return %arg0, %arg1 : i32, i32
  }
}

</mosaic_0001>

<llo_original>
// kernel: _lambda_.8
$region0: #{_lambda_.8}
  #allocation0 [shape = 'u32[]', space=smem, size = 0x4, offset = 0x4, fixed_abs, tag = 'smem constant byte address 0x4 - core index']
  #allocation1 [shape = 'u32[144,128]{1,0:T(1,128)}', space=vmem, size = 0x12000, scoped, tag = 'internal scratch']
  %s0 = inlined_call_operand.vmem [shape: f32[512,256], index: 0, kind: input, shape index: {}]
  %s1 = inlined_call_operand.vmem [shape: f32[512,256], index: 1, kind: input, shape index: {}]
  %s2 = inlined_call_operand.vmem [shape: f32[512,1], index: 2, kind: output, shape index: {0}]
  %s3 = inlined_call_operand.vmem [shape: f32[512,1], index: 3, kind: output, shape index: {1}]
  %4 = xla_tuple %s2, %s3
  %s5 = sld [smem:[#allocation0]]
  $region26: #{_lambda_.8} parent=0
    _
  %s7 = ssub.s32 1, %s5
  %s8 = scalar_select 0, %s7, %s5
  // Predicated region
  $region2: #{_lambda_.8} parent=0 // pred_check
    _
  $region3: #{_lambda_.8} parent=0 // pred_check_branch
    %10 = sbr.rel (0) target = $region5
  $region4: #{_lambda_.8} parent=0 // pred_region
    _
  $region5: #{_lambda_.8} parent=0 // pred_fallthru
    _
  // Predicated region
  $region6: #{_lambda_.8} parent=0 // pred_check
    _
  $region7: #{_lambda_.8} parent=0 // pred_check_branch
    %12 = sbr.rel (0) target = $region9
  $region8: #{_lambda_.8} parent=0 // pred_region
    _
  $region9: #{_lambda_.8} parent=0 // pred_fallthru
    _
  %v13 = vld [vmem:[%s0] sm:$0xff]
  %v14 = vld [vmem:[%s0 + $0x8] sm:$0xff]
  %v15 = vld [vmem:[%s0 + $0x10] sm:$0xff]
  %v16 = vld [vmem:[%s0 + $0x18] sm:$0xff]
  %v17 = vld [vmem:[%s0 + $0x20] sm:$0xff]
  %v18 = vld [vmem:[%s0 + $0x28] sm:$0xff]
  %v19 = vld [vmem:[%s0 + $0x30] sm:$0xff]
  %v20 = vld [vmem:[%s0 + $0x38] sm:$0xff]
  %v21 = vld [vmem:[%s0 + $0x40] sm:$0xff]
  %v22 = vld [vmem:[%s0 + $0x48] sm:$0xff]
  %v23 = vld [vmem:[%s0 + $0x50] sm:$0xff]
  %v24 = vld [vmem:[%s0 + $0x58] sm:$0xff]
  %v25 = vld [vmem:[%s0 + $0x60] sm:$0xff]
  %v26 = vld [vmem:[%s0 + $0x68] sm:$0xff]
  %v27 = vld [vmem:[%s0 + $0x70] sm:$0xff]
  %v28 = vld [vmem:[%s0 + $0x78] sm:$0xff]
  %v29 = vld [vmem:[%s0 + $0x80] sm:$0xff]
  %v30 = vld [vmem:[%s0 + $0x88] sm:$0xff]
  %v31 = vld [vmem:[%s0 + $0x90] sm:$0xff]
  %v32 = vld [vmem:[%s0 + $0x98] sm:$0xff]
  %v33 = vld [vmem:[%s0 + $0xa0] sm:$0xff]
  %v34 = vld [vmem:[%s0 + $0xa8] sm:$0xff]
  %v35 = vld [vmem:[%s0 + $0xb0] sm:$0xff]
  %v36 = vld [vmem:[%s0 + $0xb8] sm:$0xff]
  %v37 = vld [vmem:[%s0 + $0xc0] sm:$0xff]
  %v38 = vld [vmem:[%s0 + $0xc8] sm:$0xff]
  %v39 = vld [vmem:[%s0 + $0xd0] sm:$0xff]
  %v40 = vld [vmem:[%s0 + $0xd8] sm:$0xff]
  %v41 = vld [vmem:[%s0 + $0xe0] sm:$0xff]
  %v42 = vld [vmem:[%s0 + $0xe8] sm:$0xff]
  %v43 = vld [vmem:[%s0 + $0xf0] sm:$0xff]
  %v44 = vld [vmem:[%s0 + $0xf8] sm:$0xff]
  %v45 = vld [vmem:[%s0 + $0x100] sm:$0xff]
  %v46 = vld [vmem:[%s0 + $0x108] sm:$0xff]
  %v47 = vld [vmem:[%s0 + $0x110] sm:$0xff]
  %v48 = vld [vmem:[%s0 + $0x118] sm:$0xff]
  %v49 = vld [vmem:[%s0 + $0x120] sm:$0xff]
  %v50 = vld [vmem:[%s0 + $0x128] sm:$0xff]
  %v51 = vld [vmem:[%s0 + $0x130] sm:$0xff]
  %v52 = vld [vmem:[%s0 + $0x138] sm:$0xff]
  %v53 = vld [vmem:[%s0 + $0x140] sm:$0xff]
  %v54 = vld [vmem:[%s0 + $0x148] sm:$0xff]
  %v55 = vld [vmem:[%s0 + $0x150] sm:$0xff]
  %v56 = vld [vmem:[%s0 + $0x158] sm:$0xff]
  %v57 = vld [vmem:[%s0 + $0x160] sm:$0xff]
  %v58 = vld [vmem:[%s0 + $0x168] sm:$0xff]
  %v59 = vld [vmem:[%s0 + $0x170] sm:$0xff]
  %v60 = vld [vmem:[%s0 + $0x178] sm:$0xff]
  %v61 = vld [vmem:[%s0 + $0x180] sm:$0xff]
  %v62 = vld [vmem:[%s0 + $0x188] sm:$0xff]
  %v63 = vld [vmem:[%s0 + $0x190] sm:$0xff]
  %v64 = vld [vmem:[%s0 + $0x198] sm:$0xff]
  %v65 = vld [vmem:[%s0 + $0x1a0] sm:$0xff]
  %v66 = vld [vmem:[%s0 + $0x1a8] sm:$0xff]
  %v67 = vld [vmem:[%s0 + $0x1b0] sm:$0xff]
  %v68 = vld [vmem:[%s0 + $0x1b8] sm:$0xff]
  %v69 = vld [vmem:[%s0 + $0x1c0] sm:$0xff]
  %v70 = vld [vmem:[%s0 + $0x1c8] sm:$0xff]
  %v71 = vld [vmem:[%s0 + $0x1d0] sm:$0xff]
  %v72 = vld [vmem:[%s0 + $0x1d8] sm:$0xff]
  %v73 = vld [vmem:[%s0 + $0x1e0] sm:$0xff]
  %v74 = vld [vmem:[%s0 + $0x1e8] sm:$0xff]
  %v75 = vld [vmem:[%s0 + $0x1f0] sm:$0xff]
  %v76 = vld [vmem:[%s0 + $0x1f8] sm:$0xff]
  %v77 = vld [vmem:[%s0 + $0x200] sm:$0xff]
  %v78 = vld [vmem:[%s0 + $0x208] sm:$0xff]
  %v79 = vld [vmem:[%s0 + $0x210] sm:$0xff]
  %v80 = vld [vmem:[%s0 + $0x218] sm:$0xff]
  %v81 = vld [vmem:[%s0 + $0x220] sm:$0xff]
  %v82 = vld [vmem:[%s0 + $0x228] sm:$0xff]
  %v83 = vld [vmem:[%s0 + $0x230] sm:$0xff]
  %v84 = vld [vmem:[%s0 + $0x238] sm:$0xff]
  %v85 = vld [vmem:[%s0 + $0x240] sm:$0xff]
  %v86 = vld [vmem:[%s0 + $0x248] sm:$0xff]
  %v87 = vld [vmem:[%s0 + $0x250] sm:$0xff]
  %v88 = vld [vmem:[%s0 + $0x258] sm:$0xff]
  %v89 = vld [vmem:[%s0 + $0x260] sm:$0xff]
  %v90 = vld [vmem:[%s0 + $0x268] sm:$0xff]
  %v91 = vld [vmem:[%s0 + $0x270] sm:$0xff]
  %v92 = vld [vmem:[%s0 + $0x278] sm:$0xff]
  %v93 = vld [vmem:[%s0 + $0x280] sm:$0xff]
  %v94 = vld [vmem:[%s0 + $0x288] sm:$0xff]
  %v95 = vld [vmem:[%s0 + $0x290] sm:$0xff]
  %v96 = vld [vmem:[%s0 + $0x298] sm:$0xff]
  %v97 = vld [vmem:[%s0 + $0x2a0] sm:$0xff]
  %v98 = vld [vmem:[%s0 + $0x2a8] sm:$0xff]
  %v99 = vld [vmem:[%s0 + $0x2b0] sm:$0xff]
  %v100 = vld [vmem:[%s0 + $0x2b8] sm:$0xff]
  %v101 = vld [vmem:[%s0 + $0x2c0] sm:$0xff]
  %v102 = vld [vmem:[%s0 + $0x2c8] sm:$0xff]
  %v103 = vld [vmem:[%s0 + $0x2d0] sm:$0xff]
  %v104 = vld [vmem:[%s0 + $0x2d8] sm:$0xff]
  %v105 = vld [vmem:[%s0 + $0x2e0] sm:$0xff]
  %v106 = vld [vmem:[%s0 + $0x2e8] sm:$0xff]
  %v107 = vld [vmem:[%s0 + $0x2f0] sm:$0xff]
  %v108 = vld [vmem:[%s0 + $0x2f8] sm:$0xff]
  %v109 = vld [vmem:[%s0 + $0x300] sm:$0xff]
  %v110 = vld [vmem:[%s0 + $0x308] sm:$0xff]
  %v111 = vld [vmem:[%s0 + $0x310] sm:$0xff]
  %v112 = vld [vmem:[%s0 + $0x318] sm:$0xff]
  %v113 = vld [vmem:[%s0 + $0x320] sm:$0xff]
  %v114 = vld [vmem:[%s0 + $0x328] sm:$0xff]
  %v115 = vld [vmem:[%s0 + $0x330] sm:$0xff]
  %v116 = vld [vmem:[%s0 + $0x338] sm:$0xff]
  %v117 = vld [vmem:[%s0 + $0x340] sm:$0xff]
  %v118 = vld [vmem:[%s0 + $0x348] sm:$0xff]
  %v119 = vld [vmem:[%s0 + $0x350] sm:$0xff]
  %v120 = vld [vmem:[%s0 + $0x358] sm:$0xff]
  %v121 = vld [vmem:[%s0 + $0x360] sm:$0xff]
  %v122 = vld [vmem:[%s0 + $0x368] sm:$0xff]
  %v123 = vld [vmem:[%s0 + $0x370] sm:$0xff]
  %v124 = vld [vmem:[%s0 + $0x378] sm:$0xff]
  %v125 = vld [vmem:[%s0 + $0x380] sm:$0xff]
  %v126 = vld [vmem:[%s0 + $0x388] sm:$0xff]
  %v127 = vld [vmem:[%s0 + $0x390] sm:$0xff]
  %v128 = vld [vmem:[%s0 + $0x398] sm:$0xff]
  %v129 = vld [vmem:[%s0 + $0x3a0] sm:$0xff]
  %v130 = vld [vmem:[%s0 + $0x3a8] sm:$0xff]
  %v131 = vld [vmem:[%s0 + $0x3b0] sm:$0xff]
  %v132 = vld [vmem:[%s0 + $0x3b8] sm:$0xff]
  %v133 = vld [vmem:[%s0 + $0x3c0] sm:$0xff]
  %v134 = vld [vmem:[%s0 + $0x3c8] sm:$0xff]
  %v135 = vld [vmem:[%s0 + $0x3d0] sm:$0xff]
  %v136 = vld [vmem:[%s0 + $0x3d8] sm:$0xff]
  %v137 = vld [vmem:[%s0 + $0x3e0] sm:$0xff]
  %v138 = vld [vmem:[%s0 + $0x3e8] sm:$0xff]
  %v139 = vld [vmem:[%s0 + $0x3f0] sm:$0xff]
  %v140 = vld [vmem:[%s0 + $0x3f8] sm:$0xff]
  %v141 = vld [vmem:[%s1] sm:$0xff]
  %v142 = vld [vmem:[%s1 + $0x8] sm:$0xff]
  %v143 = vld [vmem:[%s1 + $0x10] sm:$0xff]
  %v144 = vld [vmem:[%s1 + $0x18] sm:$0xff]
  %v145 = vld [vmem:[%s1 + $0x20] sm:$0xff]
  %v146 = vld [vmem:[%s1 + $0x28] sm:$0xff]
  %v147 = vld [vmem:[%s1 + $0x30] sm:$0xff]
  %v148 = vld [vmem:[%s1 + $0x38] sm:$0xff]
  %v149 = vld [vmem:[%s1 + $0x40] sm:$0xff]
  %v150 = vld [vmem:[%s1 + $0x48] sm:$0xff]
  %v151 = vld [vmem:[%s1 + $0x50] sm:$0xff]
  %v152 = vld [vmem:[%s1 + $0x58] sm:$0xff]
  %v153 = vld [vmem:[%s1 + $0x60] sm:$0xff]
  %v154 = vld [vmem:[%s1 + $0x68] sm:$0xff]
  %v155 = vld [vmem:[%s1 + $0x70] sm:$0xff]
  %v156 = vld [vmem:[%s1 + $0x78] sm:$0xff]
  %v157 = vld [vmem:[%s1 + $0x80] sm:$0xff]
  %v158 = vld [vmem:[%s1 + $0x88] sm:$0xff]
  %v159 = vld [vmem:[%s1 + $0x90] sm:$0xff]
  %v160 = vld [vmem:[%s1 + $0x98] sm:$0xff]
  %v161 = vld [vmem:[%s1 + $0xa0] sm:$0xff]
  %v162 = vld [vmem:[%s1 + $0xa8] sm:$0xff]
  %v163 = vld [vmem:[%s1 + $0xb0] sm:$0xff]
  %v164 = vld [vmem:[%s1 + $0xb8] sm:$0xff]
  %v165 = vld [vmem:[%s1 + $0xc0] sm:$0xff]
  %v166 = vld [vmem:[%s1 + $0xc8] sm:$0xff]
  %v167 = vld [vmem:[%s1 + $0xd0] sm:$0xff]
  %v168 = vld [vmem:[%s1 + $0xd8] sm:$0xff]
  %v169 = vld [vmem:[%s1 + $0xe0] sm:$0xff]
  %v170 = vld [vmem:[%s1 + $0xe8] sm:$0xff]
  %v171 = vld [vmem:[%s1 + $0xf0] sm:$0xff]
  %v172 = vld [vmem:[%s1 + $0xf8] sm:$0xff]
  %v173 = vld [vmem:[%s1 + $0x100] sm:$0xff]
  %v174 = vld [vmem:[%s1 + $0x108] sm:$0xff]
  %v175 = vld [vmem:[%s1 + $0x110] sm:$0xff]
  %v176 = vld [vmem:[%s1 + $0x118] sm:$0xff]
  %v177 = vld [vmem:[%s1 + $0x120] sm:$0xff]
  %v178 = vld [vmem:[%s1 + $0x128] sm:$0xff]
  %v179 = vld [vmem:[%s1 + $0x130] sm:$0xff]
  %v180 = vld [vmem:[%s1 + $0x138] sm:$0xff]
  %v181 = vld [vmem:[%s1 + $0x140] sm:$0xff]
  %v182 = vld [vmem:[%s1 + $0x148] sm:$0xff]
  %v183 = vld [vmem:[%s1 + $0x150] sm:$0xff]
  %v184 = vld [vmem:[%s1 + $0x158] sm:$0xff]
  %v185 = vld [vmem:[%s1 + $0x160] sm:$0xff]
  %v186 = vld [vmem:[%s1 + $0x168] sm:$0xff]
  %v187 = vld [vmem:[%s1 + $0x170] sm:$0xff]
  %v188 = vld [vmem:[%s1 + $0x178] sm:$0xff]
  %v189 = vld [vmem:[%s1 + $0x180] sm:$0xff]
  %v190 = vld [vmem:[%s1 + $0x188] sm:$0xff]
  %v191 = vld [vmem:[%s1 + $0x190] sm:$0xff]
  %v192 = vld [vmem:[%s1 + $0x198] sm:$0xff]
  %v193 = vld [vmem:[%s1 + $0x1a0] sm:$0xff]
  %v194 = vld [vmem:[%s1 + $0x1a8] sm:$0xff]
  %v195 = vld [vmem:[%s1 + $0x1b0] sm:$0xff]
  %v196 = vld [vmem:[%s1 + $0x1b8] sm:$0xff]
  %v197 = vld [vmem:[%s1 + $0x1c0] sm:$0xff]
  %v198 = vld [vmem:[%s1 + $0x1c8] sm:$0xff]
  %v199 = vld [vmem:[%s1 + $0x1d0] sm:$0xff]
  %v200 = vld [vmem:[%s1 + $0x1d8] sm:$0xff]
  %v201 = vld [vmem:[%s1 + $0x1e0] sm:$0xff]
  %v202 = vld [vmem:[%s1 + $0x1e8] sm:$0xff]
  %v203 = vld [vmem:[%s1 + $0x1f0] sm:$0xff]
  %v204 = vld [vmem:[%s1 + $0x1f8] sm:$0xff]
  %v205 = vld [vmem:[%s1 + $0x200] sm:$0xff]
  %v206 = vld [vmem:[%s1 + $0x208] sm:$0xff]
  %v207 = vld [vmem:[%s1 + $0x210] sm:$0xff]
  %v208 = vld [vmem:[%s1 + $0x218] sm:$0xff]
  %v209 = vld [vmem:[%s1 + $0x220] sm:$0xff]
  %v210 = vld [vmem:[%s1 + $0x228] sm:$0xff]
  %v211 = vld [vmem:[%s1 + $0x230] sm:$0xff]
  %v212 = vld [vmem:[%s1 + $0x238] sm:$0xff]
  %v213 = vld [vmem:[%s1 + $0x240] sm:$0xff]
  %v214 = vld [vmem:[%s1 + $0x248] sm:$0xff]
  %v215 = vld [vmem:[%s1 + $0x250] sm:$0xff]
  %v216 = vld [vmem:[%s1 + $0x258] sm:$0xff]
  %v217 = vld [vmem:[%s1 + $0x260] sm:$0xff]
  %v218 = vld [vmem:[%s1 + $0x268] sm:$0xff]
  %v219 = vld [vmem:[%s1 + $0x270] sm:$0xff]
  %v220 = vld [vmem:[%s1 + $0x278] sm:$0xff]
  %v221 = vld [vmem:[%s1 + $0x280] sm:$0xff]
  %v222 = vld [vmem:[%s1 + $0x288] sm:$0xff]
  %v223 = vld [vmem:[%s1 + $0x290] sm:$0xff]
  %v224 = vld [vmem:[%s1 + $0x298] sm:$0xff]
  %v225 = vld [vmem:[%s1 + $0x2a0] sm:$0xff]
  %v226 = vld [vmem:[%s1 + $0x2a8] sm:$0xff]
  %v227 = vld [vmem:[%s1 + $0x2b0] sm:$0xff]
  %v228 = vld [vmem:[%s1 + $0x2b8] sm:$0xff]
  %v229 = vld [vmem:[%s1 + $0x2c0] sm:$0xff]
  %v230 = vld [vmem:[%s1 + $0x2c8] sm:$0xff]
  %v231 = vld [vmem:[%s1 + $0x2d0] sm:$0xff]
  %v232 = vld [vmem:[%s1 + $0x2d8] sm:$0xff]
  %v233 = vld [vmem:[%s1 + $0x2e0] sm:$0xff]
  %v234 = vld [vmem:[%s1 + $0x2e8] sm:$0xff]
  %v235 = vld [vmem:[%s1 + $0x2f0] sm:$0xff]
  %v236 = vld [vmem:[%s1 + $0x2f8] sm:$0xff]
  %v237 = vld [vmem:[%s1 + $0x300] sm:$0xff]
  %v238 = vld [vmem:[%s1 + $0x308] sm:$0xff]
  %v239 = vld [vmem:[%s1 + $0x310] sm:$0xff]
  %v240 = vld [vmem:[%s1 + $0x318] sm:$0xff]
  %v241 = vld [vmem:[%s1 + $0x320] sm:$0xff]
  %v242 = vld [vmem:[%s1 + $0x328] sm:$0xff]
  %v243 = vld [vmem:[%s1 + $0x330] sm:$0xff]
  %v244 = vld [vmem:[%s1 + $0x338] sm:$0xff]
  %v245 = vld [vmem:[%s1 + $0x340] sm:$0xff]
  %v246 = vld [vmem:[%s1 + $0x348] sm:$0xff]
  %v247 = vld [vmem:[%s1 + $0x350] sm:$0xff]
  %v248 = vld [vmem:[%s1 + $0x358] sm:$0xff]
  %v249 = vld [vmem:[%s1 + $0x360] sm:$0xff]
  %v250 = vld [vmem:[%s1 + $0x368] sm:$0xff]
  %v251 = vld [vmem:[%s1 + $0x370] sm:$0xff]
  %v252 = vld [vmem:[%s1 + $0x378] sm:$0xff]
  %v253 = vld [vmem:[%s1 + $0x380] sm:$0xff]
  %v254 = vld [vmem:[%s1 + $0x388] sm:$0xff]
  %v255 = vld [vmem:[%s1 + $0x390] sm:$0xff]
  %v256 = vld [vmem:[%s1 + $0x398] sm:$0xff]
  %v257 = vld [vmem:[%s1 + $0x3a0] sm:$0xff]
  %v258 = vld [vmem:[%s1 + $0x3a8] sm:$0xff]
  %v259 = vld [vmem:[%s1 + $0x3b0] sm:$0xff]
  %v260 = vld [vmem:[%s1 + $0x3b8] sm:$0xff]
  %v261 = vld [vmem:[%s1 + $0x3c0] sm:$0xff]
  %v262 = vld [vmem:[%s1 + $0x3c8] sm:$0xff]
  %v263 = vld [vmem:[%s1 + $0x3d0] sm:$0xff]
  %v264 = vld [vmem:[%s1 + $0x3d8] sm:$0xff]
  %v265 = vld [vmem:[%s1 + $0x3e0] sm:$0xff]
  %v266 = vld [vmem:[%s1 + $0x3e8] sm:$0xff]
  %v267 = vld [vmem:[%s1 + $0x3f0] sm:$0xff]
  %v268 = vld [vmem:[%s1 + $0x3f8] sm:$0xff]
  %v269 = vadd.f32 %v13, %v14
  %270 = vadd.xlane.f32.xlu0 %v269
  %v271 = vpop.xlane.xlu0 %270
  %v272 = vadd.f32 %v15, %v16
  %273 = vadd.xlane.f32.xlu0 %v272
  %v274 = vpop.xlane.xlu0 %273
  %v275 = vadd.f32 %v17, %v18
  %276 = vadd.xlane.f32.xlu0 %v275
  %v277 = vpop.xlane.xlu0 %276
  %v278 = vadd.f32 %v19, %v20
  %279 = vadd.xlane.f32.xlu0 %v278
  %v280 = vpop.xlane.xlu0 %279
  %v281 = vadd.f32 %v21, %v22
  %282 = vadd.xlane.f32.xlu0 %v281
  %v283 = vpop.xlane.xlu0 %282
  %v284 = vadd.f32 %v23, %v24
  %285 = vadd.xlane.f32.xlu0 %v284
  %v286 = vpop.xlane.xlu0 %285
  %v287 = vadd.f32 %v25, %v26
  %288 = vadd.xlane.f32.xlu0 %v287
  %v289 = vpop.xlane.xlu0 %288
  %v290 = vadd.f32 %v27, %v28
  %291 = vadd.xlane.f32.xlu0 %v290
  %v292 = vpop.xlane.xlu0 %291
  %v293 = vadd.f32 %v29, %v30
  %294 = vadd.xlane.f32.xlu0 %v293
  %v295 = vpop.xlane.xlu0 %294
  %v296 = vadd.f32 %v31, %v32
  %297 = vadd.xlane.f32.xlu0 %v296
  %v298 = vpop.xlane.xlu0 %297
  %v299 = vadd.f32 %v33, %v34
  %300 = vadd.xlane.f32.xlu0 %v299
  %v301 = vpop.xlane.xlu0 %300
  %v302 = vadd.f32 %v35, %v36
  %303 = vadd.xlane.f32.xlu0 %v302
  %v304 = vpop.xlane.xlu0 %303
  %v305 = vadd.f32 %v37, %v38
  %306 = vadd.xlane.f32.xlu0 %v305
  %v307 = vpop.xlane.xlu0 %306
  %v308 = vadd.f32 %v39, %v40
  %309 = vadd.xlane.f32.xlu0 %v308
  %v310 = vpop.xlane.xlu0 %309
  %v311 = vadd.f32 %v41, %v42
  %312 = vadd.xlane.f32.xlu0 %v311
  %v313 = vpop.xlane.xlu0 %312
  %v314 = vadd.f32 %v43, %v44
  %315 = vadd.xlane.f32.xlu0 %v314
  %v316 = vpop.xlane.xlu0 %315
  %v317 = vadd.f32 %v45, %v46
  %318 = vadd.xlane.f32.xlu0 %v317
  %v319 = vpop.xlane.xlu0 %318
  %v320 = vadd.f32 %v47, %v48
  %321 = vadd.xlane.f32.xlu0 %v320
  %v322 = vpop.xlane.xlu0 %321
  %v323 = vadd.f32 %v49, %v50
  %324 = vadd.xlane.f32.xlu0 %v323
  %v325 = vpop.xlane.xlu0 %324
  %v326 = vadd.f32 %v51, %v52
  %327 = vadd.xlane.f32.xlu0 %v326
  %v328 = vpop.xlane.xlu0 %327
  %v329 = vadd.f32 %v53, %v54
  %330 = vadd.xlane.f32.xlu0 %v329
  %v331 = vpop.xlane.xlu0 %330
  %v332 = vadd.f32 %v55, %v56
  %333 = vadd.xlane.f32.xlu0 %v332
  %v334 = vpop.xlane.xlu0 %333
  %v335 = vadd.f32 %v57, %v58
  %336 = vadd.xlane.f32.xlu0 %v335
  %v337 = vpop.xlane.xlu0 %336
  %v338 = vadd.f32 %v59, %v60
  %339 = vadd.xlane.f32.xlu0 %v338
  %v340 = vpop.xlane.xlu0 %339
  %v341 = vadd.f32 %v61, %v62
  %342 = vadd.xlane.f32.xlu0 %v341
  %v343 = vpop.xlane.xlu0 %342
  %v344 = vadd.f32 %v63, %v64
  %345 = vadd.xlane.f32.xlu0 %v344
  %v346 = vpop.xlane.xlu0 %345
  %v347 = vadd.f32 %v65, %v66
  %348 = vadd.xlane.f32.xlu0 %v347
  %v349 = vpop.xlane.xlu0 %348
  %v350 = vadd.f32 %v67, %v68
  %351 = vadd.xlane.f32.xlu0 %v350
  %v352 = vpop.xlane.xlu0 %351
  %v353 = vadd.f32 %v69, %v70
  %354 = vadd.xlane.f32.xlu0 %v353
  %v355 = vpop.xlane.xlu0 %354
  %v356 = vadd.f32 %v71, %v72
  %357 = vadd.xlane.f32.xlu0 %v356
  %v358 = vpop.xlane.xlu0 %357
  %v359 = vadd.f32 %v73, %v74
  %360 = vadd.xlane.f32.xlu0 %v359
  %v361 = vpop.xlane.xlu0 %360
  %v362 = vadd.f32 %v75, %v76
  %363 = vadd.xlane.f32.xlu0 %v362
  %v364 = vpop.xlane.xlu0 %363
  %v365 = vadd.f32 %v77, %v78
  %366 = vadd.xlane.f32.xlu0 %v365
  %v367 = vpop.xlane.xlu0 %366
  %v368 = vadd.f32 %v79, %v80
  %369 = vadd.xlane.f32.xlu0 %v368
  %v370 = vpop.xlane.xlu0 %369
  %v371 = vadd.f32 %v81, %v82
  %372 = vadd.xlane.f32.xlu0 %v371
  %v373 = vpop.xlane.xlu0 %372
  %v374 = vadd.f32 %v83, %v84
  %375 = vadd.xlane.f32.xlu0 %v374
  %v376 = vpop.xlane.xlu0 %375
  %v377 = vadd.f32 %v85, %v86
  %378 = vadd.xlane.f32.xlu0 %v377
  %v379 = vpop.xlane.xlu0 %378
  %v380 = vadd.f32 %v87, %v88
  %381 = vadd.xlane.f32.xlu0 %v380
  %v382 = vpop.xlane.xlu0 %381
  %v383 = vadd.f32 %v89, %v90
  %384 = vadd.xlane.f32.xlu0 %v383
  %v385 = vpop.xlane.xlu0 %384
  %v386 = vadd.f32 %v91, %v92
  %387 = vadd.xlane.f32.xlu0 %v386
  %v388 = vpop.xlane.xlu0 %387
  %v389 = vadd.f32 %v93, %v94
  %390 = vadd.xlane.f32.xlu0 %v389
  %v391 = vpop.xlane.xlu0 %390
  %v392 = vadd.f32 %v95, %v96
  %393 = vadd.xlane.f32.xlu0 %v392
  %v394 = vpop.xlane.xlu0 %393
  %v395 = vadd.f32 %v97, %v98
  %396 = vadd.xlane.f32.xlu0 %v395
  %v397 = vpop.xlane.xlu0 %396
  %v398 = vadd.f32 %v99, %v100
  %399 = vadd.xlane.f32.xlu0 %v398
  %v400 = vpop.xlane.xlu0 %399
  %v401 = vadd.f32 %v101, %v102
  %402 = vadd.xlane.f32.xlu0 %v401
  %v403 = vpop.xlane.xlu0 %402
  %v404 = vadd.f32 %v103, %v104
  %405 = vadd.xlane.f32.xlu0 %v404
  %v406 = vpop.xlane.xlu0 %405
  %v407 = vadd.f32 %v105, %v106
  %408 = vadd.xlane.f32.xlu0 %v407
  %v409 = vpop.xlane.xlu0 %408
  %v410 = vadd.f32 %v107, %v108
  %411 = vadd.xlane.f32.xlu0 %v410
  %v412 = vpop.xlane.xlu0 %411
  %v413 = vadd.f32 %v109, %v110
  %414 = vadd.xlane.f32.xlu0 %v413
  %v415 = vpop.xlane.xlu0 %414
  %v416 = vadd.f32 %v111, %v112
  %417 = vadd.xlane.f32.xlu0 %v416
  %v418 = vpop.xlane.xlu0 %417
  %v419 = vadd.f32 %v113, %v114
  %420 = vadd.xlane.f32.xlu0 %v419
  %v421 = vpop.xlane.xlu0 %420
  %v422 = vadd.f32 %v115, %v116
  %423 = vadd.xlane.f32.xlu0 %v422
  %v424 = vpop.xlane.xlu0 %423
  %v425 = vadd.f32 %v117, %v118
  %426 = vadd.xlane.f32.xlu0 %v425
  %v427 = vpop.xlane.xlu0 %426
  %v428 = vadd.f32 %v119, %v120
  %429 = vadd.xlane.f32.xlu0 %v428
  %v430 = vpop.xlane.xlu0 %429
  %v431 = vadd.f32 %v121, %v122
  %432 = vadd.xlane.f32.xlu0 %v431
  %v433 = vpop.xlane.xlu0 %432
  %v434 = vadd.f32 %v123, %v124
  %435 = vadd.xlane.f32.xlu0 %v434
  %v436 = vpop.xlane.xlu0 %435
  %v437 = vadd.f32 %v125, %v126
  %438 = vadd.xlane.f32.xlu0 %v437
  %v439 = vpop.xlane.xlu0 %438
  %v440 = vadd.f32 %v127, %v128
  %441 = vadd.xlane.f32.xlu0 %v440
  %v442 = vpop.xlane.xlu0 %441
  %v443 = vadd.f32 %v129, %v130
  %444 = vadd.xlane.f32.xlu0 %v443
  %v445 = vpop.xlane.xlu0 %444
  %v446 = vadd.f32 %v131, %v132
  %447 = vadd.xlane.f32.xlu0 %v446
  %v448 = vpop.xlane.xlu0 %447
  %v449 = vadd.f32 %v133, %v134
  %450 = vadd.xlane.f32.xlu0 %v449
  %v451 = vpop.xlane.xlu0 %450
  %v452 = vadd.f32 %v135, %v136
  %453 = vadd.xlane.f32.xlu0 %v452
  %v454 = vpop.xlane.xlu0 %453
  %v455 = vadd.f32 %v137, %v138
  %456 = vadd.xlane.f32.xlu0 %v455
  %v457 = vpop.xlane.xlu0 %456
  %v458 = vadd.f32 %v139, %v140
  %459 = vadd.xlane.f32.xlu0 %v458
  %v460 = vpop.xlane.xlu0 %459
  %v461 = vrcp.pop 256.0
  %v462 = vmul.f32 %v271, %v461
  %v463 = vmul.f32 %v274, %v461
  %v464 = vmul.f32 %v277, %v461
  %v465 = vmul.f32 %v280, %v461
  %v466 = vmul.f32 %v283, %v461
  %v467 = vmul.f32 %v286, %v461
  %v468 = vmul.f32 %v289, %v461
  %v469 = vmul.f32 %v292, %v461
  %v470 = vmul.f32 %v295, %v461
  %v471 = vmul.f32 %v298, %v461
  %v472 = vmul.f32 %v301, %v461
  %v473 = vmul.f32 %v304, %v461
  %v474 = vmul.f32 %v307, %v461
  %v475 = vmul.f32 %v310, %v461
  %v476 = vmul.f32 %v313, %v461
  %v477 = vmul.f32 %v316, %v461
  %v478 = vmul.f32 %v319, %v461
  %v479 = vmul.f32 %v322, %v461
  %v480 = vmul.f32 %v325, %v461
  %v481 = vmul.f32 %v328, %v461
  %v482 = vmul.f32 %v331, %v461
  %v483 = vmul.f32 %v334, %v461
  %v484 = vmul.f32 %v337, %v461
  %v485 = vmul.f32 %v340, %v461
  %v486 = vmul.f32 %v343, %v461
  %v487 = vmul.f32 %v346, %v461
  %v488 = vmul.f32 %v349, %v461
  %v489 = vmul.f32 %v352, %v461
  %v490 = vmul.f32 %v355, %v461
  %v491 = vmul.f32 %v358, %v461
  %v492 = vmul.f32 %v361, %v461
  %v493 = vmul.f32 %v364, %v461
  %v494 = vmul.f32 %v367, %v461
  %v495 = vmul.f32 %v370, %v461
  %v496 = vmul.f32 %v373, %v461
  %v497 = vmul.f32 %v376, %v461
  %v498 = vmul.f32 %v379, %v461
  %v499 = vmul.f32 %v382, %v461
  %v500 = vmul.f32 %v385, %v461
  %v501 = vmul.f32 %v388, %v461
  %v502 = vmul.f32 %v391, %v461
  %v503 = vmul.f32 %v394, %v461
  %v504 = vmul.f32 %v397, %v461
  %v505 = vmul.f32 %v400, %v461
  %v506 = vmul.f32 %v403, %v461
  %v507 = vmul.f32 %v406, %v461
  %v508 = vmul.f32 %v409, %v461
  %v509 = vmul.f32 %v412, %v461
  %v510 = vmul.f32 %v415, %v461
  %v511 = vmul.f32 %v418, %v461
  %v512 = vmul.f32 %v421, %v461
  %v513 = vmul.f32 %v424, %v461
  %v514 = vmul.f32 %v427, %v461
  %v515 = vmul.f32 %v430, %v461
  %v516 = vmul.f32 %v433, %v461
  %v517 = vmul.f32 %v436, %v461
  %v518 = vmul.f32 %v439, %v461
  %v519 = vmul.f32 %v442, %v461
  %v520 = vmul.f32 %v445, %v461
  %v521 = vmul.f32 %v448, %v461
  %v522 = vmul.f32 %v451, %v461
  %v523 = vmul.f32 %v454, %v461
  %v524 = vmul.f32 %v457, %v461
  %v525 = vmul.f32 %v460, %v461
  %v526 = vadd.f32 %v141, %v142
  %527 = vadd.xlane.f32.xlu0 %v526
  %v528 = vpop.xlane.xlu0 %527
  %v529 = vadd.f32 %v143, %v144
  %530 = vadd.xlane.f32.xlu0 %v529
  %v531 = vpop.xlane.xlu0 %530
  %v532 = vadd.f32 %v145, %v146
  %533 = vadd.xlane.f32.xlu0 %v532
  %v534 = vpop.xlane.xlu0 %533
  %v535 = vadd.f32 %v147, %v148
  %536 = vadd.xlane.f32.xlu0 %v535
  %v537 = vpop.xlane.xlu0 %536
  %v538 = vadd.f32 %v149, %v150
  %539 = vadd.xlane.f32.xlu0 %v538
  %v540 = vpop.xlane.xlu0 %539
  %v541 = vadd.f32 %v151, %v152
  %542 = vadd.xlane.f32.xlu0 %v541
  %v543 = vpop.xlane.xlu0 %542
  %v544 = vadd.f32 %v153, %v154
  %545 = vadd.xlane.f32.xlu0 %v544
  %v546 = vpop.xlane.xlu0 %545
  %v547 = vadd.f32 %v155, %v156
  %548 = vadd.xlane.f32.xlu0 %v547
  %v549 = vpop.xlane.xlu0 %548
  %v550 = vadd.f32 %v157, %v158
  %551 = vadd.xlane.f32.xlu0 %v550
  %v552 = vpop.xlane.xlu0 %551
  %v553 = vadd.f32 %v159, %v160
  %554 = vadd.xlane.f32.xlu0 %v553
  %v555 = vpop.xlane.xlu0 %554
  %v556 = vadd.f32 %v161, %v162
  %557 = vadd.xlane.f32.xlu0 %v556
  %v558 = vpop.xlane.xlu0 %557
  %v559 = vadd.f32 %v163, %v164
  %560 = vadd.xlane.f32.xlu0 %v559
  %v561 = vpop.xlane.xlu0 %560
  %v562 = vadd.f32 %v165, %v166
  %563 = vadd.xlane.f32.xlu0 %v562
  %v564 = vpop.xlane.xlu0 %563
  %v565 = vadd.f32 %v167, %v168
  %566 = vadd.xlane.f32.xlu0 %v565
  %v567 = vpop.xlane.xlu0 %566
  %v568 = vadd.f32 %v169, %v170
  %569 = vadd.xlane.f32.xlu0 %v568
  %v570 = vpop.xlane.xlu0 %569
  %v571 = vadd.f32 %v171, %v172
  %572 = vadd.xlane.f32.xlu0 %v571
  %v573 = vpop.xlane.xlu0 %572
  %v574 = vadd.f32 %v173, %v174
  %575 = vadd.xlane.f32.xlu0 %v574
  %v576 = vpop.xlane.xlu0 %575
  %v577 = vadd.f32 %v175, %v176
  %578 = vadd.xlane.f32.xlu0 %v577
  %v579 = vpop.xlane.xlu0 %578
  %v580 = vadd.f32 %v177, %v178
  %581 = vadd.xlane.f32.xlu0 %v580
  %v582 = vpop.xlane.xlu0 %581
  %v583 = vadd.f32 %v179, %v180
  %584 = vadd.xlane.f32.xlu0 %v583
  %v585 = vpop.xlane.xlu0 %584
  %v586 = vadd.f32 %v181, %v182
  %587 = vadd.xlane.f32.xlu0 %v586
  %v588 = vpop.xlane.xlu0 %587
  %v589 = vadd.f32 %v183, %v184
  %590 = vadd.xlane.f32.xlu0 %v589
  %v591 = vpop.xlane.xlu0 %590
  %v592 = vadd.f32 %v185, %v186
  %593 = vadd.xlane.f32.xlu0 %v592
  %v594 = vpop.xlane.xlu0 %593
  %v595 = vadd.f32 %v187, %v188
  %596 = vadd.xlane.f32.xlu0 %v595
  %v597 = vpop.xlane.xlu0 %596
  %v598 = vadd.f32 %v189, %v190
  %599 = vadd.xlane.f32.xlu0 %v598
  %v600 = vpop.xlane.xlu0 %599
  %v601 = vadd.f32 %v191, %v192
  %602 = vadd.xlane.f32.xlu0 %v601
  %v603 = vpop.xlane.xlu0 %602
  %v604 = vadd.f32 %v193, %v194
  %605 = vadd.xlane.f32.xlu0 %v604
  %v606 = vpop.xlane.xlu0 %605
  %v607 = vadd.f32 %v195, %v196
  %608 = vadd.xlane.f32.xlu0 %v607
  %v609 = vpop.xlane.xlu0 %608
  %v610 = vadd.f32 %v197, %v198
  %611 = vadd.xlane.f32.xlu0 %v610
  %v612 = vpop.xlane.xlu0 %611
  %v613 = vadd.f32 %v199, %v200
  %614 = vadd.xlane.f32.xlu0 %v613
  %v615 = vpop.xlane.xlu0 %614
  %v616 = vadd.f32 %v201, %v202
  %617 = vadd.xlane.f32.xlu0 %v616
  %v618 = vpop.xlane.xlu0 %617
  %v619 = vadd.f32 %v203, %v204
  %620 = vadd.xlane.f32.xlu0 %v619
  %v621 = vpop.xlane.xlu0 %620
  %v622 = vadd.f32 %v205, %v206
  %623 = vadd.xlane.f32.xlu0 %v622
  %v624 = vpop.xlane.xlu0 %623
  %v625 = vadd.f32 %v207, %v208
  %626 = vadd.xlane.f32.xlu0 %v625
  %v627 = vpop.xlane.xlu0 %626
  %v628 = vadd.f32 %v209, %v210
  %629 = vadd.xlane.f32.xlu0 %v628
  %v630 = vpop.xlane.xlu0 %629
  %v631 = vadd.f32 %v211, %v212
  %632 = vadd.xlane.f32.xlu0 %v631
  %v633 = vpop.xlane.xlu0 %632
  %v634 = vadd.f32 %v213, %v214
  %635 = vadd.xlane.f32.xlu0 %v634
  %v636 = vpop.xlane.xlu0 %635
  %v637 = vadd.f32 %v215, %v216
  %638 = vadd.xlane.f32.xlu0 %v637
  %v639 = vpop.xlane.xlu0 %638
  %v640 = vadd.f32 %v217, %v218
  %641 = vadd.xlane.f32.xlu0 %v640
  %v642 = vpop.xlane.xlu0 %641
  %v643 = vadd.f32 %v219, %v220
  %644 = vadd.xlane.f32.xlu0 %v643
  %v645 = vpop.xlane.xlu0 %644
  %v646 = vadd.f32 %v221, %v222
  %647 = vadd.xlane.f32.xlu0 %v646
  %v648 = vpop.xlane.xlu0 %647
  %v649 = vadd.f32 %v223, %v224
  %650 = vadd.xlane.f32.xlu0 %v649
  %v651 = vpop.xlane.xlu0 %650
  %v652 = vadd.f32 %v225, %v226
  %653 = vadd.xlane.f32.xlu0 %v652
  %v654 = vpop.xlane.xlu0 %653
  %v655 = vadd.f32 %v227, %v228
  %656 = vadd.xlane.f32.xlu0 %v655
  %v657 = vpop.xlane.xlu0 %656
  %v658 = vadd.f32 %v229, %v230
  %659 = vadd.xlane.f32.xlu0 %v658
  %v660 = vpop.xlane.xlu0 %659
  %v661 = vadd.f32 %v231, %v232
  %662 = vadd.xlane.f32.xlu0 %v661
  %v663 = vpop.xlane.xlu0 %662
  %v664 = vadd.f32 %v233, %v234
  %665 = vadd.xlane.f32.xlu0 %v664
  %v666 = vpop.xlane.xlu0 %665
  %v667 = vadd.f32 %v235, %v236
  %668 = vadd.xlane.f32.xlu0 %v667
  %v669 = vpop.xlane.xlu0 %668
  %v670 = vadd.f32 %v237, %v238
  %671 = vadd.xlane.f32.xlu0 %v670
  %v672 = vpop.xlane.xlu0 %671
  %v673 = vadd.f32 %v239, %v240
  %674 = vadd.xlane.f32.xlu0 %v673
  %v675 = vpop.xlane.xlu0 %674
  %v676 = vadd.f32 %v241, %v242
  %677 = vadd.xlane.f32.xlu0 %v676
  %v678 = vpop.xlane.xlu0 %677
  %v679 = vadd.f32 %v243, %v244
  %680 = vadd.xlane.f32.xlu0 %v679
  %v681 = vpop.xlane.xlu0 %680
  %v682 = vadd.f32 %v245, %v246
  %683 = vadd.xlane.f32.xlu0 %v682
  %v684 = vpop.xlane.xlu0 %683
  %v685 = vadd.f32 %v247, %v248
  %686 = vadd.xlane.f32.xlu0 %v685
  %v687 = vpop.xlane.xlu0 %686
  %v688 = vadd.f32 %v249, %v250
  %689 = vadd.xlane.f32.xlu0 %v688
  %v690 = vpop.xlane.xlu0 %689
  %v691 = vadd.f32 %v251, %v252
  %692 = vadd.xlane.f32.xlu0 %v691
  %v693 = vpop.xlane.xlu0 %692
  %v694 = vadd.f32 %v253, %v254
  %695 = vadd.xlane.f32.xlu0 %v694
  %v696 = vpop.xlane.xlu0 %695
  %v697 = vadd.f32 %v255, %v256
  %698 = vadd.xlane.f32.xlu0 %v697
  %v699 = vpop.xlane.xlu0 %698
  %v700 = vadd.f32 %v257, %v258
  %701 = vadd.xlane.f32.xlu0 %v700
  %v702 = vpop.xlane.xlu0 %701
  %v703 = vadd.f32 %v259, %v260
  %704 = vadd.xlane.f32.xlu0 %v703
  %v705 = vpop.xlane.xlu0 %704
  %v706 = vadd.f32 %v261, %v262
  %707 = vadd.xlane.f32.xlu0 %v706
  %v708 = vpop.xlane.xlu0 %707
  %v709 = vadd.f32 %v263, %v264
  %710 = vadd.xlane.f32.xlu0 %v709
  %v711 = vpop.xlane.xlu0 %710
  %v712 = vadd.f32 %v265, %v266
  %713 = vadd.xlane.f32.xlu0 %v712
  %v714 = vpop.xlane.xlu0 %713
  %v715 = vadd.f32 %v267, %v268
  %716 = vadd.xlane.f32.xlu0 %v715
  %v717 = vpop.xlane.xlu0 %716
  %v718 = vmul.f32 %v528, %v461
  %v719 = vmul.f32 %v531, %v461
  %v720 = vmul.f32 %v534, %v461
  %v721 = vmul.f32 %v537, %v461
  %v722 = vmul.f32 %v540, %v461
  %v723 = vmul.f32 %v543, %v461
  %v724 = vmul.f32 %v546, %v461
  %v725 = vmul.f32 %v549, %v461
  %v726 = vmul.f32 %v552, %v461
  %v727 = vmul.f32 %v555, %v461
  %v728 = vmul.f32 %v558, %v461
  %v729 = vmul.f32 %v561, %v461
  %v730 = vmul.f32 %v564, %v461
  %v731 = vmul.f32 %v567, %v461
  %v732 = vmul.f32 %v570, %v461
  %v733 = vmul.f32 %v573, %v461
  %v734 = vmul.f32 %v576, %v461
  %v735 = vmul.f32 %v579, %v461
  %v736 = vmul.f32 %v582, %v461
  %v737 = vmul.f32 %v585, %v461
  %v738 = vmul.f32 %v588, %v461
  %v739 = vmul.f32 %v591, %v461
  %v740 = vmul.f32 %v594, %v461
  %v741 = vmul.f32 %v597, %v461
  %v742 = vmul.f32 %v600, %v461
  %v743 = vmul.f32 %v603, %v461
  %v744 = vmul.f32 %v606, %v461
  %v745 = vmul.f32 %v609, %v461
  %v746 = vmul.f32 %v612, %v461
  %v747 = vmul.f32 %v615, %v461
  %v748 = vmul.f32 %v618, %v461
  %v749 = vmul.f32 %v621, %v461
  %v750 = vmul.f32 %v624, %v461
  %v751 = vmul.f32 %v627, %v461
  %v752 = vmul.f32 %v630, %v461
  %v753 = vmul.f32 %v633, %v461
  %v754 = vmul.f32 %v636, %v461
  %v755 = vmul.f32 %v639, %v461
  %v756 = vmul.f32 %v642, %v461
  %v757 = vmul.f32 %v645, %v461
  %v758 = vmul.f32 %v648, %v461
  %v759 = vmul.f32 %v651, %v461
  %v760 = vmul.f32 %v654, %v461
  %v761 = vmul.f32 %v657, %v461
  %v762 = vmul.f32 %v660, %v461
  %v763 = vmul.f32 %v663, %v461
  %v764 = vmul.f32 %v666, %v461
  %v765 = vmul.f32 %v669, %v461
  %v766 = vmul.f32 %v672, %v461
  %v767 = vmul.f32 %v675, %v461
  %v768 = vmul.f32 %v678, %v461
  %v769 = vmul.f32 %v681, %v461
  %v770 = vmul.f32 %v684, %v461
  %v771 = vmul.f32 %v687, %v461
  %v772 = vmul.f32 %v690, %v461
  %v773 = vmul.f32 %v693, %v461
  %v774 = vmul.f32 %v696, %v461
  %v775 = vmul.f32 %v699, %v461
  %v776 = vmul.f32 %v702, %v461
  %v777 = vmul.f32 %v705, %v461
  %v778 = vmul.f32 %v708, %v461
  %v779 = vmul.f32 %v711, %v461
  %v780 = vmul.f32 %v714, %v461
  %v781 = vmul.f32 %v717, %v461
  %v782 = vadd.f32 %v462, %v718
  %v783 = vadd.f32 %v463, %v719
  %v784 = vadd.f32 %v464, %v720
  %v785 = vadd.f32 %v465, %v721
  %v786 = vadd.f32 %v466, %v722
  %v787 = vadd.f32 %v467, %v723
  %v788 = vadd.f32 %v468, %v724
  %v789 = vadd.f32 %v469, %v725
  %v790 = vadd.f32 %v470, %v726
  %v791 = vadd.f32 %v471, %v727
  %v792 = vadd.f32 %v472, %v728
  %v793 = vadd.f32 %v473, %v729
  %v794 = vadd.f32 %v474, %v730
  %v795 = vadd.f32 %v475, %v731
  %v796 = vadd.f32 %v476, %v732
  %v797 = vadd.f32 %v477, %v733
  %v798 = vadd.f32 %v478, %v734
  %v799 = vadd.f32 %v479, %v735
  %v800 = vadd.f32 %v480, %v736
  %v801 = vadd.f32 %v481, %v737
  %v802 = vadd.f32 %v482, %v738
  %v803 = vadd.f32 %v483, %v739
  %v804 = vadd.f32 %v484, %v740
  %v805 = vadd.f32 %v485, %v741
  %v806 = vadd.f32 %v486, %v742
  %v807 = vadd.f32 %v487, %v743
  %v808 = vadd.f32 %v488, %v744
  %v809 = vadd.f32 %v489, %v745
  %v810 = vadd.f32 %v490, %v746
  %v811 = vadd.f32 %v491, %v747
  %v812 = vadd.f32 %v492, %v748
  %v813 = vadd.f32 %v493, %v749
  %v814 = vadd.f32 %v494, %v750
  %v815 = vadd.f32 %v495, %v751
  %v816 = vadd.f32 %v496, %v752
  %v817 = vadd.f32 %v497, %v753
  %v818 = vadd.f32 %v498, %v754
  %v819 = vadd.f32 %v499, %v755
  %v820 = vadd.f32 %v500, %v756
  %v821 = vadd.f32 %v501, %v757
  %v822 = vadd.f32 %v502, %v758
  %v823 = vadd.f32 %v503, %v759
  %v824 = vadd.f32 %v504, %v760
  %v825 = vadd.f32 %v505, %v761
  %v826 = vadd.f32 %v506, %v762
  %v827 = vadd.f32 %v507, %v763
  %v828 = vadd.f32 %v508, %v764
  %v829 = vadd.f32 %v509, %v765
  %v830 = vadd.f32 %v510, %v766
  %v831 = vadd.f32 %v511, %v767
  %v832 = vadd.f32 %v512, %v768
  %v833 = vadd.f32 %v513, %v769
  %v834 = vadd.f32 %v514, %v770
  %v835 = vadd.f32 %v515, %v771
  %v836 = vadd.f32 %v516, %v772
  %v837 = vadd.f32 %v517, %v773
  %v838 = vadd.f32 %v518, %v774
  %v839 = vadd.f32 %v519, %v775
  %v840 = vadd.f32 %v520, %v776
  %v841 = vadd.f32 %v521, %v777
  %v842 = vadd.f32 %v522, %v778
  %v843 = vadd.f32 %v523, %v779
  %v844 = vadd.f32 %v524, %v780
  %v845 = vadd.f32 %v525, %v781
  %v846 = vmul.f32 %v782, 0.5
  %v847 = vmul.f32 %v783, 0.5
  %v848 = vmul.f32 %v784, 0.5
  %v849 = vmul.f32 %v785, 0.5
  %v850 = vmul.f32 %v786, 0.5
  %v851 = vmul.f32 %v787, 0.5
  %v852 = vmul.f32 %v788, 0.5
  %v853 = vmul.f32 %v789, 0.5
  %v854 = vmul.f32 %v790, 0.5
  %v855 = vmul.f32 %v791, 0.5
  %v856 = vmul.f32 %v792, 0.5
  %v857 = vmul.f32 %v793, 0.5
  %v858 = vmul.f32 %v794, 0.5
  %v859 = vmul.f32 %v795, 0.5
  %v860 = vmul.f32 %v796, 0.5
  %v861 = vmul.f32 %v797, 0.5
  %v862 = vmul.f32 %v798, 0.5
  %v863 = vmul.f32 %v799, 0.5
  %v864 = vmul.f32 %v800, 0.5
  %v865 = vmul.f32 %v801, 0.5
  %v866 = vmul.f32 %v802, 0.5
  %v867 = vmul.f32 %v803, 0.5
  %v868 = vmul.f32 %v804, 0.5
  %v869 = vmul.f32 %v805, 0.5
  %v870 = vmul.f32 %v806, 0.5
  %v871 = vmul.f32 %v807, 0.5
  %v872 = vmul.f32 %v808, 0.5
  %v873 = vmul.f32 %v809, 0.5
  %v874 = vmul.f32 %v810, 0.5
  %v875 = vmul.f32 %v811, 0.5
  %v876 = vmul.f32 %v812, 0.5
  %v877 = vmul.f32 %v813, 0.5
  %v878 = vmul.f32 %v814, 0.5
  %v879 = vmul.f32 %v815, 0.5
  %v880 = vmul.f32 %v816, 0.5
  %v881 = vmul.f32 %v817, 0.5
  %v882 = vmul.f32 %v818, 0.5
  %v883 = vmul.f32 %v819, 0.5
  %v884 = vmul.f32 %v820, 0.5
  %v885 = vmul.f32 %v821, 0.5
  %v886 = vmul.f32 %v822, 0.5
  %v887 = vmul.f32 %v823, 0.5
  %v888 = vmul.f32 %v824, 0.5
  %v889 = vmul.f32 %v825, 0.5
  %v890 = vmul.f32 %v826, 0.5
  %v891 = vmul.f32 %v827, 0.5
  %v892 = vmul.f32 %v828, 0.5
  %v893 = vmul.f32 %v829, 0.5
  %v894 = vmul.f32 %v830, 0.5
  %v895 = vmul.f32 %v831, 0.5
  %v896 = vmul.f32 %v832, 0.5
  %v897 = vmul.f32 %v833, 0.5
  %v898 = vmul.f32 %v834, 0.5
  %v899 = vmul.f32 %v835, 0.5
  %v900 = vmul.f32 %v836, 0.5
  %v901 = vmul.f32 %v837, 0.5
  %v902 = vmul.f32 %v838, 0.5
  %v903 = vmul.f32 %v839, 0.5
  %v904 = vmul.f32 %v840, 0.5
  %v905 = vmul.f32 %v841, 0.5
  %v906 = vmul.f32 %v842, 0.5
  %v907 = vmul.f32 %v843, 0.5
  %v908 = vmul.f32 %v844, 0.5
  %v909 = vmul.f32 %v845, 0.5
  %vm910 = vcmask 7168
  %911 = vst.msk [vmem:[%s2] sm:$0xff] %vm910, %v846
  %912 = vst.msk [vmem:[%s2 + $0x8] sm:$0xff] %vm910, %v847
  %913 = vst.msk [vmem:[%s2 + $0x10] sm:$0xff] %vm910, %v848
  %914 = vst.msk [vmem:[%s2 + $0x18] sm:$0xff] %vm910, %v849
  %915 = vst.msk [vmem:[%s2 + $0x20] sm:$0xff] %vm910, %v850
  %916 = vst.msk [vmem:[%s2 + $0x28] sm:$0xff] %vm910, %v851
  %917 = vst.msk [vmem:[%s2 + $0x30] sm:$0xff] %vm910, %v852
  %918 = vst.msk [vmem:[%s2 + $0x38] sm:$0xff] %vm910, %v853
  %919 = vst.msk [vmem:[%s2 + $0x40] sm:$0xff] %vm910, %v854
  %920 = vst.msk [vmem:[%s2 + $0x48] sm:$0xff] %vm910, %v855
  %921 = vst.msk [vmem:[%s2 + $0x50] sm:$0xff] %vm910, %v856
  %922 = vst.msk [vmem:[%s2 + $0x58] sm:$0xff] %vm910, %v857
  %923 = vst.msk [vmem:[%s2 + $0x60] sm:$0xff] %vm910, %v858
  %924 = vst.msk [vmem:[%s2 + $0x68] sm:$0xff] %vm910, %v859
  %925 = vst.msk [vmem:[%s2 + $0x70] sm:$0xff] %vm910, %v860
  %926 = vst.msk [vmem:[%s2 + $0x78] sm:$0xff] %vm910, %v861
  %927 = vst.msk [vmem:[%s2 + $0x80] sm:$0xff] %vm910, %v862
  %928 = vst.msk [vmem:[%s2 + $0x88] sm:$0xff] %vm910, %v863
  %929 = vst.msk [vmem:[%s2 + $0x90] sm:$0xff] %vm910, %v864
  %930 = vst.msk [vmem:[%s2 + $0x98] sm:$0xff] %vm910, %v865
  %931 = vst.msk [vmem:[%s2 + $0xa0] sm:$0xff] %vm910, %v866
  %932 = vst.msk [vmem:[%s2 + $0xa8] sm:$0xff] %vm910, %v867
  %933 = vst.msk [vmem:[%s2 + $0xb0] sm:$0xff] %vm910, %v868
  %934 = vst.msk [vmem:[%s2 + $0xb8] sm:$0xff] %vm910, %v869
  %935 = vst.msk [vmem:[%s2 + $0xc0] sm:$0xff] %vm910, %v870
  %936 = vst.msk [vmem:[%s2 + $0xc8] sm:$0xff] %vm910, %v871
  %937 = vst.msk [vmem:[%s2 + $0xd0] sm:$0xff] %vm910, %v872
  %938 = vst.msk [vmem:[%s2 + $0xd8] sm:$0xff] %vm910, %v873
  %939 = vst.msk [vmem:[%s2 + $0xe0] sm:$0xff] %vm910, %v874
  %940 = vst.msk [vmem:[%s2 + $0xe8] sm:$0xff] %vm910, %v875
  %941 = vst.msk [vmem:[%s2 + $0xf0] sm:$0xff] %vm910, %v876
  %942 = vst.msk [vmem:[%s2 + $0xf8] sm:$0xff] %vm910, %v877
  %943 = vst.msk [vmem:[%s2 + $0x100] sm:$0xff] %vm910, %v878
  %944 = vst.msk [vmem:[%s2 + $0x108] sm:$0xff] %vm910, %v879
  %945 = vst.msk [vmem:[%s2 + $0x110] sm:$0xff] %vm910, %v880
  %946 = vst.msk [vmem:[%s2 + $0x118] sm:$0xff] %vm910, %v881
  %947 = vst.msk [vmem:[%s2 + $0x120] sm:$0xff] %vm910, %v882
  %948 = vst.msk [vmem:[%s2 + $0x128] sm:$0xff] %vm910, %v883
  %949 = vst.msk [vmem:[%s2 + $0x130] sm:$0xff] %vm910, %v884
  %950 = vst.msk [vmem:[%s2 + $0x138] sm:$0xff] %vm910, %v885
  %951 = vst.msk [vmem:[%s2 + $0x140] sm:$0xff] %vm910, %v886
  %952 = vst.msk [vmem:[%s2 + $0x148] sm:$0xff] %vm910, %v887
  %953 = vst.msk [vmem:[%s2 + $0x150] sm:$0xff] %vm910, %v888
  %954 = vst.msk [vmem:[%s2 + $0x158] sm:$0xff] %vm910, %v889
  %955 = vst.msk [vmem:[%s2 + $0x160] sm:$0xff] %vm910, %v890
  %956 = vst.msk [vmem:[%s2 + $0x168] sm:$0xff] %vm910, %v891
  %957 = vst.msk [vmem:[%s2 + $0x170] sm:$0xff] %vm910, %v892
  %958 = vst.msk [vmem:[%s2 + $0x178] sm:$0xff] %vm910, %v893
  %959 = vst.msk [vmem:[%s2 + $0x180] sm:$0xff] %vm910, %v894
  %960 = vst.msk [vmem:[%s2 + $0x188] sm:$0xff] %vm910, %v895
  %961 = vst.msk [vmem:[%s2 + $0x190] sm:$0xff] %vm910, %v896
  %962 = vst.msk [vmem:[%s2 + $0x198] sm:$0xff] %vm910, %v897
  %963 = vst.msk [vmem:[%s2 + $0x1a0] sm:$0xff] %vm910, %v898
  %964 = vst.msk [vmem:[%s2 + $0x1a8] sm:$0xff] %vm910, %v899
  %965 = vst.msk [vmem:[%s2 + $0x1b0] sm:$0xff] %vm910, %v900
  %966 = vst.msk [vmem:[%s2 + $0x1b8] sm:$0xff] %vm910, %v901
  %967 = vst.msk [vmem:[%s2 + $0x1c0] sm:$0xff] %vm910, %v902
  %968 = vst.msk [vmem:[%s2 + $0x1c8] sm:$0xff] %vm910, %v903
  %969 = vst.msk [vmem:[%s2 + $0x1d0] sm:$0xff] %vm910, %v904
  %970 = vst.msk [vmem:[%s2 + $0x1d8] sm:$0xff] %vm910, %v905
  %971 = vst.msk [vmem:[%s2 + $0x1e0] sm:$0xff] %vm910, %v906
  %972 = vst.msk [vmem:[%s2 + $0x1e8] sm:$0xff] %vm910, %v907
  %973 = vst.msk [vmem:[%s2 + $0x1f0] sm:$0xff] %vm910, %v908
  %974 = vst.msk [vmem:[%s2 + $0x1f8] sm:$0xff] %vm910, %v909
  %v975 = vmax.f32 %v13, %v14
  %976 = vmax.xlane.f32.xlu0 %v975
  %v977 = vpop.xlane.xlu0 %976
  %v978 = vmax.f32 %v15, %v16
  %979 = vmax.xlane.f32.xlu0 %v978
  %v980 = vpop.xlane.xlu0 %979
  %v981 = vmax.f32 %v17, %v18
  %982 = vmax.xlane.f32.xlu0 %v981
  %v983 = vpop.xlane.xlu0 %982
  %v984 = vmax.f32 %v19, %v20
  %985 = vmax.xlane.f32.xlu0 %v984
  %v986 = vpop.xlane.xlu0 %985
  %v987 = vmax.f32 %v21, %v22
  %988 = vmax.xlane.f32.xlu0 %v987
  %v989 = vpop.xlane.xlu0 %988
  %v990 = vmax.f32 %v23, %v24
  %991 = vmax.xlane.f32.xlu0 %v990
  %v992 = vpop.xlane.xlu0 %991
  %v993 = vmax.f32 %v25, %v26
  %994 = vmax.xlane.f32.xlu0 %v993
  %v995 = vpop.xlane.xlu0 %994
  %v996 = vmax.f32 %v27, %v28
  %997 = vmax.xlane.f32.xlu0 %v996
  %v998 = vpop.xlane.xlu0 %997
  %v999 = vmax.f32 %v29, %v30
  %1000 = vmax.xlane.f32.xlu0 %v999
  %v1001 = vpop.xlane.xlu0 %1000
  %v1002 = vmax.f32 %v31, %v32
  %1003 = vmax.xlane.f32.xlu0 %v1002
  %v1004 = vpop.xlane.xlu0 %1003
  %v1005 = vmax.f32 %v33, %v34
  %1006 = vmax.xlane.f32.xlu0 %v1005
  %v1007 = vpop.xlane.xlu0 %1006
  %v1008 = vmax.f32 %v35, %v36
  %1009 = vmax.xlane.f32.xlu0 %v1008
  %v1010 = vpop.xlane.xlu0 %1009
  %v1011 = vmax.f32 %v37, %v38
  %1012 = vmax.xlane.f32.xlu0 %v1011
  %v1013 = vpop.xlane.xlu0 %1012
  %v1014 = vmax.f32 %v39, %v40
  %1015 = vmax.xlane.f32.xlu0 %v1014
  %v1016 = vpop.xlane.xlu0 %1015
  %v1017 = vmax.f32 %v41, %v42
  %1018 = vmax.xlane.f32.xlu0 %v1017
  %v1019 = vpop.xlane.xlu0 %1018
  %v1020 = vmax.f32 %v43, %v44
  %1021 = vmax.xlane.f32.xlu0 %v1020
  %v1022 = vpop.xlane.xlu0 %1021
  %v1023 = vmax.f32 %v45, %v46
  %1024 = vmax.xlane.f32.xlu0 %v1023
  %v1025 = vpop.xlane.xlu0 %1024
  %v1026 = vmax.f32 %v47, %v48
  %1027 = vmax.xlane.f32.xlu0 %v1026
  %v1028 = vpop.xlane.xlu0 %1027
  %v1029 = vmax.f32 %v49, %v50
  %1030 = vmax.xlane.f32.xlu0 %v1029
  %v1031 = vpop.xlane.xlu0 %1030
  %v1032 = vmax.f32 %v51, %v52
  %1033 = vmax.xlane.f32.xlu0 %v1032
  %v1034 = vpop.xlane.xlu0 %1033
  %v1035 = vmax.f32 %v53, %v54
  %1036 = vmax.xlane.f32.xlu0 %v1035
  %v1037 = vpop.xlane.xlu0 %1036
  %v1038 = vmax.f32 %v55, %v56
  %1039 = vmax.xlane.f32.xlu0 %v1038
  %v1040 = vpop.xlane.xlu0 %1039
  %v1041 = vmax.f32 %v57, %v58
  %1042 = vmax.xlane.f32.xlu0 %v1041
  %v1043 = vpop.xlane.xlu0 %1042
  %v1044 = vmax.f32 %v59, %v60
  %1045 = vmax.xlane.f32.xlu0 %v1044
  %v1046 = vpop.xlane.xlu0 %1045
  %v1047 = vmax.f32 %v61, %v62
  %1048 = vmax.xlane.f32.xlu0 %v1047
  %v1049 = vpop.xlane.xlu0 %1048
  %v1050 = vmax.f32 %v63, %v64
  %1051 = vmax.xlane.f32.xlu0 %v1050
  %v1052 = vpop.xlane.xlu0 %1051
  %v1053 = vmax.f32 %v65, %v66
  %1054 = vmax.xlane.f32.xlu0 %v1053
  %v1055 = vpop.xlane.xlu0 %1054
  %v1056 = vmax.f32 %v67, %v68
  %1057 = vmax.xlane.f32.xlu0 %v1056
  %v1058 = vpop.xlane.xlu0 %1057
  %v1059 = vmax.f32 %v69, %v70
  %1060 = vmax.xlane.f32.xlu0 %v1059
  %v1061 = vpop.xlane.xlu0 %1060
  %v1062 = vmax.f32 %v71, %v72
  %1063 = vmax.xlane.f32.xlu0 %v1062
  %v1064 = vpop.xlane.xlu0 %1063
  %v1065 = vmax.f32 %v73, %v74
  %1066 = vmax.xlane.f32.xlu0 %v1065
  %v1067 = vpop.xlane.xlu0 %1066
  %v1068 = vmax.f32 %v75, %v76
  %1069 = vmax.xlane.f32.xlu0 %v1068
  %v1070 = vpop.xlane.xlu0 %1069
  %v1071 = vmax.f32 %v77, %v78
  %1072 = vmax.xlane.f32.xlu0 %v1071
  %v1073 = vpop.xlane.xlu0 %1072
  %v1074 = vmax.f32 %v79, %v80
  %1075 = vmax.xlane.f32.xlu0 %v1074
  %v1076 = vpop.xlane.xlu0 %1075
  %v1077 = vmax.f32 %v81, %v82
  %1078 = vmax.xlane.f32.xlu0 %v1077
  %v1079 = vpop.xlane.xlu0 %1078
  %v1080 = vmax.f32 %v83, %v84
  %1081 = vmax.xlane.f32.xlu0 %v1080
  %v1082 = vpop.xlane.xlu0 %1081
  %v1083 = vmax.f32 %v85, %v86
  %1084 = vmax.xlane.f32.xlu0 %v1083
  %v1085 = vpop.xlane.xlu0 %1084
  %v1086 = vmax.f32 %v87, %v88
  %1087 = vmax.xlane.f32.xlu0 %v1086
  %v1088 = vpop.xlane.xlu0 %1087
  %v1089 = vmax.f32 %v89, %v90
  %1090 = vmax.xlane.f32.xlu0 %v1089
  %v1091 = vpop.xlane.xlu0 %1090
  %v1092 = vmax.f32 %v91, %v92
  %1093 = vmax.xlane.f32.xlu0 %v1092
  %v1094 = vpop.xlane.xlu0 %1093
  %v1095 = vmax.f32 %v93, %v94
  %1096 = vmax.xlane.f32.xlu0 %v1095
  %v1097 = vpop.xlane.xlu0 %1096
  %v1098 = vmax.f32 %v95, %v96
  %1099 = vmax.xlane.f32.xlu0 %v1098
  %v1100 = vpop.xlane.xlu0 %1099
  %v1101 = vmax.f32 %v97, %v98
  %1102 = vmax.xlane.f32.xlu0 %v1101
  %v1103 = vpop.xlane.xlu0 %1102
  %v1104 = vmax.f32 %v99, %v100
  %1105 = vmax.xlane.f32.xlu0 %v1104
  %v1106 = vpop.xlane.xlu0 %1105
  %v1107 = vmax.f32 %v101, %v102
  %1108 = vmax.xlane.f32.xlu0 %v1107
  %v1109 = vpop.xlane.xlu0 %1108
  %v1110 = vmax.f32 %v103, %v104
  %1111 = vmax.xlane.f32.xlu0 %v1110
  %v1112 = vpop.xlane.xlu0 %1111
  %v1113 = vmax.f32 %v105, %v106
  %1114 = vmax.xlane.f32.xlu0 %v1113
  %v1115 = vpop.xlane.xlu0 %1114
  %v1116 = vmax.f32 %v107, %v108
  %1117 = vmax.xlane.f32.xlu0 %v1116
  %v1118 = vpop.xlane.xlu0 %1117
  %v1119 = vmax.f32 %v109, %v110
  %1120 = vmax.xlane.f32.xlu0 %v1119
  %v1121 = vpop.xlane.xlu0 %1120
  %v1122 = vmax.f32 %v111, %v112
  %1123 = vmax.xlane.f32.xlu0 %v1122
  %v1124 = vpop.xlane.xlu0 %1123
  %v1125 = vmax.f32 %v113, %v114
  %1126 = vmax.xlane.f32.xlu0 %v1125
  %v1127 = vpop.xlane.xlu0 %1126
  %v1128 = vmax.f32 %v115, %v116
  %1129 = vmax.xlane.f32.xlu0 %v1128
  %v1130 = vpop.xlane.xlu0 %1129
  %v1131 = vmax.f32 %v117, %v118
  %1132 = vmax.xlane.f32.xlu0 %v1131
  %v1133 = vpop.xlane.xlu0 %1132
  %v1134 = vmax.f32 %v119, %v120
  %1135 = vmax.xlane.f32.xlu0 %v1134
  %v1136 = vpop.xlane.xlu0 %1135
  %v1137 = vmax.f32 %v121, %v122
  %1138 = vmax.xlane.f32.xlu0 %v1137
  %v1139 = vpop.xlane.xlu0 %1138
  %v1140 = vmax.f32 %v123, %v124
  %1141 = vmax.xlane.f32.xlu0 %v1140
  %v1142 = vpop.xlane.xlu0 %1141
  %v1143 = vmax.f32 %v125, %v126
  %1144 = vmax.xlane.f32.xlu0 %v1143
  %v1145 = vpop.xlane.xlu0 %1144
  %v1146 = vmax.f32 %v127, %v128
  %1147 = vmax.xlane.f32.xlu0 %v1146
  %v1148 = vpop.xlane.xlu0 %1147
  %v1149 = vmax.f32 %v129, %v130
  %1150 = vmax.xlane.f32.xlu0 %v1149
  %v1151 = vpop.xlane.xlu0 %1150
  %v1152 = vmax.f32 %v131, %v132
  %1153 = vmax.xlane.f32.xlu0 %v1152
  %v1154 = vpop.xlane.xlu0 %1153
  %v1155 = vmax.f32 %v133, %v134
  %1156 = vmax.xlane.f32.xlu0 %v1155
  %v1157 = vpop.xlane.xlu0 %1156
  %v1158 = vmax.f32 %v135, %v136
  %1159 = vmax.xlane.f32.xlu0 %v1158
  %v1160 = vpop.xlane.xlu0 %1159
  %v1161 = vmax.f32 %v137, %v138
  %1162 = vmax.xlane.f32.xlu0 %v1161
  %v1163 = vpop.xlane.xlu0 %1162
  %v1164 = vmax.f32 %v139, %v140
  %1165 = vmax.xlane.f32.xlu0 %v1164
  %v1166 = vpop.xlane.xlu0 %1165
  %v1167 = vmax.f32 %v141, %v142
  %1168 = vmax.xlane.f32.xlu0 %v1167
  %v1169 = vpop.xlane.xlu0 %1168
  %v1170 = vmax.f32 %v143, %v144
  %1171 = vmax.xlane.f32.xlu0 %v1170
  %v1172 = vpop.xlane.xlu0 %1171
  %v1173 = vmax.f32 %v145, %v146
  %1174 = vmax.xlane.f32.xlu0 %v1173
  %v1175 = vpop.xlane.xlu0 %1174
  %v1176 = vmax.f32 %v147, %v148
  %1177 = vmax.xlane.f32.xlu0 %v1176
  %v1178 = vpop.xlane.xlu0 %1177
  %v1179 = vmax.f32 %v149, %v150
  %1180 = vmax.xlane.f32.xlu0 %v1179
  %v1181 = vpop.xlane.xlu0 %1180
  %v1182 = vmax.f32 %v151, %v152
  %1183 = vmax.xlane.f32.xlu0 %v1182
  %v1184 = vpop.xlane.xlu0 %1183
  %v1185 = vmax.f32 %v153, %v154
  %1186 = vmax.xlane.f32.xlu0 %v1185
  %v1187 = vpop.xlane.xlu0 %1186
  %v1188 = vmax.f32 %v155, %v156
  %1189 = vmax.xlane.f32.xlu0 %v1188
  %v1190 = vpop.xlane.xlu0 %1189
  %v1191 = vmax.f32 %v157, %v158
  %1192 = vmax.xlane.f32.xlu0 %v1191
  %v1193 = vpop.xlane.xlu0 %1192
  %v1194 = vmax.f32 %v159, %v160
  %1195 = vmax.xlane.f32.xlu0 %v1194
  %v1196 = vpop.xlane.xlu0 %1195
  %v1197 = vmax.f32 %v161, %v162
  %1198 = vmax.xlane.f32.xlu0 %v1197
  %v1199 = vpop.xlane.xlu0 %1198
  %v1200 = vmax.f32 %v163, %v164
  %1201 = vmax.xlane.f32.xlu0 %v1200
  %v1202 = vpop.xlane.xlu0 %1201
  %v1203 = vmax.f32 %v165, %v166
  %1204 = vmax.xlane.f32.xlu0 %v1203
  %v1205 = vpop.xlane.xlu0 %1204
  %v1206 = vmax.f32 %v167, %v168
  %1207 = vmax.xlane.f32.xlu0 %v1206
  %v1208 = vpop.xlane.xlu0 %1207
  %v1209 = vmax.f32 %v169, %v170
  %1210 = vmax.xlane.f32.xlu0 %v1209
  %v1211 = vpop.xlane.xlu0 %1210
  %v1212 = vmax.f32 %v171, %v172
  %1213 = vmax.xlane.f32.xlu0 %v1212
  %v1214 = vpop.xlane.xlu0 %1213
  %v1215 = vmax.f32 %v173, %v174
  %1216 = vmax.xlane.f32.xlu0 %v1215
  %v1217 = vpop.xlane.xlu0 %1216
  %v1218 = vmax.f32 %v175, %v176
  %1219 = vmax.xlane.f32.xlu0 %v1218
  %v1220 = vpop.xlane.xlu0 %1219
  %v1221 = vmax.f32 %v177, %v178
  %1222 = vmax.xlane.f32.xlu0 %v1221
  %v1223 = vpop.xlane.xlu0 %1222
  %v1224 = vmax.f32 %v179, %v180
  %1225 = vmax.xlane.f32.xlu0 %v1224
  %v1226 = vpop.xlane.xlu0 %1225
  %v1227 = vmax.f32 %v181, %v182
  %1228 = vmax.xlane.f32.xlu0 %v1227
  %v1229 = vpop.xlane.xlu0 %1228
  %v1230 = vmax.f32 %v183, %v184
  %1231 = vmax.xlane.f32.xlu0 %v1230
  %v1232 = vpop.xlane.xlu0 %1231
  %v1233 = vmax.f32 %v185, %v186
  %1234 = vmax.xlane.f32.xlu0 %v1233
  %v1235 = vpop.xlane.xlu0 %1234
  %v1236 = vmax.f32 %v187, %v188
  %1237 = vmax.xlane.f32.xlu0 %v1236
  %v1238 = vpop.xlane.xlu0 %1237
  %v1239 = vmax.f32 %v189, %v190
  %1240 = vmax.xlane.f32.xlu0 %v1239
  %v1241 = vpop.xlane.xlu0 %1240
  %v1242 = vmax.f32 %v191, %v192
  %1243 = vmax.xlane.f32.xlu0 %v1242
  %v1244 = vpop.xlane.xlu0 %1243
  %v1245 = vmax.f32 %v193, %v194
  %1246 = vmax.xlane.f32.xlu0 %v1245
  %v1247 = vpop.xlane.xlu0 %1246
  %v1248 = vmax.f32 %v195, %v196
  %1249 = vmax.xlane.f32.xlu0 %v1248
  %v1250 = vpop.xlane.xlu0 %1249
  %v1251 = vmax.f32 %v197, %v198
  %1252 = vmax.xlane.f32.xlu0 %v1251
  %v1253 = vpop.xlane.xlu0 %1252
  %v1254 = vmax.f32 %v199, %v200
  %1255 = vmax.xlane.f32.xlu0 %v1254
  %v1256 = vpop.xlane.xlu0 %1255
  %v1257 = vmax.f32 %v201, %v202
  %1258 = vmax.xlane.f32.xlu0 %v1257
  %v1259 = vpop.xlane.xlu0 %1258
  %v1260 = vmax.f32 %v203, %v204
  %1261 = vmax.xlane.f32.xlu0 %v1260
  %v1262 = vpop.xlane.xlu0 %1261
  %v1263 = vmax.f32 %v205, %v206
  %1264 = vmax.xlane.f32.xlu0 %v1263
  %v1265 = vpop.xlane.xlu0 %1264
  %v1266 = vmax.f32 %v207, %v208
  %1267 = vmax.xlane.f32.xlu0 %v1266
  %v1268 = vpop.xlane.xlu0 %1267
  %v1269 = vmax.f32 %v209, %v210
  %1270 = vmax.xlane.f32.xlu0 %v1269
  %v1271 = vpop.xlane.xlu0 %1270
  %v1272 = vmax.f32 %v211, %v212
  %1273 = vmax.xlane.f32.xlu0 %v1272
  %v1274 = vpop.xlane.xlu0 %1273
  %v1275 = vmax.f32 %v213, %v214
  %1276 = vmax.xlane.f32.xlu0 %v1275
  %v1277 = vpop.xlane.xlu0 %1276
  %v1278 = vmax.f32 %v215, %v216
  %1279 = vmax.xlane.f32.xlu0 %v1278
  %v1280 = vpop.xlane.xlu0 %1279
  %v1281 = vmax.f32 %v217, %v218
  %1282 = vmax.xlane.f32.xlu0 %v1281
  %v1283 = vpop.xlane.xlu0 %1282
  %v1284 = vmax.f32 %v219, %v220
  %1285 = vmax.xlane.f32.xlu0 %v1284
  %v1286 = vpop.xlane.xlu0 %1285
  %v1287 = vmax.f32 %v221, %v222
  %1288 = vmax.xlane.f32.xlu0 %v1287
  %v1289 = vpop.xlane.xlu0 %1288
  %v1290 = vmax.f32 %v223, %v224
  %1291 = vmax.xlane.f32.xlu0 %v1290
  %v1292 = vpop.xlane.xlu0 %1291
  %v1293 = vmax.f32 %v225, %v226
  %1294 = vmax.xlane.f32.xlu0 %v1293
  %v1295 = vpop.xlane.xlu0 %1294
  %v1296 = vmax.f32 %v227, %v228
  %1297 = vmax.xlane.f32.xlu0 %v1296
  %v1298 = vpop.xlane.xlu0 %1297
  %v1299 = vmax.f32 %v229, %v230
  %1300 = vmax.xlane.f32.xlu0 %v1299
  %v1301 = vpop.xlane.xlu0 %1300
  %v1302 = vmax.f32 %v231, %v232
  %1303 = vmax.xlane.f32.xlu0 %v1302
  %v1304 = vpop.xlane.xlu0 %1303
  %v1305 = vmax.f32 %v233, %v234
  %1306 = vmax.xlane.f32.xlu0 %v1305
  %v1307 = vpop.xlane.xlu0 %1306
  %v1308 = vmax.f32 %v235, %v236
  %1309 = vmax.xlane.f32.xlu0 %v1308
  %v1310 = vpop.xlane.xlu0 %1309
  %v1311 = vmax.f32 %v237, %v238
  %1312 = vmax.xlane.f32.xlu0 %v1311
  %v1313 = vpop.xlane.xlu0 %1312
  %v1314 = vmax.f32 %v239, %v240
  %1315 = vmax.xlane.f32.xlu0 %v1314
  %v1316 = vpop.xlane.xlu0 %1315
  %v1317 = vmax.f32 %v241, %v242
  %1318 = vmax.xlane.f32.xlu0 %v1317
  %v1319 = vpop.xlane.xlu0 %1318
  %v1320 = vmax.f32 %v243, %v244
  %1321 = vmax.xlane.f32.xlu0 %v1320
  %v1322 = vpop.xlane.xlu0 %1321
  %v1323 = vmax.f32 %v245, %v246
  %1324 = vmax.xlane.f32.xlu0 %v1323
  %v1325 = vpop.xlane.xlu0 %1324
  %v1326 = vmax.f32 %v247, %v248
  %1327 = vmax.xlane.f32.xlu0 %v1326
  %v1328 = vpop.xlane.xlu0 %1327
  %v1329 = vmax.f32 %v249, %v250
  %1330 = vmax.xlane.f32.xlu0 %v1329
  %v1331 = vpop.xlane.xlu0 %1330
  %v1332 = vmax.f32 %v251, %v252
  %1333 = vmax.xlane.f32.xlu0 %v1332
  %v1334 = vpop.xlane.xlu0 %1333
  %v1335 = vmax.f32 %v253, %v254
  %1336 = vmax.xlane.f32.xlu0 %v1335
  %v1337 = vpop.xlane.xlu0 %1336
  %v1338 = vmax.f32 %v255, %v256
  %1339 = vmax.xlane.f32.xlu0 %v1338
  %v1340 = vpop.xlane.xlu0 %1339
  %v1341 = vmax.f32 %v257, %v258
  %1342 = vmax.xlane.f32.xlu0 %v1341
  %v1343 = vpop.xlane.xlu0 %1342
  %v1344 = vmax.f32 %v259, %v260
  %1345 = vmax.xlane.f32.xlu0 %v1344
  %v1346 = vpop.xlane.xlu0 %1345
  %v1347 = vmax.f32 %v261, %v262
  %1348 = vmax.xlane.f32.xlu0 %v1347
  %v1349 = vpop.xlane.xlu0 %1348
  %v1350 = vmax.f32 %v263, %v264
  %1351 = vmax.xlane.f32.xlu0 %v1350
  %v1352 = vpop.xlane.xlu0 %1351
  %v1353 = vmax.f32 %v265, %v266
  %1354 = vmax.xlane.f32.xlu0 %v1353
  %v1355 = vpop.xlane.xlu0 %1354
  %v1356 = vmax.f32 %v267, %v268
  %1357 = vmax.xlane.f32.xlu0 %v1356
  %v1358 = vpop.xlane.xlu0 %1357
  %v1359 = vmax.f32 %v977, %v1169
  %v1360 = vmax.f32 %v980, %v1172
  %v1361 = vmax.f32 %v983, %v1175
  %v1362 = vmax.f32 %v986, %v1178
  %v1363 = vmax.f32 %v989, %v1181
  %v1364 = vmax.f32 %v992, %v1184
  %v1365 = vmax.f32 %v995, %v1187
  %v1366 = vmax.f32 %v998, %v1190
  %v1367 = vmax.f32 %v1001, %v1193
  %v1368 = vmax.f32 %v1004, %v1196
  %v1369 = vmax.f32 %v1007, %v1199
  %v1370 = vmax.f32 %v1010, %v1202
  %v1371 = vmax.f32 %v1013, %v1205
  %v1372 = vmax.f32 %v1016, %v1208
  %v1373 = vmax.f32 %v1019, %v1211
  %v1374 = vmax.f32 %v1022, %v1214
  %v1375 = vmax.f32 %v1025, %v1217
  %v1376 = vmax.f32 %v1028, %v1220
  %v1377 = vmax.f32 %v1031, %v1223
  %v1378 = vmax.f32 %v1034, %v1226
  %v1379 = vmax.f32 %v1037, %v1229
  %v1380 = vmax.f32 %v1040, %v1232
  %v1381 = vmax.f32 %v1043, %v1235
  %v1382 = vmax.f32 %v1046, %v1238
  %v1383 = vmax.f32 %v1049, %v1241
  %v1384 = vmax.f32 %v1052, %v1244
  %v1385 = vmax.f32 %v1055, %v1247
  %v1386 = vmax.f32 %v1058, %v1250
  %v1387 = vmax.f32 %v1061, %v1253
  %v1388 = vmax.f32 %v1064, %v1256
  %v1389 = vmax.f32 %v1067, %v1259
  %v1390 = vmax.f32 %v1070, %v1262
  %v1391 = vmax.f32 %v1073, %v1265
  %v1392 = vmax.f32 %v1076, %v1268
  %v1393 = vmax.f32 %v1079, %v1271
  %v1394 = vmax.f32 %v1082, %v1274
  %v1395 = vmax.f32 %v1085, %v1277
  %v1396 = vmax.f32 %v1088, %v1280
  %v1397 = vmax.f32 %v1091, %v1283
  %v1398 = vmax.f32 %v1094, %v1286
  %v1399 = vmax.f32 %v1097, %v1289
  %v1400 = vmax.f32 %v1100, %v1292
  %v1401 = vmax.f32 %v1103, %v1295
  %v1402 = vmax.f32 %v1106, %v1298
  %v1403 = vmax.f32 %v1109, %v1301
  %v1404 = vmax.f32 %v1112, %v1304
  %v1405 = vmax.f32 %v1115, %v1307
  %v1406 = vmax.f32 %v1118, %v1310
  %v1407 = vmax.f32 %v1121, %v1313
  %v1408 = vmax.f32 %v1124, %v1316
  %v1409 = vmax.f32 %v1127, %v1319
  %v1410 = vmax.f32 %v1130, %v1322
  %v1411 = vmax.f32 %v1133, %v1325
  %v1412 = vmax.f32 %v1136, %v1328
  %v1413 = vmax.f32 %v1139, %v1331
  %v1414 = vmax.f32 %v1142, %v1334
  %v1415 = vmax.f32 %v1145, %v1337
  %v1416 = vmax.f32 %v1148, %v1340
  %v1417 = vmax.f32 %v1151, %v1343
  %v1418 = vmax.f32 %v1154, %v1346
  %v1419 = vmax.f32 %v1157, %v1349
  %v1420 = vmax.f32 %v1160, %v1352
  %v1421 = vmax.f32 %v1163, %v1355
  %v1422 = vmax.f32 %v1166, %v1358
  %1423 = vst.msk [vmem:[%s3] sm:$0xff] %vm910, %v1359
  %1424 = vst.msk [vmem:[%s3 + $0x8] sm:$0xff] %vm910, %v1360
  %1425 = vst.msk [vmem:[%s3 + $0x10] sm:$0xff] %vm910, %v1361
  %1426 = vst.msk [vmem:[%s3 + $0x18] sm:$0xff] %vm910, %v1362
  %1427 = vst.msk [vmem:[%s3 + $0x20] sm:$0xff] %vm910, %v1363
  %1428 = vst.msk [vmem:[%s3 + $0x28] sm:$0xff] %vm910, %v1364
  %1429 = vst.msk [vmem:[%s3 + $0x30] sm:$0xff] %vm910, %v1365
  %1430 = vst.msk [vmem:[%s3 + $0x38] sm:$0xff] %vm910, %v1366
  %1431 = vst.msk [vmem:[%s3 + $0x40] sm:$0xff] %vm910, %v1367
  %1432 = vst.msk [vmem:[%s3 + $0x48] sm:$0xff] %vm910, %v1368
  %1433 = vst.msk [vmem:[%s3 + $0x50] sm:$0xff] %vm910, %v1369
  %1434 = vst.msk [vmem:[%s3 + $0x58] sm:$0xff] %vm910, %v1370
  %1435 = vst.msk [vmem:[%s3 + $0x60] sm:$0xff] %vm910, %v1371
  %1436 = vst.msk [vmem:[%s3 + $0x68] sm:$0xff] %vm910, %v1372
  %1437 = vst.msk [vmem:[%s3 + $0x70] sm:$0xff] %vm910, %v1373
  %1438 = vst.msk [vmem:[%s3 + $0x78] sm:$0xff] %vm910, %v1374
  %1439 = vst.msk [vmem:[%s3 + $0x80] sm:$0xff] %vm910, %v1375
  %1440 = vst.msk [vmem:[%s3 + $0x88] sm:$0xff] %vm910, %v1376
  %1441 = vst.msk [vmem:[%s3 + $0x90] sm:$0xff] %vm910, %v1377
  %1442 = vst.msk [vmem:[%s3 + $0x98] sm:$0xff] %vm910, %v1378
  %1443 = vst.msk [vmem:[%s3 + $0xa0] sm:$0xff] %vm910, %v1379
  %1444 = vst.msk [vmem:[%s3 + $0xa8] sm:$0xff] %vm910, %v1380
  %1445 = vst.msk [vmem:[%s3 + $0xb0] sm:$0xff] %vm910, %v1381
  %1446 = vst.msk [vmem:[%s3 + $0xb8] sm:$0xff] %vm910, %v1382
  %1447 = vst.msk [vmem:[%s3 + $0xc0] sm:$0xff] %vm910, %v1383
  %1448 = vst.msk [vmem:[%s3 + $0xc8] sm:$0xff] %vm910, %v1384
  %1449 = vst.msk [vmem:[%s3 + $0xd0] sm:$0xff] %vm910, %v1385
  %1450 = vst.msk [vmem:[%s3 + $0xd8] sm:$0xff] %vm910, %v1386
  %1451 = vst.msk [vmem:[%s3 + $0xe0] sm:$0xff] %vm910, %v1387
  %1452 = vst.msk [vmem:[%s3 + $0xe8] sm:$0xff] %vm910, %v1388
  %1453 = vst.msk [vmem:[%s3 + $0xf0] sm:$0xff] %vm910, %v1389
  %1454 = vst.msk [vmem:[%s3 + $0xf8] sm:$0xff] %vm910, %v1390
  %1455 = vst.msk [vmem:[%s3 + $0x100] sm:$0xff] %vm910, %v1391
  %1456 = vst.msk [vmem:[%s3 + $0x108] sm:$0xff] %vm910, %v1392
  %1457 = vst.msk [vmem:[%s3 + $0x110] sm:$0xff] %vm910, %v1393
  %1458 = vst.msk [vmem:[%s3 + $0x118] sm:$0xff] %vm910, %v1394
  %1459 = vst.msk [vmem:[%s3 + $0x120] sm:$0xff] %vm910, %v1395
  %1460 = vst.msk [vmem:[%s3 + $0x128] sm:$0xff] %vm910, %v1396
  %1461 = vst.msk [vmem:[%s3 + $0x130] sm:$0xff] %vm910, %v1397
  %1462 = vst.msk [vmem:[%s3 + $0x138] sm:$0xff] %vm910, %v1398
  %1463 = vst.msk [vmem:[%s3 + $0x140] sm:$0xff] %vm910, %v1399
  %1464 = vst.msk [vmem:[%s3 + $0x148] sm:$0xff] %vm910, %v1400
  %1465 = vst.msk [vmem:[%s3 + $0x150] sm:$0xff] %vm910, %v1401
  %1466 = vst.msk [vmem:[%s3 + $0x158] sm:$0xff] %vm910, %v1402
  %1467 = vst.msk [vmem:[%s3 + $0x160] sm:$0xff] %vm910, %v1403
  %1468 = vst.msk [vmem:[%s3 + $0x168] sm:$0xff] %vm910, %v1404
  %1469 = vst.msk [vmem:[%s3 + $0x170] sm:$0xff] %vm910, %v1405
  %1470 = vst.msk [vmem:[%s3 + $0x178] sm:$0xff] %vm910, %v1406
  %1471 = vst.msk [vmem:[%s3 + $0x180] sm:$0xff] %vm910, %v1407
  %1472 = vst.msk [vmem:[%s3 + $0x188] sm:$0xff] %vm910, %v1408
  %1473 = vst.msk [vmem:[%s3 + $0x190] sm:$0xff] %vm910, %v1409
  %1474 = vst.msk [vmem:[%s3 + $0x198] sm:$0xff] %vm910, %v1410
  %1475 = vst.msk [vmem:[%s3 + $0x1a0] sm:$0xff] %vm910, %v1411
  %1476 = vst.msk [vmem:[%s3 + $0x1a8] sm:$0xff] %vm910, %v1412
  %1477 = vst.msk [vmem:[%s3 + $0x1b0] sm:$0xff] %vm910, %v1413
  %1478 = vst.msk [vmem:[%s3 + $0x1b8] sm:$0xff] %vm910, %v1414
  %1479 = vst.msk [vmem:[%s3 + $0x1c0] sm:$0xff] %vm910, %v1415
  %1480 = vst.msk [vmem:[%s3 + $0x1c8] sm:$0xff] %vm910, %v1416
  %1481 = vst.msk [vmem:[%s3 + $0x1d0] sm:$0xff] %vm910, %v1417
  %1482 = vst.msk [vmem:[%s3 + $0x1d8] sm:$0xff] %vm910, %v1418
  %1483 = vst.msk [vmem:[%s3 + $0x1e0] sm:$0xff] %vm910, %v1419
  %1484 = vst.msk [vmem:[%s3 + $0x1e8] sm:$0xff] %vm910, %v1420
  %1485 = vst.msk [vmem:[%s3 + $0x1f0] sm:$0xff] %vm910, %v1421
  %1486 = vst.msk [vmem:[%s3 + $0x1f8] sm:$0xff] %vm910, %v1422
  // Predicated region
  $region10: #{_lambda_.8} parent=0 // pred_check
    _
  $region11: #{_lambda_.8} parent=0 // pred_check_branch
    %1488 = sbr.rel (0) target = $region13
  $region12: #{_lambda_.8} parent=0 // pred_region
    _
  $region13: #{_lambda_.8} parent=0 // pred_fallthru
    _
  // Predicated region
  $region14: #{_lambda_.8} parent=0 // pred_check
    _
  $region15: #{_lambda_.8} parent=0 // pred_check_branch
    %1490 = sbr.rel (0) target = $region17
  $region16: #{_lambda_.8} parent=0 // pred_region
    _
  $region17: #{_lambda_.8} parent=0 // pred_fallthru
    _
  // Predicated region
  $region18: #{_lambda_.8} parent=0 // pred_check
    _
  $region19: #{_lambda_.8} parent=0 // pred_check_branch
    %1492 = sbr.rel (0) target = $region21
  $region20: #{_lambda_.8} parent=0 // pred_region
    _
  $region21: #{_lambda_.8} parent=0 // pred_fallthru
    _
  // Predicated region
  $region22: #{_lambda_.8} parent=0 // pred_check
    _
  $region23: #{_lambda_.8} parent=0 // pred_check_branch
    %1494 = sbr.rel (0) target = $region25
  $region24: #{_lambda_.8} parent=0 // pred_region
    _
  $region25: #{_lambda_.8} parent=0 // pred_fallthru
    _

// kernel: _lambda_.9
$region0: #{_lambda_.9}
  #allocation0 [shape = 'u32[]', space=smem, size = 0x4, offset = 0x4, fixed_abs, tag = 'smem constant byte address 0x4 - core index']
  #allocation1 [shape = 'u32[144,128]{1,0:T(1,128)}', space=vmem, size = 0x12000, scoped, tag = 'internal scratch']
  #allocation2 [shape = 'f32[256,128]{1,0:T(8,128)}', space=vmem, size = 0x20000, scoped, tag = 'scratch operand']
  %s0 = inlined_call_operand.vmem [shape: bf16[512,128], index: 0, kind: input, shape index: {}]
  %s1 = inlined_call_operand.vmem [shape: bf16[128,128], index: 1, kind: input, shape index: {}]
  %s2 = inlined_call_operand.vmem [shape: f32[1,128], index: 2, kind: input, shape index: {}]
  %s3 = inlined_call_operand.vmem [shape: f32[512,128], index: 3, kind: output, shape index: {}]
  %s4 = sld [smem:[#allocation0]]
  $region53: #{_lambda_.9} parent=0
    _
  %s6 = ssub.s32 1, %s4
  %s7 = scalar_select 0, %s6, %s4
  loop: start=0, step=1, limit=4
  $region2: #{_lambda_.9} parent=0 // loop_pre_header
    _
  $region3: #{_lambda_.9} parent=0 // loop_header
    %s9 = sphi 0, %s13
    %p10 = scmp.ge.s32.totalorder %s9, 4
    %s16 = sphi 0, %s35
    %s17 = sphi 0, %s31
    %s18 = sphi 0, %s27
    %s19 = sphi 0, %s16
    %s20 = sphi 0, %s17
    %s21 = sphi 0, %s18
    %s22 = sphi 0, %s19
    %s23 = sphi 0, %s20
    %s24 = sphi 0, %s21
    %s40 = sphi 0, %s42
    %s43 = sphi 0, %s40
    %s44 = sphi 0, %s43
    %s60 = sphi 0, %s44
    %s68 = sphi 0, %s70
    %s71 = sphi 0, %s68
    %s72 = sphi 0, %s71
    %s88 = sphi 0, %s72
    %s94 = sphi 0, %s96
    %s97 = sphi 0, %s94
    %s98 = sphi 0, %s97
    %s114 = sphi 0, %s98
    %s122 = sphi 0, %s124
    %s125 = sphi 0, %s122
    %s126 = sphi 0, %s125
    %s142 = sphi 0, %s126
  $region4: #{_lambda_.9} parent=0 // loop_header_branch
    %12 = sbr.rel (%p10) target = $region8
  $region5: #{_lambda_.9} parent=0 // loop_body
    %s14 = ssub.s32 %s9, 1
    %s15 = ssub.s32 %s9, 2
    %s25 = sadd.s32 1, %s18
    %p26 = scmp.ge.s32.totalorder %s25, 1
    %s27 = scalar_select %p26, 0, %s25
    %s28 = sadd.s32 1, %s17
    %s29 = scalar_select %p26, %s28, %s17
    %p30 = scmp.ge.s32.totalorder %s29, 1
    %s31 = scalar_select %p30, 0, %s29
    %s32 = sadd.s32 1, %s16
    %s33 = scalar_select %p30, %s32, %s16
    %p34 = scmp.ge.s32.totalorder %s33, 2
    %s35 = scalar_select %p34, 0, %s33
    %s36 = ssub.s32 %s16, %s35
    %s37 = ssub.s32 %s18, %s27
    %s38 = sor.u32 %s36, %s37
    %p39 = scmp.eq.s32.totalorder %s38, 0
    %s41 = sadd.s32 %s40, 1
    %s42 = scalar_select %p39, %s40, %s41
    %p45 = pneg %p39
    %p46 = scmp.eq.s32.totalorder %s9, 1
    %p47 = por %p45, %p46
    %p48 = scmp.ne.s32.totalorder %s40, %s43
    %p49 = scmp.eq.s32.totalorder %s9, 0
    %p50 = por %p48, %p49
    %p51 = scmp.ne.s32.totalorder %s40, %s43
    %p52 = scmp.eq.s32.totalorder %s14, 1
    %p53 = por %p51, %p52
    %p54 = scmp.ne.s32.totalorder %s43, %s44
    %p55 = scmp.eq.s32.totalorder %s14, 0
    %p56 = por %p54, %p55
    %p57 = scmp.ne.s32.totalorder %s43, %s44
    %p58 = scmp.eq.s32.totalorder %s15, 1
    %p59 = por %p57, %p58
    %p61 = scmp.ne.s32.totalorder %s44, %s60
    %p62 = scmp.eq.s32.totalorder %s15, 0
    %p63 = por %p61, %p62
    %s64 = ssub.s32 %s18, %s27
    %s65 = ssub.s32 %s17, %s31
    %s66 = sor.u32 %s64, %s65
    %p67 = scmp.eq.s32.totalorder %s66, 0
    %s69 = sadd.s32 %s68, 1
    %s70 = scalar_select %p67, %s68, %s69
    %p73 = pneg %p67
    %p74 = scmp.eq.s32.totalorder %s9, 1
    %p75 = por %p73, %p74
    %p76 = scmp.ne.s32.totalorder %s68, %s71
    %p77 = scmp.eq.s32.totalorder %s9, 0
    %p78 = por %p76, %p77
    %p79 = scmp.ne.s32.totalorder %s68, %s71
    %p80 = scmp.eq.s32.totalorder %s14, 1
    %p81 = por %p79, %p80
    %p82 = scmp.ne.s32.totalorder %s71, %s72
    %p83 = scmp.eq.s32.totalorder %s14, 0
    %p84 = por %p82, %p83
    %p85 = scmp.ne.s32.totalorder %s71, %s72
    %p86 = scmp.eq.s32.totalorder %s15, 1
    %p87 = por %p85, %p86
    %p89 = scmp.ne.s32.totalorder %s72, %s88
    %p90 = scmp.eq.s32.totalorder %s15, 0
    %p91 = por %p89, %p90
    %s92 = ssub.s32 %s17, %s31
    %p93 = scmp.eq.s32.totalorder %s92, 0
    %s95 = sadd.s32 %s94, 1
    %s96 = scalar_select %p93, %s94, %s95
    %p99 = pneg %p93
    %p100 = scmp.eq.s32.totalorder %s9, 1
    %p101 = por %p99, %p100
    %p102 = scmp.ne.s32.totalorder %s94, %s97
    %p103 = scmp.eq.s32.totalorder %s9, 0
    %p104 = por %p102, %p103
    %p105 = scmp.ne.s32.totalorder %s94, %s97
    %p106 = scmp.eq.s32.totalorder %s14, 1
    %p107 = por %p105, %p106
    %p108 = scmp.ne.s32.totalorder %s97, %s98
    %p109 = scmp.eq.s32.totalorder %s14, 0
    %p110 = por %p108, %p109
    %p111 = scmp.ne.s32.totalorder %s97, %s98
    %p112 = scmp.eq.s32.totalorder %s15, 1
    %p113 = por %p111, %p112
    %p115 = scmp.ne.s32.totalorder %s98, %s114
    %p116 = scmp.eq.s32.totalorder %s15, 0
    %p117 = por %p115, %p116
    %s118 = ssub.s32 %s16, %s35
    %s119 = ssub.s32 %s17, %s31
    %s120 = sor.u32 %s118, %s119
    %p121 = scmp.eq.s32.totalorder %s120, 0
    %s123 = sadd.s32 %s122, 1
    %s124 = scalar_select %p121, %s122, %s123
    %p127 = pneg %p121
    %p128 = scmp.eq.s32.totalorder %s9, 1
    %p129 = por %p127, %p128
    %p130 = scmp.ne.s32.totalorder %s122, %s125
    %p131 = scmp.eq.s32.totalorder %s9, 0
    %p132 = por %p130, %p131
    %p133 = scmp.ne.s32.totalorder %s122, %s125
    %p134 = scmp.eq.s32.totalorder %s14, 1
    %p135 = por %p133, %p134
    %p136 = scmp.ne.s32.totalorder %s125, %s126
    %p137 = scmp.eq.s32.totalorder %s14, 0
    %p138 = por %p136, %p137
    %p139 = scmp.ne.s32.totalorder %s125, %s126
    %p140 = scmp.eq.s32.totalorder %s15, 1
    %p141 = por %p139, %p140
    %p143 = scmp.ne.s32.totalorder %s126, %s142
    %p144 = scmp.eq.s32.totalorder %s15, 0
    %p145 = por %p143, %p144
    %p146 = scmp.le.s32.totalorder 1, %s9
    %p147 = scmp.lt.s32.totalorder %s9, 3
    %p148 = pnand %p146, %p147
    %p149 = pneg %p148
    // Predicated region
    $region9: #{_lambda_.9} parent=5 // pred_check
      _
    $region10: #{_lambda_.9} parent=5 // pred_check_branch
      %151 = sbr.rel (%p148) target = $region12
    $region11: #{_lambda_.9} parent=5 // pred_region
      %s152 = ssub.s32 %s9, 1
      // Predicated region
      $region13: #{_lambda_.9} parent=11 // pred_check
        %p153 = pneg %p84
      $region14: #{_lambda_.9} parent=11 // pred_check_branch
        %155 = sbr.rel (%p153) target = $region16
      $region15: #{_lambda_.9} parent=11 // pred_region
        %s156 = smul.u32 16, %s21
        %p157 = scmp.lt.s32.totalorder %s156, 15
        %s158 = scalar_select %p157, %s156, 15
        %p159 = scmp.lt.s32.totalorder %s20, 0
        %s160 = scalar_select %p159, %s20, 0
        %s161 = sadd.s32 %s160, %s158
        %s162 = smul.addr %s161, 4
        %s163 = scalar_lea.vmem %s1, %s162
        %s164 = smul.u32 16, %s21
      $region16: #{_lambda_.9} parent=11 // pred_fallthru
        _
      // Predicated region
      $region17: #{_lambda_.9} parent=11 // pred_check
        %p165 = pneg %p110
      $region18: #{_lambda_.9} parent=11 // pred_check_branch
        %167 = sbr.rel (%p165) target = $region20
      $region19: #{_lambda_.9} parent=11 // pred_region
        %p168 = scmp.lt.s32.totalorder %s20, 0
        %s169 = scalar_select %p168, %s20, 0
        %s170 = scalar_lea.vmem %s2, %s169
      $region20: #{_lambda_.9} parent=11 // pred_fallthru
        _
    $region12: #{_lambda_.9} parent=5 // pred_fallthru
      _
    %p171 = scmp.lt.s32.totalorder %s9, 2
    // Predicated region
    $region21: #{_lambda_.9} parent=5 // pred_check
      %p172 = pneg %p171
    $region22: #{_lambda_.9} parent=5 // pred_check_branch
      %174 = sbr.rel (%p172) target = $region24
    $region23: #{_lambda_.9} parent=5 // pred_region
      // Predicated region
      $region25: #{_lambda_.9} parent=23 // pred_check
        %p175 = pneg %p50
      $region26: #{_lambda_.9} parent=23 // pred_check_branch
        %177 = sbr.rel (%p175) target = $region28
      $region27: #{_lambda_.9} parent=23 // pred_region
        %s178 = smul.u32 32, %s16
        %p179 = scmp.lt.s32.totalorder %s178, 63
        %s180 = scalar_select %p179, %s178, 63
        %p181 = scmp.lt.s32.totalorder %s18, 0
        %s182 = scalar_select %p181, %s18, 0
        %s183 = sadd.s32 %s182, %s180
        %s184 = smul.addr %s183, 4
        %s185 = scalar_lea.vmem %s0, %s184
        %s186 = smul.u32 32, %s16
      $region28: #{_lambda_.9} parent=23 // pred_fallthru
        _
    $region24: #{_lambda_.9} parent=5 // pred_fallthru
      _
    %p187 = scmp.le.s32.totalorder 1, %s9
    %p188 = scmp.lt.s32.totalorder %s9, 3
    %p189 = pnand %p187, %p188
    %p190 = pneg %p189
    // Predicated region
    $region29: #{_lambda_.9} parent=5 // pred_check
      _
    $region30: #{_lambda_.9} parent=5 // pred_check_branch
      %192 = sbr.rel (%p189) target = $region32
    $region31: #{_lambda_.9} parent=5 // pred_region
      %s193 = ssub.s32 %s9, 1
      %s194 = smul.u32 32, %s19
      %p195 = scmp.lt.s32.totalorder %s194, 63
      %s196 = scalar_select %p195, %s194, 63
      %p197 = scmp.lt.s32.totalorder %s21, 0
      %s198 = scalar_select %p197, %s21, 0
      %s199 = sadd.s32 %s198, %s196
      %s200 = smul.addr %s199, 4
      %s201 = scalar_lea.vmem %s0, %s200
      %p202 = pneg %p56
      %p203 = pneg %p53
      %s204 = smul.u32 16, %s21
      %p205 = scmp.lt.s32.totalorder %s204, 15
      %s206 = scalar_select %p205, %s204, 15
      %p207 = scmp.lt.s32.totalorder %s20, 0
      %s208 = scalar_select %p207, %s20, 0
      %s209 = sadd.s32 %s208, %s206
      %s210 = smul.addr %s209, 4
      %s211 = scalar_lea.vmem %s1, %s210
      %p212 = pneg %p84
      %p213 = pneg %p81
      %p214 = scmp.lt.s32.totalorder %s20, 0
      %s215 = scalar_select %p214, %s20, 0
      %s216 = scalar_lea.vmem %s2, %s215
      %p217 = pneg %p110
      %p218 = pneg %p107
      %p219 = pneg %p138
      %p220 = pneg %p135
      %s221 = smul.u32 32, %s19
      %p222 = scmp.lt.s32.totalorder %s221, 63
      %s223 = scalar_select %p222, %s221, 63
      %p224 = scmp.lt.s32.totalorder %s20, 0
      %s225 = scalar_select %p224, %s20, 0
      %s226 = sadd.s32 %s225, %s223
      %s227 = smul.addr %s226, 8
      %s228 = scalar_lea.vmem %s3, %s227
      %s229 = smul.u32 32, %s19
      %p230 = scmp.lt.s32.totalorder %s229, 63
      %s231 = scalar_select %p230, %s229, 63
      %p232 = scmp.lt.s32.totalorder %s21, 0
      %s233 = scalar_select %p232, %s21, 0
      %s234 = sadd.s32 %s233, %s231
      %s235 = smul.addr %s234, 4
      %s236 = scalar_lea.vmem %s0, %s235
      %s237 = smul.u32 32, %s19
      %s238 = smul.u32 16, %s21
      %p239 = scmp.lt.s32.totalorder %s238, 15
      %s240 = scalar_select %p239, %s238, 15
      %p241 = scmp.lt.s32.totalorder %s20, 0
      %s242 = scalar_select %p241, %s20, 0
      %s243 = sadd.s32 %s242, %s240
      %s244 = smul.addr %s243, 4
      %s245 = scalar_lea.vmem %s1, %s244
      %s246 = smul.u32 16, %s21
      %p247 = scmp.lt.s32.totalorder %s20, 0
      %s248 = scalar_select %p247, %s20, 0
      %s249 = scalar_lea.vmem %s2, %s248
      %s250 = smul.u32 32, %s19
      %p251 = scmp.lt.s32.totalorder %s250, 63
      %s252 = scalar_select %p251, %s250, 63
      %p253 = scmp.lt.s32.totalorder %s20, 0
      %s254 = scalar_select %p253, %s20, 0
      %s255 = sadd.s32 %s254, %s252
      %s256 = smul.addr %s255, 8
      %s257 = scalar_lea.vmem %s3, %s256
      %s258 = smul.u32 32, %s19
      %p260 = scmp.eq.s32.totalorder %s21, 0
      // Predicated region
      $region33: #{_lambda_.9} parent=31 // pred_check
        %p261 = pneg %p260
      $region34: #{_lambda_.9} parent=31 // pred_check_branch
        %263 = sbr.rel (%p261) target = $region36
      $region35: #{_lambda_.9} parent=31 // pred_region
        %264 = vst [vmem:[#allocation2] sm:$0xff] 0.0
        %265 = vst [vmem:[#allocation2 + $0x8] sm:$0xff] 0.0
        %266 = vst [vmem:[#allocation2 + $0x10] sm:$0xff] 0.0
        %267 = vst [vmem:[#allocation2 + $0x18] sm:$0xff] 0.0
        %268 = vst [vmem:[#allocation2 + $0x20] sm:$0xff] 0.0
        %269 = vst [vmem:[#allocation2 + $0x28] sm:$0xff] 0.0
        %270 = vst [vmem:[#allocation2 + $0x30] sm:$0xff] 0.0
        %271 = vst [vmem:[#allocation2 + $0x38] sm:$0xff] 0.0
        %272 = vst [vmem:[#allocation2 + $0x40] sm:$0xff] 0.0
        %273 = vst [vmem:[#allocation2 + $0x48] sm:$0xff] 0.0
        %274 = vst [vmem:[#allocation2 + $0x50] sm:$0xff] 0.0
        %275 = vst [vmem:[#allocation2 + $0x58] sm:$0xff] 0.0
        %276 = vst [vmem:[#allocation2 + $0x60] sm:$0xff] 0.0
        %277 = vst [vmem:[#allocation2 + $0x68] sm:$0xff] 0.0
        %278 = vst [vmem:[#allocation2 + $0x70] sm:$0xff] 0.0
        %279 = vst [vmem:[#allocation2 + $0x78] sm:$0xff] 0.0
        %280 = vst [vmem:[#allocation2 + $0x80] sm:$0xff] 0.0
        %281 = vst [vmem:[#allocation2 + $0x88] sm:$0xff] 0.0
        %282 = vst [vmem:[#allocation2 + $0x90] sm:$0xff] 0.0
        %283 = vst [vmem:[#allocation2 + $0x98] sm:$0xff] 0.0
        %284 = vst [vmem:[#allocation2 + $0xa0] sm:$0xff] 0.0
        %285 = vst [vmem:[#allocation2 + $0xa8] sm:$0xff] 0.0
        %286 = vst [vmem:[#allocation2 + $0xb0] sm:$0xff] 0.0
        %287 = vst [vmem:[#allocation2 + $0xb8] sm:$0xff] 0.0
        %288 = vst [vmem:[#allocation2 + $0xc0] sm:$0xff] 0.0
        %289 = vst [vmem:[#allocation2 + $0xc8] sm:$0xff] 0.0
        %290 = vst [vmem:[#allocation2 + $0xd0] sm:$0xff] 0.0
        %291 = vst [vmem:[#allocation2 + $0xd8] sm:$0xff] 0.0
        %292 = vst [vmem:[#allocation2 + $0xe0] sm:$0xff] 0.0
        %293 = vst [vmem:[#allocation2 + $0xe8] sm:$0xff] 0.0
        %294 = vst [vmem:[#allocation2 + $0xf0] sm:$0xff] 0.0
        %295 = vst [vmem:[#allocation2 + $0xf8] sm:$0xff] 0.0
      $region36: #{_lambda_.9} parent=31 // pred_fallthru
        _
      %v296 = vld [vmem:[#allocation2] sm:$0xff]
      %v297 = vld [vmem:[#allocation2 + $0x8] sm:$0xff]
      %v298 = vld [vmem:[#allocation2 + $0x10] sm:$0xff]
      %v299 = vld [vmem:[#allocation2 + $0x18] sm:$0xff]
      %v300 = vld [vmem:[#allocation2 + $0x20] sm:$0xff]
      %v301 = vld [vmem:[#allocation2 + $0x28] sm:$0xff]
      %v302 = vld [vmem:[#allocation2 + $0x30] sm:$0xff]
      %v303 = vld [vmem:[#allocation2 + $0x38] sm:$0xff]
      %v304 = vld [vmem:[#allocation2 + $0x40] sm:$0xff]
      %v305 = vld [vmem:[#allocation2 + $0x48] sm:$0xff]
      %v306 = vld [vmem:[#allocation2 + $0x50] sm:$0xff]
      %v307 = vld [vmem:[#allocation2 + $0x58] sm:$0xff]
      %v308 = vld [vmem:[#allocation2 + $0x60] sm:$0xff]
      %v309 = vld [vmem:[#allocation2 + $0x68] sm:$0xff]
      %v310 = vld [vmem:[#allocation2 + $0x70] sm:$0xff]
      %v311 = vld [vmem:[#allocation2 + $0x78] sm:$0xff]
      %v312 = vld [vmem:[#allocation2 + $0x80] sm:$0xff]
      %v313 = vld [vmem:[#allocation2 + $0x88] sm:$0xff]
      %v314 = vld [vmem:[#allocation2 + $0x90] sm:$0xff]
      %v315 = vld [vmem:[#allocation2 + $0x98] sm:$0xff]
      %v316 = vld [vmem:[#allocation2 + $0xa0] sm:$0xff]
      %v317 = vld [vmem:[#allocation2 + $0xa8] sm:$0xff]
      %v318 = vld [vmem:[#allocation2 + $0xb0] sm:$0xff]
      %v319 = vld [vmem:[#allocation2 + $0xb8] sm:$0xff]
      %v320 = vld [vmem:[#allocation2 + $0xc0] sm:$0xff]
      %v321 = vld [vmem:[#allocation2 + $0xc8] sm:$0xff]
      %v322 = vld [vmem:[#allocation2 + $0xd0] sm:$0xff]
      %v323 = vld [vmem:[#allocation2 + $0xd8] sm:$0xff]
      %v324 = vld [vmem:[#allocation2 + $0xe0] sm:$0xff]
      %v325 = vld [vmem:[#allocation2 + $0xe8] sm:$0xff]
      %v326 = vld [vmem:[#allocation2 + $0xf0] sm:$0xff]
      %v327 = vld [vmem:[#allocation2 + $0xf8] sm:$0xff]
      %v328 = vld [vmem:[%s236] sm:$0xf]
      %v329 = vld [vmem:[%s236 + $0x4] sm:$0xf]
      %v330 = vld [vmem:[%s236 + $0x8] sm:$0xf]
      %v331 = vld [vmem:[%s236 + $0xc] sm:$0xf]
      %v332 = vld [vmem:[%s236 + $0x10] sm:$0xf]
      %v333 = vld [vmem:[%s236 + $0x14] sm:$0xf]
      %v334 = vld [vmem:[%s236 + $0x18] sm:$0xf]
      %v335 = vld [vmem:[%s236 + $0x1c] sm:$0xf]
      %v336 = vld [vmem:[%s236 + $0x20] sm:$0xf]
      %v337 = vld [vmem:[%s236 + $0x24] sm:$0xf]
      %v338 = vld [vmem:[%s236 + $0x28] sm:$0xf]
      %v339 = vld [vmem:[%s236 + $0x2c] sm:$0xf]
      %v340 = vld [vmem:[%s236 + $0x30] sm:$0xf]
      %v341 = vld [vmem:[%s236 + $0x34] sm:$0xf]
      %v342 = vld [vmem:[%s236 + $0x38] sm:$0xf]
      %v343 = vld [vmem:[%s236 + $0x3c] sm:$0xf]
      %v344 = vld [vmem:[%s236 + $0x40] sm:$0xf]
      %v345 = vld [vmem:[%s236 + $0x44] sm:$0xf]
      %v346 = vld [vmem:[%s236 + $0x48] sm:$0xf]
      %v347 = vld [vmem:[%s236 + $0x4c] sm:$0xf]
      %v348 = vld [vmem:[%s236 + $0x50] sm:$0xf]
      %v349 = vld [vmem:[%s236 + $0x54] sm:$0xf]
      %v350 = vld [vmem:[%s236 + $0x58] sm:$0xf]
      %v351 = vld [vmem:[%s236 + $0x5c] sm:$0xf]
      %v352 = vld [vmem:[%s236 + $0x60] sm:$0xf]
      %v353 = vld [vmem:[%s236 + $0x64] sm:$0xf]
      %v354 = vld [vmem:[%s236 + $0x68] sm:$0xf]
      %v355 = vld [vmem:[%s236 + $0x6c] sm:$0xf]
      %v356 = vld [vmem:[%s236 + $0x70] sm:$0xf]
      %v357 = vld [vmem:[%s236 + $0x74] sm:$0xf]
      %v358 = vld [vmem:[%s236 + $0x78] sm:$0xf]
      %v359 = vld [vmem:[%s236 + $0x7c] sm:$0xf]
      %v360 = vld [vmem:[%s245] sm:$0xf]
      %v361 = vld [vmem:[%s245 + $0x4] sm:$0xf]
      %v362 = vld [vmem:[%s245 + $0x8] sm:$0xf]
      %v363 = vld [vmem:[%s245 + $0xc] sm:$0xf]
      %v364 = vld [vmem:[%s245 + $0x10] sm:$0xf]
      %v365 = vld [vmem:[%s245 + $0x14] sm:$0xf]
      %v366 = vld [vmem:[%s245 + $0x18] sm:$0xf]
      %v367 = vld [vmem:[%s245 + $0x1c] sm:$0xf]
      %v368 = vld [vmem:[%s245 + $0x20] sm:$0xf]
      %v369 = vld [vmem:[%s245 + $0x24] sm:$0xf]
      %v370 = vld [vmem:[%s245 + $0x28] sm:$0xf]
      %v371 = vld [vmem:[%s245 + $0x2c] sm:$0xf]
      %v372 = vld [vmem:[%s245 + $0x30] sm:$0xf]
      %v373 = vld [vmem:[%s245 + $0x34] sm:$0xf]
      %v374 = vld [vmem:[%s245 + $0x38] sm:$0xf]
      %v375 = vld [vmem:[%s245 + $0x3c] sm:$0xf]
      %v408 = vunpack.c.l.b16 %v328
      %v409 = vunpack.c.l.b16 %v329
      %v410 = vunpack.c.l.b16 %v330
      %v411 = vunpack.c.l.b16 %v331
      %v412 = vunpack.c.l.b16 %v332
      %v413 = vunpack.c.l.b16 %v333
      %v414 = vunpack.c.l.b16 %v334
      %v415 = vunpack.c.l.b16 %v335
      %v416 = vunpack.c.l.b16 %v336
      %v417 = vunpack.c.l.b16 %v337
      %v418 = vunpack.c.l.b16 %v338
      %v419 = vunpack.c.l.b16 %v339
      %v420 = vunpack.c.l.b16 %v340
      %v421 = vunpack.c.l.b16 %v341
      %v422 = vunpack.c.l.b16 %v342
      %v423 = vunpack.c.l.b16 %v343
      %v424 = vunpack.c.l.b16 %v344
      %v425 = vunpack.c.l.b16 %v345
      %v426 = vunpack.c.l.b16 %v346
      %v427 = vunpack.c.l.b16 %v347
      %v428 = vunpack.c.l.b16 %v348
      %v429 = vunpack.c.l.b16 %v349
      %v430 = vunpack.c.l.b16 %v350
      %v431 = vunpack.c.l.b16 %v351
      %v432 = vunpack.c.l.b16 %v352
      %v433 = vunpack.c.l.b16 %v353
      %v434 = vunpack.c.l.b16 %v354
      %v435 = vunpack.c.l.b16 %v355
      %v436 = vunpack.c.l.b16 %v356
      %v437 = vunpack.c.l.b16 %v357
      %v438 = vunpack.c.l.b16 %v358
      %v439 = vunpack.c.l.b16 %v359
      %v440 = vpack.c.b16 %v409, %v408
      %v441 = vpack.c.b16 %v411, %v410
      %v442 = vpack.c.b16 %v413, %v412
      %v443 = vpack.c.b16 %v415, %v414
      %v444 = vpack.c.b16 %v417, %v416
      %v445 = vpack.c.b16 %v419, %v418
      %v446 = vpack.c.b16 %v421, %v420
      %v447 = vpack.c.b16 %v423, %v422
      %v448 = vpack.c.b16 %v425, %v424
      %v449 = vpack.c.b16 %v427, %v426
      %v450 = vpack.c.b16 %v429, %v428
      %v451 = vpack.c.b16 %v431, %v430
      %v452 = vpack.c.b16 %v433, %v432
      %v453 = vpack.c.b16 %v435, %v434
      %v454 = vpack.c.b16 %v437, %v436
      %v455 = vpack.c.b16 %v439, %v438
      %v488 = vunpack.c.l.b16 %v360
      %v489 = vunpack.c.l.b16 %v361
      %v490 = vunpack.c.l.b16 %v362
      %v491 = vunpack.c.l.b16 %v363
      %v492 = vunpack.c.l.b16 %v364
      %v493 = vunpack.c.l.b16 %v365
      %v494 = vunpack.c.l.b16 %v366
      %v495 = vunpack.c.l.b16 %v367
      %v496 = vunpack.c.l.b16 %v368
      %v497 = vunpack.c.l.b16 %v369
      %v498 = vunpack.c.l.b16 %v370
      %v499 = vunpack.c.l.b16 %v371
      %v500 = vunpack.c.l.b16 %v372
      %v501 = vunpack.c.l.b16 %v373
      %v502 = vunpack.c.l.b16 %v374
      %v503 = vunpack.c.l.b16 %v375
      %v504 = vpack.c.b16 %v489, %v488
      %v505 = vpack.c.b16 %v491, %v490
      %v506 = vpack.c.b16 %v493, %v492
      %v507 = vpack.c.b16 %v495, %v494
      %v508 = vpack.c.b16 %v497, %v496
      %v509 = vpack.c.b16 %v499, %v498
      %v510 = vpack.c.b16 %v501, %v500
      %v511 = vpack.c.b16 %v503, %v502
      %520 = vmatprep.subr.bf16.mxu0 0
      %521 = vmatpush1.bf16.msra.mxu0 %v504
      %522 = vmatprep.subr.bf16.mxu0 0
      %523 = vmatpush1.bf16.msra.mxu0 %v505
      %524 = vmatprep.subr.bf16.mxu0 0
      %525 = vmatpush1.bf16.msra.mxu0 %v506
      %526 = vmatprep.subr.bf16.mxu0 0
      %527 = vmatpush1.bf16.msra.mxu0 %v507
      %528 = vmatprep.subr.bf16.mxu0 0
      %529 = vmatpush1.bf16.msra.mxu0 %v508
      %530 = vmatprep.subr.bf16.mxu0 0
      %531 = vmatpush1.bf16.msra.mxu0 %v509
      %532 = vmatprep.subr.bf16.mxu0 0
      %533 = vmatpush1.bf16.msra.mxu0 %v510
      %534 = vmatprep.subr.bf16.mxu0 0
      %535 = vmatpush1.bf16.msra.mxu0 %v511
      %536 = vmatprep.subr.bf16.mxu0 0
      %537 = vmatpush1.bf16.msra.mxu0 0
      %538 = vmatprep.subr.bf16.mxu0 0
      %539 = vmatpush1.bf16.msra.mxu0 0
      %540 = vmatprep.subr.bf16.mxu0 0
      %541 = vmatpush1.bf16.msra.mxu0 0
      %542 = vmatprep.subr.bf16.mxu0 0
      %543 = vmatpush1.bf16.msra.mxu0 0
      %544 = vmatprep.subr.bf16.mxu0 0
      %545 = vmatpush1.bf16.msra.mxu0 0
      %546 = vmatprep.subr.bf16.mxu0 0
      %547 = vmatpush1.bf16.msra.mxu0 0
      %548 = vmatprep.subr.bf16.mxu0 0
      %549 = vmatpush1.bf16.msra.mxu0 0
      %550 = vmatprep.subr.bf16.mxu0 0
      %551 = vmatpush1.bf16.msra.mxu0 0
      %552 = vmatprep.mubr.bf16.mxu0 0
      %553 = vmatmul.mubr.bf16.gmra.mrb[0].mxu0 %v440
      %v554 = vpop.f32.mrb[0].mxu0
      %v555 = vadd.f32 0.0, %v554
      %v556 = vpop.f32.mrb[0].mxu0
      %v557 = vpop.f32.mrb[0].mxu0
      %v558 = vadd.f32 0.0, %v557
      %v559 = vpop.f32.mrb[0].mxu0
      %560 = vmatprep.mubr.bf16.mxu0 0
      %561 = vmatmul.mubr.bf16.gmra.mrb[0].mxu0 %v441
      %v562 = vpop.f32.mrb[0].mxu0
      %v563 = vadd.f32 0.0, %v562
      %v564 = vpop.f32.mrb[0].mxu0
      %v565 = vpop.f32.mrb[0].mxu0
      %v566 = vadd.f32 0.0, %v565
      %v567 = vpop.f32.mrb[0].mxu0
      %568 = vmatprep.mubr.bf16.mxu0 0
      %569 = vmatmul.mubr.bf16.gmra.mrb[0].mxu0 %v442
      %v570 = vpop.f32.mrb[0].mxu0
      %v571 = vadd.f32 0.0, %v570
      %v572 = vpop.f32.mrb[0].mxu0
      %v573 = vpop.f32.mrb[0].mxu0
      %v574 = vadd.f32 0.0, %v573
      %v575 = vpop.f32.mrb[0].mxu0
      %576 = vmatprep.mubr.bf16.mxu0 0
      %577 = vmatmul.mubr.bf16.gmra.mrb[0].mxu0 %v443
      %v578 = vpop.f32.mrb[0].mxu0
      %v579 = vadd.f32 0.0, %v578
      %v580 = vpop.f32.mrb[0].mxu0
      %v581 = vpop.f32.mrb[0].mxu0
      %v582 = vadd.f32 0.0, %v581
      %v583 = vpop.f32.mrb[0].mxu0
      %584 = vmatprep.mubr.bf16.mxu0 0
      %585 = vmatmul.mubr.bf16.gmra.mrb[0].mxu0 %v444
      %v586 = vpop.f32.mrb[0].mxu0
      %v587 = vadd.f32 0.0, %v586
      %v588 = vpop.f32.mrb[0].mxu0
      %v589 = vpop.f32.mrb[0].mxu0
      %v590 = vadd.f32 0.0, %v589
      %v591 = vpop.f32.mrb[0].mxu0
      %592 = vmatprep.mubr.bf16.mxu0 0
      %593 = vmatmul.mubr.bf16.gmra.mrb[0].mxu0 %v445
      %v594 = vpop.f32.mrb[0].mxu0
      %v595 = vadd.f32 0.0, %v594
      %v596 = vpop.f32.mrb[0].mxu0
      %v597 = vpop.f32.mrb[0].mxu0
      %v598 = vadd.f32 0.0, %v597
      %v599 = vpop.f32.mrb[0].mxu0
      %600 = vmatprep.mubr.bf16.mxu0 0
      %601 = vmatmul.mubr.bf16.gmra.mrb[0].mxu0 %v446
      %v602 = vpop.f32.mrb[0].mxu0
      %v603 = vadd.f32 0.0, %v602
      %v604 = vpop.f32.mrb[0].mxu0
      %v605 = vpop.f32.mrb[0].mxu0
      %v606 = vadd.f32 0.0, %v605
      %v607 = vpop.f32.mrb[0].mxu0
      %608 = vmatprep.mubr.bf16.mxu0 0
      %609 = vmatmul.mubr.bf16.gmra.mrb[0].mxu0 %v447
      %v610 = vpop.f32.mrb[0].mxu0
      %v611 = vadd.f32 0.0, %v610
      %v612 = vpop.f32.mrb[0].mxu0
      %v613 = vpop.f32.mrb[0].mxu0
      %v614 = vadd.f32 0.0, %v613
      %v615 = vpop.f32.mrb[0].mxu0
      %616 = vmatprep.mubr.bf16.mxu0 0
      %617 = vmatmul.mubr.bf16.gmra.mrb[0].mxu0 %v448
      %v618 = vpop.f32.mrb[0].mxu0
      %v619 = vadd.f32 0.0, %v618
      %v620 = vpop.f32.mrb[0].mxu0
      %v621 = vpop.f32.mrb[0].mxu0
      %v622 = vadd.f32 0.0, %v621
      %v623 = vpop.f32.mrb[0].mxu0
      %624 = vmatprep.mubr.bf16.mxu0 0
      %625 = vmatmul.mubr.bf16.gmra.mrb[0].mxu0 %v449
      %v626 = vpop.f32.mrb[0].mxu0
      %v627 = vadd.f32 0.0, %v626
      %v628 = vpop.f32.mrb[0].mxu0
      %v629 = vpop.f32.mrb[0].mxu0
      %v630 = vadd.f32 0.0, %v629
      %v631 = vpop.f32.mrb[0].mxu0
      %632 = vmatprep.mubr.bf16.mxu0 0
      %633 = vmatmul.mubr.bf16.gmra.mrb[0].mxu0 %v450
      %v634 = vpop.f32.mrb[0].mxu0
      %v635 = vadd.f32 0.0, %v634
      %v636 = vpop.f32.mrb[0].mxu0
      %v637 = vpop.f32.mrb[0].mxu0
      %v638 = vadd.f32 0.0, %v637
      %v639 = vpop.f32.mrb[0].mxu0
      %640 = vmatprep.mubr.bf16.mxu0 0
      %641 = vmatmul.mubr.bf16.gmra.mrb[0].mxu0 %v451
      %v642 = vpop.f32.mrb[0].mxu0
      %v643 = vadd.f32 0.0, %v642
      %v644 = vpop.f32.mrb[0].mxu0
      %v645 = vpop.f32.mrb[0].mxu0
      %v646 = vadd.f32 0.0, %v645
      %v647 = vpop.f32.mrb[0].mxu0
      %648 = vmatprep.mubr.bf16.mxu0 0
      %649 = vmatmul.mubr.bf16.gmra.mrb[0].mxu0 %v452
      %v650 = vpop.f32.mrb[0].mxu0
      %v651 = vadd.f32 0.0, %v650
      %v652 = vpop.f32.mrb[0].mxu0
      %v653 = vpop.f32.mrb[0].mxu0
      %v654 = vadd.f32 0.0, %v653
      %v655 = vpop.f32.mrb[0].mxu0
      %656 = vmatprep.mubr.bf16.mxu0 0
      %657 = vmatmul.mubr.bf16.gmra.mrb[0].mxu0 %v453
      %v658 = vpop.f32.mrb[0].mxu0
      %v659 = vadd.f32 0.0, %v658
      %v660 = vpop.f32.mrb[0].mxu0
      %v661 = vpop.f32.mrb[0].mxu0
      %v662 = vadd.f32 0.0, %v661
      %v663 = vpop.f32.mrb[0].mxu0
      %664 = vmatprep.mubr.bf16.mxu0 0
      %665 = vmatmul.mubr.bf16.gmra.mrb[0].mxu0 %v454
      %v666 = vpop.f32.mrb[0].mxu0
      %v667 = vadd.f32 0.0, %v666
      %v668 = vpop.f32.mrb[0].mxu0
      %v669 = vpop.f32.mrb[0].mxu0
      %v670 = vadd.f32 0.0, %v669
      %v671 = vpop.f32.mrb[0].mxu0
      %672 = vmatprep.mubr.bf16.mxu0 0
      %673 = vmatmul.mubr.bf16.gmra.mrb[0].mxu0 %v455
      %v674 = vpop.f32.mrb[0].mxu0
      %v675 = vadd.f32 0.0, %v674
      %v676 = vpop.f32.mrb[0].mxu0
      %v677 = vpop.f32.mrb[0].mxu0
      %v678 = vadd.f32 0.0, %v677
      %v679 = vpop.f32.mrb[0].mxu0
      %680 = vdwg.mxu0
      %v681 = vadd.f32 %v296, %v555
      %v682 = vadd.f32 %v297, %v558
      %v683 = vadd.f32 %v298, %v563
      %v684 = vadd.f32 %v299, %v566
      %v685 = vadd.f32 %v300, %v571
      %v686 = vadd.f32 %v301, %v574
      %v687 = vadd.f32 %v302, %v579
      %v688 = vadd.f32 %v303, %v582
      %v689 = vadd.f32 %v304, %v587
      %v690 = vadd.f32 %v305, %v590
      %v691 = vadd.f32 %v306, %v595
      %v692 = vadd.f32 %v307, %v598
      %v693 = vadd.f32 %v308, %v603
      %v694 = vadd.f32 %v309, %v606
      %v695 = vadd.f32 %v310, %v611
      %v696 = vadd.f32 %v311, %v614
      %v697 = vadd.f32 %v312, %v619
      %v698 = vadd.f32 %v313, %v622
      %v699 = vadd.f32 %v314, %v627
      %v700 = vadd.f32 %v315, %v630
      %v701 = vadd.f32 %v316, %v635
      %v702 = vadd.f32 %v317, %v638
      %v703 = vadd.f32 %v318, %v643
      %v704 = vadd.f32 %v319, %v646
      %v705 = vadd.f32 %v320, %v651
      %v706 = vadd.f32 %v321, %v654
      %v707 = vadd.f32 %v322, %v659
      %v708 = vadd.f32 %v323, %v662
      %v709 = vadd.f32 %v324, %v667
      %v710 = vadd.f32 %v325, %v670
      %v711 = vadd.f32 %v326, %v675
      %v712 = vadd.f32 %v327, %v678
      %713 = vst [vmem:[#allocation2] sm:$0xff] %v681
      %714 = vst [vmem:[#allocation2 + $0x8] sm:$0xff] %v682
      %715 = vst [vmem:[#allocation2 + $0x10] sm:$0xff] %v683
      %716 = vst [vmem:[#allocation2 + $0x18] sm:$0xff] %v684
      %717 = vst [vmem:[#allocation2 + $0x20] sm:$0xff] %v685
      %718 = vst [vmem:[#allocation2 + $0x28] sm:$0xff] %v686
      %719 = vst [vmem:[#allocation2 + $0x30] sm:$0xff] %v687
      %720 = vst [vmem:[#allocation2 + $0x38] sm:$0xff] %v688
      %721 = vst [vmem:[#allocation2 + $0x40] sm:$0xff] %v689
      %722 = vst [vmem:[#allocation2 + $0x48] sm:$0xff] %v690
      %723 = vst [vmem:[#allocation2 + $0x50] sm:$0xff] %v691
      %724 = vst [vmem:[#allocation2 + $0x58] sm:$0xff] %v692
      %725 = vst [vmem:[#allocation2 + $0x60] sm:$0xff] %v693
      %726 = vst [vmem:[#allocation2 + $0x68] sm:$0xff] %v694
      %727 = vst [vmem:[#allocation2 + $0x70] sm:$0xff] %v695
      %728 = vst [vmem:[#allocation2 + $0x78] sm:$0xff] %v696
      %729 = vst [vmem:[#allocation2 + $0x80] sm:$0xff] %v697
      %730 = vst [vmem:[#allocation2 + $0x88] sm:$0xff] %v698
      %731 = vst [vmem:[#allocation2 + $0x90] sm:$0xff] %v699
      %732 = vst [vmem:[#allocation2 + $0x98] sm:$0xff] %v700
      %733 = vst [vmem:[#allocation2 + $0xa0] sm:$0xff] %v701
      %734 = vst [vmem:[#allocation2 + $0xa8] sm:$0xff] %v702
      %735 = vst [vmem:[#allocation2 + $0xb0] sm:$0xff] %v703
      %736 = vst [vmem:[#allocation2 + $0xb8] sm:$0xff] %v704
      %737 = vst [vmem:[#allocation2 + $0xc0] sm:$0xff] %v705
      %738 = vst [vmem:[#allocation2 + $0xc8] sm:$0xff] %v706
      %739 = vst [vmem:[#allocation2 + $0xd0] sm:$0xff] %v707
      %740 = vst [vmem:[#allocation2 + $0xd8] sm:$0xff] %v708
      %741 = vst [vmem:[#allocation2 + $0xe0] sm:$0xff] %v709
      %742 = vst [vmem:[#allocation2 + $0xe8] sm:$0xff] %v710
      %743 = vst [vmem:[#allocation2 + $0xf0] sm:$0xff] %v711
      %744 = vst [vmem:[#allocation2 + $0xf8] sm:$0xff] %v712
      // Predicated region
      $region37: #{_lambda_.9} parent=31 // pred_check
        %p745 = pneg %p260
      $region38: #{_lambda_.9} parent=31 // pred_check_branch
        %747 = sbr.rel (%p745) target = $region40
      $region39: #{_lambda_.9} parent=31 // pred_region
        %v748 = vld [vmem:[#allocation2] sm:$0xff]
        %v749 = vld [vmem:[#allocation2 + $0x8] sm:$0xff]
        %v750 = vld [vmem:[#allocation2 + $0x10] sm:$0xff]
        %v751 = vld [vmem:[#allocation2 + $0x18] sm:$0xff]
        %v752 = vld [vmem:[#allocation2 + $0x20] sm:$0xff]
        %v753 = vld [vmem:[#allocation2 + $0x28] sm:$0xff]
        %v754 = vld [vmem:[#allocation2 + $0x30] sm:$0xff]
        %v755 = vld [vmem:[#allocation2 + $0x38] sm:$0xff]
        %v756 = vld [vmem:[#allocation2 + $0x40] sm:$0xff]
        %v757 = vld [vmem:[#allocation2 + $0x48] sm:$0xff]
        %v758 = vld [vmem:[#allocation2 + $0x50] sm:$0xff]
        %v759 = vld [vmem:[#allocation2 + $0x58] sm:$0xff]
        %v760 = vld [vmem:[#allocation2 + $0x60] sm:$0xff]
        %v761 = vld [vmem:[#allocation2 + $0x68] sm:$0xff]
        %v762 = vld [vmem:[#allocation2 + $0x70] sm:$0xff]
        %v763 = vld [vmem:[#allocation2 + $0x78] sm:$0xff]
        %v764 = vld [vmem:[#allocation2 + $0x80] sm:$0xff]
        %v765 = vld [vmem:[#allocation2 + $0x88] sm:$0xff]
        %v766 = vld [vmem:[#allocation2 + $0x90] sm:$0xff]
        %v767 = vld [vmem:[#allocation2 + $0x98] sm:$0xff]
        %v768 = vld [vmem:[#allocation2 + $0xa0] sm:$0xff]
        %v769 = vld [vmem:[#allocation2 + $0xa8] sm:$0xff]
        %v770 = vld [vmem:[#allocation2 + $0xb0] sm:$0xff]
        %v771 = vld [vmem:[#allocation2 + $0xb8] sm:$0xff]
        %v772 = vld [vmem:[#allocation2 + $0xc0] sm:$0xff]
        %v773 = vld [vmem:[#allocation2 + $0xc8] sm:$0xff]
        %v774 = vld [vmem:[#allocation2 + $0xd0] sm:$0xff]
        %v775 = vld [vmem:[#allocation2 + $0xd8] sm:$0xff]
        %v776 = vld [vmem:[#allocation2 + $0xe0] sm:$0xff]
        %v777 = vld [vmem:[#allocation2 + $0xe8] sm:$0xff]
        %v778 = vld [vmem:[#allocation2 + $0xf0] sm:$0xff]
        %v779 = vld [vmem:[#allocation2 + $0xf8] sm:$0xff]
        %v780 = vld [vmem:[%s249] sm:$0x1]
        %v782 = vlaneseq
        %v783 = vshrl.u32 %v782, 7
        %v784 = vsub.s32 0, %v783
        %v785 = vrot.slane %v780, %v784
        %v787 = vadd.f32 %v748, %v785
        %v788 = vadd.f32 %v749, %v785
        %v789 = vadd.f32 %v750, %v785
        %v790 = vadd.f32 %v751, %v785
        %v791 = vadd.f32 %v752, %v785
        %v792 = vadd.f32 %v753, %v785
        %v793 = vadd.f32 %v754, %v785
        %v794 = vadd.f32 %v755, %v785
        %v795 = vadd.f32 %v756, %v785
        %v796 = vadd.f32 %v757, %v785
        %v797 = vadd.f32 %v758, %v785
        %v798 = vadd.f32 %v759, %v785
        %v799 = vadd.f32 %v760, %v785
        %v800 = vadd.f32 %v761, %v785
        %v801 = vadd.f32 %v762, %v785
        %v802 = vadd.f32 %v763, %v785
        %v803 = vadd.f32 %v764, %v785
        %v804 = vadd.f32 %v765, %v785
        %v805 = vadd.f32 %v766, %v785
        %v806 = vadd.f32 %v767, %v785
        %v807 = vadd.f32 %v768, %v785
        %v808 = vadd.f32 %v769, %v785
        %v809 = vadd.f32 %v770, %v785
        %v810 = vadd.f32 %v771, %v785
        %v811 = vadd.f32 %v772, %v785
        %v812 = vadd.f32 %v773, %v785
        %v813 = vadd.f32 %v774, %v785
        %v814 = vadd.f32 %v775, %v785
        %v815 = vadd.f32 %v776, %v785
        %v816 = vadd.f32 %v777, %v785
        %v817 = vadd.f32 %v778, %v785
        %v818 = vadd.f32 %v779, %v785
        %v819 = vxor.u32 %v787, 2147483648
        %v820 = vxor.u32 %v788, 2147483648
        %v821 = vxor.u32 %v789, 2147483648
        %v822 = vxor.u32 %v790, 2147483648
        %v823 = vxor.u32 %v791, 2147483648
        %v824 = vxor.u32 %v792, 2147483648
        %v825 = vxor.u32 %v793, 2147483648
        %v826 = vxor.u32 %v794, 2147483648
        %v827 = vxor.u32 %v795, 2147483648
        %v828 = vxor.u32 %v796, 2147483648
        %v829 = vxor.u32 %v797, 2147483648
        %v830 = vxor.u32 %v798, 2147483648
        %v831 = vxor.u32 %v799, 2147483648
        %v832 = vxor.u32 %v800, 2147483648
        %v833 = vxor.u32 %v801, 2147483648
        %v834 = vxor.u32 %v802, 2147483648
        %v835 = vxor.u32 %v803, 2147483648
        %v836 = vxor.u32 %v804, 2147483648
        %v837 = vxor.u32 %v805, 2147483648
        %v838 = vxor.u32 %v806, 2147483648
        %v839 = vxor.u32 %v807, 2147483648
        %v840 = vxor.u32 %v808, 2147483648
        %v841 = vxor.u32 %v809, 2147483648
        %v842 = vxor.u32 %v810, 2147483648
        %v843 = vxor.u32 %v811, 2147483648
        %v844 = vxor.u32 %v812, 2147483648
        %v845 = vxor.u32 %v813, 2147483648
        %v846 = vxor.u32 %v814, 2147483648
        %v847 = vxor.u32 %v815, 2147483648
        %v848 = vxor.u32 %v816, 2147483648
        %v849 = vxor.u32 %v817, 2147483648
        %v850 = vxor.u32 %v818, 2147483648
        %v851 = vmul.f32 %v819, 1.442695
        %v852 = vpow.pop %v851
        %v853 = vmul.f32 %v820, 1.442695
        %v854 = vpow.pop %v853
        %v855 = vmul.f32 %v821, 1.442695
        %v856 = vpow.pop %v855
        %v857 = vmul.f32 %v822, 1.442695
        %v858 = vpow.pop %v857
        %v859 = vmul.f32 %v823, 1.442695
        %v860 = vpow.pop %v859
        %v861 = vmul.f32 %v824, 1.442695
        %v862 = vpow.pop %v861
        %v863 = vmul.f32 %v825, 1.442695
        %v864 = vpow.pop %v863
        %v865 = vmul.f32 %v826, 1.442695
        %v866 = vpow.pop %v865
        %v867 = vmul.f32 %v827, 1.442695
        %v868 = vpow.pop %v867
        %v869 = vmul.f32 %v828, 1.442695
        %v870 = vpow.pop %v869
        %v871 = vmul.f32 %v829, 1.442695
        %v872 = vpow.pop %v871
        %v873 = vmul.f32 %v830, 1.442695
        %v874 = vpow.pop %v873
        %v875 = vmul.f32 %v831, 1.442695
        %v876 = vpow.pop %v875
        %v877 = vmul.f32 %v832, 1.442695
        %v878 = vpow.pop %v877
        %v879 = vmul.f32 %v833, 1.442695
        %v880 = vpow.pop %v879
        %v881 = vmul.f32 %v834, 1.442695
        %v882 = vpow.pop %v881
        %v883 = vmul.f32 %v835, 1.442695
        %v884 = vpow.pop %v883
        %v885 = vmul.f32 %v836, 1.442695
        %v886 = vpow.pop %v885
        %v887 = vmul.f32 %v837, 1.442695
        %v888 = vpow.pop %v887
        %v889 = vmul.f32 %v838, 1.442695
        %v890 = vpow.pop %v889
        %v891 = vmul.f32 %v839, 1.442695
        %v892 = vpow.pop %v891
        %v893 = vmul.f32 %v840, 1.442695
        %v894 = vpow.pop %v893
        %v895 = vmul.f32 %v841, 1.442695
        %v896 = vpow.pop %v895
        %v897 = vmul.f32 %v842, 1.442695
        %v898 = vpow.pop %v897
        %v899 = vmul.f32 %v843, 1.442695
        %v900 = vpow.pop %v899
        %v901 = vmul.f32 %v844, 1.442695
        %v902 = vpow.pop %v901
        %v903 = vmul.f32 %v845, 1.442695
        %v904 = vpow.pop %v903
        %v905 = vmul.f32 %v846, 1.442695
        %v906 = vpow.pop %v905
        %v907 = vmul.f32 %v847, 1.442695
        %v908 = vpow.pop %v907
        %v909 = vmul.f32 %v848, 1.442695
        %v910 = vpow.pop %v909
        %v911 = vmul.f32 %v849, 1.442695
        %v912 = vpow.pop %v911
        %v913 = vmul.f32 %v850, 1.442695
        %v914 = vpow.pop %v913
        %v915 = vadd.f32 %v852, 1.0
        %v916 = vadd.f32 %v854, 1.0
        %v917 = vadd.f32 %v856, 1.0
        %v918 = vadd.f32 %v858, 1.0
        %v919 = vadd.f32 %v860, 1.0
        %v920 = vadd.f32 %v862, 1.0
        %v921 = vadd.f32 %v864, 1.0
        %v922 = vadd.f32 %v866, 1.0
        %v923 = vadd.f32 %v868, 1.0
        %v924 = vadd.f32 %v870, 1.0
        %v925 = vadd.f32 %v872, 1.0
        %v926 = vadd.f32 %v874, 1.0
        %v927 = vadd.f32 %v876, 1.0
        %v928 = vadd.f32 %v878, 1.0
        %v929 = vadd.f32 %v880, 1.0
        %v930 = vadd.f32 %v882, 1.0
        %v931 = vadd.f32 %v884, 1.0
        %v932 = vadd.f32 %v886, 1.0
        %v933 = vadd.f32 %v888, 1.0
        %v934 = vadd.f32 %v890, 1.0
        %v935 = vadd.f32 %v892, 1.0
        %v936 = vadd.f32 %v894, 1.0
        %v937 = vadd.f32 %v896, 1.0
        %v938 = vadd.f32 %v898, 1.0
        %v939 = vadd.f32 %v900, 1.0
        %v940 = vadd.f32 %v902, 1.0
        %v941 = vadd.f32 %v904, 1.0
        %v942 = vadd.f32 %v906, 1.0
        %v943 = vadd.f32 %v908, 1.0
        %v944 = vadd.f32 %v910, 1.0
        %v945 = vadd.f32 %v912, 1.0
        %v946 = vadd.f32 %v914, 1.0
        %v947 = vrcp.pop %v915
        %v948 = vmul.f32 1.0, %v947
        %v949 = vrcp.pop %v916
        %v950 = vmul.f32 1.0, %v949
        %v951 = vrcp.pop %v917
        %v952 = vmul.f32 1.0, %v951
        %v953 = vrcp.pop %v918
        %v954 = vmul.f32 1.0, %v953
        %v955 = vrcp.pop %v919
        %v956 = vmul.f32 1.0, %v955
        %v957 = vrcp.pop %v920
        %v958 = vmul.f32 1.0, %v957
        %v959 = vrcp.pop %v921
        %v960 = vmul.f32 1.0, %v959
        %v961 = vrcp.pop %v922
        %v962 = vmul.f32 1.0, %v961
        %v963 = vrcp.pop %v923
        %v964 = vmul.f32 1.0, %v963
        %v965 = vrcp.pop %v924
        %v966 = vmul.f32 1.0, %v965
        %v967 = vrcp.pop %v925
        %v968 = vmul.f32 1.0, %v967
        %v969 = vrcp.pop %v926
        %v970 = vmul.f32 1.0, %v969
        %v971 = vrcp.pop %v927
        %v972 = vmul.f32 1.0, %v971
        %v973 = vrcp.pop %v928
        %v974 = vmul.f32 1.0, %v973
        %v975 = vrcp.pop %v929
        %v976 = vmul.f32 1.0, %v975
        %v977 = vrcp.pop %v930
        %v978 = vmul.f32 1.0, %v977
        %v979 = vrcp.pop %v931
        %v980 = vmul.f32 1.0, %v979
        %v981 = vrcp.pop %v932
        %v982 = vmul.f32 1.0, %v981
        %v983 = vrcp.pop %v933
        %v984 = vmul.f32 1.0, %v983
        %v985 = vrcp.pop %v934
        %v986 = vmul.f32 1.0, %v985
        %v987 = vrcp.pop %v935
        %v988 = vmul.f32 1.0, %v987
        %v989 = vrcp.pop %v936
        %v990 = vmul.f32 1.0, %v989
        %v991 = vrcp.pop %v937
        %v992 = vmul.f32 1.0, %v991
        %v993 = vrcp.pop %v938
        %v994 = vmul.f32 1.0, %v993
        %v995 = vrcp.pop %v939
        %v996 = vmul.f32 1.0, %v995
        %v997 = vrcp.pop %v940
        %v998 = vmul.f32 1.0, %v997
        %v999 = vrcp.pop %v941
        %v1000 = vmul.f32 1.0, %v999
        %v1001 = vrcp.pop %v942
        %v1002 = vmul.f32 1.0, %v1001
        %v1003 = vrcp.pop %v943
        %v1004 = vmul.f32 1.0, %v1003
        %v1005 = vrcp.pop %v944
        %v1006 = vmul.f32 1.0, %v1005
        %v1007 = vrcp.pop %v945
        %v1008 = vmul.f32 1.0, %v1007
        %v1009 = vrcp.pop %v946
        %v1010 = vmul.f32 1.0, %v1009
        %1011 = vst [vmem:[%s257] sm:$0xff] %v948
        %1012 = vst [vmem:[%s257 + $0x8] sm:$0xff] %v950
        %1013 = vst [vmem:[%s257 + $0x10] sm:$0xff] %v952
        %1014 = vst [vmem:[%s257 + $0x18] sm:$0xff] %v954
        %1015 = vst [vmem:[%s257 + $0x20] sm:$0xff] %v956
        %1016 = vst [vmem:[%s257 + $0x28] sm:$0xff] %v958
        %1017 = vst [vmem:[%s257 + $0x30] sm:$0xff] %v960
        %1018 = vst [vmem:[%s257 + $0x38] sm:$0xff] %v962
        %1019 = vst [vmem:[%s257 + $0x40] sm:$0xff] %v964
        %1020 = vst [vmem:[%s257 + $0x48] sm:$0xff] %v966
        %1021 = vst [vmem:[%s257 + $0x50] sm:$0xff] %v968
        %1022 = vst [vmem:[%s257 + $0x58] sm:$0xff] %v970
        %1023 = vst [vmem:[%s257 + $0x60] sm:$0xff] %v972
        %1024 = vst [vmem:[%s257 + $0x68] sm:$0xff] %v974
        %1025 = vst [vmem:[%s257 + $0x70] sm:$0xff] %v976
        %1026 = vst [vmem:[%s257 + $0x78] sm:$0xff] %v978
        %1027 = vst [vmem:[%s257 + $0x80] sm:$0xff] %v980
        %1028 = vst [vmem:[%s257 + $0x88] sm:$0xff] %v982
        %1029 = vst [vmem:[%s257 + $0x90] sm:$0xff] %v984
        %1030 = vst [vmem:[%s257 + $0x98] sm:$0xff] %v986
        %1031 = vst [vmem:[%s257 + $0xa0] sm:$0xff] %v988
        %1032 = vst [vmem:[%s257 + $0xa8] sm:$0xff] %v990
        %1033 = vst [vmem:[%s257 + $0xb0] sm:$0xff] %v992
        %1034 = vst [vmem:[%s257 + $0xb8] sm:$0xff] %v994
        %1035 = vst [vmem:[%s257 + $0xc0] sm:$0xff] %v996
        %1036 = vst [vmem:[%s257 + $0xc8] sm:$0xff] %v998
        %1037 = vst [vmem:[%s257 + $0xd0] sm:$0xff] %v1000
        %1038 = vst [vmem:[%s257 + $0xd8] sm:$0xff] %v1002
        %1039 = vst [vmem:[%s257 + $0xe0] sm:$0xff] %v1004
        %1040 = vst [vmem:[%s257 + $0xe8] sm:$0xff] %v1006
        %1041 = vst [vmem:[%s257 + $0xf0] sm:$0xff] %v1008
        %1042 = vst [vmem:[%s257 + $0xf8] sm:$0xff] %v1010
      $region40: #{_lambda_.9} parent=31 // pred_fallthru
        _
      %s1043 = smul.u32 32, %s19
      %p1044 = scmp.lt.s32.totalorder %s1043, 63
      %s1045 = scalar_select %p1044, %s1043, 63
      %p1046 = scmp.lt.s32.totalorder %s20, 0
      %s1047 = scalar_select %p1046, %s20, 0
      %s1048 = sadd.s32 %s1047, %s1045
      %s1049 = smul.addr %s1048, 8
      %s1050 = scalar_lea.vmem %s3, %s1049
      // Predicated region
      $region41: #{_lambda_.9} parent=31 // pred_check
        %p1051 = pneg %p135
      $region42: #{_lambda_.9} parent=31 // pred_check_branch
        %1053 = sbr.rel (%p1051) target = $region44
      $region43: #{_lambda_.9} parent=31 // pred_region
        %s1054 = smul.u32 32, %s19
      $region44: #{_lambda_.9} parent=31 // pred_fallthru
        _
    $region32: #{_lambda_.9} parent=5 // pred_fallthru
      _
    %p1055 = scmp.le.s32.totalorder 2, %s9
    // Predicated region
    $region45: #{_lambda_.9} parent=5 // pred_check
      %p1056 = pneg %p1055
    $region46: #{_lambda_.9} parent=5 // pred_check_branch
      %1058 = sbr.rel (%p1056) target = $region48
    $region47: #{_lambda_.9} parent=5 // pred_region
      %s1059 = ssub.s32 %s9, 2
      // Predicated region
      $region49: #{_lambda_.9} parent=47 // pred_check
        %p1060 = pneg %p141
      $region50: #{_lambda_.9} parent=47 // pred_check_branch
        %1062 = sbr.rel (%p1060) target = $region52
      $region51: #{_lambda_.9} parent=47 // pred_region
        %s1063 = smul.u32 32, %s22
        %p1064 = scmp.lt.s32.totalorder %s1063, 63
        %s1065 = scalar_select %p1064, %s1063, 63
        %p1066 = scmp.lt.s32.totalorder %s23, 0
        %s1067 = scalar_select %p1066, %s23, 0
        %s1068 = sadd.s32 %s1067, %s1065
        %s1069 = smul.addr %s1068, 8
        %s1070 = scalar_lea.vmem %s3, %s1069
      $region52: #{_lambda_.9} parent=47 // pred_fallthru
        _
    $region48: #{_lambda_.9} parent=5 // pred_fallthru
      _
  $region6: #{_lambda_.9} parent=0 // loop_footer
    %s13 = sadd.s32 1, %s9
  $region7: #{_lambda_.9} parent=0 // loop_footer_branch
    %8 = sbr.rel target = $region3
  $region8: #{_lambda_.9} parent=0 // loop_exit
    _

// kernel: _lambda_.7
$region0: #{_lambda_.7}
  #allocation0 [shape = 'u32[]', space=smem, size = 0x4, offset = 0x4, fixed_abs, tag = 'smem constant byte address 0x4 - core index']
  #allocation1 [shape = 'u32[144,128]{1,0:T(1,128)}', space=vmem, size = 0x12000, scoped, tag = 'internal scratch']
  #allocation2 [shape = 'f32[256,256]{1,0:T(8,128)}', space=vmem, size = 0x40000, scoped, tag = 'scratch operand']
  %s0 = inlined_call_operand.vmem [shape: bf16[512,2304], index: 0, kind: input, shape index: {}]
  %s1 = inlined_call_operand.vmem [shape: bf16[2304,256], index: 1, kind: input, shape index: {}]
  %s2 = inlined_call_operand.vmem [shape: f32[1,256], index: 2, kind: input, shape index: {}]
  %s3 = inlined_call_operand.vmem [shape: f32[512,256], index: 3, kind: output, shape index: {}]
  %s4 = sld [smem:[#allocation0]]
  $region91: #{_lambda_.7} parent=0
    _
  %s6 = ssub.s32 1, %s4
  %s7 = scalar_select 0, %s6, %s4
  $region1: #{_lambda_.7} parent=0
    #allocation3 [shape = 'u8[262144]{0}', space=vmem, size = 0x40000, scoped, tag = 'input window, operand 0']
    loop: start=0, step=1, limit=20
    $region2: #{_lambda_.7} parent=1 // loop_pre_header
      _
    $region3: #{_lambda_.7} parent=1 // loop_header
      %s9 = sphi 0, %s13
      %p10 = scmp.ge.s32.totalorder %s9, 20
      %s16 = sphi 0, %s35
      %s17 = sphi 0, %s31
      %s18 = sphi 0, %s27
      %s19 = sphi 0, %s16
      %s20 = sphi 0, %s17
      %s21 = sphi 0, %s18
      %s22 = sphi 0, %s19
      %s23 = sphi 0, %s20
      %s24 = sphi 0, %s21
      %s40 = sphi 0, %s42
      %s43 = sphi 0, %s40
      %s44 = sphi 0, %s43
      %s60 = sphi 0, %s44
      %s68 = sphi 0, %s70
      %s71 = sphi 0, %s68
      %s72 = sphi 0, %s71
      %s88 = sphi 0, %s72
      %s94 = sphi 0, %s96
      %s97 = sphi 0, %s94
      %s98 = sphi 0, %s97
      %s114 = sphi 0, %s98
      %s122 = sphi 0, %s124
      %s125 = sphi 0, %s122
      %s126 = sphi 0, %s125
      %s142 = sphi 0, %s126
    $region4: #{_lambda_.7} parent=1 // loop_header_branch
      %12 = sbr.rel (%p10) target = $region8
    $region5: #{_lambda_.7} parent=1 // loop_body
      %s14 = ssub.s32 %s9, 1
      %s15 = ssub.s32 %s9, 2
      %s25 = sadd.s32 1, %s18
      %p26 = scmp.ge.s32.totalorder %s25, 9
      %s27 = scalar_select %p26, 0, %s25
      %s28 = sadd.s32 1, %s17
      %s29 = scalar_select %p26, %s28, %s17
      %p30 = scmp.ge.s32.totalorder %s29, 1
      %s31 = scalar_select %p30, 0, %s29
      %s32 = sadd.s32 1, %s16
      %s33 = scalar_select %p30, %s32, %s16
      %p34 = scmp.ge.s32.totalorder %s33, 2
      %s35 = scalar_select %p34, 0, %s33
      %s36 = ssub.s32 %s16, %s35
      %s37 = ssub.s32 %s18, %s27
      %s38 = sor.u32 %s36, %s37
      %p39 = scmp.eq.s32.totalorder %s38, 0
      %s41 = sadd.s32 %s40, 1
      %s42 = scalar_select %p39, %s40, %s41
      %p45 = pneg %p39
      %p46 = scmp.eq.s32.totalorder %s9, 17
      %p47 = por %p45, %p46
      %p48 = scmp.ne.s32.totalorder %s40, %s43
      %p49 = scmp.eq.s32.totalorder %s9, 0
      %p50 = por %p48, %p49
      %p51 = scmp.ne.s32.totalorder %s40, %s43
      %p52 = scmp.eq.s32.totalorder %s14, 17
      %p53 = por %p51, %p52
      %p54 = scmp.ne.s32.totalorder %s43, %s44
      %p55 = scmp.eq.s32.totalorder %s14, 0
      %p56 = por %p54, %p55
      %p57 = scmp.ne.s32.totalorder %s43, %s44
      %p58 = scmp.eq.s32.totalorder %s15, 17
      %p59 = por %p57, %p58
      %p61 = scmp.ne.s32.totalorder %s44, %s60
      %p62 = scmp.eq.s32.totalorder %s15, 0
      %p63 = por %p61, %p62
      %s64 = ssub.s32 %s18, %s27
      %s65 = ssub.s32 %s17, %s31
      %s66 = sor.u32 %s64, %s65
      %p67 = scmp.eq.s32.totalorder %s66, 0
      %s69 = sadd.s32 %s68, 1
      %s70 = scalar_select %p67, %s68, %s69
      %p73 = pneg %p67
      %p74 = scmp.eq.s32.totalorder %s9, 17
      %p75 = por %p73, %p74
      %p76 = scmp.ne.s32.totalorder %s68, %s71
      %p77 = scmp.eq.s32.totalorder %s9, 0
      %p78 = por %p76, %p77
      %p79 = scmp.ne.s32.totalorder %s68, %s71
      %p80 = scmp.eq.s32.totalorder %s14, 17
      %p81 = por %p79, %p80
      %p82 = scmp.ne.s32.totalorder %s71, %s72
      %p83 = scmp.eq.s32.totalorder %s14, 0
      %p84 = por %p82, %p83
      %p85 = scmp.ne.s32.totalorder %s71, %s72
      %p86 = scmp.eq.s32.totalorder %s15, 17
      %p87 = por %p85, %p86
      %p89 = scmp.ne.s32.totalorder %s72, %s88
      %p90 = scmp.eq.s32.totalorder %s15, 0
      %p91 = por %p89, %p90
      %s92 = ssub.s32 %s17, %s31
      %p93 = scmp.eq.s32.totalorder %s92, 0
      %s95 = sadd.s32 %s94, 1
      %s96 = scalar_select %p93, %s94, %s95
      %p99 = pneg %p93
      %p100 = scmp.eq.s32.totalorder %s9, 17
      %p101 = por %p99, %p100
      %p102 = scmp.ne.s32.totalorder %s94, %s97
      %p103 = scmp.eq.s32.totalorder %s9, 0
      %p104 = por %p102, %p103
      %p105 = scmp.ne.s32.totalorder %s94, %s97
      %p106 = scmp.eq.s32.totalorder %s14, 17
      %p107 = por %p105, %p106
      %p108 = scmp.ne.s32.totalorder %s97, %s98
      %p109 = scmp.eq.s32.totalorder %s14, 0
      %p110 = por %p108, %p109
      %p111 = scmp.ne.s32.totalorder %s97, %s98
      %p112 = scmp.eq.s32.totalorder %s15, 17
      %p113 = por %p111, %p112
      %p115 = scmp.ne.s32.totalorder %s98, %s114
      %p116 = scmp.eq.s32.totalorder %s15, 0
      %p117 = por %p115, %p116
      %s118 = ssub.s32 %s16, %s35
      %s119 = ssub.s32 %s17, %s31
      %s120 = sor.u32 %s118, %s119
      %p121 = scmp.eq.s32.totalorder %s120, 0
      %s123 = sadd.s32 %s122, 1
      %s124 = scalar_select %p121, %s122, %s123
      %p127 = pneg %p121
      %p128 = scmp.eq.s32.totalorder %s9, 17
      %p129 = por %p127, %p128
      %p130 = scmp.ne.s32.totalorder %s122, %s125
      %p131 = scmp.eq.s32.totalorder %s9, 0
      %p132 = por %p130, %p131
      %p133 = scmp.ne.s32.totalorder %s122, %s125
      %p134 = scmp.eq.s32.totalorder %s14, 17
      %p135 = por %p133, %p134
      %p136 = scmp.ne.s32.totalorder %s125, %s126
      %p137 = scmp.eq.s32.totalorder %s14, 0
      %p138 = por %p136, %p137
      %p139 = scmp.ne.s32.totalorder %s125, %s126
      %p140 = scmp.eq.s32.totalorder %s15, 17
      %p141 = por %p139, %p140
      %p143 = scmp.ne.s32.totalorder %s126, %s142
      %p144 = scmp.eq.s32.totalorder %s15, 0
      %p145 = por %p143, %p144
      %p146 = scmp.le.s32.totalorder 1, %s9
      %p147 = scmp.lt.s32.totalorder %s9, 19
      %p148 = pnand %p146, %p147
      %p149 = pneg %p148
      // Predicated region
      $region9: #{_lambda_.7} parent=5 // pred_check
        _
      $region10: #{_lambda_.7} parent=5 // pred_check_branch
        %151 = sbr.rel (%p148) target = $region12
      $region11: #{_lambda_.7} parent=5 // pred_region
        %s152 = ssub.s32 %s9, 1
        // Predicated region
        $region13: #{_lambda_.7} parent=11 // pred_check
          %p153 = pneg %p110
        $region14: #{_lambda_.7} parent=11 // pred_check_branch
          %155 = sbr.rel (%p153) target = $region16
        $region15: #{_lambda_.7} parent=11 // pred_region
          %s156 = smul.u32 2, %s20
          %p157 = scmp.lt.s32.totalorder %s156, 1
          %s158 = scalar_select %p157, %s156, 1
          %s159 = scalar_lea.vmem %s2, %s158
          %s160 = smul.u32 2, %s20
        $region16: #{_lambda_.7} parent=11 // pred_fallthru
          _
      $region12: #{_lambda_.7} parent=5 // pred_fallthru
        _
      %p161 = scmp.lt.s32.totalorder %s9, 18
      // Predicated region
      $region17: #{_lambda_.7} parent=5 // pred_check
        %p162 = pneg %p161
      $region18: #{_lambda_.7} parent=5 // pred_check_branch
        %164 = sbr.rel (%p162) target = $region20
      $region19: #{_lambda_.7} parent=5 // pred_region
        // Predicated region
        $region21: #{_lambda_.7} parent=19 // pred_check
          %p165 = pneg %p50
        $region22: #{_lambda_.7} parent=19 // pred_check_branch
          %167 = sbr.rel (%p165) target = $region24
        $region23: #{_lambda_.7} parent=19 // pred_region
          %s168 = sand.u32 %s40, 1
          %s169 = sand.u32 %s40, 1
          %s170 = smul.addr %s169, 256
          %s171 = scalar_lea.vmem [#allocation3], %s170
          %s172 = smul.u32 32, %s16
          %s173 = smul.u32 2, %s18
          %s174 = smul.addr %s172, 18
          %s175 = sadd.s32 %s173, %s174
          %s176 = smul.addr %s175, 4
          %s177 = scalar_lea.vmem %s0, %s176
          // Predicated region
          $region25: #{_lambda_.7} parent=23 // pred_check
            _
          $region26: #{_lambda_.7} parent=23 // pred_check_branch
            %179 = sbr.rel (0) target = $region28
          $region27: #{_lambda_.7} parent=23 // pred_region
            // Predicated region
            $region29: #{_lambda_.7} parent=27 // pred_check
              _
            $region30: #{_lambda_.7} parent=27 // pred_check_branch
              %181 = sbr.rel (0) target = $region32
            $region31: #{_lambda_.7} parent=27 // pred_region
              // Predicated region
              $region44: #{_lambda_.7} parent=31 // pred_check
                _
              $region45: #{_lambda_.7} parent=31 // pred_check_branch
                %258 = sbr.rel (0) target = $region47
              $region46: #{_lambda_.7} parent=31 // pred_region
                loop: start=0, step=1, limit=1
                $region48: #{_lambda_.7} parent=46 // loop_pre_header
                  _
                $region49: #{_lambda_.7} parent=46 // loop_header
                  %s260 = sphi 0, %s264
                  %p261 = scmp.ge.s32.totalorder %s260, 1
                  %s265 = sphi %s177, %s177
                  %s266 = sphi %s171, %s171
                $region50: #{_lambda_.7} parent=46 // loop_header_branch
                  %263 = sbr.rel (%p261) target = $region54
                $region51: #{_lambda_.7} parent=46 // loop_body
                  %v267 = vld [vmem:[%s265] sm:$0xff]
                  %268 = vst [vmem:[%s266] sm:$0xff] %v267
                  %v269 = vld [vmem:[%s265 + $0x48] sm:$0xff]
                  %270 = vst [vmem:[%s266 + $0x8] sm:$0xff] %v269
                  %v271 = vld [vmem:[%s265 + $0x90] sm:$0xff]
                  %272 = vst [vmem:[%s266 + $0x10] sm:$0xff] %v271
                  %v273 = vld [vmem:[%s265 + $0xd8] sm:$0xff]
                  %274 = vst [vmem:[%s266 + $0x18] sm:$0xff] %v273
                  %v275 = vld [vmem:[%s265 + $0x120] sm:$0xff]
                  %276 = vst [vmem:[%s266 + $0x20] sm:$0xff] %v275
                  %v277 = vld [vmem:[%s265 + $0x168] sm:$0xff]
                  %278 = vst [vmem:[%s266 + $0x28] sm:$0xff] %v277
                  %v279 = vld [vmem:[%s265 + $0x1b0] sm:$0xff]
                  %280 = vst [vmem:[%s266 + $0x30] sm:$0xff] %v279
                  %v281 = vld [vmem:[%s265 + $0x1f8] sm:$0xff]
                  %282 = vst [vmem:[%s266 + $0x38] sm:$0xff] %v281
                  %v283 = vld [vmem:[%s265 + $0x240] sm:$0xff]
                  %284 = vst [vmem:[%s266 + $0x40] sm:$0xff] %v283
                  %v285 = vld [vmem:[%s265 + $0x288] sm:$0xff]
                  %286 = vst [vmem:[%s266 + $0x48] sm:$0xff] %v285
                  %v287 = vld [vmem:[%s265 + $0x2d0] sm:$0xff]
                  %288 = vst [vmem:[%s266 + $0x50] sm:$0xff] %v287
                  %v289 = vld [vmem:[%s265 + $0x318] sm:$0xff]
                  %290 = vst [vmem:[%s266 + $0x58] sm:$0xff] %v289
                  %v291 = vld [vmem:[%s265 + $0x360] sm:$0xff]
                  %292 = vst [vmem:[%s266 + $0x60] sm:$0xff] %v291
                  %v293 = vld [vmem:[%s265 + $0x3a8] sm:$0xff]
                  %294 = vst [vmem:[%s266 + $0x68] sm:$0xff] %v293
                  %v295 = vld [vmem:[%s265 + $0x3f0] sm:$0xff]
                  %296 = vst [vmem:[%s266 + $0x70] sm:$0xff] %v295
                  %v297 = vld [vmem:[%s265 + $0x438] sm:$0xff]
                  %298 = vst [vmem:[%s266 + $0x78] sm:$0xff] %v297
                  %v299 = vld [vmem:[%s265 + $0x480] sm:$0xff]
                  %300 = vst [vmem:[%s266 + $0x80] sm:$0xff] %v299
                  %v301 = vld [vmem:[%s265 + $0x4c8] sm:$0xff]
                  %302 = vst [vmem:[%s266 + $0x88] sm:$0xff] %v301
                  %v303 = vld [vmem:[%s265 + $0x510] sm:$0xff]
                  %304 = vst [vmem:[%s266 + $0x90] sm:$0xff] %v303
                  %v305 = vld [vmem:[%s265 + $0x558] sm:$0xff]
                  %306 = vst [vmem:[%s266 + $0x98] sm:$0xff] %v305
                  %v307 = vld [vmem:[%s265 + $0x5a0] sm:$0xff]
                  %308 = vst [vmem:[%s266 + $0xa0] sm:$0xff] %v307
                  %v309 = vld [vmem:[%s265 + $0x5e8] sm:$0xff]
                  %310 = vst [vmem:[%s266 + $0xa8] sm:$0xff] %v309
                  %v311 = vld [vmem:[%s265 + $0x630] sm:$0xff]
                  %312 = vst [vmem:[%s266 + $0xb0] sm:$0xff] %v311
                  %v313 = vld [vmem:[%s265 + $0x678] sm:$0xff]
                  %314 = vst [vmem:[%s266 + $0xb8] sm:$0xff] %v313
                  %v315 = vld [vmem:[%s265 + $0x6c0] sm:$0xff]
                  %316 = vst [vmem:[%s266 + $0xc0] sm:$0xff] %v315
                  %v317 = vld [vmem:[%s265 + $0x708] sm:$0xff]
                  %318 = vst [vmem:[%s266 + $0xc8] sm:$0xff] %v317
                  %v319 = vld [vmem:[%s265 + $0x750] sm:$0xff]
                  %320 = vst [vmem:[%s266 + $0xd0] sm:$0xff] %v319
                  %v321 = vld [vmem:[%s265 + $0x798] sm:$0xff]
                  %322 = vst [vmem:[%s266 + $0xd8] sm:$0xff] %v321
                  %v323 = vld [vmem:[%s265 + $0x7e0] sm:$0xff]
                  %324 = vst [vmem:[%s266 + $0xe0] sm:$0xff] %v323
                  %v325 = vld [vmem:[%s265 + $0x828] sm:$0xff]
                  %326 = vst [vmem:[%s266 + $0xe8] sm:$0xff] %v325
                  %v327 = vld [vmem:[%s265 + $0x870] sm:$0xff]
                  %328 = vst [vmem:[%s266 + $0xf0] sm:$0xff] %v327
                  %v329 = vld [vmem:[%s265 + $0x8b8] sm:$0xff]
                  %330 = vst [vmem:[%s266 + $0xf8] sm:$0xff] %v329
                $region52: #{_lambda_.7} parent=46 // loop_footer
                  %s264 = sadd.s32 1, %s260
                $region53: #{_lambda_.7} parent=46 // loop_footer_branch
                  %259 = sbr.rel target = $region49
                $region54: #{_lambda_.7} parent=46 // loop_exit
                  _
              $region47: #{_lambda_.7} parent=31 // pred_fallthru
                _
              // Predicated region
              $region55: #{_lambda_.7} parent=31 // pred_check
                _
              $region56: #{_lambda_.7} parent=31 // pred_check_branch
                %332 = sbr.rel target = $region58
              $region57: #{_lambda_.7} parent=31 // pred_region
                _
              $region58: #{_lambda_.7} parent=31 // pred_fallthru
                _
            $region32: #{_lambda_.7} parent=27 // pred_fallthru
              _
            // Predicated region
            $region33: #{_lambda_.7} parent=27 // pred_check
              _
            $region34: #{_lambda_.7} parent=27 // pred_check_branch
              %183 = sbr.rel target = $region36
            $region35: #{_lambda_.7} parent=27 // pred_region
              loop: start=0, step=1, limit=1
              $region37: #{_lambda_.7} parent=35 // loop_pre_header
                _
              $region38: #{_lambda_.7} parent=35 // loop_header
                %s186 = sphi 0, %s190
                %p187 = scmp.ge.s32.totalorder %s186, 1
                %s191 = sphi %s177, %s177
                %s192 = sphi %s171, %s171
              $region39: #{_lambda_.7} parent=35 // loop_header_branch
                %189 = sbr.rel (%p187) target = $region43
              $region40: #{_lambda_.7} parent=35 // loop_body
                %v193 = vld [vmem:[%s191] sm:$0xff]
                %194 = vst [vmem:[%s192] sm:$0xff] %v193
                %v195 = vld [vmem:[%s191 + $0x48] sm:$0xff]
                %196 = vst [vmem:[%s192 + $0x8] sm:$0xff] %v195
                %v197 = vld [vmem:[%s191 + $0x90] sm:$0xff]
                %198 = vst [vmem:[%s192 + $0x10] sm:$0xff] %v197
                %v199 = vld [vmem:[%s191 + $0xd8] sm:$0xff]
                %200 = vst [vmem:[%s192 + $0x18] sm:$0xff] %v199
                %v201 = vld [vmem:[%s191 + $0x120] sm:$0xff]
                %202 = vst [vmem:[%s192 + $0x20] sm:$0xff] %v201
                %v203 = vld [vmem:[%s191 + $0x168] sm:$0xff]
                %204 = vst [vmem:[%s192 + $0x28] sm:$0xff] %v203
                %v205 = vld [vmem:[%s191 + $0x1b0] sm:$0xff]
                %206 = vst [vmem:[%s192 + $0x30] sm:$0xff] %v205
                %v207 = vld [vmem:[%s191 + $0x1f8] sm:$0xff]
                %208 = vst [vmem:[%s192 + $0x38] sm:$0xff] %v207
                %v209 = vld [vmem:[%s191 + $0x240] sm:$0xff]
                %210 = vst [vmem:[%s192 + $0x40] sm:$0xff] %v209
                %v211 = vld [vmem:[%s191 + $0x288] sm:$0xff]
                %212 = vst [vmem:[%s192 + $0x48] sm:$0xff] %v211
                %v213 = vld [vmem:[%s191 + $0x2d0] sm:$0xff]
                %214 = vst [vmem:[%s192 + $0x50] sm:$0xff] %v213
                %v215 = vld [vmem:[%s191 + $0x318] sm:$0xff]
                %216 = vst [vmem:[%s192 + $0x58] sm:$0xff] %v215
                %v217 = vld [vmem:[%s191 + $0x360] sm:$0xff]
                %218 = vst [vmem:[%s192 + $0x60] sm:$0xff] %v217
                %v219 = vld [vmem:[%s191 + $0x3a8] sm:$0xff]
                %220 = vst [vmem:[%s192 + $0x68] sm:$0xff] %v219
                %v221 = vld [vmem:[%s191 + $0x3f0] sm:$0xff]
                %222 = vst [vmem:[%s192 + $0x70] sm:$0xff] %v221
                %v223 = vld [vmem:[%s191 + $0x438] sm:$0xff]
                %224 = vst [vmem:[%s192 + $0x78] sm:$0xff] %v223
                %v225 = vld [vmem:[%s191 + $0x480] sm:$0xff]
                %226 = vst [vmem:[%s192 + $0x80] sm:$0xff] %v225
                %v227 = vld [vmem:[%s191 + $0x4c8] sm:$0xff]
                %228 = vst [vmem:[%s192 + $0x88] sm:$0xff] %v227
                %v229 = vld [vmem:[%s191 + $0x510] sm:$0xff]
                %230 = vst [vmem:[%s192 + $0x90] sm:$0xff] %v229
                %v231 = vld [vmem:[%s191 + $0x558] sm:$0xff]
                %232 = vst [vmem:[%s192 + $0x98] sm:$0xff] %v231
                %v233 = vld [vmem:[%s191 + $0x5a0] sm:$0xff]
                %234 = vst [vmem:[%s192 + $0xa0] sm:$0xff] %v233
                %v235 = vld [vmem:[%s191 + $0x5e8] sm:$0xff]
                %236 = vst [vmem:[%s192 + $0xa8] sm:$0xff] %v235
                %v237 = vld [vmem:[%s191 + $0x630] sm:$0xff]
                %238 = vst [vmem:[%s192 + $0xb0] sm:$0xff] %v237
                %v239 = vld [vmem:[%s191 + $0x678] sm:$0xff]
                %240 = vst [vmem:[%s192 + $0xb8] sm:$0xff] %v239
                %v241 = vld [vmem:[%s191 + $0x6c0] sm:$0xff]
                %242 = vst [vmem:[%s192 + $0xc0] sm:$0xff] %v241
                %v243 = vld [vmem:[%s191 + $0x708] sm:$0xff]
                %244 = vst [vmem:[%s192 + $0xc8] sm:$0xff] %v243
                %v245 = vld [vmem:[%s191 + $0x750] sm:$0xff]
                %246 = vst [vmem:[%s192 + $0xd0] sm:$0xff] %v245
                %v247 = vld [vmem:[%s191 + $0x798] sm:$0xff]
                %248 = vst [vmem:[%s192 + $0xd8] sm:$0xff] %v247
                %v249 = vld [vmem:[%s191 + $0x7e0] sm:$0xff]
                %250 = vst [vmem:[%s192 + $0xe0] sm:$0xff] %v249
                %v251 = vld [vmem:[%s191 + $0x828] sm:$0xff]
                %252 = vst [vmem:[%s192 + $0xe8] sm:$0xff] %v251
                %v253 = vld [vmem:[%s191 + $0x870] sm:$0xff]
                %254 = vst [vmem:[%s192 + $0xf0] sm:$0xff] %v253
                %v255 = vld [vmem:[%s191 + $0x8b8] sm:$0xff]
                %256 = vst [vmem:[%s192 + $0xf8] sm:$0xff] %v255
              $region41: #{_lambda_.7} parent=35 // loop_footer
                %s190 = sadd.s32 1, %s186
              $region42: #{_lambda_.7} parent=35 // loop_footer_branch
                %185 = sbr.rel target = $region38
              $region43: #{_lambda_.7} parent=35 // loop_exit
                _
            $region36: #{_lambda_.7} parent=27 // pred_fallthru
              _
          $region28: #{_lambda_.7} parent=23 // pred_fallthru
            _
          %333 = vnop
        $region24: #{_lambda_.7} parent=19 // pred_fallthru
          _
        // Predicated region
        $region59: #{_lambda_.7} parent=19 // pred_check
          %p334 = pneg %p78
        $region60: #{_lambda_.7} parent=19 // pred_check_branch
          %336 = sbr.rel (%p334) target = $region62
        $region61: #{_lambda_.7} parent=19 // pred_region
          %s337 = smul.u32 32, %s18
          %s338 = smul.u32 2, %s17
          %p339 = scmp.lt.s32.totalorder %s337, 287
          %s340 = scalar_select %p339, %s337, 287
          %p341 = scmp.lt.s32.totalorder %s338, 1
          %s342 = scalar_select %p341, %s338, 1
          %s343 = smul.addr %s340, 2
          %s344 = sadd.s32 %s342, %s343
          %s345 = smul.addr %s344, 4
          %s346 = scalar_lea.vmem %s1, %s345
          %s347 = smul.u32 32, %s18
          %s348 = smul.u32 2, %s17
        $region62: #{_lambda_.7} parent=19 // pred_fallthru
          _
      $region20: #{_lambda_.7} parent=5 // pred_fallthru
        _
      %p349 = scmp.le.s32.totalorder 1, %s9
      %p350 = scmp.lt.s32.totalorder %s9, 19
      %p351 = pnand %p349, %p350
      %p352 = pneg %p351
      // Predicated region
      $region63: #{_lambda_.7} parent=5 // pred_check
        _
      $region64: #{_lambda_.7} parent=5 // pred_check_branch
        %354 = sbr.rel (%p351) target = $region66
      $region65: #{_lambda_.7} parent=5 // pred_region
        %s355 = ssub.s32 %s9, 1
        %s356 = sand.u32 %s43, 1
        %s357 = sand.u32 %s43, 1
        %s358 = smul.addr %s357, 256
        %s359 = scalar_lea.vmem [#allocation3], %s358
        // Predicated region
        $region67: #{_lambda_.7} parent=65 // pred_check
          %p360 = pneg %p56
        $region68: #{_lambda_.7} parent=65 // pred_check_branch
          %362 = sbr.rel (%p360) target = $region70
        $region69: #{_lambda_.7} parent=65 // pred_region
          _
        $region70: #{_lambda_.7} parent=65 // pred_fallthru
          _
        %s363 = sand.u32 %s43, 1
        %s364 = sand.u32 %s43, 1
        %s365 = smul.addr %s364, 256
        %s366 = scalar_lea.vmem [#allocation3], %s365
        %p367 = pneg %p56
        %p368 = pneg %p53
        %s369 = smul.u32 32, %s21
        %s370 = smul.u32 2, %s20
        %p371 = scmp.lt.s32.totalorder %s369, 287
        %s372 = scalar_select %p371, %s369, 287
        %p373 = scmp.lt.s32.totalorder %s370, 1
        %s374 = scalar_select %p373, %s370, 1
        %s375 = smul.addr %s372, 2
        %s376 = sadd.s32 %s374, %s375
        %s377 = smul.addr %s376, 4
        %s378 = scalar_lea.vmem %s1, %s377
        %p379 = pneg %p84
        %p380 = pneg %p81
        %s381 = smul.u32 2, %s20
        %p382 = scmp.lt.s32.totalorder %s381, 1
        %s383 = scalar_select %p382, %s381, 1
        %s384 = scalar_lea.vmem %s2, %s383
        %p385 = pneg %p110
        %p386 = pneg %p107
        %p387 = pneg %p138
        %p388 = pneg %p135
        %s389 = smul.u32 32, %s19
        %s390 = smul.u32 2, %s20
        %p391 = scmp.lt.s32.totalorder %s389, 63
        %s392 = scalar_select %p391, %s389, 63
        %p393 = scmp.lt.s32.totalorder %s390, 1
        %s394 = scalar_select %p393, %s390, 1
        %s395 = smul.addr %s392, 2
        %s396 = sadd.s32 %s394, %s395
        %s397 = smul.addr %s396, 8
        %s398 = scalar_lea.vmem %s3, %s397
        %s399 = smul.u32 32, %s19
        %s400 = smul.u32 2, %s21
        %s401 = smul.u32 32, %s21
        %s402 = smul.u32 2, %s20
        %p403 = scmp.lt.s32.totalorder %s401, 287
        %s404 = scalar_select %p403, %s401, 287
        %p405 = scmp.lt.s32.totalorder %s402, 1
        %s406 = scalar_select %p405, %s402, 1
        %s407 = smul.addr %s404, 2
        %s408 = sadd.s32 %s406, %s407
        %s409 = smul.addr %s408, 4
        %s410 = scalar_lea.vmem %s1, %s409
        %s411 = smul.u32 32, %s21
        %s412 = smul.u32 2, %s20
        %s413 = smul.u32 2, %s20
        %p414 = scmp.lt.s32.totalorder %s413, 1
        %s415 = scalar_select %p414, %s413, 1
        %s416 = scalar_lea.vmem %s2, %s415
        %s417 = smul.u32 2, %s20
        %s418 = smul.u32 32, %s19
        %s419 = smul.u32 2, %s20
        %p420 = scmp.lt.s32.totalorder %s418, 63
        %s421 = scalar_select %p420, %s418, 63
        %p422 = scmp.lt.s32.totalorder %s419, 1
        %s423 = scalar_select %p422, %s419, 1
        %s424 = smul.addr %s421, 2
        %s425 = sadd.s32 %s423, %s424
        %s426 = smul.addr %s425, 8
        %s427 = scalar_lea.vmem %s3, %s426
        %s428 = smul.u32 32, %s19
        %s429 = smul.u32 2, %s20
        %p430 = scmp.eq.s32.totalorder %s21, 0
        // Predicated region
        $region71: #{_lambda_.7} parent=65 // pred_check
          %p431 = pneg %p430
        $region72: #{_lambda_.7} parent=65 // pred_check_branch
          %433 = sbr.rel (%p431) target = $region74
        $region73: #{_lambda_.7} parent=65 // pred_region
          %434 = vst [vmem:[#allocation2] sm:$0xff] 0.0
          %435 = vst [vmem:[#allocation2 + $0x8] sm:$0xff] 0.0
          %436 = vst [vmem:[#allocation2 + $0x10] sm:$0xff] 0.0
          %437 = vst [vmem:[#allocation2 + $0x18] sm:$0xff] 0.0
          %438 = vst [vmem:[#allocation2 + $0x20] sm:$0xff] 0.0
          %439 = vst [vmem:[#allocation2 + $0x28] sm:$0xff] 0.0
          %440 = vst [vmem:[#allocation2 + $0x30] sm:$0xff] 0.0
          %441 = vst [vmem:[#allocation2 + $0x38] sm:$0xff] 0.0
          %442 = vst [vmem:[#allocation2 + $0x40] sm:$0xff] 0.0
          %443 = vst [vmem:[#allocation2 + $0x48] sm:$0xff] 0.0
          %444 = vst [vmem:[#allocation2 + $0x50] sm:$0xff] 0.0
          %445 = vst [vmem:[#allocation2 + $0x58] sm:$0xff] 0.0
          %446 = vst [vmem:[#allocation2 + $0x60] sm:$0xff] 0.0
          %447 = vst [vmem:[#allocation2 + $0x68] sm:$0xff] 0.0
          %448 = vst [vmem:[#allocation2 + $0x70] sm:$0xff] 0.0
          %449 = vst [vmem:[#allocation2 + $0x78] sm:$0xff] 0.0
          %450 = vst [vmem:[#allocation2 + $0x80] sm:$0xff] 0.0
          %451 = vst [vmem:[#allocation2 + $0x88] sm:$0xff] 0.0
          %452 = vst [vmem:[#allocation2 + $0x90] sm:$0xff] 0.0
          %453 = vst [vmem:[#allocation2 + $0x98] sm:$0xff] 0.0
          %454 = vst [vmem:[#allocation2 + $0xa0] sm:$0xff] 0.0
          %455 = vst [vmem:[#allocation2 + $0xa8] sm:$0xff] 0.0
          %456 = vst [vmem:[#allocation2 + $0xb0] sm:$0xff] 0.0
          %457 = vst [vmem:[#allocation2 + $0xb8] sm:$0xff] 0.0
          %458 = vst [vmem:[#allocation2 + $0xc0] sm:$0xff] 0.0
          %459 = vst [vmem:[#allocation2 + $0xc8] sm:$0xff] 0.0
          %460 = vst [vmem:[#allocation2 + $0xd0] sm:$0xff] 0.0
          %461 = vst [vmem:[#allocation2 + $0xd8] sm:$0xff] 0.0
          %462 = vst [vmem:[#allocation2 + $0xe0] sm:$0xff] 0.0
          %463 = vst [vmem:[#allocation2 + $0xe8] sm:$0xff] 0.0
          %464 = vst [vmem:[#allocation2 + $0xf0] sm:$0xff] 0.0
          %465 = vst [vmem:[#allocation2 + $0xf8] sm:$0xff] 0.0
          %466 = vst [vmem:[#allocation2 + $0x100] sm:$0xff] 0.0
          %467 = vst [vmem:[#allocation2 + $0x108] sm:$0xff] 0.0
          %468 = vst [vmem:[#allocation2 + $0x110] sm:$0xff] 0.0
          %469 = vst [vmem:[#allocation2 + $0x118] sm:$0xff] 0.0
          %470 = vst [vmem:[#allocation2 + $0x120] sm:$0xff] 0.0
          %471 = vst [vmem:[#allocation2 + $0x128] sm:$0xff] 0.0
          %472 = vst [vmem:[#allocation2 + $0x130] sm:$0xff] 0.0
          %473 = vst [vmem:[#allocation2 + $0x138] sm:$0xff] 0.0
          %474 = vst [vmem:[#allocation2 + $0x140] sm:$0xff] 0.0
          %475 = vst [vmem:[#allocation2 + $0x148] sm:$0xff] 0.0
          %476 = vst [vmem:[#allocation2 + $0x150] sm:$0xff] 0.0
          %477 = vst [vmem:[#allocation2 + $0x158] sm:$0xff] 0.0
          %478 = vst [vmem:[#allocation2 + $0x160] sm:$0xff] 0.0
          %479 = vst [vmem:[#allocation2 + $0x168] sm:$0xff] 0.0
          %480 = vst [vmem:[#allocation2 + $0x170] sm:$0xff] 0.0
          %481 = vst [vmem:[#allocation2 + $0x178] sm:$0xff] 0.0
          %482 = vst [vmem:[#allocation2 + $0x180] sm:$0xff] 0.0
          %483 = vst [vmem:[#allocation2 + $0x188] sm:$0xff] 0.0
          %484 = vst [vmem:[#allocation2 + $0x190] sm:$0xff] 0.0
          %485 = vst [vmem:[#allocation2 + $0x198] sm:$0xff] 0.0
          %486 = vst [vmem:[#allocation2 + $0x1a0] sm:$0xff] 0.0
          %487 = vst [vmem:[#allocation2 + $0x1a8] sm:$0xff] 0.0
          %488 = vst [vmem:[#allocation2 + $0x1b0] sm:$0xff] 0.0
          %489 = vst [vmem:[#allocation2 + $0x1b8] sm:$0xff] 0.0
          %490 = vst [vmem:[#allocation2 + $0x1c0] sm:$0xff] 0.0
          %491 = vst [vmem:[#allocation2 + $0x1c8] sm:$0xff] 0.0
          %492 = vst [vmem:[#allocation2 + $0x1d0] sm:$0xff] 0.0
          %493 = vst [vmem:[#allocation2 + $0x1d8] sm:$0xff] 0.0
          %494 = vst [vmem:[#allocation2 + $0x1e0] sm:$0xff] 0.0
          %495 = vst [vmem:[#allocation2 + $0x1e8] sm:$0xff] 0.0
          %496 = vst [vmem:[#allocation2 + $0x1f0] sm:$0xff] 0.0
          %497 = vst [vmem:[#allocation2 + $0x1f8] sm:$0xff] 0.0
        $region74: #{_lambda_.7} parent=65 // pred_fallthru
          _
        %v498 = vld [vmem:[#allocation2] sm:$0xff]
        %v499 = vld [vmem:[#allocation2 + $0x8] sm:$0xff]
        %v500 = vld [vmem:[#allocation2 + $0x10] sm:$0xff]
        %v501 = vld [vmem:[#allocation2 + $0x18] sm:$0xff]
        %v502 = vld [vmem:[#allocation2 + $0x20] sm:$0xff]
        %v503 = vld [vmem:[#allocation2 + $0x28] sm:$0xff]
        %v504 = vld [vmem:[#allocation2 + $0x30] sm:$0xff]
        %v505 = vld [vmem:[#allocation2 + $0x38] sm:$0xff]
        %v506 = vld [vmem:[#allocation2 + $0x40] sm:$0xff]
        %v507 = vld [vmem:[#allocation2 + $0x48] sm:$0xff]
        %v508 = vld [vmem:[#allocation2 + $0x50] sm:$0xff]
        %v509 = vld [vmem:[#allocation2 + $0x58] sm:$0xff]
        %v510 = vld [vmem:[#allocation2 + $0x60] sm:$0xff]
        %v511 = vld [vmem:[#allocation2 + $0x68] sm:$0xff]
        %v512 = vld [vmem:[#allocation2 + $0x70] sm:$0xff]
        %v513 = vld [vmem:[#allocation2 + $0x78] sm:$0xff]
        %v514 = vld [vmem:[#allocation2 + $0x80] sm:$0xff]
        %v515 = vld [vmem:[#allocation2 + $0x88] sm:$0xff]
        %v516 = vld [vmem:[#allocation2 + $0x90] sm:$0xff]
        %v517 = vld [vmem:[#allocation2 + $0x98] sm:$0xff]
        %v518 = vld [vmem:[#allocation2 + $0xa0] sm:$0xff]
        %v519 = vld [vmem:[#allocation2 + $0xa8] sm:$0xff]
        %v520 = vld [vmem:[#allocation2 + $0xb0] sm:$0xff]
        %v521 = vld [vmem:[#allocation2 + $0xb8] sm:$0xff]
        %v522 = vld [vmem:[#allocation2 + $0xc0] sm:$0xff]
        %v523 = vld [vmem:[#allocation2 + $0xc8] sm:$0xff]
        %v524 = vld [vmem:[#allocation2 + $0xd0] sm:$0xff]
        %v525 = vld [vmem:[#allocation2 + $0xd8] sm:$0xff]
        %v526 = vld [vmem:[#allocation2 + $0xe0] sm:$0xff]
        %v527 = vld [vmem:[#allocation2 + $0xe8] sm:$0xff]
        %v528 = vld [vmem:[#allocation2 + $0xf0] sm:$0xff]
        %v529 = vld [vmem:[#allocation2 + $0xf8] sm:$0xff]
        %v530 = vld [vmem:[#allocation2 + $0x100] sm:$0xff]
        %v531 = vld [vmem:[#allocation2 + $0x108] sm:$0xff]
        %v532 = vld [vmem:[#allocation2 + $0x110] sm:$0xff]
        %v533 = vld [vmem:[#allocation2 + $0x118] sm:$0xff]
        %v534 = vld [vmem:[#allocation2 + $0x120] sm:$0xff]
        %v535 = vld [vmem:[#allocation2 + $0x128] sm:$0xff]
        %v536 = vld [vmem:[#allocation2 + $0x130] sm:$0xff]
        %v537 = vld [vmem:[#allocation2 + $0x138] sm:$0xff]
        %v538 = vld [vmem:[#allocation2 + $0x140] sm:$0xff]
        %v539 = vld [vmem:[#allocation2 + $0x148] sm:$0xff]
        %v540 = vld [vmem:[#allocation2 + $0x150] sm:$0xff]
        %v541 = vld [vmem:[#allocation2 + $0x158] sm:$0xff]
        %v542 = vld [vmem:[#allocation2 + $0x160] sm:$0xff]
        %v543 = vld [vmem:[#allocation2 + $0x168] sm:$0xff]
        %v544 = vld [vmem:[#allocation2 + $0x170] sm:$0xff]
        %v545 = vld [vmem:[#allocation2 + $0x178] sm:$0xff]
        %v546 = vld [vmem:[#allocation2 + $0x180] sm:$0xff]
        %v547 = vld [vmem:[#allocation2 + $0x188] sm:$0xff]
        %v548 = vld [vmem:[#allocation2 + $0x190] sm:$0xff]
        %v549 = vld [vmem:[#allocation2 + $0x198] sm:$0xff]
        %v550 = vld [vmem:[#allocation2 + $0x1a0] sm:$0xff]
        %v551 = vld [vmem:[#allocation2 + $0x1a8] sm:$0xff]
        %v552 = vld [vmem:[#allocation2 + $0x1b0] sm:$0xff]
        %v553 = vld [vmem:[#allocation2 + $0x1b8] sm:$0xff]
        %v554 = vld [vmem:[#allocation2 + $0x1c0] sm:$0xff]
        %v555 = vld [vmem:[#allocation2 + $0x1c8] sm:$0xff]
        %v556 = vld [vmem:[#allocation2 + $0x1d0] sm:$0xff]
        %v557 = vld [vmem:[#allocation2 + $0x1d8] sm:$0xff]
        %v558 = vld [vmem:[#allocation2 + $0x1e0] sm:$0xff]
        %v559 = vld [vmem:[#allocation2 + $0x1e8] sm:$0xff]
        %v560 = vld [vmem:[#allocation2 + $0x1f0] sm:$0xff]
        %v561 = vld [vmem:[#allocation2 + $0x1f8] sm:$0xff]
        %v562 = vld [vmem:[%s359] sm:$0xff]
        %v563 = vld [vmem:[%s359 + $0x8] sm:$0xff]
        %v564 = vld [vmem:[%s359 + $0x10] sm:$0xff]
        %v565 = vld [vmem:[%s359 + $0x18] sm:$0xff]
        %v566 = vld [vmem:[%s359 + $0x20] sm:$0xff]
        %v567 = vld [vmem:[%s359 + $0x28] sm:$0xff]
        %v568 = vld [vmem:[%s359 + $0x30] sm:$0xff]
        %v569 = vld [vmem:[%s359 + $0x38] sm:$0xff]
        %v570 = vld [vmem:[%s359 + $0x40] sm:$0xff]
        %v571 = vld [vmem:[%s359 + $0x48] sm:$0xff]
        %v572 = vld [vmem:[%s359 + $0x50] sm:$0xff]
        %v573 = vld [vmem:[%s359 + $0x58] sm:$0xff]
        %v574 = vld [vmem:[%s359 + $0x60] sm:$0xff]
        %v575 = vld [vmem:[%s359 + $0x68] sm:$0xff]
        %v576 = vld [vmem:[%s359 + $0x70] sm:$0xff]
        %v577 = vld [vmem:[%s359 + $0x78] sm:$0xff]
        %v578 = vld [vmem:[%s359 + $0x80] sm:$0xff]
        %v579 = vld [vmem:[%s359 + $0x88] sm:$0xff]
        %v580 = vld [vmem:[%s359 + $0x90] sm:$0xff]
        %v581 = vld [vmem:[%s359 + $0x98] sm:$0xff]
        %v582 = vld [vmem:[%s359 + $0xa0] sm:$0xff]
        %v583 = vld [vmem:[%s359 + $0xa8] sm:$0xff]
        %v584 = vld [vmem:[%s359 + $0xb0] sm:$0xff]
        %v585 = vld [vmem:[%s359 + $0xb8] sm:$0xff]
        %v586 = vld [vmem:[%s359 + $0xc0] sm:$0xff]
        %v587 = vld [vmem:[%s359 + $0xc8] sm:$0xff]
        %v588 = vld [vmem:[%s359 + $0xd0] sm:$0xff]
        %v589 = vld [vmem:[%s359 + $0xd8] sm:$0xff]
        %v590 = vld [vmem:[%s359 + $0xe0] sm:$0xff]
        %v591 = vld [vmem:[%s359 + $0xe8] sm:$0xff]
        %v592 = vld [vmem:[%s359 + $0xf0] sm:$0xff]
        %v593 = vld [vmem:[%s359 + $0xf8] sm:$0xff]
        %v594 = vld [vmem:[%s410] sm:$0xff]
        %v595 = vld [vmem:[%s410 + $0x8] sm:$0xff]
        %v596 = vld [vmem:[%s410 + $0x10] sm:$0xff]
        %v597 = vld [vmem:[%s410 + $0x18] sm:$0xff]
        %v598 = vld [vmem:[%s410 + $0x20] sm:$0xff]
        %v599 = vld [vmem:[%s410 + $0x28] sm:$0xff]
        %v600 = vld [vmem:[%s410 + $0x30] sm:$0xff]
        %v601 = vld [vmem:[%s410 + $0x38] sm:$0xff]
        %v602 = vld [vmem:[%s410 + $0x40] sm:$0xff]
        %v603 = vld [vmem:[%s410 + $0x48] sm:$0xff]
        %v604 = vld [vmem:[%s410 + $0x50] sm:$0xff]
        %v605 = vld [vmem:[%s410 + $0x58] sm:$0xff]
        %v606 = vld [vmem:[%s410 + $0x60] sm:$0xff]
        %v607 = vld [vmem:[%s410 + $0x68] sm:$0xff]
        %v608 = vld [vmem:[%s410 + $0x70] sm:$0xff]
        %v609 = vld [vmem:[%s410 + $0x78] sm:$0xff]
        %v610 = vld [vmem:[%s410 + $0x80] sm:$0xff]
        %v611 = vld [vmem:[%s410 + $0x88] sm:$0xff]
        %v612 = vld [vmem:[%s410 + $0x90] sm:$0xff]
        %v613 = vld [vmem:[%s410 + $0x98] sm:$0xff]
        %v614 = vld [vmem:[%s410 + $0xa0] sm:$0xff]
        %v615 = vld [vmem:[%s410 + $0xa8] sm:$0xff]
        %v616 = vld [vmem:[%s410 + $0xb0] sm:$0xff]
        %v617 = vld [vmem:[%s410 + $0xb8] sm:$0xff]
        %v618 = vld [vmem:[%s410 + $0xc0] sm:$0xff]
        %v619 = vld [vmem:[%s410 + $0xc8] sm:$0xff]
        %v620 = vld [vmem:[%s410 + $0xd0] sm:$0xff]
        %v621 = vld [vmem:[%s410 + $0xd8] sm:$0xff]
        %v622 = vld [vmem:[%s410 + $0xe0] sm:$0xff]
        %v623 = vld [vmem:[%s410 + $0xe8] sm:$0xff]
        %v624 = vld [vmem:[%s410 + $0xf0] sm:$0xff]
        %v625 = vld [vmem:[%s410 + $0xf8] sm:$0xff]
        %v658 = vunpack.c.l.b16 %v562
        %v659 = vunpack.c.h.b16 %v562
        %v660 = vunpack.c.l.b16 %v563
        %v661 = vunpack.c.h.b16 %v563
        %v662 = vunpack.c.l.b16 %v564
        %v663 = vunpack.c.h.b16 %v564
        %v664 = vunpack.c.l.b16 %v565
        %v665 = vunpack.c.h.b16 %v565
        %v666 = vunpack.c.l.b16 %v566
        %v667 = vunpack.c.h.b16 %v566
        %v668 = vunpack.c.l.b16 %v567
        %v669 = vunpack.c.h.b16 %v567
        %v670 = vunpack.c.l.b16 %v568
        %v671 = vunpack.c.h.b16 %v568
        %v672 = vunpack.c.l.b16 %v569
        %v673 = vunpack.c.h.b16 %v569
        %v674 = vunpack.c.l.b16 %v570
        %v675 = vunpack.c.h.b16 %v570
        %v676 = vunpack.c.l.b16 %v571
        %v677 = vunpack.c.h.b16 %v571
        %v678 = vunpack.c.l.b16 %v572
        %v679 = vunpack.c.h.b16 %v572
        %v680 = vunpack.c.l.b16 %v573
        %v681 = vunpack.c.h.b16 %v573
        %v682 = vunpack.c.l.b16 %v574
        %v683 = vunpack.c.h.b16 %v574
        %v684 = vunpack.c.l.b16 %v575
        %v685 = vunpack.c.h.b16 %v575
        %v686 = vunpack.c.l.b16 %v576
        %v687 = vunpack.c.h.b16 %v576
        %v688 = vunpack.c.l.b16 %v577
        %v689 = vunpack.c.h.b16 %v577
        %v690 = vunpack.c.l.b16 %v578
        %v691 = vunpack.c.h.b16 %v578
        %v692 = vunpack.c.l.b16 %v579
        %v693 = vunpack.c.h.b16 %v579
        %v694 = vunpack.c.l.b16 %v580
        %v695 = vunpack.c.h.b16 %v580
        %v696 = vunpack.c.l.b16 %v581
        %v697 = vunpack.c.h.b16 %v581
        %v698 = vunpack.c.l.b16 %v582
        %v699 = vunpack.c.h.b16 %v582
        %v700 = vunpack.c.l.b16 %v583
        %v701 = vunpack.c.h.b16 %v583
        %v702 = vunpack.c.l.b16 %v584
        %v703 = vunpack.c.h.b16 %v584
        %v704 = vunpack.c.l.b16 %v585
        %v705 = vunpack.c.h.b16 %v585
        %v706 = vunpack.c.l.b16 %v586
        %v707 = vunpack.c.h.b16 %v586
        %v708 = vunpack.c.l.b16 %v587
        %v709 = vunpack.c.h.b16 %v587
        %v710 = vunpack.c.l.b16 %v588
        %v711 = vunpack.c.h.b16 %v588
        %v712 = vunpack.c.l.b16 %v589
        %v713 = vunpack.c.h.b16 %v589
        %v714 = vunpack.c.l.b16 %v590
        %v715 = vunpack.c.h.b16 %v590
        %v716 = vunpack.c.l.b16 %v591
        %v717 = vunpack.c.h.b16 %v591
        %v718 = vunpack.c.l.b16 %v592
        %v719 = vunpack.c.h.b16 %v592
        %v720 = vunpack.c.l.b16 %v593
        %v721 = vunpack.c.h.b16 %v593
        %v722 = vpack.c.b16 %v660, %v658
        %v723 = vpack.c.b16 %v661, %v659
        %v724 = vpack.c.b16 %v664, %v662
        %v725 = vpack.c.b16 %v665, %v663
        %v726 = vpack.c.b16 %v668, %v666
        %v727 = vpack.c.b16 %v669, %v667
        %v728 = vpack.c.b16 %v672, %v670
        %v729 = vpack.c.b16 %v673, %v671
        %v730 = vpack.c.b16 %v676, %v674
        %v731 = vpack.c.b16 %v677, %v675
        %v732 = vpack.c.b16 %v680, %v678
        %v733 = vpack.c.b16 %v681, %v679
        %v734 = vpack.c.b16 %v684, %v682
        %v735 = vpack.c.b16 %v685, %v683
        %v736 = vpack.c.b16 %v688, %v686
        %v737 = vpack.c.b16 %v689, %v687
        %v738 = vpack.c.b16 %v692, %v690
        %v739 = vpack.c.b16 %v693, %v691
        %v740 = vpack.c.b16 %v696, %v694
        %v741 = vpack.c.b16 %v697, %v695
        %v742 = vpack.c.b16 %v700, %v698
        %v743 = vpack.c.b16 %v701, %v699
        %v744 = vpack.c.b16 %v704, %v702
        %v745 = vpack.c.b16 %v705, %v703
        %v746 = vpack.c.b16 %v708, %v706
        %v747 = vpack.c.b16 %v709, %v707
        %v748 = vpack.c.b16 %v712, %v710
        %v749 = vpack.c.b16 %v713, %v711
        %v750 = vpack.c.b16 %v716, %v714
        %v751 = vpack.c.b16 %v717, %v715
        %v752 = vpack.c.b16 %v720, %v718
        %v753 = vpack.c.b16 %v721, %v719
        %v818 = vunpack.c.l.b16 %v594
        %v819 = vunpack.c.h.b16 %v594
        %v820 = vunpack.c.l.b16 %v595
        %v821 = vunpack.c.h.b16 %v595
        %v822 = vunpack.c.l.b16 %v596
        %v823 = vunpack.c.h.b16 %v596
        %v824 = vunpack.c.l.b16 %v597
        %v825 = vunpack.c.h.b16 %v597
        %v826 = vunpack.c.l.b16 %v598
        %v827 = vunpack.c.h.b16 %v598
        %v828 = vunpack.c.l.b16 %v599
        %v829 = vunpack.c.h.b16 %v599
        %v830 = vunpack.c.l.b16 %v600
        %v831 = vunpack.c.h.b16 %v600
        %v832 = vunpack.c.l.b16 %v601
        %v833 = vunpack.c.h.b16 %v601
        %v834 = vunpack.c.l.b16 %v602
        %v835 = vunpack.c.h.b16 %v602
        %v836 = vunpack.c.l.b16 %v603
        %v837 = vunpack.c.h.b16 %v603
        %v838 = vunpack.c.l.b16 %v604
        %v839 = vunpack.c.h.b16 %v604
        %v840 = vunpack.c.l.b16 %v605
        %v841 = vunpack.c.h.b16 %v605
        %v842 = vunpack.c.l.b16 %v606
        %v843 = vunpack.c.h.b16 %v606
        %v844 = vunpack.c.l.b16 %v607
        %v845 = vunpack.c.h.b16 %v607
        %v846 = vunpack.c.l.b16 %v608
        %v847 = vunpack.c.h.b16 %v608
        %v848 = vunpack.c.l.b16 %v609
        %v849 = vunpack.c.h.b16 %v609
        %v850 = vunpack.c.l.b16 %v610
        %v851 = vunpack.c.h.b16 %v610
        %v852 = vunpack.c.l.b16 %v611
        %v853 = vunpack.c.h.b16 %v611
        %v854 = vunpack.c.l.b16 %v612
        %v855 = vunpack.c.h.b16 %v612
        %v856 = vunpack.c.l.b16 %v613
        %v857 = vunpack.c.h.b16 %v613
        %v858 = vunpack.c.l.b16 %v614
        %v859 = vunpack.c.h.b16 %v614
        %v860 = vunpack.c.l.b16 %v615
        %v861 = vunpack.c.h.b16 %v615
        %v862 = vunpack.c.l.b16 %v616
        %v863 = vunpack.c.h.b16 %v616
        %v864 = vunpack.c.l.b16 %v617
        %v865 = vunpack.c.h.b16 %v617
        %v866 = vunpack.c.l.b16 %v618
        %v867 = vunpack.c.h.b16 %v618
        %v868 = vunpack.c.l.b16 %v619
        %v869 = vunpack.c.h.b16 %v619
        %v870 = vunpack.c.l.b16 %v620
        %v871 = vunpack.c.h.b16 %v620
        %v872 = vunpack.c.l.b16 %v621
        %v873 = vunpack.c.h.b16 %v621
        %v874 = vunpack.c.l.b16 %v622
        %v875 = vunpack.c.h.b16 %v622
        %v876 = vunpack.c.l.b16 %v623
        %v877 = vunpack.c.h.b16 %v623
        %v878 = vunpack.c.l.b16 %v624
        %v879 = vunpack.c.h.b16 %v624
        %v880 = vunpack.c.l.b16 %v625
        %v881 = vunpack.c.h.b16 %v625
        %v882 = vpack.c.b16 %v820, %v818
        %v883 = vpack.c.b16 %v821, %v819
        %v884 = vpack.c.b16 %v824, %v822
        %v885 = vpack.c.b16 %v825, %v823
        %v886 = vpack.c.b16 %v828, %v826
        %v887 = vpack.c.b16 %v829, %v827
        %v888 = vpack.c.b16 %v832, %v830
        %v889 = vpack.c.b16 %v833, %v831
        %v890 = vpack.c.b16 %v836, %v834
        %v891 = vpack.c.b16 %v837, %v835
        %v892 = vpack.c.b16 %v840, %v838
        %v893 = vpack.c.b16 %v841, %v839
        %v894 = vpack.c.b16 %v844, %v842
        %v895 = vpack.c.b16 %v845, %v843
        %v896 = vpack.c.b16 %v848, %v846
        %v897 = vpack.c.b16 %v849, %v847
        %v898 = vpack.c.b16 %v852, %v850
        %v899 = vpack.c.b16 %v853, %v851
        %v900 = vpack.c.b16 %v856, %v854
        %v901 = vpack.c.b16 %v857, %v855
        %v902 = vpack.c.b16 %v860, %v858
        %v903 = vpack.c.b16 %v861, %v859
        %v904 = vpack.c.b16 %v864, %v862
        %v905 = vpack.c.b16 %v865, %v863
        %v906 = vpack.c.b16 %v868, %v866
        %v907 = vpack.c.b16 %v869, %v867
        %v908 = vpack.c.b16 %v872, %v870
        %v909 = vpack.c.b16 %v873, %v871
        %v910 = vpack.c.b16 %v876, %v874
        %v911 = vpack.c.b16 %v877, %v875
        %v912 = vpack.c.b16 %v880, %v878
        %v913 = vpack.c.b16 %v881, %v879
        %946 = vmatprep.subr.bf16.mxu0 %v883
        %947 = vmatpush1.bf16.msra.mxu0 %v882
        %948 = vmatprep.subr.bf16.mxu0 %v885
        %949 = vmatpush1.bf16.msra.mxu0 %v884
        %950 = vmatprep.subr.bf16.mxu0 %v887
        %951 = vmatpush1.bf16.msra.mxu0 %v886
        %952 = vmatprep.subr.bf16.mxu0 %v889
        %953 = vmatpush1.bf16.msra.mxu0 %v888
        %954 = vmatprep.subr.bf16.mxu0 %v891
        %955 = vmatpush1.bf16.msra.mxu0 %v890
        %956 = vmatprep.subr.bf16.mxu0 %v893
        %957 = vmatpush1.bf16.msra.mxu0 %v892
        %958 = vmatprep.subr.bf16.mxu0 %v895
        %959 = vmatpush1.bf16.msra.mxu0 %v894
        %960 = vmatprep.subr.bf16.mxu0 %v897
        %961 = vmatpush1.bf16.msra.mxu0 %v896
        %962 = vmatprep.subr.bf16.mxu0 %v899
        %963 = vmatpush1.bf16.msra.mxu0 %v898
        %964 = vmatprep.subr.bf16.mxu0 %v901
        %965 = vmatpush1.bf16.msra.mxu0 %v900
        %966 = vmatprep.subr.bf16.mxu0 %v903
        %967 = vmatpush1.bf16.msra.mxu0 %v902
        %968 = vmatprep.subr.bf16.mxu0 %v905
        %969 = vmatpush1.bf16.msra.mxu0 %v904
        %970 = vmatprep.subr.bf16.mxu0 %v907
        %971 = vmatpush1.bf16.msra.mxu0 %v906
        %972 = vmatprep.subr.bf16.mxu0 %v909
        %973 = vmatpush1.bf16.msra.mxu0 %v908
        %974 = vmatprep.subr.bf16.mxu0 %v911
        %975 = vmatpush1.bf16.msra.mxu0 %v910
        %976 = vmatprep.subr.bf16.mxu0 %v913
        %977 = vmatpush1.bf16.msra.mxu0 %v912
        %978 = vmatprep.mubr.bf16.mxu0 %v723
        %979 = vmatmul.mubr.bf16.gmra.mrb[0].mxu0 %v722
        %v980 = vpop.f32.mrb[0].mxu0
        %v981 = vadd.f32 0.0, %v980
        %v982 = vpop.f32.mrb[0].mxu0
        %v983 = vadd.f32 0.0, %v982
        %v984 = vpop.f32.mrb[0].mxu0
        %v985 = vadd.f32 0.0, %v984
        %v986 = vpop.f32.mrb[0].mxu0
        %v987 = vadd.f32 0.0, %v986
        %988 = vmatprep.mubr.bf16.mxu0 %v725
        %989 = vmatmul.mubr.bf16.gmra.mrb[0].mxu0 %v724
        %v990 = vpop.f32.mrb[0].mxu0
        %v991 = vadd.f32 0.0, %v990
        %v992 = vpop.f32.mrb[0].mxu0
        %v993 = vadd.f32 0.0, %v992
        %v994 = vpop.f32.mrb[0].mxu0
        %v995 = vadd.f32 0.0, %v994
        %v996 = vpop.f32.mrb[0].mxu0
        %v997 = vadd.f32 0.0, %v996
        %998 = vmatprep.mubr.bf16.mxu0 %v727
        %999 = vmatmul.mubr.bf16.gmra.mrb[0].mxu0 %v726
        %v1000 = vpop.f32.mrb[0].mxu0
        %v1001 = vadd.f32 0.0, %v1000
        %v1002 = vpop.f32.mrb[0].mxu0
        %v1003 = vadd.f32 0.0, %v1002
        %v1004 = vpop.f32.mrb[0].mxu0
        %v1005 = vadd.f32 0.0, %v1004
        %v1006 = vpop.f32.mrb[0].mxu0
        %v1007 = vadd.f32 0.0, %v1006
        %1008 = vmatprep.mubr.bf16.mxu0 %v729
        %1009 = vmatmul.mubr.bf16.gmra.mrb[0].mxu0 %v728
        %v1010 = vpop.f32.mrb[0].mxu0
        %v1011 = vadd.f32 0.0, %v1010
        %v1012 = vpop.f32.mrb[0].mxu0
        %v1013 = vadd.f32 0.0, %v1012
        %v1014 = vpop.f32.mrb[0].mxu0
        %v1015 = vadd.f32 0.0, %v1014
        %v1016 = vpop.f32.mrb[0].mxu0
        %v1017 = vadd.f32 0.0, %v1016
        %1018 = vmatprep.mubr.bf16.mxu0 %v731
        %1019 = vmatmul.mubr.bf16.gmra.mrb[0].mxu0 %v730
        %v1020 = vpop.f32.mrb[0].mxu0
        %v1021 = vadd.f32 0.0, %v1020
        %v1022 = vpop.f32.mrb[0].mxu0
        %v1023 = vadd.f32 0.0, %v1022
        %v1024 = vpop.f32.mrb[0].mxu0
        %v1025 = vadd.f32 0.0, %v1024
        %v1026 = vpop.f32.mrb[0].mxu0
        %v1027 = vadd.f32 0.0, %v1026
        %1028 = vmatprep.mubr.bf16.mxu0 %v733
        %1029 = vmatmul.mubr.bf16.gmra.mrb[0].mxu0 %v732
        %v1030 = vpop.f32.mrb[0].mxu0
        %v1031 = vadd.f32 0.0, %v1030
        %v1032 = vpop.f32.mrb[0].mxu0
        %v1033 = vadd.f32 0.0, %v1032
        %v1034 = vpop.f32.mrb[0].mxu0
        %v1035 = vadd.f32 0.0, %v1034
        %v1036 = vpop.f32.mrb[0].mxu0
        %v1037 = vadd.f32 0.0, %v1036
        %1038 = vmatprep.mubr.bf16.mxu0 %v735
        %1039 = vmatmul.mubr.bf16.gmra.mrb[0].mxu0 %v734
        %v1040 = vpop.f32.mrb[0].mxu0
        %v1041 = vadd.f32 0.0, %v1040
        %v1042 = vpop.f32.mrb[0].mxu0
        %v1043 = vadd.f32 0.0, %v1042
        %v1044 = vpop.f32.mrb[0].mxu0
        %v1045 = vadd.f32 0.0, %v1044
        %v1046 = vpop.f32.mrb[0].mxu0
        %v1047 = vadd.f32 0.0, %v1046
        %1048 = vmatprep.mubr.bf16.mxu0 %v737
        %1049 = vmatmul.mubr.bf16.gmra.mrb[0].mxu0 %v736
        %v1050 = vpop.f32.mrb[0].mxu0
        %v1051 = vadd.f32 0.0, %v1050
        %v1052 = vpop.f32.mrb[0].mxu0
        %v1053 = vadd.f32 0.0, %v1052
        %v1054 = vpop.f32.mrb[0].mxu0
        %v1055 = vadd.f32 0.0, %v1054
        %v1056 = vpop.f32.mrb[0].mxu0
        %v1057 = vadd.f32 0.0, %v1056
        %1058 = vmatprep.mubr.bf16.mxu0 %v739
        %1059 = vmatmul.mubr.bf16.gmra.mrb[0].mxu0 %v738
        %v1060 = vpop.f32.mrb[0].mxu0
        %v1061 = vadd.f32 0.0, %v1060
        %v1062 = vpop.f32.mrb[0].mxu0
        %v1063 = vadd.f32 0.0, %v1062
        %v1064 = vpop.f32.mrb[0].mxu0
        %v1065 = vadd.f32 0.0, %v1064
        %v1066 = vpop.f32.mrb[0].mxu0
        %v1067 = vadd.f32 0.0, %v1066
        %1068 = vmatprep.mubr.bf16.mxu0 %v741
        %1069 = vmatmul.mubr.bf16.gmra.mrb[0].mxu0 %v740
        %v1070 = vpop.f32.mrb[0].mxu0
        %v1071 = vadd.f32 0.0, %v1070
        %v1072 = vpop.f32.mrb[0].mxu0
        %v1073 = vadd.f32 0.0, %v1072
        %v1074 = vpop.f32.mrb[0].mxu0
        %v1075 = vadd.f32 0.0, %v1074
        %v1076 = vpop.f32.mrb[0].mxu0
        %v1077 = vadd.f32 0.0, %v1076
        %1078 = vmatprep.mubr.bf16.mxu0 %v743
        %1079 = vmatmul.mubr.bf16.gmra.mrb[0].mxu0 %v742
        %v1080 = vpop.f32.mrb[0].mxu0
        %v1081 = vadd.f32 0.0, %v1080
        %v1082 = vpop.f32.mrb[0].mxu0
        %v1083 = vadd.f32 0.0, %v1082
        %v1084 = vpop.f32.mrb[0].mxu0
        %v1085 = vadd.f32 0.0, %v1084
        %v1086 = vpop.f32.mrb[0].mxu0
        %v1087 = vadd.f32 0.0, %v1086
        %1088 = vmatprep.mubr.bf16.mxu0 %v745
        %1089 = vmatmul.mubr.bf16.gmra.mrb[0].mxu0 %v744
        %v1090 = vpop.f32.mrb[0].mxu0
        %v1091 = vadd.f32 0.0, %v1090
        %v1092 = vpop.f32.mrb[0].mxu0
        %v1093 = vadd.f32 0.0, %v1092
        %v1094 = vpop.f32.mrb[0].mxu0
        %v1095 = vadd.f32 0.0, %v1094
        %v1096 = vpop.f32.mrb[0].mxu0
        %v1097 = vadd.f32 0.0, %v1096
        %1098 = vmatprep.mubr.bf16.mxu0 %v747
        %1099 = vmatmul.mubr.bf16.gmra.mrb[0].mxu0 %v746
        %v1100 = vpop.f32.mrb[0].mxu0
        %v1101 = vadd.f32 0.0, %v1100
        %v1102 = vpop.f32.mrb[0].mxu0
        %v1103 = vadd.f32 0.0, %v1102
        %v1104 = vpop.f32.mrb[0].mxu0
        %v1105 = vadd.f32 0.0, %v1104
        %v1106 = vpop.f32.mrb[0].mxu0
        %v1107 = vadd.f32 0.0, %v1106
        %1108 = vmatprep.mubr.bf16.mxu0 %v749
        %1109 = vmatmul.mubr.bf16.gmra.mrb[0].mxu0 %v748
        %v1110 = vpop.f32.mrb[0].mxu0
        %v1111 = vadd.f32 0.0, %v1110
        %v1112 = vpop.f32.mrb[0].mxu0
        %v1113 = vadd.f32 0.0, %v1112
        %v1114 = vpop.f32.mrb[0].mxu0
        %v1115 = vadd.f32 0.0, %v1114
        %v1116 = vpop.f32.mrb[0].mxu0
        %v1117 = vadd.f32 0.0, %v1116
        %1118 = vmatprep.mubr.bf16.mxu0 %v751
        %1119 = vmatmul.mubr.bf16.gmra.mrb[0].mxu0 %v750
        %v1120 = vpop.f32.mrb[0].mxu0
        %v1121 = vadd.f32 0.0, %v1120
        %v1122 = vpop.f32.mrb[0].mxu0
        %v1123 = vadd.f32 0.0, %v1122
        %v1124 = vpop.f32.mrb[0].mxu0
        %v1125 = vadd.f32 0.0, %v1124
        %v1126 = vpop.f32.mrb[0].mxu0
        %v1127 = vadd.f32 0.0, %v1126
        %1128 = vmatprep.mubr.bf16.mxu0 %v753
        %1129 = vmatmul.mubr.bf16.gmra.mrb[0].mxu0 %v752
        %v1130 = vpop.f32.mrb[0].mxu0
        %v1131 = vadd.f32 0.0, %v1130
        %v1132 = vpop.f32.mrb[0].mxu0
        %v1133 = vadd.f32 0.0, %v1132
        %v1134 = vpop.f32.mrb[0].mxu0
        %v1135 = vadd.f32 0.0, %v1134
        %v1136 = vpop.f32.mrb[0].mxu0
        %v1137 = vadd.f32 0.0, %v1136
        %1138 = vdwg.mxu0
        %v1139 = vadd.f32 %v498, %v981
        %v1140 = vadd.f32 %v499, %v983
        %v1141 = vadd.f32 %v500, %v985
        %v1142 = vadd.f32 %v501, %v987
        %v1143 = vadd.f32 %v502, %v991
        %v1144 = vadd.f32 %v503, %v993
        %v1145 = vadd.f32 %v504, %v995
        %v1146 = vadd.f32 %v505, %v997
        %v1147 = vadd.f32 %v506, %v1001
        %v1148 = vadd.f32 %v507, %v1003
        %v1149 = vadd.f32 %v508, %v1005
        %v1150 = vadd.f32 %v509, %v1007
        %v1151 = vadd.f32 %v510, %v1011
        %v1152 = vadd.f32 %v511, %v1013
        %v1153 = vadd.f32 %v512, %v1015
        %v1154 = vadd.f32 %v513, %v1017
        %v1155 = vadd.f32 %v514, %v1021
        %v1156 = vadd.f32 %v515, %v1023
        %v1157 = vadd.f32 %v516, %v1025
        %v1158 = vadd.f32 %v517, %v1027
        %v1159 = vadd.f32 %v518, %v1031
        %v1160 = vadd.f32 %v519, %v1033
        %v1161 = vadd.f32 %v520, %v1035
        %v1162 = vadd.f32 %v521, %v1037
        %v1163 = vadd.f32 %v522, %v1041
        %v1164 = vadd.f32 %v523, %v1043
        %v1165 = vadd.f32 %v524, %v1045
        %v1166 = vadd.f32 %v525, %v1047
        %v1167 = vadd.f32 %v526, %v1051
        %v1168 = vadd.f32 %v527, %v1053
        %v1169 = vadd.f32 %v528, %v1055
        %v1170 = vadd.f32 %v529, %v1057
        %v1171 = vadd.f32 %v530, %v1061
        %v1172 = vadd.f32 %v531, %v1063
        %v1173 = vadd.f32 %v532, %v1065
        %v1174 = vadd.f32 %v533, %v1067
        %v1175 = vadd.f32 %v534, %v1071
        %v1176 = vadd.f32 %v535, %v1073
        %v1177 = vadd.f32 %v536, %v1075
        %v1178 = vadd.f32 %v537, %v1077
        %v1179 = vadd.f32 %v538, %v1081
        %v1180 = vadd.f32 %v539, %v1083
        %v1181 = vadd.f32 %v540, %v1085
        %v1182 = vadd.f32 %v541, %v1087
        %v1183 = vadd.f32 %v542, %v1091
        %v1184 = vadd.f32 %v543, %v1093
        %v1185 = vadd.f32 %v544, %v1095
        %v1186 = vadd.f32 %v545, %v1097
        %v1187 = vadd.f32 %v546, %v1101
        %v1188 = vadd.f32 %v547, %v1103
        %v1189 = vadd.f32 %v548, %v1105
        %v1190 = vadd.f32 %v549, %v1107
        %v1191 = vadd.f32 %v550, %v1111
        %v1192 = vadd.f32 %v551, %v1113
        %v1193 = vadd.f32 %v552, %v1115
        %v1194 = vadd.f32 %v553, %v1117
        %v1195 = vadd.f32 %v554, %v1121
        %v1196 = vadd.f32 %v555, %v1123
        %v1197 = vadd.f32 %v556, %v1125
        %v1198 = vadd.f32 %v557, %v1127
        %v1199 = vadd.f32 %v558, %v1131
        %v1200 = vadd.f32 %v559, %v1133
        %v1201 = vadd.f32 %v560, %v1135
        %v1202 = vadd.f32 %v561, %v1137
        %1203 = vst [vmem:[#allocation2] sm:$0xff] %v1139
        %1204 = vst [vmem:[#allocation2 + $0x8] sm:$0xff] %v1140
        %1205 = vst [vmem:[#allocation2 + $0x10] sm:$0xff] %v1141
        %1206 = vst [vmem:[#allocation2 + $0x18] sm:$0xff] %v1142
        %1207 = vst [vmem:[#allocation2 + $0x20] sm:$0xff] %v1143
        %1208 = vst [vmem:[#allocation2 + $0x28] sm:$0xff] %v1144
        %1209 = vst [vmem:[#allocation2 + $0x30] sm:$0xff] %v1145
        %1210 = vst [vmem:[#allocation2 + $0x38] sm:$0xff] %v1146
        %1211 = vst [vmem:[#allocation2 + $0x40] sm:$0xff] %v1147
        %1212 = vst [vmem:[#allocation2 + $0x48] sm:$0xff] %v1148
        %1213 = vst [vmem:[#allocation2 + $0x50] sm:$0xff] %v1149
        %1214 = vst [vmem:[#allocation2 + $0x58] sm:$0xff] %v1150
        %1215 = vst [vmem:[#allocation2 + $0x60] sm:$0xff] %v1151
        %1216 = vst [vmem:[#allocation2 + $0x68] sm:$0xff] %v1152
        %1217 = vst [vmem:[#allocation2 + $0x70] sm:$0xff] %v1153
        %1218 = vst [vmem:[#allocation2 + $0x78] sm:$0xff] %v1154
        %1219 = vst [vmem:[#allocation2 + $0x80] sm:$0xff] %v1155
        %1220 = vst [vmem:[#allocation2 + $0x88] sm:$0xff] %v1156
        %1221 = vst [vmem:[#allocation2 + $0x90] sm:$0xff] %v1157
        %1222 = vst [vmem:[#allocation2 + $0x98] sm:$0xff] %v1158
        %1223 = vst [vmem:[#allocation2 + $0xa0] sm:$0xff] %v1159
        %1224 = vst [vmem:[#allocation2 + $0xa8] sm:$0xff] %v1160
        %1225 = vst [vmem:[#allocation2 + $0xb0] sm:$0xff] %v1161
        %1226 = vst [vmem:[#allocation2 + $0xb8] sm:$0xff] %v1162
        %1227 = vst [vmem:[#allocation2 + $0xc0] sm:$0xff] %v1163
        %1228 = vst [vmem:[#allocation2 + $0xc8] sm:$0xff] %v1164
        %1229 = vst [vmem:[#allocation2 + $0xd0] sm:$0xff] %v1165
        %1230 = vst [vmem:[#allocation2 + $0xd8] sm:$0xff] %v1166
        %1231 = vst [vmem:[#allocation2 + $0xe0] sm:$0xff] %v1167
        %1232 = vst [vmem:[#allocation2 + $0xe8] sm:$0xff] %v1168
        %1233 = vst [vmem:[#allocation2 + $0xf0] sm:$0xff] %v1169
        %1234 = vst [vmem:[#allocation2 + $0xf8] sm:$0xff] %v1170
        %1235 = vst [vmem:[#allocation2 + $0x100] sm:$0xff] %v1171
        %1236 = vst [vmem:[#allocation2 + $0x108] sm:$0xff] %v1172
        %1237 = vst [vmem:[#allocation2 + $0x110] sm:$0xff] %v1173
        %1238 = vst [vmem:[#allocation2 + $0x118] sm:$0xff] %v1174
        %1239 = vst [vmem:[#allocation2 + $0x120] sm:$0xff] %v1175
        %1240 = vst [vmem:[#allocation2 + $0x128] sm:$0xff] %v1176
        %1241 = vst [vmem:[#allocation2 + $0x130] sm:$0xff] %v1177
        %1242 = vst [vmem:[#allocation2 + $0x138] sm:$0xff] %v1178
        %1243 = vst [vmem:[#allocation2 + $0x140] sm:$0xff] %v1179
        %1244 = vst [vmem:[#allocation2 + $0x148] sm:$0xff] %v1180
        %1245 = vst [vmem:[#allocation2 + $0x150] sm:$0xff] %v1181
        %1246 = vst [vmem:[#allocation2 + $0x158] sm:$0xff] %v1182
        %1247 = vst [vmem:[#allocation2 + $0x160] sm:$0xff] %v1183
        %1248 = vst [vmem:[#allocation2 + $0x168] sm:$0xff] %v1184
        %1249 = vst [vmem:[#allocation2 + $0x170] sm:$0xff] %v1185
        %1250 = vst [vmem:[#allocation2 + $0x178] sm:$0xff] %v1186
        %1251 = vst [vmem:[#allocation2 + $0x180] sm:$0xff] %v1187
        %1252 = vst [vmem:[#allocation2 + $0x188] sm:$0xff] %v1188
        %1253 = vst [vmem:[#allocation2 + $0x190] sm:$0xff] %v1189
        %1254 = vst [vmem:[#allocation2 + $0x198] sm:$0xff] %v1190
        %1255 = vst [vmem:[#allocation2 + $0x1a0] sm:$0xff] %v1191
        %1256 = vst [vmem:[#allocation2 + $0x1a8] sm:$0xff] %v1192
        %1257 = vst [vmem:[#allocation2 + $0x1b0] sm:$0xff] %v1193
        %1258 = vst [vmem:[#allocation2 + $0x1b8] sm:$0xff] %v1194
        %1259 = vst [vmem:[#allocation2 + $0x1c0] sm:$0xff] %v1195
        %1260 = vst [vmem:[#allocation2 + $0x1c8] sm:$0xff] %v1196
        %1261 = vst [vmem:[#allocation2 + $0x1d0] sm:$0xff] %v1197
        %1262 = vst [vmem:[#allocation2 + $0x1d8] sm:$0xff] %v1198
        %1263 = vst [vmem:[#allocation2 + $0x1e0] sm:$0xff] %v1199
        %1264 = vst [vmem:[#allocation2 + $0x1e8] sm:$0xff] %v1200
        %1265 = vst [vmem:[#allocation2 + $0x1f0] sm:$0xff] %v1201
        %1266 = vst [vmem:[#allocation2 + $0x1f8] sm:$0xff] %v1202
        %p1267 = scmp.eq.s32.totalorder %s21, 8
        // Predicated region
        $region75: #{_lambda_.7} parent=65 // pred_check
          %p1268 = pneg %p1267
        $region76: #{_lambda_.7} parent=65 // pred_check_branch
          %1270 = sbr.rel (%p1268) target = $region78
        $region77: #{_lambda_.7} parent=65 // pred_region
          %v1271 = vld [vmem:[#allocation2] sm:$0xff]
          %v1272 = vld [vmem:[#allocation2 + $0x8] sm:$0xff]
          %v1273 = vld [vmem:[#allocation2 + $0x10] sm:$0xff]
          %v1274 = vld [vmem:[#allocation2 + $0x18] sm:$0xff]
          %v1275 = vld [vmem:[#allocation2 + $0x20] sm:$0xff]
          %v1276 = vld [vmem:[#allocation2 + $0x28] sm:$0xff]
          %v1277 = vld [vmem:[#allocation2 + $0x30] sm:$0xff]
          %v1278 = vld [vmem:[#allocation2 + $0x38] sm:$0xff]
          %v1279 = vld [vmem:[#allocation2 + $0x40] sm:$0xff]
          %v1280 = vld [vmem:[#allocation2 + $0x48] sm:$0xff]
          %v1281 = vld [vmem:[#allocation2 + $0x50] sm:$0xff]
          %v1282 = vld [vmem:[#allocation2 + $0x58] sm:$0xff]
          %v1283 = vld [vmem:[#allocation2 + $0x60] sm:$0xff]
          %v1284 = vld [vmem:[#allocation2 + $0x68] sm:$0xff]
          %v1285 = vld [vmem:[#allocation2 + $0x70] sm:$0xff]
          %v1286 = vld [vmem:[#allocation2 + $0x78] sm:$0xff]
          %v1287 = vld [vmem:[#allocation2 + $0x80] sm:$0xff]
          %v1288 = vld [vmem:[#allocation2 + $0x88] sm:$0xff]
          %v1289 = vld [vmem:[#allocation2 + $0x90] sm:$0xff]
          %v1290 = vld [vmem:[#allocation2 + $0x98] sm:$0xff]
          %v1291 = vld [vmem:[#allocation2 + $0xa0] sm:$0xff]
          %v1292 = vld [vmem:[#allocation2 + $0xa8] sm:$0xff]
          %v1293 = vld [vmem:[#allocation2 + $0xb0] sm:$0xff]
          %v1294 = vld [vmem:[#allocation2 + $0xb8] sm:$0xff]
          %v1295 = vld [vmem:[#allocation2 + $0xc0] sm:$0xff]
          %v1296 = vld [vmem:[#allocation2 + $0xc8] sm:$0xff]
          %v1297 = vld [vmem:[#allocation2 + $0xd0] sm:$0xff]
          %v1298 = vld [vmem:[#allocation2 + $0xd8] sm:$0xff]
          %v1299 = vld [vmem:[#allocation2 + $0xe0] sm:$0xff]
          %v1300 = vld [vmem:[#allocation2 + $0xe8] sm:$0xff]
          %v1301 = vld [vmem:[#allocation2 + $0xf0] sm:$0xff]
          %v1302 = vld [vmem:[#allocation2 + $0xf8] sm:$0xff]
          %v1303 = vld [vmem:[#allocation2 + $0x100] sm:$0xff]
          %v1304 = vld [vmem:[#allocation2 + $0x108] sm:$0xff]
          %v1305 = vld [vmem:[#allocation2 + $0x110] sm:$0xff]
          %v1306 = vld [vmem:[#allocation2 + $0x118] sm:$0xff]
          %v1307 = vld [vmem:[#allocation2 + $0x120] sm:$0xff]
          %v1308 = vld [vmem:[#allocation2 + $0x128] sm:$0xff]
          %v1309 = vld [vmem:[#allocation2 + $0x130] sm:$0xff]
          %v1310 = vld [vmem:[#allocation2 + $0x138] sm:$0xff]
          %v1311 = vld [vmem:[#allocation2 + $0x140] sm:$0xff]
          %v1312 = vld [vmem:[#allocation2 + $0x148] sm:$0xff]
          %v1313 = vld [vmem:[#allocation2 + $0x150] sm:$0xff]
          %v1314 = vld [vmem:[#allocation2 + $0x158] sm:$0xff]
          %v1315 = vld [vmem:[#allocation2 + $0x160] sm:$0xff]
          %v1316 = vld [vmem:[#allocation2 + $0x168] sm:$0xff]
          %v1317 = vld [vmem:[#allocation2 + $0x170] sm:$0xff]
          %v1318 = vld [vmem:[#allocation2 + $0x178] sm:$0xff]
          %v1319 = vld [vmem:[#allocation2 + $0x180] sm:$0xff]
          %v1320 = vld [vmem:[#allocation2 + $0x188] sm:$0xff]
          %v1321 = vld [vmem:[#allocation2 + $0x190] sm:$0xff]
          %v1322 = vld [vmem:[#allocation2 + $0x198] sm:$0xff]
          %v1323 = vld [vmem:[#allocation2 + $0x1a0] sm:$0xff]
          %v1324 = vld [vmem:[#allocation2 + $0x1a8] sm:$0xff]
          %v1325 = vld [vmem:[#allocation2 + $0x1b0] sm:$0xff]
          %v1326 = vld [vmem:[#allocation2 + $0x1b8] sm:$0xff]
          %v1327 = vld [vmem:[#allocation2 + $0x1c0] sm:$0xff]
          %v1328 = vld [vmem:[#allocation2 + $0x1c8] sm:$0xff]
          %v1329 = vld [vmem:[#allocation2 + $0x1d0] sm:$0xff]
          %v1330 = vld [vmem:[#allocation2 + $0x1d8] sm:$0xff]
          %v1331 = vld [vmem:[#allocation2 + $0x1e0] sm:$0xff]
          %v1332 = vld [vmem:[#allocation2 + $0x1e8] sm:$0xff]
          %v1333 = vld [vmem:[#allocation2 + $0x1f0] sm:$0xff]
          %v1334 = vld [vmem:[#allocation2 + $0x1f8] sm:$0xff]
          %v1335 = vld [vmem:[%s416] sm:$0x3]
          %v1337 = vlaneseq
          %v1338 = vshrl.u32 %v1337, 7
          %v1339 = vsub.s32 0, %v1338
          %v1340 = vrot.slane %v1335, %v1339
          %v1341 = vlaneseq
          %v1342 = vshrl.u32 %v1341, 7
          %v1343 = vsub.s32 1, %v1342
          %v1344 = vrot.slane %v1335, %v1343
          %v1347 = vadd.f32 %v1271, %v1340
          %v1348 = vadd.f32 %v1272, %v1344
          %v1349 = vadd.f32 %v1273, %v1340
          %v1350 = vadd.f32 %v1274, %v1344
          %v1351 = vadd.f32 %v1275, %v1340
          %v1352 = vadd.f32 %v1276, %v1344
          %v1353 = vadd.f32 %v1277, %v1340
          %v1354 = vadd.f32 %v1278, %v1344
          %v1355 = vadd.f32 %v1279, %v1340
          %v1356 = vadd.f32 %v1280, %v1344
          %v1357 = vadd.f32 %v1281, %v1340
          %v1358 = vadd.f32 %v1282, %v1344
          %v1359 = vadd.f32 %v1283, %v1340
          %v1360 = vadd.f32 %v1284, %v1344
          %v1361 = vadd.f32 %v1285, %v1340
          %v1362 = vadd.f32 %v1286, %v1344
          %v1363 = vadd.f32 %v1287, %v1340
          %v1364 = vadd.f32 %v1288, %v1344
          %v1365 = vadd.f32 %v1289, %v1340
          %v1366 = vadd.f32 %v1290, %v1344
          %v1367 = vadd.f32 %v1291, %v1340
          %v1368 = vadd.f32 %v1292, %v1344
          %v1369 = vadd.f32 %v1293, %v1340
          %v1370 = vadd.f32 %v1294, %v1344
          %v1371 = vadd.f32 %v1295, %v1340
          %v1372 = vadd.f32 %v1296, %v1344
          %v1373 = vadd.f32 %v1297, %v1340
          %v1374 = vadd.f32 %v1298, %v1344
          %v1375 = vadd.f32 %v1299, %v1340
          %v1376 = vadd.f32 %v1300, %v1344
          %v1377 = vadd.f32 %v1301, %v1340
          %v1378 = vadd.f32 %v1302, %v1344
          %v1379 = vadd.f32 %v1303, %v1340
          %v1380 = vadd.f32 %v1304, %v1344
          %v1381 = vadd.f32 %v1305, %v1340
          %v1382 = vadd.f32 %v1306, %v1344
          %v1383 = vadd.f32 %v1307, %v1340
          %v1384 = vadd.f32 %v1308, %v1344
          %v1385 = vadd.f32 %v1309, %v1340
          %v1386 = vadd.f32 %v1310, %v1344
          %v1387 = vadd.f32 %v1311, %v1340
          %v1388 = vadd.f32 %v1312, %v1344
          %v1389 = vadd.f32 %v1313, %v1340
          %v1390 = vadd.f32 %v1314, %v1344
          %v1391 = vadd.f32 %v1315, %v1340
          %v1392 = vadd.f32 %v1316, %v1344
          %v1393 = vadd.f32 %v1317, %v1340
          %v1394 = vadd.f32 %v1318, %v1344
          %v1395 = vadd.f32 %v1319, %v1340
          %v1396 = vadd.f32 %v1320, %v1344
          %v1397 = vadd.f32 %v1321, %v1340
          %v1398 = vadd.f32 %v1322, %v1344
          %v1399 = vadd.f32 %v1323, %v1340
          %v1400 = vadd.f32 %v1324, %v1344
          %v1401 = vadd.f32 %v1325, %v1340
          %v1402 = vadd.f32 %v1326, %v1344
          %v1403 = vadd.f32 %v1327, %v1340
          %v1404 = vadd.f32 %v1328, %v1344
          %v1405 = vadd.f32 %v1329, %v1340
          %v1406 = vadd.f32 %v1330, %v1344
          %v1407 = vadd.f32 %v1331, %v1340
          %v1408 = vadd.f32 %v1332, %v1344
          %v1409 = vadd.f32 %v1333, %v1340
          %v1410 = vadd.f32 %v1334, %v1344
          %v1411 = vmax.f32 %v1347, 0.0
          %v1412 = vmax.f32 %v1348, 0.0
          %v1413 = vmax.f32 %v1349, 0.0
          %v1414 = vmax.f32 %v1350, 0.0
          %v1415 = vmax.f32 %v1351, 0.0
          %v1416 = vmax.f32 %v1352, 0.0
          %v1417 = vmax.f32 %v1353, 0.0
          %v1418 = vmax.f32 %v1354, 0.0
          %v1419 = vmax.f32 %v1355, 0.0
          %v1420 = vmax.f32 %v1356, 0.0
          %v1421 = vmax.f32 %v1357, 0.0
          %v1422 = vmax.f32 %v1358, 0.0
          %v1423 = vmax.f32 %v1359, 0.0
          %v1424 = vmax.f32 %v1360, 0.0
          %v1425 = vmax.f32 %v1361, 0.0
          %v1426 = vmax.f32 %v1362, 0.0
          %v1427 = vmax.f32 %v1363, 0.0
          %v1428 = vmax.f32 %v1364, 0.0
          %v1429 = vmax.f32 %v1365, 0.0
          %v1430 = vmax.f32 %v1366, 0.0
          %v1431 = vmax.f32 %v1367, 0.0
          %v1432 = vmax.f32 %v1368, 0.0
          %v1433 = vmax.f32 %v1369, 0.0
          %v1434 = vmax.f32 %v1370, 0.0
          %v1435 = vmax.f32 %v1371, 0.0
          %v1436 = vmax.f32 %v1372, 0.0
          %v1437 = vmax.f32 %v1373, 0.0
          %v1438 = vmax.f32 %v1374, 0.0
          %v1439 = vmax.f32 %v1375, 0.0
          %v1440 = vmax.f32 %v1376, 0.0
          %v1441 = vmax.f32 %v1377, 0.0
          %v1442 = vmax.f32 %v1378, 0.0
          %v1443 = vmax.f32 %v1379, 0.0
          %v1444 = vmax.f32 %v1380, 0.0
          %v1445 = vmax.f32 %v1381, 0.0
          %v1446 = vmax.f32 %v1382, 0.0
          %v1447 = vmax.f32 %v1383, 0.0
          %v1448 = vmax.f32 %v1384, 0.0
          %v1449 = vmax.f32 %v1385, 0.0
          %v1450 = vmax.f32 %v1386, 0.0
          %v1451 = vmax.f32 %v1387, 0.0
          %v1452 = vmax.f32 %v1388, 0.0
          %v1453 = vmax.f32 %v1389, 0.0
          %v1454 = vmax.f32 %v1390, 0.0
          %v1455 = vmax.f32 %v1391, 0.0
          %v1456 = vmax.f32 %v1392, 0.0
          %v1457 = vmax.f32 %v1393, 0.0
          %v1458 = vmax.f32 %v1394, 0.0
          %v1459 = vmax.f32 %v1395, 0.0
          %v1460 = vmax.f32 %v1396, 0.0
          %v1461 = vmax.f32 %v1397, 0.0
          %v1462 = vmax.f32 %v1398, 0.0
          %v1463 = vmax.f32 %v1399, 0.0
          %v1464 = vmax.f32 %v1400, 0.0
          %v1465 = vmax.f32 %v1401, 0.0
          %v1466 = vmax.f32 %v1402, 0.0
          %v1467 = vmax.f32 %v1403, 0.0
          %v1468 = vmax.f32 %v1404, 0.0
          %v1469 = vmax.f32 %v1405, 0.0
          %v1470 = vmax.f32 %v1406, 0.0
          %v1471 = vmax.f32 %v1407, 0.0
          %v1472 = vmax.f32 %v1408, 0.0
          %v1473 = vmax.f32 %v1409, 0.0
          %v1474 = vmax.f32 %v1410, 0.0
          %1475 = vst [vmem:[%s427] sm:$0xff] %v1411
          %1476 = vst [vmem:[%s427 + $0x8] sm:$0xff] %v1412
          %1477 = vst [vmem:[%s427 + $0x10] sm:$0xff] %v1413
          %1478 = vst [vmem:[%s427 + $0x18] sm:$0xff] %v1414
          %1479 = vst [vmem:[%s427 + $0x20] sm:$0xff] %v1415
          %1480 = vst [vmem:[%s427 + $0x28] sm:$0xff] %v1416
          %1481 = vst [vmem:[%s427 + $0x30] sm:$0xff] %v1417
          %1482 = vst [vmem:[%s427 + $0x38] sm:$0xff] %v1418
          %1483 = vst [vmem:[%s427 + $0x40] sm:$0xff] %v1419
          %1484 = vst [vmem:[%s427 + $0x48] sm:$0xff] %v1420
          %1485 = vst [vmem:[%s427 + $0x50] sm:$0xff] %v1421
          %1486 = vst [vmem:[%s427 + $0x58] sm:$0xff] %v1422
          %1487 = vst [vmem:[%s427 + $0x60] sm:$0xff] %v1423
          %1488 = vst [vmem:[%s427 + $0x68] sm:$0xff] %v1424
          %1489 = vst [vmem:[%s427 + $0x70] sm:$0xff] %v1425
          %1490 = vst [vmem:[%s427 + $0x78] sm:$0xff] %v1426
          %1491 = vst [vmem:[%s427 + $0x80] sm:$0xff] %v1427
          %1492 = vst [vmem:[%s427 + $0x88] sm:$0xff] %v1428
          %1493 = vst [vmem:[%s427 + $0x90] sm:$0xff] %v1429
          %1494 = vst [vmem:[%s427 + $0x98] sm:$0xff] %v1430
          %1495 = vst [vmem:[%s427 + $0xa0] sm:$0xff] %v1431
          %1496 = vst [vmem:[%s427 + $0xa8] sm:$0xff] %v1432
          %1497 = vst [vmem:[%s427 + $0xb0] sm:$0xff] %v1433
          %1498 = vst [vmem:[%s427 + $0xb8] sm:$0xff] %v1434
          %1499 = vst [vmem:[%s427 + $0xc0] sm:$0xff] %v1435
          %1500 = vst [vmem:[%s427 + $0xc8] sm:$0xff] %v1436
          %1501 = vst [vmem:[%s427 + $0xd0] sm:$0xff] %v1437
          %1502 = vst [vmem:[%s427 + $0xd8] sm:$0xff] %v1438
          %1503 = vst [vmem:[%s427 + $0xe0] sm:$0xff] %v1439
          %1504 = vst [vmem:[%s427 + $0xe8] sm:$0xff] %v1440
          %1505 = vst [vmem:[%s427 + $0xf0] sm:$0xff] %v1441
          %1506 = vst [vmem:[%s427 + $0xf8] sm:$0xff] %v1442
          %1507 = vst [vmem:[%s427 + $0x100] sm:$0xff] %v1443
          %1508 = vst [vmem:[%s427 + $0x108] sm:$0xff] %v1444
          %1509 = vst [vmem:[%s427 + $0x110] sm:$0xff] %v1445
          %1510 = vst [vmem:[%s427 + $0x118] sm:$0xff] %v1446
          %1511 = vst [vmem:[%s427 + $0x120] sm:$0xff] %v1447
          %1512 = vst [vmem:[%s427 + $0x128] sm:$0xff] %v1448
          %1513 = vst [vmem:[%s427 + $0x130] sm:$0xff] %v1449
          %1514 = vst [vmem:[%s427 + $0x138] sm:$0xff] %v1450
          %1515 = vst [vmem:[%s427 + $0x140] sm:$0xff] %v1451
          %1516 = vst [vmem:[%s427 + $0x148] sm:$0xff] %v1452
          %1517 = vst [vmem:[%s427 + $0x150] sm:$0xff] %v1453
          %1518 = vst [vmem:[%s427 + $0x158] sm:$0xff] %v1454
          %1519 = vst [vmem:[%s427 + $0x160] sm:$0xff] %v1455
          %1520 = vst [vmem:[%s427 + $0x168] sm:$0xff] %v1456
          %1521 = vst [vmem:[%s427 + $0x170] sm:$0xff] %v1457
          %1522 = vst [vmem:[%s427 + $0x178] sm:$0xff] %v1458
          %1523 = vst [vmem:[%s427 + $0x180] sm:$0xff] %v1459
          %1524 = vst [vmem:[%s427 + $0x188] sm:$0xff] %v1460
          %1525 = vst [vmem:[%s427 + $0x190] sm:$0xff] %v1461
          %1526 = vst [vmem:[%s427 + $0x198] sm:$0xff] %v1462
          %1527 = vst [vmem:[%s427 + $0x1a0] sm:$0xff] %v1463
          %1528 = vst [vmem:[%s427 + $0x1a8] sm:$0xff] %v1464
          %1529 = vst [vmem:[%s427 + $0x1b0] sm:$0xff] %v1465
          %1530 = vst [vmem:[%s427 + $0x1b8] sm:$0xff] %v1466
          %1531 = vst [vmem:[%s427 + $0x1c0] sm:$0xff] %v1467
          %1532 = vst [vmem:[%s427 + $0x1c8] sm:$0xff] %v1468
          %1533 = vst [vmem:[%s427 + $0x1d0] sm:$0xff] %v1469
          %1534 = vst [vmem:[%s427 + $0x1d8] sm:$0xff] %v1470
          %1535 = vst [vmem:[%s427 + $0x1e0] sm:$0xff] %v1471
          %1536 = vst [vmem:[%s427 + $0x1e8] sm:$0xff] %v1472
          %1537 = vst [vmem:[%s427 + $0x1f0] sm:$0xff] %v1473
          %1538 = vst [vmem:[%s427 + $0x1f8] sm:$0xff] %v1474
        $region78: #{_lambda_.7} parent=65 // pred_fallthru
          _
        %s1539 = smul.u32 32, %s19
        %s1540 = smul.u32 2, %s20
        %p1541 = scmp.lt.s32.totalorder %s1539, 63
        %s1542 = scalar_select %p1541, %s1539, 63
        %p1543 = scmp.lt.s32.totalorder %s1540, 1
        %s1544 = scalar_select %p1543, %s1540, 1
        %s1545 = smul.addr %s1542, 2
        %s1546 = sadd.s32 %s1544, %s1545
        %s1547 = smul.addr %s1546, 8
        %s1548 = scalar_lea.vmem %s3, %s1547
        // Predicated region
        $region79: #{_lambda_.7} parent=65 // pred_check
          %p1549 = pneg %p135
        $region80: #{_lambda_.7} parent=65 // pred_check_branch
          %1551 = sbr.rel (%p1549) target = $region82
        $region81: #{_lambda_.7} parent=65 // pred_region
          %s1552 = smul.u32 32, %s19
          %s1553 = smul.u32 2, %s20
        $region82: #{_lambda_.7} parent=65 // pred_fallthru
          _
      $region66: #{_lambda_.7} parent=5 // pred_fallthru
        _
      %p1554 = scmp.le.s32.totalorder 2, %s9
      // Predicated region
      $region83: #{_lambda_.7} parent=5 // pred_check
        %p1555 = pneg %p1554
      $region84: #{_lambda_.7} parent=5 // pred_check_branch
        %1557 = sbr.rel (%p1555) target = $region86
      $region85: #{_lambda_.7} parent=5 // pred_region
        %s1558 = ssub.s32 %s9, 2
        // Predicated region
        $region87: #{_lambda_.7} parent=85 // pred_check
          %p1559 = pneg %p141
        $region88: #{_lambda_.7} parent=85 // pred_check_branch
          %1561 = sbr.rel (%p1559) target = $region90
        $region89: #{_lambda_.7} parent=85 // pred_region
          %s1562 = smul.u32 32, %s22
          %s1563 = smul.u32 2, %s23
          %p1564 = scmp.lt.s32.totalorder %s1562, 63
          %s1565 = scalar_select %p1564, %s1562, 63
          %p1566 = scmp.lt.s32.totalorder %s1563, 1
          %s1567 = scalar_select %p1566, %s1563, 1
          %s1568 = smul.addr %s1565, 2
          %s1569 = sadd.s32 %s1567, %s1568
          %s1570 = smul.addr %s1569, 8
          %s1571 = scalar_lea.vmem %s3, %s1570
        $region90: #{_lambda_.7} parent=85 // pred_fallthru
          _
      $region86: #{_lambda_.7} parent=5 // pred_fallthru
        _
    $region6: #{_lambda_.7} parent=1 // loop_footer
      %s13 = sadd.s32 1, %s9
    $region7: #{_lambda_.7} parent=1 // loop_footer_branch
      %8 = sbr.rel target = $region3
    $region8: #{_lambda_.7} parent=1 // loop_exit
      _

// kernel: _lambda_.10
$region0: #{_lambda_.10}
  #allocation0 [shape = 'u32[]', space=smem, size = 0x4, offset = 0x4, fixed_abs, tag = 'smem constant byte address 0x4 - core index']
  #allocation1 [shape = 'u32[144,128]{1,0:T(1,128)}', space=vmem, size = 0x12000, scoped, tag = 'internal scratch']
  %s0 = inlined_call_operand.vmem [shape: f32[512,256], index: 0, kind: input, shape index: {}]
  %s1 = inlined_call_operand.vmem [shape: f32[512,256], index: 1, kind: input, shape index: {}]
  %s2 = inlined_call_operand.vmem [shape: f32[512,256], index: 2, kind: input, shape index: {}]
  %s3 = inlined_call_operand.vmem [shape: f32[512,256], index: 3, kind: input, shape index: {}]
  %s4 = inlined_call_operand.vmem [shape: f32[512,1], index: 4, kind: input, shape index: {}]
  %s5 = inlined_call_operand.vmem [shape: f32[512,512], index: 5, kind: output, shape index: {}]
  %s6 = sld [smem:[#allocation0]]
  $region30: #{_lambda_.10} parent=0
    _
  %s8 = ssub.s32 1, %s6
  %s9 = scalar_select 0, %s8, %s6
  // Predicated region
  $region2: #{_lambda_.10} parent=0 // pred_check
    _
  $region3: #{_lambda_.10} parent=0 // pred_check_branch
    %11 = sbr.rel (0) target = $region5
  $region4: #{_lambda_.10} parent=0 // pred_region
    _
  $region5: #{_lambda_.10} parent=0 // pred_fallthru
    _
  // Predicated region
  $region6: #{_lambda_.10} parent=0 // pred_check
    _
  $region7: #{_lambda_.10} parent=0 // pred_check_branch
    %13 = sbr.rel (0) target = $region9
  $region8: #{_lambda_.10} parent=0 // pred_region
    _
  $region9: #{_lambda_.10} parent=0 // pred_fallthru
    _
  // Predicated region
  $region10: #{_lambda_.10} parent=0 // pred_check
    _
  $region11: #{_lambda_.10} parent=0 // pred_check_branch
    %15 = sbr.rel (0) target = $region13
  $region12: #{_lambda_.10} parent=0 // pred_region
    _
  $region13: #{_lambda_.10} parent=0 // pred_fallthru
    _
  // Predicated region
  $region14: #{_lambda_.10} parent=0 // pred_check
    _
  $region15: #{_lambda_.10} parent=0 // pred_check_branch
    %17 = sbr.rel (0) target = $region17
  $region16: #{_lambda_.10} parent=0 // pred_region
    _
  $region17: #{_lambda_.10} parent=0 // pred_fallthru
    _
  // Predicated region
  $region18: #{_lambda_.10} parent=0 // pred_check
    _
  $region19: #{_lambda_.10} parent=0 // pred_check_branch
    %19 = sbr.rel (0) target = $region21
  $region20: #{_lambda_.10} parent=0 // pred_region
    _
  $region21: #{_lambda_.10} parent=0 // pred_fallthru
    _
  %v20 = vld [vmem:[%s0] sm:$0xff]
  %v21 = vld [vmem:[%s0 + $0x8] sm:$0xff]
  %v22 = vld [vmem:[%s0 + $0x10] sm:$0xff]
  %v23 = vld [vmem:[%s0 + $0x18] sm:$0xff]
  %v24 = vld [vmem:[%s0 + $0x20] sm:$0xff]
  %v25 = vld [vmem:[%s0 + $0x28] sm:$0xff]
  %v26 = vld [vmem:[%s0 + $0x30] sm:$0xff]
  %v27 = vld [vmem:[%s0 + $0x38] sm:$0xff]
  %v28 = vld [vmem:[%s0 + $0x40] sm:$0xff]
  %v29 = vld [vmem:[%s0 + $0x48] sm:$0xff]
  %v30 = vld [vmem:[%s0 + $0x50] sm:$0xff]
  %v31 = vld [vmem:[%s0 + $0x58] sm:$0xff]
  %v32 = vld [vmem:[%s0 + $0x60] sm:$0xff]
  %v33 = vld [vmem:[%s0 + $0x68] sm:$0xff]
  %v34 = vld [vmem:[%s0 + $0x70] sm:$0xff]
  %v35 = vld [vmem:[%s0 + $0x78] sm:$0xff]
  %v36 = vld [vmem:[%s0 + $0x80] sm:$0xff]
  %v37 = vld [vmem:[%s0 + $0x88] sm:$0xff]
  %v38 = vld [vmem:[%s0 + $0x90] sm:$0xff]
  %v39 = vld [vmem:[%s0 + $0x98] sm:$0xff]
  %v40 = vld [vmem:[%s0 + $0xa0] sm:$0xff]
  %v41 = vld [vmem:[%s0 + $0xa8] sm:$0xff]
  %v42 = vld [vmem:[%s0 + $0xb0] sm:$0xff]
  %v43 = vld [vmem:[%s0 + $0xb8] sm:$0xff]
  %v44 = vld [vmem:[%s0 + $0xc0] sm:$0xff]
  %v45 = vld [vmem:[%s0 + $0xc8] sm:$0xff]
  %v46 = vld [vmem:[%s0 + $0xd0] sm:$0xff]
  %v47 = vld [vmem:[%s0 + $0xd8] sm:$0xff]
  %v48 = vld [vmem:[%s0 + $0xe0] sm:$0xff]
  %v49 = vld [vmem:[%s0 + $0xe8] sm:$0xff]
  %v50 = vld [vmem:[%s0 + $0xf0] sm:$0xff]
  %v51 = vld [vmem:[%s0 + $0xf8] sm:$0xff]
  %v52 = vld [vmem:[%s0 + $0x100] sm:$0xff]
  %v53 = vld [vmem:[%s0 + $0x108] sm:$0xff]
  %v54 = vld [vmem:[%s0 + $0x110] sm:$0xff]
  %v55 = vld [vmem:[%s0 + $0x118] sm:$0xff]
  %v56 = vld [vmem:[%s0 + $0x120] sm:$0xff]
  %v57 = vld [vmem:[%s0 + $0x128] sm:$0xff]
  %v58 = vld [vmem:[%s0 + $0x130] sm:$0xff]
  %v59 = vld [vmem:[%s0 + $0x138] sm:$0xff]
  %v60 = vld [vmem:[%s0 + $0x140] sm:$0xff]
  %v61 = vld [vmem:[%s0 + $0x148] sm:$0xff]
  %v62 = vld [vmem:[%s0 + $0x150] sm:$0xff]
  %v63 = vld [vmem:[%s0 + $0x158] sm:$0xff]
  %v64 = vld [vmem:[%s0 + $0x160] sm:$0xff]
  %v65 = vld [vmem:[%s0 + $0x168] sm:$0xff]
  %v66 = vld [vmem:[%s0 + $0x170] sm:$0xff]
  %v67 = vld [vmem:[%s0 + $0x178] sm:$0xff]
  %v68 = vld [vmem:[%s0 + $0x180] sm:$0xff]
  %v69 = vld [vmem:[%s0 + $0x188] sm:$0xff]
  %v70 = vld [vmem:[%s0 + $0x190] sm:$0xff]
  %v71 = vld [vmem:[%s0 + $0x198] sm:$0xff]
  %v72 = vld [vmem:[%s0 + $0x1a0] sm:$0xff]
  %v73 = vld [vmem:[%s0 + $0x1a8] sm:$0xff]
  %v74 = vld [vmem:[%s0 + $0x1b0] sm:$0xff]
  %v75 = vld [vmem:[%s0 + $0x1b8] sm:$0xff]
  %v76 = vld [vmem:[%s0 + $0x1c0] sm:$0xff]
  %v77 = vld [vmem:[%s0 + $0x1c8] sm:$0xff]
  %v78 = vld [vmem:[%s0 + $0x1d0] sm:$0xff]
  %v79 = vld [vmem:[%s0 + $0x1d8] sm:$0xff]
  %v80 = vld [vmem:[%s0 + $0x1e0] sm:$0xff]
  %v81 = vld [vmem:[%s0 + $0x1e8] sm:$0xff]
  %v82 = vld [vmem:[%s0 + $0x1f0] sm:$0xff]
  %v83 = vld [vmem:[%s0 + $0x1f8] sm:$0xff]
  %v84 = vld [vmem:[%s0 + $0x200] sm:$0xff]
  %v85 = vld [vmem:[%s0 + $0x208] sm:$0xff]
  %v86 = vld [vmem:[%s0 + $0x210] sm:$0xff]
  %v87 = vld [vmem:[%s0 + $0x218] sm:$0xff]
  %v88 = vld [vmem:[%s0 + $0x220] sm:$0xff]
  %v89 = vld [vmem:[%s0 + $0x228] sm:$0xff]
  %v90 = vld [vmem:[%s0 + $0x230] sm:$0xff]
  %v91 = vld [vmem:[%s0 + $0x238] sm:$0xff]
  %v92 = vld [vmem:[%s0 + $0x240] sm:$0xff]
  %v93 = vld [vmem:[%s0 + $0x248] sm:$0xff]
  %v94 = vld [vmem:[%s0 + $0x250] sm:$0xff]
  %v95 = vld [vmem:[%s0 + $0x258] sm:$0xff]
  %v96 = vld [vmem:[%s0 + $0x260] sm:$0xff]
  %v97 = vld [vmem:[%s0 + $0x268] sm:$0xff]
  %v98 = vld [vmem:[%s0 + $0x270] sm:$0xff]
  %v99 = vld [vmem:[%s0 + $0x278] sm:$0xff]
  %v100 = vld [vmem:[%s0 + $0x280] sm:$0xff]
  %v101 = vld [vmem:[%s0 + $0x288] sm:$0xff]
  %v102 = vld [vmem:[%s0 + $0x290] sm:$0xff]
  %v103 = vld [vmem:[%s0 + $0x298] sm:$0xff]
  %v104 = vld [vmem:[%s0 + $0x2a0] sm:$0xff]
  %v105 = vld [vmem:[%s0 + $0x2a8] sm:$0xff]
  %v106 = vld [vmem:[%s0 + $0x2b0] sm:$0xff]
  %v107 = vld [vmem:[%s0 + $0x2b8] sm:$0xff]
  %v108 = vld [vmem:[%s0 + $0x2c0] sm:$0xff]
  %v109 = vld [vmem:[%s0 + $0x2c8] sm:$0xff]
  %v110 = vld [vmem:[%s0 + $0x2d0] sm:$0xff]
  %v111 = vld [vmem:[%s0 + $0x2d8] sm:$0xff]
  %v112 = vld [vmem:[%s0 + $0x2e0] sm:$0xff]
  %v113 = vld [vmem:[%s0 + $0x2e8] sm:$0xff]
  %v114 = vld [vmem:[%s0 + $0x2f0] sm:$0xff]
  %v115 = vld [vmem:[%s0 + $0x2f8] sm:$0xff]
  %v116 = vld [vmem:[%s0 + $0x300] sm:$0xff]
  %v117 = vld [vmem:[%s0 + $0x308] sm:$0xff]
  %v118 = vld [vmem:[%s0 + $0x310] sm:$0xff]
  %v119 = vld [vmem:[%s0 + $0x318] sm:$0xff]
  %v120 = vld [vmem:[%s0 + $0x320] sm:$0xff]
  %v121 = vld [vmem:[%s0 + $0x328] sm:$0xff]
  %v122 = vld [vmem:[%s0 + $0x330] sm:$0xff]
  %v123 = vld [vmem:[%s0 + $0x338] sm:$0xff]
  %v124 = vld [vmem:[%s0 + $0x340] sm:$0xff]
  %v125 = vld [vmem:[%s0 + $0x348] sm:$0xff]
  %v126 = vld [vmem:[%s0 + $0x350] sm:$0xff]
  %v127 = vld [vmem:[%s0 + $0x358] sm:$0xff]
  %v128 = vld [vmem:[%s0 + $0x360] sm:$0xff]
  %v129 = vld [vmem:[%s0 + $0x368] sm:$0xff]
  %v130 = vld [vmem:[%s0 + $0x370] sm:$0xff]
  %v131 = vld [vmem:[%s0 + $0x378] sm:$0xff]
  %v132 = vld [vmem:[%s0 + $0x380] sm:$0xff]
  %v133 = vld [vmem:[%s0 + $0x388] sm:$0xff]
  %v134 = vld [vmem:[%s0 + $0x390] sm:$0xff]
  %v135 = vld [vmem:[%s0 + $0x398] sm:$0xff]
  %v136 = vld [vmem:[%s0 + $0x3a0] sm:$0xff]
  %v137 = vld [vmem:[%s0 + $0x3a8] sm:$0xff]
  %v138 = vld [vmem:[%s0 + $0x3b0] sm:$0xff]
  %v139 = vld [vmem:[%s0 + $0x3b8] sm:$0xff]
  %v140 = vld [vmem:[%s0 + $0x3c0] sm:$0xff]
  %v141 = vld [vmem:[%s0 + $0x3c8] sm:$0xff]
  %v142 = vld [vmem:[%s0 + $0x3d0] sm:$0xff]
  %v143 = vld [vmem:[%s0 + $0x3d8] sm:$0xff]
  %v144 = vld [vmem:[%s0 + $0x3e0] sm:$0xff]
  %v145 = vld [vmem:[%s0 + $0x3e8] sm:$0xff]
  %v146 = vld [vmem:[%s0 + $0x3f0] sm:$0xff]
  %v147 = vld [vmem:[%s0 + $0x3f8] sm:$0xff]
  %v148 = vld [vmem:[%s1] sm:$0xff]
  %v149 = vld [vmem:[%s1 + $0x8] sm:$0xff]
  %v150 = vld [vmem:[%s1 + $0x10] sm:$0xff]
  %v151 = vld [vmem:[%s1 + $0x18] sm:$0xff]
  %v152 = vld [vmem:[%s1 + $0x20] sm:$0xff]
  %v153 = vld [vmem:[%s1 + $0x28] sm:$0xff]
  %v154 = vld [vmem:[%s1 + $0x30] sm:$0xff]
  %v155 = vld [vmem:[%s1 + $0x38] sm:$0xff]
  %v156 = vld [vmem:[%s1 + $0x40] sm:$0xff]
  %v157 = vld [vmem:[%s1 + $0x48] sm:$0xff]
  %v158 = vld [vmem:[%s1 + $0x50] sm:$0xff]
  %v159 = vld [vmem:[%s1 + $0x58] sm:$0xff]
  %v160 = vld [vmem:[%s1 + $0x60] sm:$0xff]
  %v161 = vld [vmem:[%s1 + $0x68] sm:$0xff]
  %v162 = vld [vmem:[%s1 + $0x70] sm:$0xff]
  %v163 = vld [vmem:[%s1 + $0x78] sm:$0xff]
  %v164 = vld [vmem:[%s1 + $0x80] sm:$0xff]
  %v165 = vld [vmem:[%s1 + $0x88] sm:$0xff]
  %v166 = vld [vmem:[%s1 + $0x90] sm:$0xff]
  %v167 = vld [vmem:[%s1 + $0x98] sm:$0xff]
  %v168 = vld [vmem:[%s1 + $0xa0] sm:$0xff]
  %v169 = vld [vmem:[%s1 + $0xa8] sm:$0xff]
  %v170 = vld [vmem:[%s1 + $0xb0] sm:$0xff]
  %v171 = vld [vmem:[%s1 + $0xb8] sm:$0xff]
  %v172 = vld [vmem:[%s1 + $0xc0] sm:$0xff]
  %v173 = vld [vmem:[%s1 + $0xc8] sm:$0xff]
  %v174 = vld [vmem:[%s1 + $0xd0] sm:$0xff]
  %v175 = vld [vmem:[%s1 + $0xd8] sm:$0xff]
  %v176 = vld [vmem:[%s1 + $0xe0] sm:$0xff]
  %v177 = vld [vmem:[%s1 + $0xe8] sm:$0xff]
  %v178 = vld [vmem:[%s1 + $0xf0] sm:$0xff]
  %v179 = vld [vmem:[%s1 + $0xf8] sm:$0xff]
  %v180 = vld [vmem:[%s1 + $0x100] sm:$0xff]
  %v181 = vld [vmem:[%s1 + $0x108] sm:$0xff]
  %v182 = vld [vmem:[%s1 + $0x110] sm:$0xff]
  %v183 = vld [vmem:[%s1 + $0x118] sm:$0xff]
  %v184 = vld [vmem:[%s1 + $0x120] sm:$0xff]
  %v185 = vld [vmem:[%s1 + $0x128] sm:$0xff]
  %v186 = vld [vmem:[%s1 + $0x130] sm:$0xff]
  %v187 = vld [vmem:[%s1 + $0x138] sm:$0xff]
  %v188 = vld [vmem:[%s1 + $0x140] sm:$0xff]
  %v189 = vld [vmem:[%s1 + $0x148] sm:$0xff]
  %v190 = vld [vmem:[%s1 + $0x150] sm:$0xff]
  %v191 = vld [vmem:[%s1 + $0x158] sm:$0xff]
  %v192 = vld [vmem:[%s1 + $0x160] sm:$0xff]
  %v193 = vld [vmem:[%s1 + $0x168] sm:$0xff]
  %v194 = vld [vmem:[%s1 + $0x170] sm:$0xff]
  %v195 = vld [vmem:[%s1 + $0x178] sm:$0xff]
  %v196 = vld [vmem:[%s1 + $0x180] sm:$0xff]
  %v197 = vld [vmem:[%s1 + $0x188] sm:$0xff]
  %v198 = vld [vmem:[%s1 + $0x190] sm:$0xff]
  %v199 = vld [vmem:[%s1 + $0x198] sm:$0xff]
  %v200 = vld [vmem:[%s1 + $0x1a0] sm:$0xff]
  %v201 = vld [vmem:[%s1 + $0x1a8] sm:$0xff]
  %v202 = vld [vmem:[%s1 + $0x1b0] sm:$0xff]
  %v203 = vld [vmem:[%s1 + $0x1b8] sm:$0xff]
  %v204 = vld [vmem:[%s1 + $0x1c0] sm:$0xff]
  %v205 = vld [vmem:[%s1 + $0x1c8] sm:$0xff]
  %v206 = vld [vmem:[%s1 + $0x1d0] sm:$0xff]
  %v207 = vld [vmem:[%s1 + $0x1d8] sm:$0xff]
  %v208 = vld [vmem:[%s1 + $0x1e0] sm:$0xff]
  %v209 = vld [vmem:[%s1 + $0x1e8] sm:$0xff]
  %v210 = vld [vmem:[%s1 + $0x1f0] sm:$0xff]
  %v211 = vld [vmem:[%s1 + $0x1f8] sm:$0xff]
  %v212 = vld [vmem:[%s1 + $0x200] sm:$0xff]
  %v213 = vld [vmem:[%s1 + $0x208] sm:$0xff]
  %v214 = vld [vmem:[%s1 + $0x210] sm:$0xff]
  %v215 = vld [vmem:[%s1 + $0x218] sm:$0xff]
  %v216 = vld [vmem:[%s1 + $0x220] sm:$0xff]
  %v217 = vld [vmem:[%s1 + $0x228] sm:$0xff]
  %v218 = vld [vmem:[%s1 + $0x230] sm:$0xff]
  %v219 = vld [vmem:[%s1 + $0x238] sm:$0xff]
  %v220 = vld [vmem:[%s1 + $0x240] sm:$0xff]
  %v221 = vld [vmem:[%s1 + $0x248] sm:$0xff]
  %v222 = vld [vmem:[%s1 + $0x250] sm:$0xff]
  %v223 = vld [vmem:[%s1 + $0x258] sm:$0xff]
  %v224 = vld [vmem:[%s1 + $0x260] sm:$0xff]
  %v225 = vld [vmem:[%s1 + $0x268] sm:$0xff]
  %v226 = vld [vmem:[%s1 + $0x270] sm:$0xff]
  %v227 = vld [vmem:[%s1 + $0x278] sm:$0xff]
  %v228 = vld [vmem:[%s1 + $0x280] sm:$0xff]
  %v229 = vld [vmem:[%s1 + $0x288] sm:$0xff]
  %v230 = vld [vmem:[%s1 + $0x290] sm:$0xff]
  %v231 = vld [vmem:[%s1 + $0x298] sm:$0xff]
  %v232 = vld [vmem:[%s1 + $0x2a0] sm:$0xff]
  %v233 = vld [vmem:[%s1 + $0x2a8] sm:$0xff]
  %v234 = vld [vmem:[%s1 + $0x2b0] sm:$0xff]
  %v235 = vld [vmem:[%s1 + $0x2b8] sm:$0xff]
  %v236 = vld [vmem:[%s1 + $0x2c0] sm:$0xff]
  %v237 = vld [vmem:[%s1 + $0x2c8] sm:$0xff]
  %v238 = vld [vmem:[%s1 + $0x2d0] sm:$0xff]
  %v239 = vld [vmem:[%s1 + $0x2d8] sm:$0xff]
  %v240 = vld [vmem:[%s1 + $0x2e0] sm:$0xff]
  %v241 = vld [vmem:[%s1 + $0x2e8] sm:$0xff]
  %v242 = vld [vmem:[%s1 + $0x2f0] sm:$0xff]
  %v243 = vld [vmem:[%s1 + $0x2f8] sm:$0xff]
  %v244 = vld [vmem:[%s1 + $0x300] sm:$0xff]
  %v245 = vld [vmem:[%s1 + $0x308] sm:$0xff]
  %v246 = vld [vmem:[%s1 + $0x310] sm:$0xff]
  %v247 = vld [vmem:[%s1 + $0x318] sm:$0xff]
  %v248 = vld [vmem:[%s1 + $0x320] sm:$0xff]
  %v249 = vld [vmem:[%s1 + $0x328] sm:$0xff]
  %v250 = vld [vmem:[%s1 + $0x330] sm:$0xff]
  %v251 = vld [vmem:[%s1 + $0x338] sm:$0xff]
  %v252 = vld [vmem:[%s1 + $0x340] sm:$0xff]
  %v253 = vld [vmem:[%s1 + $0x348] sm:$0xff]
  %v254 = vld [vmem:[%s1 + $0x350] sm:$0xff]
  %v255 = vld [vmem:[%s1 + $0x358] sm:$0xff]
  %v256 = vld [vmem:[%s1 + $0x360] sm:$0xff]
  %v257 = vld [vmem:[%s1 + $0x368] sm:$0xff]
  %v258 = vld [vmem:[%s1 + $0x370] sm:$0xff]
  %v259 = vld [vmem:[%s1 + $0x378] sm:$0xff]
  %v260 = vld [vmem:[%s1 + $0x380] sm:$0xff]
  %v261 = vld [vmem:[%s1 + $0x388] sm:$0xff]
  %v262 = vld [vmem:[%s1 + $0x390] sm:$0xff]
  %v263 = vld [vmem:[%s1 + $0x398] sm:$0xff]
  %v264 = vld [vmem:[%s1 + $0x3a0] sm:$0xff]
  %v265 = vld [vmem:[%s1 + $0x3a8] sm:$0xff]
  %v266 = vld [vmem:[%s1 + $0x3b0] sm:$0xff]
  %v267 = vld [vmem:[%s1 + $0x3b8] sm:$0xff]
  %v268 = vld [vmem:[%s1 + $0x3c0] sm:$0xff]
  %v269 = vld [vmem:[%s1 + $0x3c8] sm:$0xff]
  %v270 = vld [vmem:[%s1 + $0x3d0] sm:$0xff]
  %v271 = vld [vmem:[%s1 + $0x3d8] sm:$0xff]
  %v272 = vld [vmem:[%s1 + $0x3e0] sm:$0xff]
  %v273 = vld [vmem:[%s1 + $0x3e8] sm:$0xff]
  %v274 = vld [vmem:[%s1 + $0x3f0] sm:$0xff]
  %v275 = vld [vmem:[%s1 + $0x3f8] sm:$0xff]
  %v276 = vld [vmem:[%s4] sm:$0xff]
  %v277 = vld [vmem:[%s4 + $0x8] sm:$0xff]
  %v278 = vld [vmem:[%s4 + $0x10] sm:$0xff]
  %v279 = vld [vmem:[%s4 + $0x18] sm:$0xff]
  %v280 = vld [vmem:[%s4 + $0x20] sm:$0xff]
  %v281 = vld [vmem:[%s4 + $0x28] sm:$0xff]
  %v282 = vld [vmem:[%s4 + $0x30] sm:$0xff]
  %v283 = vld [vmem:[%s4 + $0x38] sm:$0xff]
  %v284 = vld [vmem:[%s4 + $0x40] sm:$0xff]
  %v285 = vld [vmem:[%s4 + $0x48] sm:$0xff]
  %v286 = vld [vmem:[%s4 + $0x50] sm:$0xff]
  %v287 = vld [vmem:[%s4 + $0x58] sm:$0xff]
  %v288 = vld [vmem:[%s4 + $0x60] sm:$0xff]
  %v289 = vld [vmem:[%s4 + $0x68] sm:$0xff]
  %v290 = vld [vmem:[%s4 + $0x70] sm:$0xff]
  %v291 = vld [vmem:[%s4 + $0x78] sm:$0xff]
  %v292 = vld [vmem:[%s4 + $0x80] sm:$0xff]
  %v293 = vld [vmem:[%s4 + $0x88] sm:$0xff]
  %v294 = vld [vmem:[%s4 + $0x90] sm:$0xff]
  %v295 = vld [vmem:[%s4 + $0x98] sm:$0xff]
  %v296 = vld [vmem:[%s4 + $0xa0] sm:$0xff]
  %v297 = vld [vmem:[%s4 + $0xa8] sm:$0xff]
  %v298 = vld [vmem:[%s4 + $0xb0] sm:$0xff]
  %v299 = vld [vmem:[%s4 + $0xb8] sm:$0xff]
  %v300 = vld [vmem:[%s4 + $0xc0] sm:$0xff]
  %v301 = vld [vmem:[%s4 + $0xc8] sm:$0xff]
  %v302 = vld [vmem:[%s4 + $0xd0] sm:$0xff]
  %v303 = vld [vmem:[%s4 + $0xd8] sm:$0xff]
  %v304 = vld [vmem:[%s4 + $0xe0] sm:$0xff]
  %v305 = vld [vmem:[%s4 + $0xe8] sm:$0xff]
  %v306 = vld [vmem:[%s4 + $0xf0] sm:$0xff]
  %v307 = vld [vmem:[%s4 + $0xf8] sm:$0xff]
  %v308 = vld [vmem:[%s4 + $0x100] sm:$0xff]
  %v309 = vld [vmem:[%s4 + $0x108] sm:$0xff]
  %v310 = vld [vmem:[%s4 + $0x110] sm:$0xff]
  %v311 = vld [vmem:[%s4 + $0x118] sm:$0xff]
  %v312 = vld [vmem:[%s4 + $0x120] sm:$0xff]
  %v313 = vld [vmem:[%s4 + $0x128] sm:$0xff]
  %v314 = vld [vmem:[%s4 + $0x130] sm:$0xff]
  %v315 = vld [vmem:[%s4 + $0x138] sm:$0xff]
  %v316 = vld [vmem:[%s4 + $0x140] sm:$0xff]
  %v317 = vld [vmem:[%s4 + $0x148] sm:$0xff]
  %v318 = vld [vmem:[%s4 + $0x150] sm:$0xff]
  %v319 = vld [vmem:[%s4 + $0x158] sm:$0xff]
  %v320 = vld [vmem:[%s4 + $0x160] sm:$0xff]
  %v321 = vld [vmem:[%s4 + $0x168] sm:$0xff]
  %v322 = vld [vmem:[%s4 + $0x170] sm:$0xff]
  %v323 = vld [vmem:[%s4 + $0x178] sm:$0xff]
  %v324 = vld [vmem:[%s4 + $0x180] sm:$0xff]
  %v325 = vld [vmem:[%s4 + $0x188] sm:$0xff]
  %v326 = vld [vmem:[%s4 + $0x190] sm:$0xff]
  %v327 = vld [vmem:[%s4 + $0x198] sm:$0xff]
  %v328 = vld [vmem:[%s4 + $0x1a0] sm:$0xff]
  %v329 = vld [vmem:[%s4 + $0x1a8] sm:$0xff]
  %v330 = vld [vmem:[%s4 + $0x1b0] sm:$0xff]
  %v331 = vld [vmem:[%s4 + $0x1b8] sm:$0xff]
  %v332 = vld [vmem:[%s4 + $0x1c0] sm:$0xff]
  %v333 = vld [vmem:[%s4 + $0x1c8] sm:$0xff]
  %v334 = vld [vmem:[%s4 + $0x1d0] sm:$0xff]
  %v335 = vld [vmem:[%s4 + $0x1d8] sm:$0xff]
  %v336 = vld [vmem:[%s4 + $0x1e0] sm:$0xff]
  %v337 = vld [vmem:[%s4 + $0x1e8] sm:$0xff]
  %v338 = vld [vmem:[%s4 + $0x1f0] sm:$0xff]
  %v339 = vld [vmem:[%s4 + $0x1f8] sm:$0xff]
  %v340 = vmul.f32 %v20, %v148
  %v341 = vmul.f32 %v21, %v149
  %v342 = vmul.f32 %v22, %v150
  %v343 = vmul.f32 %v23, %v151
  %v344 = vmul.f32 %v24, %v152
  %v345 = vmul.f32 %v25, %v153
  %v346 = vmul.f32 %v26, %v154
  %v347 = vmul.f32 %v27, %v155
  %v348 = vmul.f32 %v28, %v156
  %v349 = vmul.f32 %v29, %v157
  %v350 = vmul.f32 %v30, %v158
  %v351 = vmul.f32 %v31, %v159
  %v352 = vmul.f32 %v32, %v160
  %v353 = vmul.f32 %v33, %v161
  %v354 = vmul.f32 %v34, %v162
  %v355 = vmul.f32 %v35, %v163
  %v356 = vmul.f32 %v36, %v164
  %v357 = vmul.f32 %v37, %v165
  %v358 = vmul.f32 %v38, %v166
  %v359 = vmul.f32 %v39, %v167
  %v360 = vmul.f32 %v40, %v168
  %v361 = vmul.f32 %v41, %v169
  %v362 = vmul.f32 %v42, %v170
  %v363 = vmul.f32 %v43, %v171
  %v364 = vmul.f32 %v44, %v172
  %v365 = vmul.f32 %v45, %v173
  %v366 = vmul.f32 %v46, %v174
  %v367 = vmul.f32 %v47, %v175
  %v368 = vmul.f32 %v48, %v176
  %v369 = vmul.f32 %v49, %v177
  %v370 = vmul.f32 %v50, %v178
  %v371 = vmul.f32 %v51, %v179
  %v372 = vmul.f32 %v52, %v180
  %v373 = vmul.f32 %v53, %v181
  %v374 = vmul.f32 %v54, %v182
  %v375 = vmul.f32 %v55, %v183
  %v376 = vmul.f32 %v56, %v184
  %v377 = vmul.f32 %v57, %v185
  %v378 = vmul.f32 %v58, %v186
  %v379 = vmul.f32 %v59, %v187
  %v380 = vmul.f32 %v60, %v188
  %v381 = vmul.f32 %v61, %v189
  %v382 = vmul.f32 %v62, %v190
  %v383 = vmul.f32 %v63, %v191
  %v384 = vmul.f32 %v64, %v192
  %v385 = vmul.f32 %v65, %v193
  %v386 = vmul.f32 %v66, %v194
  %v387 = vmul.f32 %v67, %v195
  %v388 = vmul.f32 %v68, %v196
  %v389 = vmul.f32 %v69, %v197
  %v390 = vmul.f32 %v70, %v198
  %v391 = vmul.f32 %v71, %v199
  %v392 = vmul.f32 %v72, %v200
  %v393 = vmul.f32 %v73, %v201
  %v394 = vmul.f32 %v74, %v202
  %v395 = vmul.f32 %v75, %v203
  %v396 = vmul.f32 %v76, %v204
  %v397 = vmul.f32 %v77, %v205
  %v398 = vmul.f32 %v78, %v206
  %v399 = vmul.f32 %v79, %v207
  %v400 = vmul.f32 %v80, %v208
  %v401 = vmul.f32 %v81, %v209
  %v402 = vmul.f32 %v82, %v210
  %v403 = vmul.f32 %v83, %v211
  %v404 = vmul.f32 %v84, %v212
  %v405 = vmul.f32 %v85, %v213
  %v406 = vmul.f32 %v86, %v214
  %v407 = vmul.f32 %v87, %v215
  %v408 = vmul.f32 %v88, %v216
  %v409 = vmul.f32 %v89, %v217
  %v410 = vmul.f32 %v90, %v218
  %v411 = vmul.f32 %v91, %v219
  %v412 = vmul.f32 %v92, %v220
  %v413 = vmul.f32 %v93, %v221
  %v414 = vmul.f32 %v94, %v222
  %v415 = vmul.f32 %v95, %v223
  %v416 = vmul.f32 %v96, %v224
  %v417 = vmul.f32 %v97, %v225
  %v418 = vmul.f32 %v98, %v226
  %v419 = vmul.f32 %v99, %v227
  %v420 = vmul.f32 %v100, %v228
  %v421 = vmul.f32 %v101, %v229
  %v422 = vmul.f32 %v102, %v230
  %v423 = vmul.f32 %v103, %v231
  %v424 = vmul.f32 %v104, %v232
  %v425 = vmul.f32 %v105, %v233
  %v426 = vmul.f32 %v106, %v234
  %v427 = vmul.f32 %v107, %v235
  %v428 = vmul.f32 %v108, %v236
  %v429 = vmul.f32 %v109, %v237
  %v430 = vmul.f32 %v110, %v238
  %v431 = vmul.f32 %v111, %v239
  %v432 = vmul.f32 %v112, %v240
  %v433 = vmul.f32 %v113, %v241
  %v434 = vmul.f32 %v114, %v242
  %v435 = vmul.f32 %v115, %v243
  %v436 = vmul.f32 %v116, %v244
  %v437 = vmul.f32 %v117, %v245
  %v438 = vmul.f32 %v118, %v246
  %v439 = vmul.f32 %v119, %v247
  %v440 = vmul.f32 %v120, %v248
  %v441 = vmul.f32 %v121, %v249
  %v442 = vmul.f32 %v122, %v250
  %v443 = vmul.f32 %v123, %v251
  %v444 = vmul.f32 %v124, %v252
  %v445 = vmul.f32 %v125, %v253
  %v446 = vmul.f32 %v126, %v254
  %v447 = vmul.f32 %v127, %v255
  %v448 = vmul.f32 %v128, %v256
  %v449 = vmul.f32 %v129, %v257
  %v450 = vmul.f32 %v130, %v258
  %v451 = vmul.f32 %v131, %v259
  %v452 = vmul.f32 %v132, %v260
  %v453 = vmul.f32 %v133, %v261
  %v454 = vmul.f32 %v134, %v262
  %v455 = vmul.f32 %v135, %v263
  %v456 = vmul.f32 %v136, %v264
  %v457 = vmul.f32 %v137, %v265
  %v458 = vmul.f32 %v138, %v266
  %v459 = vmul.f32 %v139, %v267
  %v460 = vmul.f32 %v140, %v268
  %v461 = vmul.f32 %v141, %v269
  %v462 = vmul.f32 %v142, %v270
  %v463 = vmul.f32 %v143, %v271
  %v464 = vmul.f32 %v144, %v272
  %v465 = vmul.f32 %v145, %v273
  %v466 = vmul.f32 %v146, %v274
  %v467 = vmul.f32 %v147, %v275
  %v468 = vadd.f32 %v340, %v20
  %v469 = vadd.f32 %v341, %v21
  %v470 = vadd.f32 %v342, %v22
  %v471 = vadd.f32 %v343, %v23
  %v472 = vadd.f32 %v344, %v24
  %v473 = vadd.f32 %v345, %v25
  %v474 = vadd.f32 %v346, %v26
  %v475 = vadd.f32 %v347, %v27
  %v476 = vadd.f32 %v348, %v28
  %v477 = vadd.f32 %v349, %v29
  %v478 = vadd.f32 %v350, %v30
  %v479 = vadd.f32 %v351, %v31
  %v480 = vadd.f32 %v352, %v32
  %v481 = vadd.f32 %v353, %v33
  %v482 = vadd.f32 %v354, %v34
  %v483 = vadd.f32 %v355, %v35
  %v484 = vadd.f32 %v356, %v36
  %v485 = vadd.f32 %v357, %v37
  %v486 = vadd.f32 %v358, %v38
  %v487 = vadd.f32 %v359, %v39
  %v488 = vadd.f32 %v360, %v40
  %v489 = vadd.f32 %v361, %v41
  %v490 = vadd.f32 %v362, %v42
  %v491 = vadd.f32 %v363, %v43
  %v492 = vadd.f32 %v364, %v44
  %v493 = vadd.f32 %v365, %v45
  %v494 = vadd.f32 %v366, %v46
  %v495 = vadd.f32 %v367, %v47
  %v496 = vadd.f32 %v368, %v48
  %v497 = vadd.f32 %v369, %v49
  %v498 = vadd.f32 %v370, %v50
  %v499 = vadd.f32 %v371, %v51
  %v500 = vadd.f32 %v372, %v52
  %v501 = vadd.f32 %v373, %v53
  %v502 = vadd.f32 %v374, %v54
  %v503 = vadd.f32 %v375, %v55
  %v504 = vadd.f32 %v376, %v56
  %v505 = vadd.f32 %v377, %v57
  %v506 = vadd.f32 %v378, %v58
  %v507 = vadd.f32 %v379, %v59
  %v508 = vadd.f32 %v380, %v60
  %v509 = vadd.f32 %v381, %v61
  %v510 = vadd.f32 %v382, %v62
  %v511 = vadd.f32 %v383, %v63
  %v512 = vadd.f32 %v384, %v64
  %v513 = vadd.f32 %v385, %v65
  %v514 = vadd.f32 %v386, %v66
  %v515 = vadd.f32 %v387, %v67
  %v516 = vadd.f32 %v388, %v68
  %v517 = vadd.f32 %v389, %v69
  %v518 = vadd.f32 %v390, %v70
  %v519 = vadd.f32 %v391, %v71
  %v520 = vadd.f32 %v392, %v72
  %v521 = vadd.f32 %v393, %v73
  %v522 = vadd.f32 %v394, %v74
  %v523 = vadd.f32 %v395, %v75
  %v524 = vadd.f32 %v396, %v76
  %v525 = vadd.f32 %v397, %v77
  %v526 = vadd.f32 %v398, %v78
  %v527 = vadd.f32 %v399, %v79
  %v528 = vadd.f32 %v400, %v80
  %v529 = vadd.f32 %v401, %v81
  %v530 = vadd.f32 %v402, %v82
  %v531 = vadd.f32 %v403, %v83
  %v532 = vadd.f32 %v404, %v84
  %v533 = vadd.f32 %v405, %v85
  %v534 = vadd.f32 %v406, %v86
  %v535 = vadd.f32 %v407, %v87
  %v536 = vadd.f32 %v408, %v88
  %v537 = vadd.f32 %v409, %v89
  %v538 = vadd.f32 %v410, %v90
  %v539 = vadd.f32 %v411, %v91
  %v540 = vadd.f32 %v412, %v92
  %v541 = vadd.f32 %v413, %v93
  %v542 = vadd.f32 %v414, %v94
  %v543 = vadd.f32 %v415, %v95
  %v544 = vadd.f32 %v416, %v96
  %v545 = vadd.f32 %v417, %v97
  %v546 = vadd.f32 %v418, %v98
  %v547 = vadd.f32 %v419, %v99
  %v548 = vadd.f32 %v420, %v100
  %v549 = vadd.f32 %v421, %v101
  %v550 = vadd.f32 %v422, %v102
  %v551 = vadd.f32 %v423, %v103
  %v552 = vadd.f32 %v424, %v104
  %v553 = vadd.f32 %v425, %v105
  %v554 = vadd.f32 %v426, %v106
  %v555 = vadd.f32 %v427, %v107
  %v556 = vadd.f32 %v428, %v108
  %v557 = vadd.f32 %v429, %v109
  %v558 = vadd.f32 %v430, %v110
  %v559 = vadd.f32 %v431, %v111
  %v560 = vadd.f32 %v432, %v112
  %v561 = vadd.f32 %v433, %v113
  %v562 = vadd.f32 %v434, %v114
  %v563 = vadd.f32 %v435, %v115
  %v564 = vadd.f32 %v436, %v116
  %v565 = vadd.f32 %v437, %v117
  %v566 = vadd.f32 %v438, %v118
  %v567 = vadd.f32 %v439, %v119
  %v568 = vadd.f32 %v440, %v120
  %v569 = vadd.f32 %v441, %v121
  %v570 = vadd.f32 %v442, %v122
  %v571 = vadd.f32 %v443, %v123
  %v572 = vadd.f32 %v444, %v124
  %v573 = vadd.f32 %v445, %v125
  %v574 = vadd.f32 %v446, %v126
  %v575 = vadd.f32 %v447, %v127
  %v576 = vadd.f32 %v448, %v128
  %v577 = vadd.f32 %v449, %v129
  %v578 = vadd.f32 %v450, %v130
  %v579 = vadd.f32 %v451, %v131
  %v580 = vadd.f32 %v452, %v132
  %v581 = vadd.f32 %v453, %v133
  %v582 = vadd.f32 %v454, %v134
  %v583 = vadd.f32 %v455, %v135
  %v584 = vadd.f32 %v456, %v136
  %v585 = vadd.f32 %v457, %v137
  %v586 = vadd.f32 %v458, %v138
  %v587 = vadd.f32 %v459, %v139
  %v588 = vadd.f32 %v460, %v140
  %v589 = vadd.f32 %v461, %v141
  %v590 = vadd.f32 %v462, %v142
  %v591 = vadd.f32 %v463, %v143
  %v592 = vadd.f32 %v464, %v144
  %v593 = vadd.f32 %v465, %v145
  %v594 = vadd.f32 %v466, %v146
  %v595 = vadd.f32 %v467, %v147
  %v596 = vld [vmem:[%s2] sm:$0xff]
  %v597 = vld [vmem:[%s2 + $0x8] sm:$0xff]
  %v598 = vld [vmem:[%s2 + $0x10] sm:$0xff]
  %v599 = vld [vmem:[%s2 + $0x18] sm:$0xff]
  %v600 = vld [vmem:[%s2 + $0x20] sm:$0xff]
  %v601 = vld [vmem:[%s2 + $0x28] sm:$0xff]
  %v602 = vld [vmem:[%s2 + $0x30] sm:$0xff]
  %v603 = vld [vmem:[%s2 + $0x38] sm:$0xff]
  %v604 = vld [vmem:[%s2 + $0x40] sm:$0xff]
  %v605 = vld [vmem:[%s2 + $0x48] sm:$0xff]
  %v606 = vld [vmem:[%s2 + $0x50] sm:$0xff]
  %v607 = vld [vmem:[%s2 + $0x58] sm:$0xff]
  %v608 = vld [vmem:[%s2 + $0x60] sm:$0xff]
  %v609 = vld [vmem:[%s2 + $0x68] sm:$0xff]
  %v610 = vld [vmem:[%s2 + $0x70] sm:$0xff]
  %v611 = vld [vmem:[%s2 + $0x78] sm:$0xff]
  %v612 = vld [vmem:[%s2 + $0x80] sm:$0xff]
  %v613 = vld [vmem:[%s2 + $0x88] sm:$0xff]
  %v614 = vld [vmem:[%s2 + $0x90] sm:$0xff]
  %v615 = vld [vmem:[%s2 + $0x98] sm:$0xff]
  %v616 = vld [vmem:[%s2 + $0xa0] sm:$0xff]
  %v617 = vld [vmem:[%s2 + $0xa8] sm:$0xff]
  %v618 = vld [vmem:[%s2 + $0xb0] sm:$0xff]
  %v619 = vld [vmem:[%s2 + $0xb8] sm:$0xff]
  %v620 = vld [vmem:[%s2 + $0xc0] sm:$0xff]
  %v621 = vld [vmem:[%s2 + $0xc8] sm:$0xff]
  %v622 = vld [vmem:[%s2 + $0xd0] sm:$0xff]
  %v623 = vld [vmem:[%s2 + $0xd8] sm:$0xff]
  %v624 = vld [vmem:[%s2 + $0xe0] sm:$0xff]
  %v625 = vld [vmem:[%s2 + $0xe8] sm:$0xff]
  %v626 = vld [vmem:[%s2 + $0xf0] sm:$0xff]
  %v627 = vld [vmem:[%s2 + $0xf8] sm:$0xff]
  %v628 = vld [vmem:[%s2 + $0x100] sm:$0xff]
  %v629 = vld [vmem:[%s2 + $0x108] sm:$0xff]
  %v630 = vld [vmem:[%s2 + $0x110] sm:$0xff]
  %v631 = vld [vmem:[%s2 + $0x118] sm:$0xff]
  %v632 = vld [vmem:[%s2 + $0x120] sm:$0xff]
  %v633 = vld [vmem:[%s2 + $0x128] sm:$0xff]
  %v634 = vld [vmem:[%s2 + $0x130] sm:$0xff]
  %v635 = vld [vmem:[%s2 + $0x138] sm:$0xff]
  %v636 = vld [vmem:[%s2 + $0x140] sm:$0xff]
  %v637 = vld [vmem:[%s2 + $0x148] sm:$0xff]
  %v638 = vld [vmem:[%s2 + $0x150] sm:$0xff]
  %v639 = vld [vmem:[%s2 + $0x158] sm:$0xff]
  %v640 = vld [vmem:[%s2 + $0x160] sm:$0xff]
  %v641 = vld [vmem:[%s2 + $0x168] sm:$0xff]
  %v642 = vld [vmem:[%s2 + $0x170] sm:$0xff]
  %v643 = vld [vmem:[%s2 + $0x178] sm:$0xff]
  %v644 = vld [vmem:[%s2 + $0x180] sm:$0xff]
  %v645 = vld [vmem:[%s2 + $0x188] sm:$0xff]
  %v646 = vld [vmem:[%s2 + $0x190] sm:$0xff]
  %v647 = vld [vmem:[%s2 + $0x198] sm:$0xff]
  %v648 = vld [vmem:[%s2 + $0x1a0] sm:$0xff]
  %v649 = vld [vmem:[%s2 + $0x1a8] sm:$0xff]
  %v650 = vld [vmem:[%s2 + $0x1b0] sm:$0xff]
  %v651 = vld [vmem:[%s2 + $0x1b8] sm:$0xff]
  %v652 = vld [vmem:[%s2 + $0x1c0] sm:$0xff]
  %v653 = vld [vmem:[%s2 + $0x1c8] sm:$0xff]
  %v654 = vld [vmem:[%s2 + $0x1d0] sm:$0xff]
  %v655 = vld [vmem:[%s2 + $0x1d8] sm:$0xff]
  %v656 = vld [vmem:[%s2 + $0x1e0] sm:$0xff]
  %v657 = vld [vmem:[%s2 + $0x1e8] sm:$0xff]
  %v658 = vld [vmem:[%s2 + $0x1f0] sm:$0xff]
  %v659 = vld [vmem:[%s2 + $0x1f8] sm:$0xff]
  %v660 = vld [vmem:[%s2 + $0x200] sm:$0xff]
  %v661 = vld [vmem:[%s2 + $0x208] sm:$0xff]
  %v662 = vld [vmem:[%s2 + $0x210] sm:$0xff]
  %v663 = vld [vmem:[%s2 + $0x218] sm:$0xff]
  %v664 = vld [vmem:[%s2 + $0x220] sm:$0xff]
  %v665 = vld [vmem:[%s2 + $0x228] sm:$0xff]
  %v666 = vld [vmem:[%s2 + $0x230] sm:$0xff]
  %v667 = vld [vmem:[%s2 + $0x238] sm:$0xff]
  %v668 = vld [vmem:[%s2 + $0x240] sm:$0xff]
  %v669 = vld [vmem:[%s2 + $0x248] sm:$0xff]
  %v670 = vld [vmem:[%s2 + $0x250] sm:$0xff]
  %v671 = vld [vmem:[%s2 + $0x258] sm:$0xff]
  %v672 = vld [vmem:[%s2 + $0x260] sm:$0xff]
  %v673 = vld [vmem:[%s2 + $0x268] sm:$0xff]
  %v674 = vld [vmem:[%s2 + $0x270] sm:$0xff]
  %v675 = vld [vmem:[%s2 + $0x278] sm:$0xff]
  %v676 = vld [vmem:[%s2 + $0x280] sm:$0xff]
  %v677 = vld [vmem:[%s2 + $0x288] sm:$0xff]
  %v678 = vld [vmem:[%s2 + $0x290] sm:$0xff]
  %v679 = vld [vmem:[%s2 + $0x298] sm:$0xff]
  %v680 = vld [vmem:[%s2 + $0x2a0] sm:$0xff]
  %v681 = vld [vmem:[%s2 + $0x2a8] sm:$0xff]
  %v682 = vld [vmem:[%s2 + $0x2b0] sm:$0xff]
  %v683 = vld [vmem:[%s2 + $0x2b8] sm:$0xff]
  %v684 = vld [vmem:[%s2 + $0x2c0] sm:$0xff]
  %v685 = vld [vmem:[%s2 + $0x2c8] sm:$0xff]
  %v686 = vld [vmem:[%s2 + $0x2d0] sm:$0xff]
  %v687 = vld [vmem:[%s2 + $0x2d8] sm:$0xff]
  %v688 = vld [vmem:[%s2 + $0x2e0] sm:$0xff]
  %v689 = vld [vmem:[%s2 + $0x2e8] sm:$0xff]
  %v690 = vld [vmem:[%s2 + $0x2f0] sm:$0xff]
  %v691 = vld [vmem:[%s2 + $0x2f8] sm:$0xff]
  %v692 = vld [vmem:[%s2 + $0x300] sm:$0xff]
  %v693 = vld [vmem:[%s2 + $0x308] sm:$0xff]
  %v694 = vld [vmem:[%s2 + $0x310] sm:$0xff]
  %v695 = vld [vmem:[%s2 + $0x318] sm:$0xff]
  %v696 = vld [vmem:[%s2 + $0x320] sm:$0xff]
  %v697 = vld [vmem:[%s2 + $0x328] sm:$0xff]
  %v698 = vld [vmem:[%s2 + $0x330] sm:$0xff]
  %v699 = vld [vmem:[%s2 + $0x338] sm:$0xff]
  %v700 = vld [vmem:[%s2 + $0x340] sm:$0xff]
  %v701 = vld [vmem:[%s2 + $0x348] sm:$0xff]
  %v702 = vld [vmem:[%s2 + $0x350] sm:$0xff]
  %v703 = vld [vmem:[%s2 + $0x358] sm:$0xff]
  %v704 = vld [vmem:[%s2 + $0x360] sm:$0xff]
  %v705 = vld [vmem:[%s2 + $0x368] sm:$0xff]
  %v706 = vld [vmem:[%s2 + $0x370] sm:$0xff]
  %v707 = vld [vmem:[%s2 + $0x378] sm:$0xff]
  %v708 = vld [vmem:[%s2 + $0x380] sm:$0xff]
  %v709 = vld [vmem:[%s2 + $0x388] sm:$0xff]
  %v710 = vld [vmem:[%s2 + $0x390] sm:$0xff]
  %v711 = vld [vmem:[%s2 + $0x398] sm:$0xff]
  %v712 = vld [vmem:[%s2 + $0x3a0] sm:$0xff]
  %v713 = vld [vmem:[%s2 + $0x3a8] sm:$0xff]
  %v714 = vld [vmem:[%s2 + $0x3b0] sm:$0xff]
  %v715 = vld [vmem:[%s2 + $0x3b8] sm:$0xff]
  %v716 = vld [vmem:[%s2 + $0x3c0] sm:$0xff]
  %v717 = vld [vmem:[%s2 + $0x3c8] sm:$0xff]
  %v718 = vld [vmem:[%s2 + $0x3d0] sm:$0xff]
  %v719 = vld [vmem:[%s2 + $0x3d8] sm:$0xff]
  %v720 = vld [vmem:[%s2 + $0x3e0] sm:$0xff]
  %v721 = vld [vmem:[%s2 + $0x3e8] sm:$0xff]
  %v722 = vld [vmem:[%s2 + $0x3f0] sm:$0xff]
  %v723 = vld [vmem:[%s2 + $0x3f8] sm:$0xff]
  %725 = vset.pattern.permute.xlu0 0
  %726 = vperm.xlu0 %725, %v276
  %v727 = vpop.permute.xlu0 %726
  %730 = vset.pattern.permute.xlu0 0
  %731 = vperm.xlu0 %730, %v277
  %v732 = vpop.permute.xlu0 %731
  %735 = vset.pattern.permute.xlu0 0
  %736 = vperm.xlu0 %735, %v278
  %v737 = vpop.permute.xlu0 %736
  %740 = vset.pattern.permute.xlu0 0
  %741 = vperm.xlu0 %740, %v279
  %v742 = vpop.permute.xlu0 %741
  %745 = vset.pattern.permute.xlu0 0
  %746 = vperm.xlu0 %745, %v280
  %v747 = vpop.permute.xlu0 %746
  %750 = vset.pattern.permute.xlu0 0
  %751 = vperm.xlu0 %750, %v281
  %v752 = vpop.permute.xlu0 %751
  %755 = vset.pattern.permute.xlu0 0
  %756 = vperm.xlu0 %755, %v282
  %v757 = vpop.permute.xlu0 %756
  %760 = vset.pattern.permute.xlu0 0
  %761 = vperm.xlu0 %760, %v283
  %v762 = vpop.permute.xlu0 %761
  %765 = vset.pattern.permute.xlu0 0
  %766 = vperm.xlu0 %765, %v284
  %v767 = vpop.permute.xlu0 %766
  %770 = vset.pattern.permute.xlu0 0
  %771 = vperm.xlu0 %770, %v285
  %v772 = vpop.permute.xlu0 %771
  %775 = vset.pattern.permute.xlu0 0
  %776 = vperm.xlu0 %775, %v286
  %v777 = vpop.permute.xlu0 %776
  %780 = vset.pattern.permute.xlu0 0
  %781 = vperm.xlu0 %780, %v287
  %v782 = vpop.permute.xlu0 %781
  %785 = vset.pattern.permute.xlu0 0
  %786 = vperm.xlu0 %785, %v288
  %v787 = vpop.permute.xlu0 %786
  %790 = vset.pattern.permute.xlu0 0
  %791 = vperm.xlu0 %790, %v289
  %v792 = vpop.permute.xlu0 %791
  %795 = vset.pattern.permute.xlu0 0
  %796 = vperm.xlu0 %795, %v290
  %v797 = vpop.permute.xlu0 %796
  %800 = vset.pattern.permute.xlu0 0
  %801 = vperm.xlu0 %800, %v291
  %v802 = vpop.permute.xlu0 %801
  %805 = vset.pattern.permute.xlu0 0
  %806 = vperm.xlu0 %805, %v292
  %v807 = vpop.permute.xlu0 %806
  %810 = vset.pattern.permute.xlu0 0
  %811 = vperm.xlu0 %810, %v293
  %v812 = vpop.permute.xlu0 %811
  %815 = vset.pattern.permute.xlu0 0
  %816 = vperm.xlu0 %815, %v294
  %v817 = vpop.permute.xlu0 %816
  %820 = vset.pattern.permute.xlu0 0
  %821 = vperm.xlu0 %820, %v295
  %v822 = vpop.permute.xlu0 %821
  %825 = vset.pattern.permute.xlu0 0
  %826 = vperm.xlu0 %825, %v296
  %v827 = vpop.permute.xlu0 %826
  %830 = vset.pattern.permute.xlu0 0
  %831 = vperm.xlu0 %830, %v297
  %v832 = vpop.permute.xlu0 %831
  %835 = vset.pattern.permute.xlu0 0
  %836 = vperm.xlu0 %835, %v298
  %v837 = vpop.permute.xlu0 %836
  %840 = vset.pattern.permute.xlu0 0
  %841 = vperm.xlu0 %840, %v299
  %v842 = vpop.permute.xlu0 %841
  %845 = vset.pattern.permute.xlu0 0
  %846 = vperm.xlu0 %845, %v300
  %v847 = vpop.permute.xlu0 %846
  %850 = vset.pattern.permute.xlu0 0
  %851 = vperm.xlu0 %850, %v301
  %v852 = vpop.permute.xlu0 %851
  %855 = vset.pattern.permute.xlu0 0
  %856 = vperm.xlu0 %855, %v302
  %v857 = vpop.permute.xlu0 %856
  %860 = vset.pattern.permute.xlu0 0
  %861 = vperm.xlu0 %860, %v303
  %v862 = vpop.permute.xlu0 %861
  %865 = vset.pattern.permute.xlu0 0
  %866 = vperm.xlu0 %865, %v304
  %v867 = vpop.permute.xlu0 %866
  %870 = vset.pattern.permute.xlu0 0
  %871 = vperm.xlu0 %870, %v305
  %v872 = vpop.permute.xlu0 %871
  %875 = vset.pattern.permute.xlu0 0
  %876 = vperm.xlu0 %875, %v306
  %v877 = vpop.permute.xlu0 %876
  %880 = vset.pattern.permute.xlu0 0
  %881 = vperm.xlu0 %880, %v307
  %v882 = vpop.permute.xlu0 %881
  %885 = vset.pattern.permute.xlu0 0
  %886 = vperm.xlu0 %885, %v308
  %v887 = vpop.permute.xlu0 %886
  %890 = vset.pattern.permute.xlu0 0
  %891 = vperm.xlu0 %890, %v309
  %v892 = vpop.permute.xlu0 %891
  %895 = vset.pattern.permute.xlu0 0
  %896 = vperm.xlu0 %895, %v310
  %v897 = vpop.permute.xlu0 %896
  %900 = vset.pattern.permute.xlu0 0
  %901 = vperm.xlu0 %900, %v311
  %v902 = vpop.permute.xlu0 %901
  %905 = vset.pattern.permute.xlu0 0
  %906 = vperm.xlu0 %905, %v312
  %v907 = vpop.permute.xlu0 %906
  %910 = vset.pattern.permute.xlu0 0
  %911 = vperm.xlu0 %910, %v313
  %v912 = vpop.permute.xlu0 %911
  %915 = vset.pattern.permute.xlu0 0
  %916 = vperm.xlu0 %915, %v314
  %v917 = vpop.permute.xlu0 %916
  %920 = vset.pattern.permute.xlu0 0
  %921 = vperm.xlu0 %920, %v315
  %v922 = vpop.permute.xlu0 %921
  %925 = vset.pattern.permute.xlu0 0
  %926 = vperm.xlu0 %925, %v316
  %v927 = vpop.permute.xlu0 %926
  %930 = vset.pattern.permute.xlu0 0
  %931 = vperm.xlu0 %930, %v317
  %v932 = vpop.permute.xlu0 %931
  %935 = vset.pattern.permute.xlu0 0
  %936 = vperm.xlu0 %935, %v318
  %v937 = vpop.permute.xlu0 %936
  %940 = vset.pattern.permute.xlu0 0
  %941 = vperm.xlu0 %940, %v319
  %v942 = vpop.permute.xlu0 %941
  %945 = vset.pattern.permute.xlu0 0
  %946 = vperm.xlu0 %945, %v320
  %v947 = vpop.permute.xlu0 %946
  %950 = vset.pattern.permute.xlu0 0
  %951 = vperm.xlu0 %950, %v321
  %v952 = vpop.permute.xlu0 %951
  %955 = vset.pattern.permute.xlu0 0
  %956 = vperm.xlu0 %955, %v322
  %v957 = vpop.permute.xlu0 %956
  %960 = vset.pattern.permute.xlu0 0
  %961 = vperm.xlu0 %960, %v323
  %v962 = vpop.permute.xlu0 %961
  %965 = vset.pattern.permute.xlu0 0
  %966 = vperm.xlu0 %965, %v324
  %v967 = vpop.permute.xlu0 %966
  %970 = vset.pattern.permute.xlu0 0
  %971 = vperm.xlu0 %970, %v325
  %v972 = vpop.permute.xlu0 %971
  %975 = vset.pattern.permute.xlu0 0
  %976 = vperm.xlu0 %975, %v326
  %v977 = vpop.permute.xlu0 %976
  %980 = vset.pattern.permute.xlu0 0
  %981 = vperm.xlu0 %980, %v327
  %v982 = vpop.permute.xlu0 %981
  %985 = vset.pattern.permute.xlu0 0
  %986 = vperm.xlu0 %985, %v328
  %v987 = vpop.permute.xlu0 %986
  %990 = vset.pattern.permute.xlu0 0
  %991 = vperm.xlu0 %990, %v329
  %v992 = vpop.permute.xlu0 %991
  %995 = vset.pattern.permute.xlu0 0
  %996 = vperm.xlu0 %995, %v330
  %v997 = vpop.permute.xlu0 %996
  %1000 = vset.pattern.permute.xlu0 0
  %1001 = vperm.xlu0 %1000, %v331
  %v1002 = vpop.permute.xlu0 %1001
  %1005 = vset.pattern.permute.xlu0 0
  %1006 = vperm.xlu0 %1005, %v332
  %v1007 = vpop.permute.xlu0 %1006
  %1010 = vset.pattern.permute.xlu0 0
  %1011 = vperm.xlu0 %1010, %v333
  %v1012 = vpop.permute.xlu0 %1011
  %1015 = vset.pattern.permute.xlu0 0
  %1016 = vperm.xlu0 %1015, %v334
  %v1017 = vpop.permute.xlu0 %1016
  %1020 = vset.pattern.permute.xlu0 0
  %1021 = vperm.xlu0 %1020, %v335
  %v1022 = vpop.permute.xlu0 %1021
  %1025 = vset.pattern.permute.xlu0 0
  %1026 = vperm.xlu0 %1025, %v336
  %v1027 = vpop.permute.xlu0 %1026
  %1030 = vset.pattern.permute.xlu0 0
  %1031 = vperm.xlu0 %1030, %v337
  %v1032 = vpop.permute.xlu0 %1031
  %1035 = vset.pattern.permute.xlu0 0
  %1036 = vperm.xlu0 %1035, %v338
  %v1037 = vpop.permute.xlu0 %1036
  %1040 = vset.pattern.permute.xlu0 0
  %1041 = vperm.xlu0 %1040, %v339
  %v1042 = vpop.permute.xlu0 %1041
  %v1044 = vmul.f32 %v727, %v596
  %v1045 = vmul.f32 %v727, %v597
  %v1046 = vmul.f32 %v732, %v598
  %v1047 = vmul.f32 %v732, %v599
  %v1048 = vmul.f32 %v737, %v600
  %v1049 = vmul.f32 %v737, %v601
  %v1050 = vmul.f32 %v742, %v602
  %v1051 = vmul.f32 %v742, %v603
  %v1052 = vmul.f32 %v747, %v604
  %v1053 = vmul.f32 %v747, %v605
  %v1054 = vmul.f32 %v752, %v606
  %v1055 = vmul.f32 %v752, %v607
  %v1056 = vmul.f32 %v757, %v608
  %v1057 = vmul.f32 %v757, %v609
  %v1058 = vmul.f32 %v762, %v610
  %v1059 = vmul.f32 %v762, %v611
  %v1060 = vmul.f32 %v767, %v612
  %v1061 = vmul.f32 %v767, %v613
  %v1062 = vmul.f32 %v772, %v614
  %v1063 = vmul.f32 %v772, %v615
  %v1064 = vmul.f32 %v777, %v616
  %v1065 = vmul.f32 %v777, %v617
  %v1066 = vmul.f32 %v782, %v618
  %v1067 = vmul.f32 %v782, %v619
  %v1068 = vmul.f32 %v787, %v620
  %v1069 = vmul.f32 %v787, %v621
  %v1070 = vmul.f32 %v792, %v622
  %v1071 = vmul.f32 %v792, %v623
  %v1072 = vmul.f32 %v797, %v624
  %v1073 = vmul.f32 %v797, %v625
  %v1074 = vmul.f32 %v802, %v626
  %v1075 = vmul.f32 %v802, %v627
  %v1076 = vmul.f32 %v807, %v628
  %v1077 = vmul.f32 %v807, %v629
  %v1078 = vmul.f32 %v812, %v630
  %v1079 = vmul.f32 %v812, %v631
  %v1080 = vmul.f32 %v817, %v632
  %v1081 = vmul.f32 %v817, %v633
  %v1082 = vmul.f32 %v822, %v634
  %v1083 = vmul.f32 %v822, %v635
  %v1084 = vmul.f32 %v827, %v636
  %v1085 = vmul.f32 %v827, %v637
  %v1086 = vmul.f32 %v832, %v638
  %v1087 = vmul.f32 %v832, %v639
  %v1088 = vmul.f32 %v837, %v640
  %v1089 = vmul.f32 %v837, %v641
  %v1090 = vmul.f32 %v842, %v642
  %v1091 = vmul.f32 %v842, %v643
  %v1092 = vmul.f32 %v847, %v644
  %v1093 = vmul.f32 %v847, %v645
  %v1094 = vmul.f32 %v852, %v646
  %v1095 = vmul.f32 %v852, %v647
  %v1096 = vmul.f32 %v857, %v648
  %v1097 = vmul.f32 %v857, %v649
  %v1098 = vmul.f32 %v862, %v650
  %v1099 = vmul.f32 %v862, %v651
  %v1100 = vmul.f32 %v867, %v652
  %v1101 = vmul.f32 %v867, %v653
  %v1102 = vmul.f32 %v872, %v654
  %v1103 = vmul.f32 %v872, %v655
  %v1104 = vmul.f32 %v877, %v656
  %v1105 = vmul.f32 %v877, %v657
  %v1106 = vmul.f32 %v882, %v658
  %v1107 = vmul.f32 %v882, %v659
  %v1108 = vmul.f32 %v887, %v660
  %v1109 = vmul.f32 %v887, %v661
  %v1110 = vmul.f32 %v892, %v662
  %v1111 = vmul.f32 %v892, %v663
  %v1112 = vmul.f32 %v897, %v664
  %v1113 = vmul.f32 %v897, %v665
  %v1114 = vmul.f32 %v902, %v666
  %v1115 = vmul.f32 %v902, %v667
  %v1116 = vmul.f32 %v907, %v668
  %v1117 = vmul.f32 %v907, %v669
  %v1118 = vmul.f32 %v912, %v670
  %v1119 = vmul.f32 %v912, %v671
  %v1120 = vmul.f32 %v917, %v672
  %v1121 = vmul.f32 %v917, %v673
  %v1122 = vmul.f32 %v922, %v674
  %v1123 = vmul.f32 %v922, %v675
  %v1124 = vmul.f32 %v927, %v676
  %v1125 = vmul.f32 %v927, %v677
  %v1126 = vmul.f32 %v932, %v678
  %v1127 = vmul.f32 %v932, %v679
  %v1128 = vmul.f32 %v937, %v680
  %v1129 = vmul.f32 %v937, %v681
  %v1130 = vmul.f32 %v942, %v682
  %v1131 = vmul.f32 %v942, %v683
  %v1132 = vmul.f32 %v947, %v684
  %v1133 = vmul.f32 %v947, %v685
  %v1134 = vmul.f32 %v952, %v686
  %v1135 = vmul.f32 %v952, %v687
  %v1136 = vmul.f32 %v957, %v688
  %v1137 = vmul.f32 %v957, %v689
  %v1138 = vmul.f32 %v962, %v690
  %v1139 = vmul.f32 %v962, %v691
  %v1140 = vmul.f32 %v967, %v692
  %v1141 = vmul.f32 %v967, %v693
  %v1142 = vmul.f32 %v972, %v694
  %v1143 = vmul.f32 %v972, %v695
  %v1144 = vmul.f32 %v977, %v696
  %v1145 = vmul.f32 %v977, %v697
  %v1146 = vmul.f32 %v982, %v698
  %v1147 = vmul.f32 %v982, %v699
  %v1148 = vmul.f32 %v987, %v700
  %v1149 = vmul.f32 %v987, %v701
  %v1150 = vmul.f32 %v992, %v702
  %v1151 = vmul.f32 %v992, %v703
  %v1152 = vmul.f32 %v997, %v704
  %v1153 = vmul.f32 %v997, %v705
  %v1154 = vmul.f32 %v1002, %v706
  %v1155 = vmul.f32 %v1002, %v707
  %v1156 = vmul.f32 %v1007, %v708
  %v1157 = vmul.f32 %v1007, %v709
  %v1158 = vmul.f32 %v1012, %v710
  %v1159 = vmul.f32 %v1012, %v711
  %v1160 = vmul.f32 %v1017, %v712
  %v1161 = vmul.f32 %v1017, %v713
  %v1162 = vmul.f32 %v1022, %v714
  %v1163 = vmul.f32 %v1022, %v715
  %v1164 = vmul.f32 %v1027, %v716
  %v1165 = vmul.f32 %v1027, %v717
  %v1166 = vmul.f32 %v1032, %v718
  %v1167 = vmul.f32 %v1032, %v719
  %v1168 = vmul.f32 %v1037, %v720
  %v1169 = vmul.f32 %v1037, %v721
  %v1170 = vmul.f32 %v1042, %v722
  %v1171 = vmul.f32 %v1042, %v723
  %v1172 = vadd.f32 %v468, %v1044
  %v1173 = vadd.f32 %v469, %v1045
  %v1174 = vadd.f32 %v470, %v1046
  %v1175 = vadd.f32 %v471, %v1047
  %v1176 = vadd.f32 %v472, %v1048
  %v1177 = vadd.f32 %v473, %v1049
  %v1178 = vadd.f32 %v474, %v1050
  %v1179 = vadd.f32 %v475, %v1051
  %v1180 = vadd.f32 %v476, %v1052
  %v1181 = vadd.f32 %v477, %v1053
  %v1182 = vadd.f32 %v478, %v1054
  %v1183 = vadd.f32 %v479, %v1055
  %v1184 = vadd.f32 %v480, %v1056
  %v1185 = vadd.f32 %v481, %v1057
  %v1186 = vadd.f32 %v482, %v1058
  %v1187 = vadd.f32 %v483, %v1059
  %v1188 = vadd.f32 %v484, %v1060
  %v1189 = vadd.f32 %v485, %v1061
  %v1190 = vadd.f32 %v486, %v1062
  %v1191 = vadd.f32 %v487, %v1063
  %v1192 = vadd.f32 %v488, %v1064
  %v1193 = vadd.f32 %v489, %v1065
  %v1194 = vadd.f32 %v490, %v1066
  %v1195 = vadd.f32 %v491, %v1067
  %v1196 = vadd.f32 %v492, %v1068
  %v1197 = vadd.f32 %v493, %v1069
  %v1198 = vadd.f32 %v494, %v1070
  %v1199 = vadd.f32 %v495, %v1071
  %v1200 = vadd.f32 %v496, %v1072
  %v1201 = vadd.f32 %v497, %v1073
  %v1202 = vadd.f32 %v498, %v1074
  %v1203 = vadd.f32 %v499, %v1075
  %v1204 = vadd.f32 %v500, %v1076
  %v1205 = vadd.f32 %v501, %v1077
  %v1206 = vadd.f32 %v502, %v1078
  %v1207 = vadd.f32 %v503, %v1079
  %v1208 = vadd.f32 %v504, %v1080
  %v1209 = vadd.f32 %v505, %v1081
  %v1210 = vadd.f32 %v506, %v1082
  %v1211 = vadd.f32 %v507, %v1083
  %v1212 = vadd.f32 %v508, %v1084
  %v1213 = vadd.f32 %v509, %v1085
  %v1214 = vadd.f32 %v510, %v1086
  %v1215 = vadd.f32 %v511, %v1087
  %v1216 = vadd.f32 %v512, %v1088
  %v1217 = vadd.f32 %v513, %v1089
  %v1218 = vadd.f32 %v514, %v1090
  %v1219 = vadd.f32 %v515, %v1091
  %v1220 = vadd.f32 %v516, %v1092
  %v1221 = vadd.f32 %v517, %v1093
  %v1222 = vadd.f32 %v518, %v1094
  %v1223 = vadd.f32 %v519, %v1095
  %v1224 = vadd.f32 %v520, %v1096
  %v1225 = vadd.f32 %v521, %v1097
  %v1226 = vadd.f32 %v522, %v1098
  %v1227 = vadd.f32 %v523, %v1099
  %v1228 = vadd.f32 %v524, %v1100
  %v1229 = vadd.f32 %v525, %v1101
  %v1230 = vadd.f32 %v526, %v1102
  %v1231 = vadd.f32 %v527, %v1103
  %v1232 = vadd.f32 %v528, %v1104
  %v1233 = vadd.f32 %v529, %v1105
  %v1234 = vadd.f32 %v530, %v1106
  %v1235 = vadd.f32 %v531, %v1107
  %v1236 = vadd.f32 %v532, %v1108
  %v1237 = vadd.f32 %v533, %v1109
  %v1238 = vadd.f32 %v534, %v1110
  %v1239 = vadd.f32 %v535, %v1111
  %v1240 = vadd.f32 %v536, %v1112
  %v1241 = vadd.f32 %v537, %v1113
  %v1242 = vadd.f32 %v538, %v1114
  %v1243 = vadd.f32 %v539, %v1115
  %v1244 = vadd.f32 %v540, %v1116
  %v1245 = vadd.f32 %v541, %v1117
  %v1246 = vadd.f32 %v542, %v1118
  %v1247 = vadd.f32 %v543, %v1119
  %v1248 = vadd.f32 %v544, %v1120
  %v1249 = vadd.f32 %v545, %v1121
  %v1250 = vadd.f32 %v546, %v1122
  %v1251 = vadd.f32 %v547, %v1123
  %v1252 = vadd.f32 %v548, %v1124
  %v1253 = vadd.f32 %v549, %v1125
  %v1254 = vadd.f32 %v550, %v1126
  %v1255 = vadd.f32 %v551, %v1127
  %v1256 = vadd.f32 %v552, %v1128
  %v1257 = vadd.f32 %v553, %v1129
  %v1258 = vadd.f32 %v554, %v1130
  %v1259 = vadd.f32 %v555, %v1131
  %v1260 = vadd.f32 %v556, %v1132
  %v1261 = vadd.f32 %v557, %v1133
  %v1262 = vadd.f32 %v558, %v1134
  %v1263 = vadd.f32 %v559, %v1135
  %v1264 = vadd.f32 %v560, %v1136
  %v1265 = vadd.f32 %v561, %v1137
  %v1266 = vadd.f32 %v562, %v1138
  %v1267 = vadd.f32 %v563, %v1139
  %v1268 = vadd.f32 %v564, %v1140
  %v1269 = vadd.f32 %v565, %v1141
  %v1270 = vadd.f32 %v566, %v1142
  %v1271 = vadd.f32 %v567, %v1143
  %v1272 = vadd.f32 %v568, %v1144
  %v1273 = vadd.f32 %v569, %v1145
  %v1274 = vadd.f32 %v570, %v1146
  %v1275 = vadd.f32 %v571, %v1147
  %v1276 = vadd.f32 %v572, %v1148
  %v1277 = vadd.f32 %v573, %v1149
  %v1278 = vadd.f32 %v574, %v1150
  %v1279 = vadd.f32 %v575, %v1151
  %v1280 = vadd.f32 %v576, %v1152
  %v1281 = vadd.f32 %v577, %v1153
  %v1282 = vadd.f32 %v578, %v1154
  %v1283 = vadd.f32 %v579, %v1155
  %v1284 = vadd.f32 %v580, %v1156
  %v1285 = vadd.f32 %v581, %v1157
  %v1286 = vadd.f32 %v582, %v1158
  %v1287 = vadd.f32 %v583, %v1159
  %v1288 = vadd.f32 %v584, %v1160
  %v1289 = vadd.f32 %v585, %v1161
  %v1290 = vadd.f32 %v586, %v1162
  %v1291 = vadd.f32 %v587, %v1163
  %v1292 = vadd.f32 %v588, %v1164
  %v1293 = vadd.f32 %v589, %v1165
  %v1294 = vadd.f32 %v590, %v1166
  %v1295 = vadd.f32 %v591, %v1167
  %v1296 = vadd.f32 %v592, %v1168
  %v1297 = vadd.f32 %v593, %v1169
  %v1298 = vadd.f32 %v594, %v1170
  %v1299 = vadd.f32 %v595, %v1171
  %1300 = vst [vmem:[%s5] sm:$0xff] %v1172
  %1301 = vst [vmem:[%s5 + $0x8] sm:$0xff] %v1173
  %1302 = vst [vmem:[%s5 + $0x20] sm:$0xff] %v1174
  %1303 = vst [vmem:[%s5 + $0x28] sm:$0xff] %v1175
  %1304 = vst [vmem:[%s5 + $0x40] sm:$0xff] %v1176
  %1305 = vst [vmem:[%s5 + $0x48] sm:$0xff] %v1177
  %1306 = vst [vmem:[%s5 + $0x60] sm:$0xff] %v1178
  %1307 = vst [vmem:[%s5 + $0x68] sm:$0xff] %v1179
  %1308 = vst [vmem:[%s5 + $0x80] sm:$0xff] %v1180
  %1309 = vst [vmem:[%s5 + $0x88] sm:$0xff] %v1181
  %1310 = vst [vmem:[%s5 + $0xa0] sm:$0xff] %v1182
  %1311 = vst [vmem:[%s5 + $0xa8] sm:$0xff] %v1183
  %1312 = vst [vmem:[%s5 + $0xc0] sm:$0xff] %v1184
  %1313 = vst [vmem:[%s5 + $0xc8] sm:$0xff] %v1185
  %1314 = vst [vmem:[%s5 + $0xe0] sm:$0xff] %v1186
  %1315 = vst [vmem:[%s5 + $0xe8] sm:$0xff] %v1187
  %1316 = vst [vmem:[%s5 + $0x100] sm:$0xff] %v1188
  %1317 = vst [vmem:[%s5 + $0x108] sm:$0xff] %v1189
  %1318 = vst [vmem:[%s5 + $0x120] sm:$0xff] %v1190
  %1319 = vst [vmem:[%s5 + $0x128] sm:$0xff] %v1191
  %1320 = vst [vmem:[%s5 + $0x140] sm:$0xff] %v1192
  %1321 = vst [vmem:[%s5 + $0x148] sm:$0xff] %v1193
  %1322 = vst [vmem:[%s5 + $0x160] sm:$0xff] %v1194
  %1323 = vst [vmem:[%s5 + $0x168] sm:$0xff] %v1195
  %1324 = vst [vmem:[%s5 + $0x180] sm:$0xff] %v1196
  %1325 = vst [vmem:[%s5 + $0x188] sm:$0xff] %v1197
  %1326 = vst [vmem:[%s5 + $0x1a0] sm:$0xff] %v1198
  %1327 = vst [vmem:[%s5 + $0x1a8] sm:$0xff] %v1199
  %1328 = vst [vmem:[%s5 + $0x1c0] sm:$0xff] %v1200
  %1329 = vst [vmem:[%s5 + $0x1c8] sm:$0xff] %v1201
  %1330 = vst [vmem:[%s5 + $0x1e0] sm:$0xff] %v1202
  %1331 = vst [vmem:[%s5 + $0x1e8] sm:$0xff] %v1203
  %1332 = vst [vmem:[%s5 + $0x200] sm:$0xff] %v1204
  %1333 = vst [vmem:[%s5 + $0x208] sm:$0xff] %v1205
  %1334 = vst [vmem:[%s5 + $0x220] sm:$0xff] %v1206
  %1335 = vst [vmem:[%s5 + $0x228] sm:$0xff] %v1207
  %1336 = vst [vmem:[%s5 + $0x240] sm:$0xff] %v1208
  %1337 = vst [vmem:[%s5 + $0x248] sm:$0xff] %v1209
  %1338 = vst [vmem:[%s5 + $0x260] sm:$0xff] %v1210
  %1339 = vst [vmem:[%s5 + $0x268] sm:$0xff] %v1211
  %1340 = vst [vmem:[%s5 + $0x280] sm:$0xff] %v1212
  %1341 = vst [vmem:[%s5 + $0x288] sm:$0xff] %v1213
  %1342 = vst [vmem:[%s5 + $0x2a0] sm:$0xff] %v1214
  %1343 = vst [vmem:[%s5 + $0x2a8] sm:$0xff] %v1215
  %1344 = vst [vmem:[%s5 + $0x2c0] sm:$0xff] %v1216
  %1345 = vst [vmem:[%s5 + $0x2c8] sm:$0xff] %v1217
  %1346 = vst [vmem:[%s5 + $0x2e0] sm:$0xff] %v1218
  %1347 = vst [vmem:[%s5 + $0x2e8] sm:$0xff] %v1219
  %1348 = vst [vmem:[%s5 + $0x300] sm:$0xff] %v1220
  %1349 = vst [vmem:[%s5 + $0x308] sm:$0xff] %v1221
  %1350 = vst [vmem:[%s5 + $0x320] sm:$0xff] %v1222
  %1351 = vst [vmem:[%s5 + $0x328] sm:$0xff] %v1223
  %1352 = vst [vmem:[%s5 + $0x340] sm:$0xff] %v1224
  %1353 = vst [vmem:[%s5 + $0x348] sm:$0xff] %v1225
  %1354 = vst [vmem:[%s5 + $0x360] sm:$0xff] %v1226
  %1355 = vst [vmem:[%s5 + $0x368] sm:$0xff] %v1227
  %1356 = vst [vmem:[%s5 + $0x380] sm:$0xff] %v1228
  %1357 = vst [vmem:[%s5 + $0x388] sm:$0xff] %v1229
  %1358 = vst [vmem:[%s5 + $0x3a0] sm:$0xff] %v1230
  %1359 = vst [vmem:[%s5 + $0x3a8] sm:$0xff] %v1231
  %1360 = vst [vmem:[%s5 + $0x3c0] sm:$0xff] %v1232
  %1361 = vst [vmem:[%s5 + $0x3c8] sm:$0xff] %v1233
  %1362 = vst [vmem:[%s5 + $0x3e0] sm:$0xff] %v1234
  %1363 = vst [vmem:[%s5 + $0x3e8] sm:$0xff] %v1235
  %1364 = vst [vmem:[%s5 + $0x400] sm:$0xff] %v1236
  %1365 = vst [vmem:[%s5 + $0x408] sm:$0xff] %v1237
  %1366 = vst [vmem:[%s5 + $0x420] sm:$0xff] %v1238
  %1367 = vst [vmem:[%s5 + $0x428] sm:$0xff] %v1239
  %1368 = vst [vmem:[%s5 + $0x440] sm:$0xff] %v1240
  %1369 = vst [vmem:[%s5 + $0x448] sm:$0xff] %v1241
  %1370 = vst [vmem:[%s5 + $0x460] sm:$0xff] %v1242
  %1371 = vst [vmem:[%s5 + $0x468] sm:$0xff] %v1243
  %1372 = vst [vmem:[%s5 + $0x480] sm:$0xff] %v1244
  %1373 = vst [vmem:[%s5 + $0x488] sm:$0xff] %v1245
  %1374 = vst [vmem:[%s5 + $0x4a0] sm:$0xff] %v1246
  %1375 = vst [vmem:[%s5 + $0x4a8] sm:$0xff] %v1247
  %1376 = vst [vmem:[%s5 + $0x4c0] sm:$0xff] %v1248
  %1377 = vst [vmem:[%s5 + $0x4c8] sm:$0xff] %v1249
  %1378 = vst [vmem:[%s5 + $0x4e0] sm:$0xff] %v1250
  %1379 = vst [vmem:[%s5 + $0x4e8] sm:$0xff] %v1251
  %1380 = vst [vmem:[%s5 + $0x500] sm:$0xff] %v1252
  %1381 = vst [vmem:[%s5 + $0x508] sm:$0xff] %v1253
  %1382 = vst [vmem:[%s5 + $0x520] sm:$0xff] %v1254
  %1383 = vst [vmem:[%s5 + $0x528] sm:$0xff] %v1255
  %1384 = vst [vmem:[%s5 + $0x540] sm:$0xff] %v1256
  %1385 = vst [vmem:[%s5 + $0x548] sm:$0xff] %v1257
  %1386 = vst [vmem:[%s5 + $0x560] sm:$0xff] %v1258
  %1387 = vst [vmem:[%s5 + $0x568] sm:$0xff] %v1259
  %1388 = vst [vmem:[%s5 + $0x580] sm:$0xff] %v1260
  %1389 = vst [vmem:[%s5 + $0x588] sm:$0xff] %v1261
  %1390 = vst [vmem:[%s5 + $0x5a0] sm:$0xff] %v1262
  %1391 = vst [vmem:[%s5 + $0x5a8] sm:$0xff] %v1263
  %1392 = vst [vmem:[%s5 + $0x5c0] sm:$0xff] %v1264
  %1393 = vst [vmem:[%s5 + $0x5c8] sm:$0xff] %v1265
  %1394 = vst [vmem:[%s5 + $0x5e0] sm:$0xff] %v1266
  %1395 = vst [vmem:[%s5 + $0x5e8] sm:$0xff] %v1267
  %1396 = vst [vmem:[%s5 + $0x600] sm:$0xff] %v1268
  %1397 = vst [vmem:[%s5 + $0x608] sm:$0xff] %v1269
  %1398 = vst [vmem:[%s5 + $0x620] sm:$0xff] %v1270
  %1399 = vst [vmem:[%s5 + $0x628] sm:$0xff] %v1271
  %1400 = vst [vmem:[%s5 + $0x640] sm:$0xff] %v1272
  %1401 = vst [vmem:[%s5 + $0x648] sm:$0xff] %v1273
  %1402 = vst [vmem:[%s5 + $0x660] sm:$0xff] %v1274
  %1403 = vst [vmem:[%s5 + $0x668] sm:$0xff] %v1275
  %1404 = vst [vmem:[%s5 + $0x680] sm:$0xff] %v1276
  %1405 = vst [vmem:[%s5 + $0x688] sm:$0xff] %v1277
  %1406 = vst [vmem:[%s5 + $0x6a0] sm:$0xff] %v1278
  %1407 = vst [vmem:[%s5 + $0x6a8] sm:$0xff] %v1279
  %1408 = vst [vmem:[%s5 + $0x6c0] sm:$0xff] %v1280
  %1409 = vst [vmem:[%s5 + $0x6c8] sm:$0xff] %v1281
  %1410 = vst [vmem:[%s5 + $0x6e0] sm:$0xff] %v1282
  %1411 = vst [vmem:[%s5 + $0x6e8] sm:$0xff] %v1283
  %1412 = vst [vmem:[%s5 + $0x700] sm:$0xff] %v1284
  %1413 = vst [vmem:[%s5 + $0x708] sm:$0xff] %v1285
  %1414 = vst [vmem:[%s5 + $0x720] sm:$0xff] %v1286
  %1415 = vst [vmem:[%s5 + $0x728] sm:$0xff] %v1287
  %1416 = vst [vmem:[%s5 + $0x740] sm:$0xff] %v1288
  %1417 = vst [vmem:[%s5 + $0x748] sm:$0xff] %v1289
  %1418 = vst [vmem:[%s5 + $0x760] sm:$0xff] %v1290
  %1419 = vst [vmem:[%s5 + $0x768] sm:$0xff] %v1291
  %1420 = vst [vmem:[%s5 + $0x780] sm:$0xff] %v1292
  %1421 = vst [vmem:[%s5 + $0x788] sm:$0xff] %v1293
  %1422 = vst [vmem:[%s5 + $0x7a0] sm:$0xff] %v1294
  %1423 = vst [vmem:[%s5 + $0x7a8] sm:$0xff] %v1295
  %1424 = vst [vmem:[%s5 + $0x7c0] sm:$0xff] %v1296
  %1425 = vst [vmem:[%s5 + $0x7c8] sm:$0xff] %v1297
  %1426 = vst [vmem:[%s5 + $0x7e0] sm:$0xff] %v1298
  %1427 = vst [vmem:[%s5 + $0x7e8] sm:$0xff] %v1299
  %v1428 = vadd.f32 %v340, %v148
  %v1429 = vadd.f32 %v341, %v149
  %v1430 = vadd.f32 %v342, %v150
  %v1431 = vadd.f32 %v343, %v151
  %v1432 = vadd.f32 %v344, %v152
  %v1433 = vadd.f32 %v345, %v153
  %v1434 = vadd.f32 %v346, %v154
  %v1435 = vadd.f32 %v347, %v155
  %v1436 = vadd.f32 %v348, %v156
  %v1437 = vadd.f32 %v349, %v157
  %v1438 = vadd.f32 %v350, %v158
  %v1439 = vadd.f32 %v351, %v159
  %v1440 = vadd.f32 %v352, %v160
  %v1441 = vadd.f32 %v353, %v161
  %v1442 = vadd.f32 %v354, %v162
  %v1443 = vadd.f32 %v355, %v163
  %v1444 = vadd.f32 %v356, %v164
  %v1445 = vadd.f32 %v357, %v165
  %v1446 = vadd.f32 %v358, %v166
  %v1447 = vadd.f32 %v359, %v167
  %v1448 = vadd.f32 %v360, %v168
  %v1449 = vadd.f32 %v361, %v169
  %v1450 = vadd.f32 %v362, %v170
  %v1451 = vadd.f32 %v363, %v171
  %v1452 = vadd.f32 %v364, %v172
  %v1453 = vadd.f32 %v365, %v173
  %v1454 = vadd.f32 %v366, %v174
  %v1455 = vadd.f32 %v367, %v175
  %v1456 = vadd.f32 %v368, %v176
  %v1457 = vadd.f32 %v369, %v177
  %v1458 = vadd.f32 %v370, %v178
  %v1459 = vadd.f32 %v371, %v179
  %v1460 = vadd.f32 %v372, %v180
  %v1461 = vadd.f32 %v373, %v181
  %v1462 = vadd.f32 %v374, %v182
  %v1463 = vadd.f32 %v375, %v183
  %v1464 = vadd.f32 %v376, %v184
  %v1465 = vadd.f32 %v377, %v185
  %v1466 = vadd.f32 %v378, %v186
  %v1467 = vadd.f32 %v379, %v187
  %v1468 = vadd.f32 %v380, %v188
  %v1469 = vadd.f32 %v381, %v189
  %v1470 = vadd.f32 %v382, %v190
  %v1471 = vadd.f32 %v383, %v191
  %v1472 = vadd.f32 %v384, %v192
  %v1473 = vadd.f32 %v385, %v193
  %v1474 = vadd.f32 %v386, %v194
  %v1475 = vadd.f32 %v387, %v195
  %v1476 = vadd.f32 %v388, %v196
  %v1477 = vadd.f32 %v389, %v197
  %v1478 = vadd.f32 %v390, %v198
  %v1479 = vadd.f32 %v391, %v199
  %v1480 = vadd.f32 %v392, %v200
  %v1481 = vadd.f32 %v393, %v201
  %v1482 = vadd.f32 %v394, %v202
  %v1483 = vadd.f32 %v395, %v203
  %v1484 = vadd.f32 %v396, %v204
  %v1485 = vadd.f32 %v397, %v205
  %v1486 = vadd.f32 %v398, %v206
  %v1487 = vadd.f32 %v399, %v207
  %v1488 = vadd.f32 %v400, %v208
  %v1489 = vadd.f32 %v401, %v209
  %v1490 = vadd.f32 %v402, %v210
  %v1491 = vadd.f32 %v403, %v211
  %v1492 = vadd.f32 %v404, %v212
  %v1493 = vadd.f32 %v405, %v213
  %v1494 = vadd.f32 %v406, %v214
  %v1495 = vadd.f32 %v407, %v215
  %v1496 = vadd.f32 %v408, %v216
  %v1497 = vadd.f32 %v409, %v217
  %v1498 = vadd.f32 %v410, %v218
  %v1499 = vadd.f32 %v411, %v219
  %v1500 = vadd.f32 %v412, %v220
  %v1501 = vadd.f32 %v413, %v221
  %v1502 = vadd.f32 %v414, %v222
  %v1503 = vadd.f32 %v415, %v223
  %v1504 = vadd.f32 %v416, %v224
  %v1505 = vadd.f32 %v417, %v225
  %v1506 = vadd.f32 %v418, %v226
  %v1507 = vadd.f32 %v419, %v227
  %v1508 = vadd.f32 %v420, %v228
  %v1509 = vadd.f32 %v421, %v229
  %v1510 = vadd.f32 %v422, %v230
  %v1511 = vadd.f32 %v423, %v231
  %v1512 = vadd.f32 %v424, %v232
  %v1513 = vadd.f32 %v425, %v233
  %v1514 = vadd.f32 %v426, %v234
  %v1515 = vadd.f32 %v427, %v235
  %v1516 = vadd.f32 %v428, %v236
  %v1517 = vadd.f32 %v429, %v237
  %v1518 = vadd.f32 %v430, %v238
  %v1519 = vadd.f32 %v431, %v239
  %v1520 = vadd.f32 %v432, %v240
  %v1521 = vadd.f32 %v433, %v241
  %v1522 = vadd.f32 %v434, %v242
  %v1523 = vadd.f32 %v435, %v243
  %v1524 = vadd.f32 %v436, %v244
  %v1525 = vadd.f32 %v437, %v245
  %v1526 = vadd.f32 %v438, %v246
  %v1527 = vadd.f32 %v439, %v247
  %v1528 = vadd.f32 %v440, %v248
  %v1529 = vadd.f32 %v441, %v249
  %v1530 = vadd.f32 %v442, %v250
  %v1531 = vadd.f32 %v443, %v251
  %v1532 = vadd.f32 %v444, %v252
  %v1533 = vadd.f32 %v445, %v253
  %v1534 = vadd.f32 %v446, %v254
  %v1535 = vadd.f32 %v447, %v255
  %v1536 = vadd.f32 %v448, %v256
  %v1537 = vadd.f32 %v449, %v257
  %v1538 = vadd.f32 %v450, %v258
  %v1539 = vadd.f32 %v451, %v259
  %v1540 = vadd.f32 %v452, %v260
  %v1541 = vadd.f32 %v453, %v261
  %v1542 = vadd.f32 %v454, %v262
  %v1543 = vadd.f32 %v455, %v263
  %v1544 = vadd.f32 %v456, %v264
  %v1545 = vadd.f32 %v457, %v265
  %v1546 = vadd.f32 %v458, %v266
  %v1547 = vadd.f32 %v459, %v267
  %v1548 = vadd.f32 %v460, %v268
  %v1549 = vadd.f32 %v461, %v269
  %v1550 = vadd.f32 %v462, %v270
  %v1551 = vadd.f32 %v463, %v271
  %v1552 = vadd.f32 %v464, %v272
  %v1553 = vadd.f32 %v465, %v273
  %v1554 = vadd.f32 %v466, %v274
  %v1555 = vadd.f32 %v467, %v275
  %v1556 = vld [vmem:[%s3] sm:$0xff]
  %v1557 = vld [vmem:[%s3 + $0x8] sm:$0xff]
  %v1558 = vld [vmem:[%s3 + $0x10] sm:$0xff]
  %v1559 = vld [vmem:[%s3 + $0x18] sm:$0xff]
  %v1560 = vld [vmem:[%s3 + $0x20] sm:$0xff]
  %v1561 = vld [vmem:[%s3 + $0x28] sm:$0xff]
  %v1562 = vld [vmem:[%s3 + $0x30] sm:$0xff]
  %v1563 = vld [vmem:[%s3 + $0x38] sm:$0xff]
  %v1564 = vld [vmem:[%s3 + $0x40] sm:$0xff]
  %v1565 = vld [vmem:[%s3 + $0x48] sm:$0xff]
  %v1566 = vld [vmem:[%s3 + $0x50] sm:$0xff]
  %v1567 = vld [vmem:[%s3 + $0x58] sm:$0xff]
  %v1568 = vld [vmem:[%s3 + $0x60] sm:$0xff]
  %v1569 = vld [vmem:[%s3 + $0x68] sm:$0xff]
  %v1570 = vld [vmem:[%s3 + $0x70] sm:$0xff]
  %v1571 = vld [vmem:[%s3 + $0x78] sm:$0xff]
  %v1572 = vld [vmem:[%s3 + $0x80] sm:$0xff]
  %v1573 = vld [vmem:[%s3 + $0x88] sm:$0xff]
  %v1574 = vld [vmem:[%s3 + $0x90] sm:$0xff]
  %v1575 = vld [vmem:[%s3 + $0x98] sm:$0xff]
  %v1576 = vld [vmem:[%s3 + $0xa0] sm:$0xff]
  %v1577 = vld [vmem:[%s3 + $0xa8] sm:$0xff]
  %v1578 = vld [vmem:[%s3 + $0xb0] sm:$0xff]
  %v1579 = vld [vmem:[%s3 + $0xb8] sm:$0xff]
  %v1580 = vld [vmem:[%s3 + $0xc0] sm:$0xff]
  %v1581 = vld [vmem:[%s3 + $0xc8] sm:$0xff]
  %v1582 = vld [vmem:[%s3 + $0xd0] sm:$0xff]
  %v1583 = vld [vmem:[%s3 + $0xd8] sm:$0xff]
  %v1584 = vld [vmem:[%s3 + $0xe0] sm:$0xff]
  %v1585 = vld [vmem:[%s3 + $0xe8] sm:$0xff]
  %v1586 = vld [vmem:[%s3 + $0xf0] sm:$0xff]
  %v1587 = vld [vmem:[%s3 + $0xf8] sm:$0xff]
  %v1588 = vld [vmem:[%s3 + $0x100] sm:$0xff]
  %v1589 = vld [vmem:[%s3 + $0x108] sm:$0xff]
  %v1590 = vld [vmem:[%s3 + $0x110] sm:$0xff]
  %v1591 = vld [vmem:[%s3 + $0x118] sm:$0xff]
  %v1592 = vld [vmem:[%s3 + $0x120] sm:$0xff]
  %v1593 = vld [vmem:[%s3 + $0x128] sm:$0xff]
  %v1594 = vld [vmem:[%s3 + $0x130] sm:$0xff]
  %v1595 = vld [vmem:[%s3 + $0x138] sm:$0xff]
  %v1596 = vld [vmem:[%s3 + $0x140] sm:$0xff]
  %v1597 = vld [vmem:[%s3 + $0x148] sm:$0xff]
  %v1598 = vld [vmem:[%s3 + $0x150] sm:$0xff]
  %v1599 = vld [vmem:[%s3 + $0x158] sm:$0xff]
  %v1600 = vld [vmem:[%s3 + $0x160] sm:$0xff]
  %v1601 = vld [vmem:[%s3 + $0x168] sm:$0xff]
  %v1602 = vld [vmem:[%s3 + $0x170] sm:$0xff]
  %v1603 = vld [vmem:[%s3 + $0x178] sm:$0xff]
  %v1604 = vld [vmem:[%s3 + $0x180] sm:$0xff]
  %v1605 = vld [vmem:[%s3 + $0x188] sm:$0xff]
  %v1606 = vld [vmem:[%s3 + $0x190] sm:$0xff]
  %v1607 = vld [vmem:[%s3 + $0x198] sm:$0xff]
  %v1608 = vld [vmem:[%s3 + $0x1a0] sm:$0xff]
  %v1609 = vld [vmem:[%s3 + $0x1a8] sm:$0xff]
  %v1610 = vld [vmem:[%s3 + $0x1b0] sm:$0xff]
  %v1611 = vld [vmem:[%s3 + $0x1b8] sm:$0xff]
  %v1612 = vld [vmem:[%s3 + $0x1c0] sm:$0xff]
  %v1613 = vld [vmem:[%s3 + $0x1c8] sm:$0xff]
  %v1614 = vld [vmem:[%s3 + $0x1d0] sm:$0xff]
  %v1615 = vld [vmem:[%s3 + $0x1d8] sm:$0xff]
  %v1616 = vld [vmem:[%s3 + $0x1e0] sm:$0xff]
  %v1617 = vld [vmem:[%s3 + $0x1e8] sm:$0xff]
  %v1618 = vld [vmem:[%s3 + $0x1f0] sm:$0xff]
  %v1619 = vld [vmem:[%s3 + $0x1f8] sm:$0xff]
  %v1620 = vld [vmem:[%s3 + $0x200] sm:$0xff]
  %v1621 = vld [vmem:[%s3 + $0x208] sm:$0xff]
  %v1622 = vld [vmem:[%s3 + $0x210] sm:$0xff]
  %v1623 = vld [vmem:[%s3 + $0x218] sm:$0xff]
  %v1624 = vld [vmem:[%s3 + $0x220] sm:$0xff]
  %v1625 = vld [vmem:[%s3 + $0x228] sm:$0xff]
  %v1626 = vld [vmem:[%s3 + $0x230] sm:$0xff]
  %v1627 = vld [vmem:[%s3 + $0x238] sm:$0xff]
  %v1628 = vld [vmem:[%s3 + $0x240] sm:$0xff]
  %v1629 = vld [vmem:[%s3 + $0x248] sm:$0xff]
  %v1630 = vld [vmem:[%s3 + $0x250] sm:$0xff]
  %v1631 = vld [vmem:[%s3 + $0x258] sm:$0xff]
  %v1632 = vld [vmem:[%s3 + $0x260] sm:$0xff]
  %v1633 = vld [vmem:[%s3 + $0x268] sm:$0xff]
  %v1634 = vld [vmem:[%s3 + $0x270] sm:$0xff]
  %v1635 = vld [vmem:[%s3 + $0x278] sm:$0xff]
  %v1636 = vld [vmem:[%s3 + $0x280] sm:$0xff]
  %v1637 = vld [vmem:[%s3 + $0x288] sm:$0xff]
  %v1638 = vld [vmem:[%s3 + $0x290] sm:$0xff]
  %v1639 = vld [vmem:[%s3 + $0x298] sm:$0xff]
  %v1640 = vld [vmem:[%s3 + $0x2a0] sm:$0xff]
  %v1641 = vld [vmem:[%s3 + $0x2a8] sm:$0xff]
  %v1642 = vld [vmem:[%s3 + $0x2b0] sm:$0xff]
  %v1643 = vld [vmem:[%s3 + $0x2b8] sm:$0xff]
  %v1644 = vld [vmem:[%s3 + $0x2c0] sm:$0xff]
  %v1645 = vld [vmem:[%s3 + $0x2c8] sm:$0xff]
  %v1646 = vld [vmem:[%s3 + $0x2d0] sm:$0xff]
  %v1647 = vld [vmem:[%s3 + $0x2d8] sm:$0xff]
  %v1648 = vld [vmem:[%s3 + $0x2e0] sm:$0xff]
  %v1649 = vld [vmem:[%s3 + $0x2e8] sm:$0xff]
  %v1650 = vld [vmem:[%s3 + $0x2f0] sm:$0xff]
  %v1651 = vld [vmem:[%s3 + $0x2f8] sm:$0xff]
  %v1652 = vld [vmem:[%s3 + $0x300] sm:$0xff]
  %v1653 = vld [vmem:[%s3 + $0x308] sm:$0xff]
  %v1654 = vld [vmem:[%s3 + $0x310] sm:$0xff]
  %v1655 = vld [vmem:[%s3 + $0x318] sm:$0xff]
  %v1656 = vld [vmem:[%s3 + $0x320] sm:$0xff]
  %v1657 = vld [vmem:[%s3 + $0x328] sm:$0xff]
  %v1658 = vld [vmem:[%s3 + $0x330] sm:$0xff]
  %v1659 = vld [vmem:[%s3 + $0x338] sm:$0xff]
  %v1660 = vld [vmem:[%s3 + $0x340] sm:$0xff]
  %v1661 = vld [vmem:[%s3 + $0x348] sm:$0xff]
  %v1662 = vld [vmem:[%s3 + $0x350] sm:$0xff]
  %v1663 = vld [vmem:[%s3 + $0x358] sm:$0xff]
  %v1664 = vld [vmem:[%s3 + $0x360] sm:$0xff]
  %v1665 = vld [vmem:[%s3 + $0x368] sm:$0xff]
  %v1666 = vld [vmem:[%s3 + $0x370] sm:$0xff]
  %v1667 = vld [vmem:[%s3 + $0x378] sm:$0xff]
  %v1668 = vld [vmem:[%s3 + $0x380] sm:$0xff]
  %v1669 = vld [vmem:[%s3 + $0x388] sm:$0xff]
  %v1670 = vld [vmem:[%s3 + $0x390] sm:$0xff]
  %v1671 = vld [vmem:[%s3 + $0x398] sm:$0xff]
  %v1672 = vld [vmem:[%s3 + $0x3a0] sm:$0xff]
  %v1673 = vld [vmem:[%s3 + $0x3a8] sm:$0xff]
  %v1674 = vld [vmem:[%s3 + $0x3b0] sm:$0xff]
  %v1675 = vld [vmem:[%s3 + $0x3b8] sm:$0xff]
  %v1676 = vld [vmem:[%s3 + $0x3c0] sm:$0xff]
  %v1677 = vld [vmem:[%s3 + $0x3c8] sm:$0xff]
  %v1678 = vld [vmem:[%s3 + $0x3d0] sm:$0xff]
  %v1679 = vld [vmem:[%s3 + $0x3d8] sm:$0xff]
  %v1680 = vld [vmem:[%s3 + $0x3e0] sm:$0xff]
  %v1681 = vld [vmem:[%s3 + $0x3e8] sm:$0xff]
  %v1682 = vld [vmem:[%s3 + $0x3f0] sm:$0xff]
  %v1683 = vld [vmem:[%s3 + $0x3f8] sm:$0xff]
  %v1684 = vmul.f32 %v727, %v1556
  %v1685 = vmul.f32 %v727, %v1557
  %v1686 = vmul.f32 %v732, %v1558
  %v1687 = vmul.f32 %v732, %v1559
  %v1688 = vmul.f32 %v737, %v1560
  %v1689 = vmul.f32 %v737, %v1561
  %v1690 = vmul.f32 %v742, %v1562
  %v1691 = vmul.f32 %v742, %v1563
  %v1692 = vmul.f32 %v747, %v1564
  %v1693 = vmul.f32 %v747, %v1565
  %v1694 = vmul.f32 %v752, %v1566
  %v1695 = vmul.f32 %v752, %v1567
  %v1696 = vmul.f32 %v757, %v1568
  %v1697 = vmul.f32 %v757, %v1569
  %v1698 = vmul.f32 %v762, %v1570
  %v1699 = vmul.f32 %v762, %v1571
  %v1700 = vmul.f32 %v767, %v1572
  %v1701 = vmul.f32 %v767, %v1573
  %v1702 = vmul.f32 %v772, %v1574
  %v1703 = vmul.f32 %v772, %v1575
  %v1704 = vmul.f32 %v777, %v1576
  %v1705 = vmul.f32 %v777, %v1577
  %v1706 = vmul.f32 %v782, %v1578
  %v1707 = vmul.f32 %v782, %v1579
  %v1708 = vmul.f32 %v787, %v1580
  %v1709 = vmul.f32 %v787, %v1581
  %v1710 = vmul.f32 %v792, %v1582
  %v1711 = vmul.f32 %v792, %v1583
  %v1712 = vmul.f32 %v797, %v1584
  %v1713 = vmul.f32 %v797, %v1585
  %v1714 = vmul.f32 %v802, %v1586
  %v1715 = vmul.f32 %v802, %v1587
  %v1716 = vmul.f32 %v807, %v1588
  %v1717 = vmul.f32 %v807, %v1589
  %v1718 = vmul.f32 %v812, %v1590
  %v1719 = vmul.f32 %v812, %v1591
  %v1720 = vmul.f32 %v817, %v1592
  %v1721 = vmul.f32 %v817, %v1593
  %v1722 = vmul.f32 %v822, %v1594
  %v1723 = vmul.f32 %v822, %v1595
  %v1724 = vmul.f32 %v827, %v1596
  %v1725 = vmul.f32 %v827, %v1597
  %v1726 = vmul.f32 %v832, %v1598
  %v1727 = vmul.f32 %v832, %v1599
  %v1728 = vmul.f32 %v837, %v1600
  %v1729 = vmul.f32 %v837, %v1601
  %v1730 = vmul.f32 %v842, %v1602
  %v1731 = vmul.f32 %v842, %v1603
  %v1732 = vmul.f32 %v847, %v1604
  %v1733 = vmul.f32 %v847, %v1605
  %v1734 = vmul.f32 %v852, %v1606
  %v1735 = vmul.f32 %v852, %v1607
  %v1736 = vmul.f32 %v857, %v1608
  %v1737 = vmul.f32 %v857, %v1609
  %v1738 = vmul.f32 %v862, %v1610
  %v1739 = vmul.f32 %v862, %v1611
  %v1740 = vmul.f32 %v867, %v1612
  %v1741 = vmul.f32 %v867, %v1613
  %v1742 = vmul.f32 %v872, %v1614
  %v1743 = vmul.f32 %v872, %v1615
  %v1744 = vmul.f32 %v877, %v1616
  %v1745 = vmul.f32 %v877, %v1617
  %v1746 = vmul.f32 %v882, %v1618
  %v1747 = vmul.f32 %v882, %v1619
  %v1748 = vmul.f32 %v887, %v1620
  %v1749 = vmul.f32 %v887, %v1621
  %v1750 = vmul.f32 %v892, %v1622
  %v1751 = vmul.f32 %v892, %v1623
  %v1752 = vmul.f32 %v897, %v1624
  %v1753 = vmul.f32 %v897, %v1625
  %v1754 = vmul.f32 %v902, %v1626
  %v1755 = vmul.f32 %v902, %v1627
  %v1756 = vmul.f32 %v907, %v1628
  %v1757 = vmul.f32 %v907, %v1629
  %v1758 = vmul.f32 %v912, %v1630
  %v1759 = vmul.f32 %v912, %v1631
  %v1760 = vmul.f32 %v917, %v1632
  %v1761 = vmul.f32 %v917, %v1633
  %v1762 = vmul.f32 %v922, %v1634
  %v1763 = vmul.f32 %v922, %v1635
  %v1764 = vmul.f32 %v927, %v1636
  %v1765 = vmul.f32 %v927, %v1637
  %v1766 = vmul.f32 %v932, %v1638
  %v1767 = vmul.f32 %v932, %v1639
  %v1768 = vmul.f32 %v937, %v1640
  %v1769 = vmul.f32 %v937, %v1641
  %v1770 = vmul.f32 %v942, %v1642
  %v1771 = vmul.f32 %v942, %v1643
  %v1772 = vmul.f32 %v947, %v1644
  %v1773 = vmul.f32 %v947, %v1645
  %v1774 = vmul.f32 %v952, %v1646
  %v1775 = vmul.f32 %v952, %v1647
  %v1776 = vmul.f32 %v957, %v1648
  %v1777 = vmul.f32 %v957, %v1649
  %v1778 = vmul.f32 %v962, %v1650
  %v1779 = vmul.f32 %v962, %v1651
  %v1780 = vmul.f32 %v967, %v1652
  %v1781 = vmul.f32 %v967, %v1653
  %v1782 = vmul.f32 %v972, %v1654
  %v1783 = vmul.f32 %v972, %v1655
  %v1784 = vmul.f32 %v977, %v1656
  %v1785 = vmul.f32 %v977, %v1657
  %v1786 = vmul.f32 %v982, %v1658
  %v1787 = vmul.f32 %v982, %v1659
  %v1788 = vmul.f32 %v987, %v1660
  %v1789 = vmul.f32 %v987, %v1661
  %v1790 = vmul.f32 %v992, %v1662
  %v1791 = vmul.f32 %v992, %v1663
  %v1792 = vmul.f32 %v997, %v1664
  %v1793 = vmul.f32 %v997, %v1665
  %v1794 = vmul.f32 %v1002, %v1666
  %v1795 = vmul.f32 %v1002, %v1667
  %v1796 = vmul.f32 %v1007, %v1668
  %v1797 = vmul.f32 %v1007, %v1669
  %v1798 = vmul.f32 %v1012, %v1670
  %v1799 = vmul.f32 %v1012, %v1671
  %v1800 = vmul.f32 %v1017, %v1672
  %v1801 = vmul.f32 %v1017, %v1673
  %v1802 = vmul.f32 %v1022, %v1674
  %v1803 = vmul.f32 %v1022, %v1675
  %v1804 = vmul.f32 %v1027, %v1676
  %v1805 = vmul.f32 %v1027, %v1677
  %v1806 = vmul.f32 %v1032, %v1678
  %v1807 = vmul.f32 %v1032, %v1679
  %v1808 = vmul.f32 %v1037, %v1680
  %v1809 = vmul.f32 %v1037, %v1681
  %v1810 = vmul.f32 %v1042, %v1682
  %v1811 = vmul.f32 %v1042, %v1683
  %v1812 = vadd.f32 %v1428, %v1684
  %v1813 = vadd.f32 %v1429, %v1685
  %v1814 = vadd.f32 %v1430, %v1686
  %v1815 = vadd.f32 %v1431, %v1687
  %v1816 = vadd.f32 %v1432, %v1688
  %v1817 = vadd.f32 %v1433, %v1689
  %v1818 = vadd.f32 %v1434, %v1690
  %v1819 = vadd.f32 %v1435, %v1691
  %v1820 = vadd.f32 %v1436, %v1692
  %v1821 = vadd.f32 %v1437, %v1693
  %v1822 = vadd.f32 %v1438, %v1694
  %v1823 = vadd.f32 %v1439, %v1695
  %v1824 = vadd.f32 %v1440, %v1696
  %v1825 = vadd.f32 %v1441, %v1697
  %v1826 = vadd.f32 %v1442, %v1698
  %v1827 = vadd.f32 %v1443, %v1699
  %v1828 = vadd.f32 %v1444, %v1700
  %v1829 = vadd.f32 %v1445, %v1701
  %v1830 = vadd.f32 %v1446, %v1702
  %v1831 = vadd.f32 %v1447, %v1703
  %v1832 = vadd.f32 %v1448, %v1704
  %v1833 = vadd.f32 %v1449, %v1705
  %v1834 = vadd.f32 %v1450, %v1706
  %v1835 = vadd.f32 %v1451, %v1707
  %v1836 = vadd.f32 %v1452, %v1708
  %v1837 = vadd.f32 %v1453, %v1709
  %v1838 = vadd.f32 %v1454, %v1710
  %v1839 = vadd.f32 %v1455, %v1711
  %v1840 = vadd.f32 %v1456, %v1712
  %v1841 = vadd.f32 %v1457, %v1713
  %v1842 = vadd.f32 %v1458, %v1714
  %v1843 = vadd.f32 %v1459, %v1715
  %v1844 = vadd.f32 %v1460, %v1716
  %v1845 = vadd.f32 %v1461, %v1717
  %v1846 = vadd.f32 %v1462, %v1718
  %v1847 = vadd.f32 %v1463, %v1719
  %v1848 = vadd.f32 %v1464, %v1720
  %v1849 = vadd.f32 %v1465, %v1721
  %v1850 = vadd.f32 %v1466, %v1722
  %v1851 = vadd.f32 %v1467, %v1723
  %v1852 = vadd.f32 %v1468, %v1724
  %v1853 = vadd.f32 %v1469, %v1725
  %v1854 = vadd.f32 %v1470, %v1726
  %v1855 = vadd.f32 %v1471, %v1727
  %v1856 = vadd.f32 %v1472, %v1728
  %v1857 = vadd.f32 %v1473, %v1729
  %v1858 = vadd.f32 %v1474, %v1730
  %v1859 = vadd.f32 %v1475, %v1731
  %v1860 = vadd.f32 %v1476, %v1732
  %v1861 = vadd.f32 %v1477, %v1733
  %v1862 = vadd.f32 %v1478, %v1734
  %v1863 = vadd.f32 %v1479, %v1735
  %v1864 = vadd.f32 %v1480, %v1736
  %v1865 = vadd.f32 %v1481, %v1737
  %v1866 = vadd.f32 %v1482, %v1738
  %v1867 = vadd.f32 %v1483, %v1739
  %v1868 = vadd.f32 %v1484, %v1740
  %v1869 = vadd.f32 %v1485, %v1741
  %v1870 = vadd.f32 %v1486, %v1742
  %v1871 = vadd.f32 %v1487, %v1743
  %v1872 = vadd.f32 %v1488, %v1744
  %v1873 = vadd.f32 %v1489, %v1745
  %v1874 = vadd.f32 %v1490, %v1746
  %v1875 = vadd.f32 %v1491, %v1747
  %v1876 = vadd.f32 %v1492, %v1748
  %v1877 = vadd.f32 %v1493, %v1749
  %v1878 = vadd.f32 %v1494, %v1750
  %v1879 = vadd.f32 %v1495, %v1751
  %v1880 = vadd.f32 %v1496, %v1752
  %v1881 = vadd.f32 %v1497, %v1753
  %v1882 = vadd.f32 %v1498, %v1754
  %v1883 = vadd.f32 %v1499, %v1755
  %v1884 = vadd.f32 %v1500, %v1756
  %v1885 = vadd.f32 %v1501, %v1757
  %v1886 = vadd.f32 %v1502, %v1758
  %v1887 = vadd.f32 %v1503, %v1759
  %v1888 = vadd.f32 %v1504, %v1760
  %v1889 = vadd.f32 %v1505, %v1761
  %v1890 = vadd.f32 %v1506, %v1762
  %v1891 = vadd.f32 %v1507, %v1763
  %v1892 = vadd.f32 %v1508, %v1764
  %v1893 = vadd.f32 %v1509, %v1765
  %v1894 = vadd.f32 %v1510, %v1766
  %v1895 = vadd.f32 %v1511, %v1767
  %v1896 = vadd.f32 %v1512, %v1768
  %v1897 = vadd.f32 %v1513, %v1769
  %v1898 = vadd.f32 %v1514, %v1770
  %v1899 = vadd.f32 %v1515, %v1771
  %v1900 = vadd.f32 %v1516, %v1772
  %v1901 = vadd.f32 %v1517, %v1773
  %v1902 = vadd.f32 %v1518, %v1774
  %v1903 = vadd.f32 %v1519, %v1775
  %v1904 = vadd.f32 %v1520, %v1776
  %v1905 = vadd.f32 %v1521, %v1777
  %v1906 = vadd.f32 %v1522, %v1778
  %v1907 = vadd.f32 %v1523, %v1779
  %v1908 = vadd.f32 %v1524, %v1780
  %v1909 = vadd.f32 %v1525, %v1781
  %v1910 = vadd.f32 %v1526, %v1782
  %v1911 = vadd.f32 %v1527, %v1783
  %v1912 = vadd.f32 %v1528, %v1784
  %v1913 = vadd.f32 %v1529, %v1785
  %v1914 = vadd.f32 %v1530, %v1786
  %v1915 = vadd.f32 %v1531, %v1787
  %v1916 = vadd.f32 %v1532, %v1788
  %v1917 = vadd.f32 %v1533, %v1789
  %v1918 = vadd.f32 %v1534, %v1790
  %v1919 = vadd.f32 %v1535, %v1791
  %v1920 = vadd.f32 %v1536, %v1792
  %v1921 = vadd.f32 %v1537, %v1793
  %v1922 = vadd.f32 %v1538, %v1794
  %v1923 = vadd.f32 %v1539, %v1795
  %v1924 = vadd.f32 %v1540, %v1796
  %v1925 = vadd.f32 %v1541, %v1797
  %v1926 = vadd.f32 %v1542, %v1798
  %v1927 = vadd.f32 %v1543, %v1799
  %v1928 = vadd.f32 %v1544, %v1800
  %v1929 = vadd.f32 %v1545, %v1801
  %v1930 = vadd.f32 %v1546, %v1802
  %v1931 = vadd.f32 %v1547, %v1803
  %v1932 = vadd.f32 %v1548, %v1804
  %v1933 = vadd.f32 %v1549, %v1805
  %v1934 = vadd.f32 %v1550, %v1806
  %v1935 = vadd.f32 %v1551, %v1807
  %v1936 = vadd.f32 %v1552, %v1808
  %v1937 = vadd.f32 %v1553, %v1809
  %v1938 = vadd.f32 %v1554, %v1810
  %v1939 = vadd.f32 %v1555, %v1811
  %1940 = vst [vmem:[%s5 + $0x10] sm:$0xff] %v1812
  %1941 = vst [vmem:[%s5 + $0x18] sm:$0xff] %v1813
  %1942 = vst [vmem:[%s5 + $0x30] sm:$0xff] %v1814
  %1943 = vst [vmem:[%s5 + $0x38] sm:$0xff] %v1815
  %1944 = vst [vmem:[%s5 + $0x50] sm:$0xff] %v1816
  %1945 = vst [vmem:[%s5 + $0x58] sm:$0xff] %v1817
  %1946 = vst [vmem:[%s5 + $0x70] sm:$0xff] %v1818
  %1947 = vst [vmem:[%s5 + $0x78] sm:$0xff] %v1819
  %1948 = vst [vmem:[%s5 + $0x90] sm:$0xff] %v1820
  %1949 = vst [vmem:[%s5 + $0x98] sm:$0xff] %v1821
  %1950 = vst [vmem:[%s5 + $0xb0] sm:$0xff] %v1822
  %1951 = vst [vmem:[%s5 + $0xb8] sm:$0xff] %v1823
  %1952 = vst [vmem:[%s5 + $0xd0] sm:$0xff] %v1824
  %1953 = vst [vmem:[%s5 + $0xd8] sm:$0xff] %v1825
  %1954 = vst [vmem:[%s5 + $0xf0] sm:$0xff] %v1826
  %1955 = vst [vmem:[%s5 + $0xf8] sm:$0xff] %v1827
  %1956 = vst [vmem:[%s5 + $0x110] sm:$0xff] %v1828
  %1957 = vst [vmem:[%s5 + $0x118] sm:$0xff] %v1829
  %1958 = vst [vmem:[%s5 + $0x130] sm:$0xff] %v1830
  %1959 = vst [vmem:[%s5 + $0x138] sm:$0xff] %v1831
  %1960 = vst [vmem:[%s5 + $0x150] sm:$0xff] %v1832
  %1961 = vst [vmem:[%s5 + $0x158] sm:$0xff] %v1833
  %1962 = vst [vmem:[%s5 + $0x170] sm:$0xff] %v1834
  %1963 = vst [vmem:[%s5 + $0x178] sm:$0xff] %v1835
  %1964 = vst [vmem:[%s5 + $0x190] sm:$0xff] %v1836
  %1965 = vst [vmem:[%s5 + $0x198] sm:$0xff] %v1837
  %1966 = vst [vmem:[%s5 + $0x1b0] sm:$0xff] %v1838
  %1967 = vst [vmem:[%s5 + $0x1b8] sm:$0xff] %v1839
  %1968 = vst [vmem:[%s5 + $0x1d0] sm:$0xff] %v1840
  %1969 = vst [vmem:[%s5 + $0x1d8] sm:$0xff] %v1841
  %1970 = vst [vmem:[%s5 + $0x1f0] sm:$0xff] %v1842
  %1971 = vst [vmem:[%s5 + $0x1f8] sm:$0xff] %v1843
  %1972 = vst [vmem:[%s5 + $0x210] sm:$0xff] %v1844
  %1973 = vst [vmem:[%s5 + $0x218] sm:$0xff] %v1845
  %1974 = vst [vmem:[%s5 + $0x230] sm:$0xff] %v1846
  %1975 = vst [vmem:[%s5 + $0x238] sm:$0xff] %v1847
  %1976 = vst [vmem:[%s5 + $0x250] sm:$0xff] %v1848
  %1977 = vst [vmem:[%s5 + $0x258] sm:$0xff] %v1849
  %1978 = vst [vmem:[%s5 + $0x270] sm:$0xff] %v1850
  %1979 = vst [vmem:[%s5 + $0x278] sm:$0xff] %v1851
  %1980 = vst [vmem:[%s5 + $0x290] sm:$0xff] %v1852
  %1981 = vst [vmem:[%s5 + $0x298] sm:$0xff] %v1853
  %1982 = vst [vmem:[%s5 + $0x2b0] sm:$0xff] %v1854
  %1983 = vst [vmem:[%s5 + $0x2b8] sm:$0xff] %v1855
  %1984 = vst [vmem:[%s5 + $0x2d0] sm:$0xff] %v1856
  %1985 = vst [vmem:[%s5 + $0x2d8] sm:$0xff] %v1857
  %1986 = vst [vmem:[%s5 + $0x2f0] sm:$0xff] %v1858
  %1987 = vst [vmem:[%s5 + $0x2f8] sm:$0xff] %v1859
  %1988 = vst [vmem:[%s5 + $0x310] sm:$0xff] %v1860
  %1989 = vst [vmem:[%s5 + $0x318] sm:$0xff] %v1861
  %1990 = vst [vmem:[%s5 + $0x330] sm:$0xff] %v1862
  %1991 = vst [vmem:[%s5 + $0x338] sm:$0xff] %v1863
  %1992 = vst [vmem:[%s5 + $0x350] sm:$0xff] %v1864
  %1993 = vst [vmem:[%s5 + $0x358] sm:$0xff] %v1865
  %1994 = vst [vmem:[%s5 + $0x370] sm:$0xff] %v1866
  %1995 = vst [vmem:[%s5 + $0x378] sm:$0xff] %v1867
  %1996 = vst [vmem:[%s5 + $0x390] sm:$0xff] %v1868
  %1997 = vst [vmem:[%s5 + $0x398] sm:$0xff] %v1869
  %1998 = vst [vmem:[%s5 + $0x3b0] sm:$0xff] %v1870
  %1999 = vst [vmem:[%s5 + $0x3b8] sm:$0xff] %v1871
  %2000 = vst [vmem:[%s5 + $0x3d0] sm:$0xff] %v1872
  %2001 = vst [vmem:[%s5 + $0x3d8] sm:$0xff] %v1873
  %2002 = vst [vmem:[%s5 + $0x3f0] sm:$0xff] %v1874
  %2003 = vst [vmem:[%s5 + $0x3f8] sm:$0xff] %v1875
  %2004 = vst [vmem:[%s5 + $0x410] sm:$0xff] %v1876
  %2005 = vst [vmem:[%s5 + $0x418] sm:$0xff] %v1877
  %2006 = vst [vmem:[%s5 + $0x430] sm:$0xff] %v1878
  %2007 = vst [vmem:[%s5 + $0x438] sm:$0xff] %v1879
  %2008 = vst [vmem:[%s5 + $0x450] sm:$0xff] %v1880
  %2009 = vst [vmem:[%s5 + $0x458] sm:$0xff] %v1881
  %2010 = vst [vmem:[%s5 + $0x470] sm:$0xff] %v1882
  %2011 = vst [vmem:[%s5 + $0x478] sm:$0xff] %v1883
  %2012 = vst [vmem:[%s5 + $0x490] sm:$0xff] %v1884
  %2013 = vst [vmem:[%s5 + $0x498] sm:$0xff] %v1885
  %2014 = vst [vmem:[%s5 + $0x4b0] sm:$0xff] %v1886
  %2015 = vst [vmem:[%s5 + $0x4b8] sm:$0xff] %v1887
  %2016 = vst [vmem:[%s5 + $0x4d0] sm:$0xff] %v1888
  %2017 = vst [vmem:[%s5 + $0x4d8] sm:$0xff] %v1889
  %2018 = vst [vmem:[%s5 + $0x4f0] sm:$0xff] %v1890
  %2019 = vst [vmem:[%s5 + $0x4f8] sm:$0xff] %v1891
  %2020 = vst [vmem:[%s5 + $0x510] sm:$0xff] %v1892
  %2021 = vst [vmem:[%s5 + $0x518] sm:$0xff] %v1893
  %2022 = vst [vmem:[%s5 + $0x530] sm:$0xff] %v1894
  %2023 = vst [vmem:[%s5 + $0x538] sm:$0xff] %v1895
  %2024 = vst [vmem:[%s5 + $0x550] sm:$0xff] %v1896
  %2025 = vst [vmem:[%s5 + $0x558] sm:$0xff] %v1897
  %2026 = vst [vmem:[%s5 + $0x570] sm:$0xff] %v1898
  %2027 = vst [vmem:[%s5 + $0x578] sm:$0xff] %v1899
  %2028 = vst [vmem:[%s5 + $0x590] sm:$0xff] %v1900
  %2029 = vst [vmem:[%s5 + $0x598] sm:$0xff] %v1901
  %2030 = vst [vmem:[%s5 + $0x5b0] sm:$0xff] %v1902
  %2031 = vst [vmem:[%s5 + $0x5b8] sm:$0xff] %v1903
  %2032 = vst [vmem:[%s5 + $0x5d0] sm:$0xff] %v1904
  %2033 = vst [vmem:[%s5 + $0x5d8] sm:$0xff] %v1905
  %2034 = vst [vmem:[%s5 + $0x5f0] sm:$0xff] %v1906
  %2035 = vst [vmem:[%s5 + $0x5f8] sm:$0xff] %v1907
  %2036 = vst [vmem:[%s5 + $0x610] sm:$0xff] %v1908
  %2037 = vst [vmem:[%s5 + $0x618] sm:$0xff] %v1909
  %2038 = vst [vmem:[%s5 + $0x630] sm:$0xff] %v1910
  %2039 = vst [vmem:[%s5 + $0x638] sm:$0xff] %v1911
  %2040 = vst [vmem:[%s5 + $0x650] sm:$0xff] %v1912
  %2041 = vst [vmem:[%s5 + $0x658] sm:$0xff] %v1913
  %2042 = vst [vmem:[%s5 + $0x670] sm:$0xff] %v1914
  %2043 = vst [vmem:[%s5 + $0x678] sm:$0xff] %v1915
  %2044 = vst [vmem:[%s5 + $0x690] sm:$0xff] %v1916
  %2045 = vst [vmem:[%s5 + $0x698] sm:$0xff] %v1917
  %2046 = vst [vmem:[%s5 + $0x6b0] sm:$0xff] %v1918
  %2047 = vst [vmem:[%s5 + $0x6b8] sm:$0xff] %v1919
  %2048 = vst [vmem:[%s5 + $0x6d0] sm:$0xff] %v1920
  %2049 = vst [vmem:[%s5 + $0x6d8] sm:$0xff] %v1921
  %2050 = vst [vmem:[%s5 + $0x6f0] sm:$0xff] %v1922
  %2051 = vst [vmem:[%s5 + $0x6f8] sm:$0xff] %v1923
  %2052 = vst [vmem:[%s5 + $0x710] sm:$0xff] %v1924
  %2053 = vst [vmem:[%s5 + $0x718] sm:$0xff] %v1925
  %2054 = vst [vmem:[%s5 + $0x730] sm:$0xff] %v1926
  %2055 = vst [vmem:[%s5 + $0x738] sm:$0xff] %v1927
  %2056 = vst [vmem:[%s5 + $0x750] sm:$0xff] %v1928
  %2057 = vst [vmem:[%s5 + $0x758] sm:$0xff] %v1929
  %2058 = vst [vmem:[%s5 + $0x770] sm:$0xff] %v1930
  %2059 = vst [vmem:[%s5 + $0x778] sm:$0xff] %v1931
  %2060 = vst [vmem:[%s5 + $0x790] sm:$0xff] %v1932
  %2061 = vst [vmem:[%s5 + $0x798] sm:$0xff] %v1933
  %2062 = vst [vmem:[%s5 + $0x7b0] sm:$0xff] %v1934
  %2063 = vst [vmem:[%s5 + $0x7b8] sm:$0xff] %v1935
  %2064 = vst [vmem:[%s5 + $0x7d0] sm:$0xff] %v1936
  %2065 = vst [vmem:[%s5 + $0x7d8] sm:$0xff] %v1937
  %2066 = vst [vmem:[%s5 + $0x7f0] sm:$0xff] %v1938
  %2067 = vst [vmem:[%s5 + $0x7f8] sm:$0xff] %v1939
  // Predicated region
  $region22: #{_lambda_.10} parent=0 // pred_check
    _
  $region23: #{_lambda_.10} parent=0 // pred_check_branch
    %2069 = sbr.rel (0) target = $region25
  $region24: #{_lambda_.10} parent=0 // pred_region
    _
  $region25: #{_lambda_.10} parent=0 // pred_fallthru
    _
  // Predicated region
  $region26: #{_lambda_.10} parent=0 // pred_check
    _
  $region27: #{_lambda_.10} parent=0 // pred_check_branch
    %2071 = sbr.rel (0) target = $region29
  $region28: #{_lambda_.10} parent=0 // pred_region
    _
  $region29: #{_lambda_.10} parent=0 // pred_fallthru
    _

// kernel: _lambda_.11
$region0: #{_lambda_.11}
  #allocation0 [shape = 'u32[]', space=smem, size = 0x4, offset = 0x4, fixed_abs, tag = 'smem constant byte address 0x4 - core index']
  #allocation1 [shape = 'u32[144,128]{1,0:T(1,128)}', space=vmem, size = 0x12000, scoped, tag = 'internal scratch']
  #allocation2 [shape = 'f32[256,256]{1,0:T(8,128)}', space=vmem, size = 0x40000, scoped, tag = 'scratch operand']
  %s0 = inlined_call_operand.vmem [shape: bf16[512,512], index: 0, kind: input, shape index: {}]
  %s1 = inlined_call_operand.vmem [shape: bf16[512,256], index: 1, kind: input, shape index: {}]
  %s2 = inlined_call_operand.vmem [shape: f32[1,256], index: 2, kind: input, shape index: {}]
  %s3 = inlined_call_operand.hbm [shape: f32[512,256], index: 3, kind: output, shape index: {}]
  %s4 = sld [smem:[#allocation0]]
  $region53: #{_lambda_.11} parent=0
    _
  %s6 = ssub.s32 1, %s4
  %s7 = scalar_select 0, %s6, %s4
  $region1: #{_lambda_.11} parent=0
    #allocation3 [shape = 'u8[524288]{0}', space=vmem, size = 0x80000, scoped, tag = 'output window, operand 0']
    #allocation4 [shape = 's32[2]{0}', space=sflag, size = 0x8, scoped, tag = 'scoped memory for _lambda_.11']
    %8 = vsyncpa [#allocation4], 0
    %s9 = scalar_lea.sflag [#allocation4], 1
    %10 = vsyncpa %s9, 0
    loop: start=0, step=1, limit=4
    $region2: #{_lambda_.11} parent=1 // loop_pre_header
      _
    $region3: #{_lambda_.11} parent=1 // loop_header
      %s12 = sphi 0, %s16
      %p13 = scmp.ge.s32.totalorder %s12, 4
      %s19 = sphi 0, %s38
      %s20 = sphi 0, %s34
      %s21 = sphi 0, %s30
      %s22 = sphi 0, %s19
      %s23 = sphi 0, %s20
      %s24 = sphi 0, %s21
      %s25 = sphi 0, %s22
      %s26 = sphi 0, %s23
      %s27 = sphi 0, %s24
      %s43 = sphi 0, %s45
      %s46 = sphi 0, %s43
      %s47 = sphi 0, %s46
      %s63 = sphi 0, %s47
      %s71 = sphi 0, %s73
      %s74 = sphi 0, %s71
      %s75 = sphi 0, %s74
      %s91 = sphi 0, %s75
      %s97 = sphi 0, %s99
      %s100 = sphi 0, %s97
      %s101 = sphi 0, %s100
      %s117 = sphi 0, %s101
      %s125 = sphi 0, %s127
      %s128 = sphi 0, %s125
      %s129 = sphi 0, %s128
      %s145 = sphi 0, %s129
    $region4: #{_lambda_.11} parent=1 // loop_header_branch
      %15 = sbr.rel (%p13) target = $region8
    $region5: #{_lambda_.11} parent=1 // loop_body
      %s17 = ssub.s32 %s12, 1
      %s18 = ssub.s32 %s12, 2
      %s28 = sadd.s32 1, %s21
      %p29 = scmp.ge.s32.totalorder %s28, 1
      %s30 = scalar_select %p29, 0, %s28
      %s31 = sadd.s32 1, %s20
      %s32 = scalar_select %p29, %s31, %s20
      %p33 = scmp.ge.s32.totalorder %s32, 1
      %s34 = scalar_select %p33, 0, %s32
      %s35 = sadd.s32 1, %s19
      %s36 = scalar_select %p33, %s35, %s19
      %p37 = scmp.ge.s32.totalorder %s36, 2
      %s38 = scalar_select %p37, 0, %s36
      %s39 = ssub.s32 %s19, %s38
      %s40 = ssub.s32 %s21, %s30
      %s41 = sor.u32 %s39, %s40
      %p42 = scmp.eq.s32.totalorder %s41, 0
      %s44 = sadd.s32 %s43, 1
      %s45 = scalar_select %p42, %s43, %s44
      %p48 = pneg %p42
      %p49 = scmp.eq.s32.totalorder %s12, 1
      %p50 = por %p48, %p49
      %p51 = scmp.ne.s32.totalorder %s43, %s46
      %p52 = scmp.eq.s32.totalorder %s12, 0
      %p53 = por %p51, %p52
      %p54 = scmp.ne.s32.totalorder %s43, %s46
      %p55 = scmp.eq.s32.totalorder %s17, 1
      %p56 = por %p54, %p55
      %p57 = scmp.ne.s32.totalorder %s46, %s47
      %p58 = scmp.eq.s32.totalorder %s17, 0
      %p59 = por %p57, %p58
      %p60 = scmp.ne.s32.totalorder %s46, %s47
      %p61 = scmp.eq.s32.totalorder %s18, 1
      %p62 = por %p60, %p61
      %p64 = scmp.ne.s32.totalorder %s47, %s63
      %p65 = scmp.eq.s32.totalorder %s18, 0
      %p66 = por %p64, %p65
      %s67 = ssub.s32 %s21, %s30
      %s68 = ssub.s32 %s20, %s34
      %s69 = sor.u32 %s67, %s68
      %p70 = scmp.eq.s32.totalorder %s69, 0
      %s72 = sadd.s32 %s71, 1
      %s73 = scalar_select %p70, %s71, %s72
      %p76 = pneg %p70
      %p77 = scmp.eq.s32.totalorder %s12, 1
      %p78 = por %p76, %p77
      %p79 = scmp.ne.s32.totalorder %s71, %s74
      %p80 = scmp.eq.s32.totalorder %s12, 0
      %p81 = por %p79, %p80
      %p82 = scmp.ne.s32.totalorder %s71, %s74
      %p83 = scmp.eq.s32.totalorder %s17, 1
      %p84 = por %p82, %p83
      %p85 = scmp.ne.s32.totalorder %s74, %s75
      %p86 = scmp.eq.s32.totalorder %s17, 0
      %p87 = por %p85, %p86
      %p88 = scmp.ne.s32.totalorder %s74, %s75
      %p89 = scmp.eq.s32.totalorder %s18, 1
      %p90 = por %p88, %p89
      %p92 = scmp.ne.s32.totalorder %s75, %s91
      %p93 = scmp.eq.s32.totalorder %s18, 0
      %p94 = por %p92, %p93
      %s95 = ssub.s32 %s20, %s34
      %p96 = scmp.eq.s32.totalorder %s95, 0
      %s98 = sadd.s32 %s97, 1
      %s99 = scalar_select %p96, %s97, %s98
      %p102 = pneg %p96
      %p103 = scmp.eq.s32.totalorder %s12, 1
      %p104 = por %p102, %p103
      %p105 = scmp.ne.s32.totalorder %s97, %s100
      %p106 = scmp.eq.s32.totalorder %s12, 0
      %p107 = por %p105, %p106
      %p108 = scmp.ne.s32.totalorder %s97, %s100
      %p109 = scmp.eq.s32.totalorder %s17, 1
      %p110 = por %p108, %p109
      %p111 = scmp.ne.s32.totalorder %s100, %s101
      %p112 = scmp.eq.s32.totalorder %s17, 0
      %p113 = por %p111, %p112
      %p114 = scmp.ne.s32.totalorder %s100, %s101
      %p115 = scmp.eq.s32.totalorder %s18, 1
      %p116 = por %p114, %p115
      %p118 = scmp.ne.s32.totalorder %s101, %s117
      %p119 = scmp.eq.s32.totalorder %s18, 0
      %p120 = por %p118, %p119
      %s121 = ssub.s32 %s19, %s38
      %s122 = ssub.s32 %s20, %s34
      %s123 = sor.u32 %s121, %s122
      %p124 = scmp.eq.s32.totalorder %s123, 0
      %s126 = sadd.s32 %s125, 1
      %s127 = scalar_select %p124, %s125, %s126
      %p130 = pneg %p124
      %p131 = scmp.eq.s32.totalorder %s12, 1
      %p132 = por %p130, %p131
      %p133 = scmp.ne.s32.totalorder %s125, %s128
      %p134 = scmp.eq.s32.totalorder %s12, 0
      %p135 = por %p133, %p134
      %p136 = scmp.ne.s32.totalorder %s125, %s128
      %p137 = scmp.eq.s32.totalorder %s17, 1
      %p138 = por %p136, %p137
      %p139 = scmp.ne.s32.totalorder %s128, %s129
      %p140 = scmp.eq.s32.totalorder %s17, 0
      %p141 = por %p139, %p140
      %p142 = scmp.ne.s32.totalorder %s128, %s129
      %p143 = scmp.eq.s32.totalorder %s18, 1
      %p144 = por %p142, %p143
      %p146 = scmp.ne.s32.totalorder %s129, %s145
      %p147 = scmp.eq.s32.totalorder %s18, 0
      %p148 = por %p146, %p147
      %p149 = scmp.le.s32.totalorder 1, %s12
      %p150 = scmp.lt.s32.totalorder %s12, 3
      %p151 = pnand %p149, %p150
      %p152 = pneg %p151
      // Predicated region
      $region9: #{_lambda_.11} parent=5 // pred_check
        _
      $region10: #{_lambda_.11} parent=5 // pred_check_branch
        %154 = sbr.rel (%p151) target = $region12
      $region11: #{_lambda_.11} parent=5 // pred_region
        %s155 = ssub.s32 %s12, 1
        // Predicated region
        $region13: #{_lambda_.11} parent=11 // pred_check
          %p156 = pneg %p87
        $region14: #{_lambda_.11} parent=11 // pred_check_branch
          %158 = sbr.rel (%p156) target = $region16
        $region15: #{_lambda_.11} parent=11 // pred_region
          %s159 = smul.u32 64, %s24
          %s160 = smul.u32 2, %s23
          %p161 = scmp.lt.s32.totalorder %s159, 63
          %s162 = scalar_select %p161, %s159, 63
          %p163 = scmp.lt.s32.totalorder %s160, 1
          %s164 = scalar_select %p163, %s160, 1
          %s165 = smul.addr %s162, 2
          %s166 = sadd.s32 %s164, %s165
          %s167 = smul.addr %s166, 4
          %s168 = scalar_lea.vmem %s1, %s167
          %s169 = smul.u32 64, %s24
          %s170 = smul.u32 2, %s23
        $region16: #{_lambda_.11} parent=11 // pred_fallthru
          _
        // Predicated region
        $region17: #{_lambda_.11} parent=11 // pred_check
          %p171 = pneg %p113
        $region18: #{_lambda_.11} parent=11 // pred_check_branch
          %173 = sbr.rel (%p171) target = $region20
        $region19: #{_lambda_.11} parent=11 // pred_region
          %s174 = smul.u32 2, %s23
          %p175 = scmp.lt.s32.totalorder %s174, 1
          %s176 = scalar_select %p175, %s174, 1
          %s177 = scalar_lea.vmem %s2, %s176
          %s178 = smul.u32 2, %s23
        $region20: #{_lambda_.11} parent=11 // pred_fallthru
          _
      $region12: #{_lambda_.11} parent=5 // pred_fallthru
        _
      %p179 = scmp.lt.s32.totalorder %s12, 2
      // Predicated region
      $region21: #{_lambda_.11} parent=5 // pred_check
        %p180 = pneg %p179
      $region22: #{_lambda_.11} parent=5 // pred_check_branch
        %182 = sbr.rel (%p180) target = $region24
      $region23: #{_lambda_.11} parent=5 // pred_region
        // Predicated region
        $region25: #{_lambda_.11} parent=23 // pred_check
          %p183 = pneg %p53
        $region26: #{_lambda_.11} parent=23 // pred_check_branch
          %185 = sbr.rel (%p183) target = $region28
        $region27: #{_lambda_.11} parent=23 // pred_region
          %s186 = smul.u32 32, %s19
          %s187 = smul.u32 4, %s21
          %p188 = scmp.lt.s32.totalorder %s186, 63
          %s189 = scalar_select %p188, %s186, 63
          %p190 = scmp.lt.s32.totalorder %s187, 3
          %s191 = scalar_select %p190, %s187, 3
          %s192 = smul.addr %s189, 4
          %s193 = sadd.s32 %s191, %s192
          %s194 = smul.addr %s193, 4
          %s195 = scalar_lea.vmem %s0, %s194
          %s196 = smul.u32 32, %s19
          %s197 = smul.u32 4, %s21
        $region28: #{_lambda_.11} parent=23 // pred_fallthru
          _
      $region24: #{_lambda_.11} parent=5 // pred_fallthru
        _
      %p198 = scmp.le.s32.totalorder 1, %s12
      %p199 = scmp.lt.s32.totalorder %s12, 3
      %p200 = pnand %p198, %p199
      %p201 = pneg %p200
      // Predicated region
      $region29: #{_lambda_.11} parent=5 // pred_check
        _
      $region30: #{_lambda_.11} parent=5 // pred_check_branch
        %203 = sbr.rel (%p200) target = $region32
      $region31: #{_lambda_.11} parent=5 // pred_region
        %s204 = ssub.s32 %s12, 1
        %s205 = smul.u32 32, %s22
        %s206 = smul.u32 4, %s24
        %p207 = scmp.lt.s32.totalorder %s205, 63
        %s208 = scalar_select %p207, %s205, 63
        %p209 = scmp.lt.s32.totalorder %s206, 3
        %s210 = scalar_select %p209, %s206, 3
        %s211 = smul.addr %s208, 4
        %s212 = sadd.s32 %s210, %s211
        %s213 = smul.addr %s212, 4
        %s214 = scalar_lea.vmem %s0, %s213
        %p215 = pneg %p59
        %p216 = pneg %p56
        %s217 = smul.u32 64, %s24
        %s218 = smul.u32 2, %s23
        %p219 = scmp.lt.s32.totalorder %s217, 63
        %s220 = scalar_select %p219, %s217, 63
        %p221 = scmp.lt.s32.totalorder %s218, 1
        %s222 = scalar_select %p221, %s218, 1
        %s223 = smul.addr %s220, 2
        %s224 = sadd.s32 %s222, %s223
        %s225 = smul.addr %s224, 4
        %s226 = scalar_lea.vmem %s1, %s225
        %p227 = pneg %p87
        %p228 = pneg %p84
        %s229 = smul.u32 2, %s23
        %p230 = scmp.lt.s32.totalorder %s229, 1
        %s231 = scalar_select %p230, %s229, 1
        %s232 = scalar_lea.vmem %s2, %s231
        %p233 = pneg %p113
        %p234 = pneg %p110
        %p235 = pneg %p141
        %p236 = pneg %p138
        %s237 = sand.u32 %s128, 1
        %s238 = scalar_lea.sflag [#allocation4], %s237
        %s239 = sand.u32 %s128, 1
        %s240 = smul.addr %s239, 512
        %s241 = scalar_lea.vmem [#allocation3], %s240
        %s242 = smul.u32 32, %s22
        %s243 = smul.u32 4, %s24
        %p244 = scmp.lt.s32.totalorder %s242, 63
        %s245 = scalar_select %p244, %s242, 63
        %p246 = scmp.lt.s32.totalorder %s243, 3
        %s247 = scalar_select %p246, %s243, 3
        %s248 = smul.addr %s245, 4
        %s249 = sadd.s32 %s247, %s248
        %s250 = smul.addr %s249, 4
        %s251 = scalar_lea.vmem %s0, %s250
        %s252 = smul.u32 32, %s22
        %s253 = smul.u32 4, %s24
        %s254 = smul.u32 64, %s24
        %s255 = smul.u32 2, %s23
        %p256 = scmp.lt.s32.totalorder %s254, 63
        %s257 = scalar_select %p256, %s254, 63
        %p258 = scmp.lt.s32.totalorder %s255, 1
        %s259 = scalar_select %p258, %s255, 1
        %s260 = smul.addr %s257, 2
        %s261 = sadd.s32 %s259, %s260
        %s262 = smul.addr %s261, 4
        %s263 = scalar_lea.vmem %s1, %s262
        %s264 = smul.u32 64, %s24
        %s265 = smul.u32 2, %s23
        %s266 = smul.u32 2, %s23
        %p267 = scmp.lt.s32.totalorder %s266, 1
        %s268 = scalar_select %p267, %s266, 1
        %s269 = scalar_lea.vmem %s2, %s268
        %s270 = smul.u32 2, %s23
        %s271 = smul.u32 32, %s22
        %s272 = smul.u32 2, %s23
        %p273 = scmp.eq.s32.totalorder %s24, 0
        // Predicated region
        $region33: #{_lambda_.11} parent=31 // pred_check
          %p274 = pneg %p273
        $region34: #{_lambda_.11} parent=31 // pred_check_branch
          %276 = sbr.rel (%p274) target = $region36
        $region35: #{_lambda_.11} parent=31 // pred_region
          %277 = vst [vmem:[#allocation2] sm:$0xff] 0.0
          %278 = vst [vmem:[#allocation2 + $0x8] sm:$0xff] 0.0
          %279 = vst [vmem:[#allocation2 + $0x10] sm:$0xff] 0.0
          %280 = vst [vmem:[#allocation2 + $0x18] sm:$0xff] 0.0
          %281 = vst [vmem:[#allocation2 + $0x20] sm:$0xff] 0.0
          %282 = vst [vmem:[#allocation2 + $0x28] sm:$0xff] 0.0
          %283 = vst [vmem:[#allocation2 + $0x30] sm:$0xff] 0.0
          %284 = vst [vmem:[#allocation2 + $0x38] sm:$0xff] 0.0
          %285 = vst [vmem:[#allocation2 + $0x40] sm:$0xff] 0.0
          %286 = vst [vmem:[#allocation2 + $0x48] sm:$0xff] 0.0
          %287 = vst [vmem:[#allocation2 + $0x50] sm:$0xff] 0.0
          %288 = vst [vmem:[#allocation2 + $0x58] sm:$0xff] 0.0
          %289 = vst [vmem:[#allocation2 + $0x60] sm:$0xff] 0.0
          %290 = vst [vmem:[#allocation2 + $0x68] sm:$0xff] 0.0
          %291 = vst [vmem:[#allocation2 + $0x70] sm:$0xff] 0.0
          %292 = vst [vmem:[#allocation2 + $0x78] sm:$0xff] 0.0
          %293 = vst [vmem:[#allocation2 + $0x80] sm:$0xff] 0.0
          %294 = vst [vmem:[#allocation2 + $0x88] sm:$0xff] 0.0
          %295 = vst [vmem:[#allocation2 + $0x90] sm:$0xff] 0.0
          %296 = vst [vmem:[#allocation2 + $0x98] sm:$0xff] 0.0
          %297 = vst [vmem:[#allocation2 + $0xa0] sm:$0xff] 0.0
          %298 = vst [vmem:[#allocation2 + $0xa8] sm:$0xff] 0.0
          %299 = vst [vmem:[#allocation2 + $0xb0] sm:$0xff] 0.0
          %300 = vst [vmem:[#allocation2 + $0xb8] sm:$0xff] 0.0
          %301 = vst [vmem:[#allocation2 + $0xc0] sm:$0xff] 0.0
          %302 = vst [vmem:[#allocation2 + $0xc8] sm:$0xff] 0.0
          %303 = vst [vmem:[#allocation2 + $0xd0] sm:$0xff] 0.0
          %304 = vst [vmem:[#allocation2 + $0xd8] sm:$0xff] 0.0
          %305 = vst [vmem:[#allocation2 + $0xe0] sm:$0xff] 0.0
          %306 = vst [vmem:[#allocation2 + $0xe8] sm:$0xff] 0.0
          %307 = vst [vmem:[#allocation2 + $0xf0] sm:$0xff] 0.0
          %308 = vst [vmem:[#allocation2 + $0xf8] sm:$0xff] 0.0
          %309 = vst [vmem:[#allocation2 + $0x100] sm:$0xff] 0.0
          %310 = vst [vmem:[#allocation2 + $0x108] sm:$0xff] 0.0
          %311 = vst [vmem:[#allocation2 + $0x110] sm:$0xff] 0.0
          %312 = vst [vmem:[#allocation2 + $0x118] sm:$0xff] 0.0
          %313 = vst [vmem:[#allocation2 + $0x120] sm:$0xff] 0.0
          %314 = vst [vmem:[#allocation2 + $0x128] sm:$0xff] 0.0
          %315 = vst [vmem:[#allocation2 + $0x130] sm:$0xff] 0.0
          %316 = vst [vmem:[#allocation2 + $0x138] sm:$0xff] 0.0
          %317 = vst [vmem:[#allocation2 + $0x140] sm:$0xff] 0.0
          %318 = vst [vmem:[#allocation2 + $0x148] sm:$0xff] 0.0
          %319 = vst [vmem:[#allocation2 + $0x150] sm:$0xff] 0.0
          %320 = vst [vmem:[#allocation2 + $0x158] sm:$0xff] 0.0
          %321 = vst [vmem:[#allocation2 + $0x160] sm:$0xff] 0.0
          %322 = vst [vmem:[#allocation2 + $0x168] sm:$0xff] 0.0
          %323 = vst [vmem:[#allocation2 + $0x170] sm:$0xff] 0.0
          %324 = vst [vmem:[#allocation2 + $0x178] sm:$0xff] 0.0
          %325 = vst [vmem:[#allocation2 + $0x180] sm:$0xff] 0.0
          %326 = vst [vmem:[#allocation2 + $0x188] sm:$0xff] 0.0
          %327 = vst [vmem:[#allocation2 + $0x190] sm:$0xff] 0.0
          %328 = vst [vmem:[#allocation2 + $0x198] sm:$0xff] 0.0
          %329 = vst [vmem:[#allocation2 + $0x1a0] sm:$0xff] 0.0
          %330 = vst [vmem:[#allocation2 + $0x1a8] sm:$0xff] 0.0
          %331 = vst [vmem:[#allocation2 + $0x1b0] sm:$0xff] 0.0
          %332 = vst [vmem:[#allocation2 + $0x1b8] sm:$0xff] 0.0
          %333 = vst [vmem:[#allocation2 + $0x1c0] sm:$0xff] 0.0
          %334 = vst [vmem:[#allocation2 + $0x1c8] sm:$0xff] 0.0
          %335 = vst [vmem:[#allocation2 + $0x1d0] sm:$0xff] 0.0
          %336 = vst [vmem:[#allocation2 + $0x1d8] sm:$0xff] 0.0
          %337 = vst [vmem:[#allocation2 + $0x1e0] sm:$0xff] 0.0
          %338 = vst [vmem:[#allocation2 + $0x1e8] sm:$0xff] 0.0
          %339 = vst [vmem:[#allocation2 + $0x1f0] sm:$0xff] 0.0
          %340 = vst [vmem:[#allocation2 + $0x1f8] sm:$0xff] 0.0
        $region36: #{_lambda_.11} parent=31 // pred_fallthru
          _
        %v341 = vld [vmem:[#allocation2] sm:$0xff]
        %v342 = vld [vmem:[#allocation2 + $0x8] sm:$0xff]
        %v343 = vld [vmem:[#allocation2 + $0x10] sm:$0xff]
        %v344 = vld [vmem:[#allocation2 + $0x18] sm:$0xff]
        %v345 = vld [vmem:[#allocation2 + $0x20] sm:$0xff]
        %v346 = vld [vmem:[#allocation2 + $0x28] sm:$0xff]
        %v347 = vld [vmem:[#allocation2 + $0x30] sm:$0xff]
        %v348 = vld [vmem:[#allocation2 + $0x38] sm:$0xff]
        %v349 = vld [vmem:[#allocation2 + $0x40] sm:$0xff]
        %v350 = vld [vmem:[#allocation2 + $0x48] sm:$0xff]
        %v351 = vld [vmem:[#allocation2 + $0x50] sm:$0xff]
        %v352 = vld [vmem:[#allocation2 + $0x58] sm:$0xff]
        %v353 = vld [vmem:[#allocation2 + $0x60] sm:$0xff]
        %v354 = vld [vmem:[#allocation2 + $0x68] sm:$0xff]
        %v355 = vld [vmem:[#allocation2 + $0x70] sm:$0xff]
        %v356 = vld [vmem:[#allocation2 + $0x78] sm:$0xff]
        %v357 = vld [vmem:[#allocation2 + $0x80] sm:$0xff]
        %v358 = vld [vmem:[#allocation2 + $0x88] sm:$0xff]
        %v359 = vld [vmem:[#allocation2 + $0x90] sm:$0xff]
        %v360 = vld [vmem:[#allocation2 + $0x98] sm:$0xff]
        %v361 = vld [vmem:[#allocation2 + $0xa0] sm:$0xff]
        %v362 = vld [vmem:[#allocation2 + $0xa8] sm:$0xff]
        %v363 = vld [vmem:[#allocation2 + $0xb0] sm:$0xff]
        %v364 = vld [vmem:[#allocation2 + $0xb8] sm:$0xff]
        %v365 = vld [vmem:[#allocation2 + $0xc0] sm:$0xff]
        %v366 = vld [vmem:[#allocation2 + $0xc8] sm:$0xff]
        %v367 = vld [vmem:[#allocation2 + $0xd0] sm:$0xff]
        %v368 = vld [vmem:[#allocation2 + $0xd8] sm:$0xff]
        %v369 = vld [vmem:[#allocation2 + $0xe0] sm:$0xff]
        %v370 = vld [vmem:[#allocation2 + $0xe8] sm:$0xff]
        %v371 = vld [vmem:[#allocation2 + $0xf0] sm:$0xff]
        %v372 = vld [vmem:[#allocation2 + $0xf8] sm:$0xff]
        %v373 = vld [vmem:[#allocation2 + $0x100] sm:$0xff]
        %v374 = vld [vmem:[#allocation2 + $0x108] sm:$0xff]
        %v375 = vld [vmem:[#allocation2 + $0x110] sm:$0xff]
        %v376 = vld [vmem:[#allocation2 + $0x118] sm:$0xff]
        %v377 = vld [vmem:[#allocation2 + $0x120] sm:$0xff]
        %v378 = vld [vmem:[#allocation2 + $0x128] sm:$0xff]
        %v379 = vld [vmem:[#allocation2 + $0x130] sm:$0xff]
        %v380 = vld [vmem:[#allocation2 + $0x138] sm:$0xff]
        %v381 = vld [vmem:[#allocation2 + $0x140] sm:$0xff]
        %v382 = vld [vmem:[#allocation2 + $0x148] sm:$0xff]
        %v383 = vld [vmem:[#allocation2 + $0x150] sm:$0xff]
        %v384 = vld [vmem:[#allocation2 + $0x158] sm:$0xff]
        %v385 = vld [vmem:[#allocation2 + $0x160] sm:$0xff]
        %v386 = vld [vmem:[#allocation2 + $0x168] sm:$0xff]
        %v387 = vld [vmem:[#allocation2 + $0x170] sm:$0xff]
        %v388 = vld [vmem:[#allocation2 + $0x178] sm:$0xff]
        %v389 = vld [vmem:[#allocation2 + $0x180] sm:$0xff]
        %v390 = vld [vmem:[#allocation2 + $0x188] sm:$0xff]
        %v391 = vld [vmem:[#allocation2 + $0x190] sm:$0xff]
        %v392 = vld [vmem:[#allocation2 + $0x198] sm:$0xff]
        %v393 = vld [vmem:[#allocation2 + $0x1a0] sm:$0xff]
        %v394 = vld [vmem:[#allocation2 + $0x1a8] sm:$0xff]
        %v395 = vld [vmem:[#allocation2 + $0x1b0] sm:$0xff]
        %v396 = vld [vmem:[#allocation2 + $0x1b8] sm:$0xff]
        %v397 = vld [vmem:[#allocation2 + $0x1c0] sm:$0xff]
        %v398 = vld [vmem:[#allocation2 + $0x1c8] sm:$0xff]
        %v399 = vld [vmem:[#allocation2 + $0x1d0] sm:$0xff]
        %v400 = vld [vmem:[#allocation2 + $0x1d8] sm:$0xff]
        %v401 = vld [vmem:[#allocation2 + $0x1e0] sm:$0xff]
        %v402 = vld [vmem:[#allocation2 + $0x1e8] sm:$0xff]
        %v403 = vld [vmem:[#allocation2 + $0x1f0] sm:$0xff]
        %v404 = vld [vmem:[#allocation2 + $0x1f8] sm:$0xff]
        %v405 = vld [vmem:[%s251] sm:$0xff]
        %v406 = vld [vmem:[%s251 + $0x8] sm:$0xff]
        %v407 = vld [vmem:[%s251 + $0x10] sm:$0xff]
        %v408 = vld [vmem:[%s251 + $0x18] sm:$0xff]
        %v409 = vld [vmem:[%s251 + $0x20] sm:$0xff]
        %v410 = vld [vmem:[%s251 + $0x28] sm:$0xff]
        %v411 = vld [vmem:[%s251 + $0x30] sm:$0xff]
        %v412 = vld [vmem:[%s251 + $0x38] sm:$0xff]
        %v413 = vld [vmem:[%s251 + $0x40] sm:$0xff]
        %v414 = vld [vmem:[%s251 + $0x48] sm:$0xff]
        %v415 = vld [vmem:[%s251 + $0x50] sm:$0xff]
        %v416 = vld [vmem:[%s251 + $0x58] sm:$0xff]
        %v417 = vld [vmem:[%s251 + $0x60] sm:$0xff]
        %v418 = vld [vmem:[%s251 + $0x68] sm:$0xff]
        %v419 = vld [vmem:[%s251 + $0x70] sm:$0xff]
        %v420 = vld [vmem:[%s251 + $0x78] sm:$0xff]
        %v421 = vld [vmem:[%s251 + $0x80] sm:$0xff]
        %v422 = vld [vmem:[%s251 + $0x88] sm:$0xff]
        %v423 = vld [vmem:[%s251 + $0x90] sm:$0xff]
        %v424 = vld [vmem:[%s251 + $0x98] sm:$0xff]
        %v425 = vld [vmem:[%s251 + $0xa0] sm:$0xff]
        %v426 = vld [vmem:[%s251 + $0xa8] sm:$0xff]
        %v427 = vld [vmem:[%s251 + $0xb0] sm:$0xff]
        %v428 = vld [vmem:[%s251 + $0xb8] sm:$0xff]
        %v429 = vld [vmem:[%s251 + $0xc0] sm:$0xff]
        %v430 = vld [vmem:[%s251 + $0xc8] sm:$0xff]
        %v431 = vld [vmem:[%s251 + $0xd0] sm:$0xff]
        %v432 = vld [vmem:[%s251 + $0xd8] sm:$0xff]
        %v433 = vld [vmem:[%s251 + $0xe0] sm:$0xff]
        %v434 = vld [vmem:[%s251 + $0xe8] sm:$0xff]
        %v435 = vld [vmem:[%s251 + $0xf0] sm:$0xff]
        %v436 = vld [vmem:[%s251 + $0xf8] sm:$0xff]
        %v437 = vld [vmem:[%s251 + $0x100] sm:$0xff]
        %v438 = vld [vmem:[%s251 + $0x108] sm:$0xff]
        %v439 = vld [vmem:[%s251 + $0x110] sm:$0xff]
        %v440 = vld [vmem:[%s251 + $0x118] sm:$0xff]
        %v441 = vld [vmem:[%s251 + $0x120] sm:$0xff]
        %v442 = vld [vmem:[%s251 + $0x128] sm:$0xff]
        %v443 = vld [vmem:[%s251 + $0x130] sm:$0xff]
        %v444 = vld [vmem:[%s251 + $0x138] sm:$0xff]
        %v445 = vld [vmem:[%s251 + $0x140] sm:$0xff]
        %v446 = vld [vmem:[%s251 + $0x148] sm:$0xff]
        %v447 = vld [vmem:[%s251 + $0x150] sm:$0xff]
        %v448 = vld [vmem:[%s251 + $0x158] sm:$0xff]
        %v449 = vld [vmem:[%s251 + $0x160] sm:$0xff]
        %v450 = vld [vmem:[%s251 + $0x168] sm:$0xff]
        %v451 = vld [vmem:[%s251 + $0x170] sm:$0xff]
        %v452 = vld [vmem:[%s251 + $0x178] sm:$0xff]
        %v453 = vld [vmem:[%s251 + $0x180] sm:$0xff]
        %v454 = vld [vmem:[%s251 + $0x188] sm:$0xff]
        %v455 = vld [vmem:[%s251 + $0x190] sm:$0xff]
        %v456 = vld [vmem:[%s251 + $0x198] sm:$0xff]
        %v457 = vld [vmem:[%s251 + $0x1a0] sm:$0xff]
        %v458 = vld [vmem:[%s251 + $0x1a8] sm:$0xff]
        %v459 = vld [vmem:[%s251 + $0x1b0] sm:$0xff]
        %v460 = vld [vmem:[%s251 + $0x1b8] sm:$0xff]
        %v461 = vld [vmem:[%s251 + $0x1c0] sm:$0xff]
        %v462 = vld [vmem:[%s251 + $0x1c8] sm:$0xff]
        %v463 = vld [vmem:[%s251 + $0x1d0] sm:$0xff]
        %v464 = vld [vmem:[%s251 + $0x1d8] sm:$0xff]
        %v465 = vld [vmem:[%s251 + $0x1e0] sm:$0xff]
        %v466 = vld [vmem:[%s251 + $0x1e8] sm:$0xff]
        %v467 = vld [vmem:[%s251 + $0x1f0] sm:$0xff]
        %v468 = vld [vmem:[%s251 + $0x1f8] sm:$0xff]
        %v469 = vld [vmem:[%s263] sm:$0xff]
        %v470 = vld [vmem:[%s263 + $0x8] sm:$0xff]
        %v471 = vld [vmem:[%s263 + $0x10] sm:$0xff]
        %v472 = vld [vmem:[%s263 + $0x18] sm:$0xff]
        %v473 = vld [vmem:[%s263 + $0x20] sm:$0xff]
        %v474 = vld [vmem:[%s263 + $0x28] sm:$0xff]
        %v475 = vld [vmem:[%s263 + $0x30] sm:$0xff]
        %v476 = vld [vmem:[%s263 + $0x38] sm:$0xff]
        %v477 = vld [vmem:[%s263 + $0x40] sm:$0xff]
        %v478 = vld [vmem:[%s263 + $0x48] sm:$0xff]
        %v479 = vld [vmem:[%s263 + $0x50] sm:$0xff]
        %v480 = vld [vmem:[%s263 + $0x58] sm:$0xff]
        %v481 = vld [vmem:[%s263 + $0x60] sm:$0xff]
        %v482 = vld [vmem:[%s263 + $0x68] sm:$0xff]
        %v483 = vld [vmem:[%s263 + $0x70] sm:$0xff]
        %v484 = vld [vmem:[%s263 + $0x78] sm:$0xff]
        %v485 = vld [vmem:[%s263 + $0x80] sm:$0xff]
        %v486 = vld [vmem:[%s263 + $0x88] sm:$0xff]
        %v487 = vld [vmem:[%s263 + $0x90] sm:$0xff]
        %v488 = vld [vmem:[%s263 + $0x98] sm:$0xff]
        %v489 = vld [vmem:[%s263 + $0xa0] sm:$0xff]
        %v490 = vld [vmem:[%s263 + $0xa8] sm:$0xff]
        %v491 = vld [vmem:[%s263 + $0xb0] sm:$0xff]
        %v492 = vld [vmem:[%s263 + $0xb8] sm:$0xff]
        %v493 = vld [vmem:[%s263 + $0xc0] sm:$0xff]
        %v494 = vld [vmem:[%s263 + $0xc8] sm:$0xff]
        %v495 = vld [vmem:[%s263 + $0xd0] sm:$0xff]
        %v496 = vld [vmem:[%s263 + $0xd8] sm:$0xff]
        %v497 = vld [vmem:[%s263 + $0xe0] sm:$0xff]
        %v498 = vld [vmem:[%s263 + $0xe8] sm:$0xff]
        %v499 = vld [vmem:[%s263 + $0xf0] sm:$0xff]
        %v500 = vld [vmem:[%s263 + $0xf8] sm:$0xff]
        %v501 = vld [vmem:[%s263 + $0x100] sm:$0xff]
        %v502 = vld [vmem:[%s263 + $0x108] sm:$0xff]
        %v503 = vld [vmem:[%s263 + $0x110] sm:$0xff]
        %v504 = vld [vmem:[%s263 + $0x118] sm:$0xff]
        %v505 = vld [vmem:[%s263 + $0x120] sm:$0xff]
        %v506 = vld [vmem:[%s263 + $0x128] sm:$0xff]
        %v507 = vld [vmem:[%s263 + $0x130] sm:$0xff]
        %v508 = vld [vmem:[%s263 + $0x138] sm:$0xff]
        %v509 = vld [vmem:[%s263 + $0x140] sm:$0xff]
        %v510 = vld [vmem:[%s263 + $0x148] sm:$0xff]
        %v511 = vld [vmem:[%s263 + $0x150] sm:$0xff]
        %v512 = vld [vmem:[%s263 + $0x158] sm:$0xff]
        %v513 = vld [vmem:[%s263 + $0x160] sm:$0xff]
        %v514 = vld [vmem:[%s263 + $0x168] sm:$0xff]
        %v515 = vld [vmem:[%s263 + $0x170] sm:$0xff]
        %v516 = vld [vmem:[%s263 + $0x178] sm:$0xff]
        %v517 = vld [vmem:[%s263 + $0x180] sm:$0xff]
        %v518 = vld [vmem:[%s263 + $0x188] sm:$0xff]
        %v519 = vld [vmem:[%s263 + $0x190] sm:$0xff]
        %v520 = vld [vmem:[%s263 + $0x198] sm:$0xff]
        %v521 = vld [vmem:[%s263 + $0x1a0] sm:$0xff]
        %v522 = vld [vmem:[%s263 + $0x1a8] sm:$0xff]
        %v523 = vld [vmem:[%s263 + $0x1b0] sm:$0xff]
        %v524 = vld [vmem:[%s263 + $0x1b8] sm:$0xff]
        %v525 = vld [vmem:[%s263 + $0x1c0] sm:$0xff]
        %v526 = vld [vmem:[%s263 + $0x1c8] sm:$0xff]
        %v527 = vld [vmem:[%s263 + $0x1d0] sm:$0xff]
        %v528 = vld [vmem:[%s263 + $0x1d8] sm:$0xff]
        %v529 = vld [vmem:[%s263 + $0x1e0] sm:$0xff]
        %v530 = vld [vmem:[%s263 + $0x1e8] sm:$0xff]
        %v531 = vld [vmem:[%s263 + $0x1f0] sm:$0xff]
        %v532 = vld [vmem:[%s263 + $0x1f8] sm:$0xff]
        %v597 = vunpack.c.l.b16 %v405
        %v598 = vunpack.c.h.b16 %v405
        %v599 = vunpack.c.l.b16 %v406
        %v600 = vunpack.c.h.b16 %v406
        %v601 = vunpack.c.l.b16 %v407
        %v602 = vunpack.c.h.b16 %v407
        %v603 = vunpack.c.l.b16 %v408
        %v604 = vunpack.c.h.b16 %v408
        %v605 = vunpack.c.l.b16 %v409
        %v606 = vunpack.c.h.b16 %v409
        %v607 = vunpack.c.l.b16 %v410
        %v608 = vunpack.c.h.b16 %v410
        %v609 = vunpack.c.l.b16 %v411
        %v610 = vunpack.c.h.b16 %v411
        %v611 = vunpack.c.l.b16 %v412
        %v612 = vunpack.c.h.b16 %v412
        %v613 = vunpack.c.l.b16 %v413
        %v614 = vunpack.c.h.b16 %v413
        %v615 = vunpack.c.l.b16 %v414
        %v616 = vunpack.c.h.b16 %v414
        %v617 = vunpack.c.l.b16 %v415
        %v618 = vunpack.c.h.b16 %v415
        %v619 = vunpack.c.l.b16 %v416
        %v620 = vunpack.c.h.b16 %v416
        %v621 = vunpack.c.l.b16 %v417
        %v622 = vunpack.c.h.b16 %v417
        %v623 = vunpack.c.l.b16 %v418
        %v624 = vunpack.c.h.b16 %v418
        %v625 = vunpack.c.l.b16 %v419
        %v626 = vunpack.c.h.b16 %v419
        %v627 = vunpack.c.l.b16 %v420
        %v628 = vunpack.c.h.b16 %v420
        %v629 = vunpack.c.l.b16 %v421
        %v630 = vunpack.c.h.b16 %v421
        %v631 = vunpack.c.l.b16 %v422
        %v632 = vunpack.c.h.b16 %v422
        %v633 = vunpack.c.l.b16 %v423
        %v634 = vunpack.c.h.b16 %v423
        %v635 = vunpack.c.l.b16 %v424
        %v636 = vunpack.c.h.b16 %v424
        %v637 = vunpack.c.l.b16 %v425
        %v638 = vunpack.c.h.b16 %v425
        %v639 = vunpack.c.l.b16 %v426
        %v640 = vunpack.c.h.b16 %v426
        %v641 = vunpack.c.l.b16 %v427
        %v642 = vunpack.c.h.b16 %v427
        %v643 = vunpack.c.l.b16 %v428
        %v644 = vunpack.c.h.b16 %v428
        %v645 = vunpack.c.l.b16 %v429
        %v646 = vunpack.c.h.b16 %v429
        %v647 = vunpack.c.l.b16 %v430
        %v648 = vunpack.c.h.b16 %v430
        %v649 = vunpack.c.l.b16 %v431
        %v650 = vunpack.c.h.b16 %v431
        %v651 = vunpack.c.l.b16 %v432
        %v652 = vunpack.c.h.b16 %v432
        %v653 = vunpack.c.l.b16 %v433
        %v654 = vunpack.c.h.b16 %v433
        %v655 = vunpack.c.l.b16 %v434
        %v656 = vunpack.c.h.b16 %v434
        %v657 = vunpack.c.l.b16 %v435
        %v658 = vunpack.c.h.b16 %v435
        %v659 = vunpack.c.l.b16 %v436
        %v660 = vunpack.c.h.b16 %v436
        %v661 = vunpack.c.l.b16 %v437
        %v662 = vunpack.c.h.b16 %v437
        %v663 = vunpack.c.l.b16 %v438
        %v664 = vunpack.c.h.b16 %v438
        %v665 = vunpack.c.l.b16 %v439
        %v666 = vunpack.c.h.b16 %v439
        %v667 = vunpack.c.l.b16 %v440
        %v668 = vunpack.c.h.b16 %v440
        %v669 = vunpack.c.l.b16 %v441
        %v670 = vunpack.c.h.b16 %v441
        %v671 = vunpack.c.l.b16 %v442
        %v672 = vunpack.c.h.b16 %v442
        %v673 = vunpack.c.l.b16 %v443
        %v674 = vunpack.c.h.b16 %v443
        %v675 = vunpack.c.l.b16 %v444
        %v676 = vunpack.c.h.b16 %v444
        %v677 = vunpack.c.l.b16 %v445
        %v678 = vunpack.c.h.b16 %v445
        %v679 = vunpack.c.l.b16 %v446
        %v680 = vunpack.c.h.b16 %v446
        %v681 = vunpack.c.l.b16 %v447
        %v682 = vunpack.c.h.b16 %v447
        %v683 = vunpack.c.l.b16 %v448
        %v684 = vunpack.c.h.b16 %v448
        %v685 = vunpack.c.l.b16 %v449
        %v686 = vunpack.c.h.b16 %v449
        %v687 = vunpack.c.l.b16 %v450
        %v688 = vunpack.c.h.b16 %v450
        %v689 = vunpack.c.l.b16 %v451
        %v690 = vunpack.c.h.b16 %v451
        %v691 = vunpack.c.l.b16 %v452
        %v692 = vunpack.c.h.b16 %v452
        %v693 = vunpack.c.l.b16 %v453
        %v694 = vunpack.c.h.b16 %v453
        %v695 = vunpack.c.l.b16 %v454
        %v696 = vunpack.c.h.b16 %v454
        %v697 = vunpack.c.l.b16 %v455
        %v698 = vunpack.c.h.b16 %v455
        %v699 = vunpack.c.l.b16 %v456
        %v700 = vunpack.c.h.b16 %v456
        %v701 = vunpack.c.l.b16 %v457
        %v702 = vunpack.c.h.b16 %v457
        %v703 = vunpack.c.l.b16 %v458
        %v704 = vunpack.c.h.b16 %v458
        %v705 = vunpack.c.l.b16 %v459
        %v706 = vunpack.c.h.b16 %v459
        %v707 = vunpack.c.l.b16 %v460
        %v708 = vunpack.c.h.b16 %v460
        %v709 = vunpack.c.l.b16 %v461
        %v710 = vunpack.c.h.b16 %v461
        %v711 = vunpack.c.l.b16 %v462
        %v712 = vunpack.c.h.b16 %v462
        %v713 = vunpack.c.l.b16 %v463
        %v714 = vunpack.c.h.b16 %v463
        %v715 = vunpack.c.l.b16 %v464
        %v716 = vunpack.c.h.b16 %v464
        %v717 = vunpack.c.l.b16 %v465
        %v718 = vunpack.c.h.b16 %v465
        %v719 = vunpack.c.l.b16 %v466
        %v720 = vunpack.c.h.b16 %v466
        %v721 = vunpack.c.l.b16 %v467
        %v722 = vunpack.c.h.b16 %v467
        %v723 = vunpack.c.l.b16 %v468
        %v724 = vunpack.c.h.b16 %v468
        %v725 = vpack.c.b16 %v601, %v597
        %v726 = vpack.c.b16 %v602, %v598
        %v727 = vpack.c.b16 %v603, %v599
        %v728 = vpack.c.b16 %v604, %v600
        %v729 = vpack.c.b16 %v609, %v605
        %v730 = vpack.c.b16 %v610, %v606
        %v731 = vpack.c.b16 %v611, %v607
        %v732 = vpack.c.b16 %v612, %v608
        %v733 = vpack.c.b16 %v617, %v613
        %v734 = vpack.c.b16 %v618, %v614
        %v735 = vpack.c.b16 %v619, %v615
        %v736 = vpack.c.b16 %v620, %v616
        %v737 = vpack.c.b16 %v625, %v621
        %v738 = vpack.c.b16 %v626, %v622
        %v739 = vpack.c.b16 %v627, %v623
        %v740 = vpack.c.b16 %v628, %v624
        %v741 = vpack.c.b16 %v633, %v629
        %v742 = vpack.c.b16 %v634, %v630
        %v743 = vpack.c.b16 %v635, %v631
        %v744 = vpack.c.b16 %v636, %v632
        %v745 = vpack.c.b16 %v641, %v637
        %v746 = vpack.c.b16 %v642, %v638
        %v747 = vpack.c.b16 %v643, %v639
        %v748 = vpack.c.b16 %v644, %v640
        %v749 = vpack.c.b16 %v649, %v645
        %v750 = vpack.c.b16 %v650, %v646
        %v751 = vpack.c.b16 %v651, %v647
        %v752 = vpack.c.b16 %v652, %v648
        %v753 = vpack.c.b16 %v657, %v653
        %v754 = vpack.c.b16 %v658, %v654
        %v755 = vpack.c.b16 %v659, %v655
        %v756 = vpack.c.b16 %v660, %v656
        %v757 = vpack.c.b16 %v665, %v661
        %v758 = vpack.c.b16 %v666, %v662
        %v759 = vpack.c.b16 %v667, %v663
        %v760 = vpack.c.b16 %v668, %v664
        %v761 = vpack.c.b16 %v673, %v669
        %v762 = vpack.c.b16 %v674, %v670
        %v763 = vpack.c.b16 %v675, %v671
        %v764 = vpack.c.b16 %v676, %v672
        %v765 = vpack.c.b16 %v681, %v677
        %v766 = vpack.c.b16 %v682, %v678
        %v767 = vpack.c.b16 %v683, %v679
        %v768 = vpack.c.b16 %v684, %v680
        %v769 = vpack.c.b16 %v689, %v685
        %v770 = vpack.c.b16 %v690, %v686
        %v771 = vpack.c.b16 %v691, %v687
        %v772 = vpack.c.b16 %v692, %v688
        %v773 = vpack.c.b16 %v697, %v693
        %v774 = vpack.c.b16 %v698, %v694
        %v775 = vpack.c.b16 %v699, %v695
        %v776 = vpack.c.b16 %v700, %v696
        %v777 = vpack.c.b16 %v705, %v701
        %v778 = vpack.c.b16 %v706, %v702
        %v779 = vpack.c.b16 %v707, %v703
        %v780 = vpack.c.b16 %v708, %v704
        %v781 = vpack.c.b16 %v713, %v709
        %v782 = vpack.c.b16 %v714, %v710
        %v783 = vpack.c.b16 %v715, %v711
        %v784 = vpack.c.b16 %v716, %v712
        %v785 = vpack.c.b16 %v721, %v717
        %v786 = vpack.c.b16 %v722, %v718
        %v787 = vpack.c.b16 %v723, %v719
        %v788 = vpack.c.b16 %v724, %v720
        %v917 = vunpack.c.l.b16 %v469
        %v918 = vunpack.c.h.b16 %v469
        %v919 = vunpack.c.l.b16 %v470
        %v920 = vunpack.c.h.b16 %v470
        %v921 = vunpack.c.l.b16 %v471
        %v922 = vunpack.c.h.b16 %v471
        %v923 = vunpack.c.l.b16 %v472
        %v924 = vunpack.c.h.b16 %v472
        %v925 = vunpack.c.l.b16 %v473
        %v926 = vunpack.c.h.b16 %v473
        %v927 = vunpack.c.l.b16 %v474
        %v928 = vunpack.c.h.b16 %v474
        %v929 = vunpack.c.l.b16 %v475
        %v930 = vunpack.c.h.b16 %v475
        %v931 = vunpack.c.l.b16 %v476
        %v932 = vunpack.c.h.b16 %v476
        %v933 = vunpack.c.l.b16 %v477
        %v934 = vunpack.c.h.b16 %v477
        %v935 = vunpack.c.l.b16 %v478
        %v936 = vunpack.c.h.b16 %v478
        %v937 = vunpack.c.l.b16 %v479
        %v938 = vunpack.c.h.b16 %v479
        %v939 = vunpack.c.l.b16 %v480
        %v940 = vunpack.c.h.b16 %v480
        %v941 = vunpack.c.l.b16 %v481
        %v942 = vunpack.c.h.b16 %v481
        %v943 = vunpack.c.l.b16 %v482
        %v944 = vunpack.c.h.b16 %v482
        %v945 = vunpack.c.l.b16 %v483
        %v946 = vunpack.c.h.b16 %v483
        %v947 = vunpack.c.l.b16 %v484
        %v948 = vunpack.c.h.b16 %v484
        %v949 = vunpack.c.l.b16 %v485
        %v950 = vunpack.c.h.b16 %v485
        %v951 = vunpack.c.l.b16 %v486
        %v952 = vunpack.c.h.b16 %v486
        %v953 = vunpack.c.l.b16 %v487
        %v954 = vunpack.c.h.b16 %v487
        %v955 = vunpack.c.l.b16 %v488
        %v956 = vunpack.c.h.b16 %v488
        %v957 = vunpack.c.l.b16 %v489
        %v958 = vunpack.c.h.b16 %v489
        %v959 = vunpack.c.l.b16 %v490
        %v960 = vunpack.c.h.b16 %v490
        %v961 = vunpack.c.l.b16 %v491
        %v962 = vunpack.c.h.b16 %v491
        %v963 = vunpack.c.l.b16 %v492
        %v964 = vunpack.c.h.b16 %v492
        %v965 = vunpack.c.l.b16 %v493
        %v966 = vunpack.c.h.b16 %v493
        %v967 = vunpack.c.l.b16 %v494
        %v968 = vunpack.c.h.b16 %v494
        %v969 = vunpack.c.l.b16 %v495
        %v970 = vunpack.c.h.b16 %v495
        %v971 = vunpack.c.l.b16 %v496
        %v972 = vunpack.c.h.b16 %v496
        %v973 = vunpack.c.l.b16 %v497
        %v974 = vunpack.c.h.b16 %v497
        %v975 = vunpack.c.l.b16 %v498
        %v976 = vunpack.c.h.b16 %v498
        %v977 = vunpack.c.l.b16 %v499
        %v978 = vunpack.c.h.b16 %v499
        %v979 = vunpack.c.l.b16 %v500
        %v980 = vunpack.c.h.b16 %v500
        %v981 = vunpack.c.l.b16 %v501
        %v982 = vunpack.c.h.b16 %v501
        %v983 = vunpack.c.l.b16 %v502
        %v984 = vunpack.c.h.b16 %v502
        %v985 = vunpack.c.l.b16 %v503
        %v986 = vunpack.c.h.b16 %v503
        %v987 = vunpack.c.l.b16 %v504
        %v988 = vunpack.c.h.b16 %v504
        %v989 = vunpack.c.l.b16 %v505
        %v990 = vunpack.c.h.b16 %v505
        %v991 = vunpack.c.l.b16 %v506
        %v992 = vunpack.c.h.b16 %v506
        %v993 = vunpack.c.l.b16 %v507
        %v994 = vunpack.c.h.b16 %v507
        %v995 = vunpack.c.l.b16 %v508
        %v996 = vunpack.c.h.b16 %v508
        %v997 = vunpack.c.l.b16 %v509
        %v998 = vunpack.c.h.b16 %v509
        %v999 = vunpack.c.l.b16 %v510
        %v1000 = vunpack.c.h.b16 %v510
        %v1001 = vunpack.c.l.b16 %v511
        %v1002 = vunpack.c.h.b16 %v511
        %v1003 = vunpack.c.l.b16 %v512
        %v1004 = vunpack.c.h.b16 %v512
        %v1005 = vunpack.c.l.b16 %v513
        %v1006 = vunpack.c.h.b16 %v513
        %v1007 = vunpack.c.l.b16 %v514
        %v1008 = vunpack.c.h.b16 %v514
        %v1009 = vunpack.c.l.b16 %v515
        %v1010 = vunpack.c.h.b16 %v515
        %v1011 = vunpack.c.l.b16 %v516
        %v1012 = vunpack.c.h.b16 %v516
        %v1013 = vunpack.c.l.b16 %v517
        %v1014 = vunpack.c.h.b16 %v517
        %v1015 = vunpack.c.l.b16 %v518
        %v1016 = vunpack.c.h.b16 %v518
        %v1017 = vunpack.c.l.b16 %v519
        %v1018 = vunpack.c.h.b16 %v519
        %v1019 = vunpack.c.l.b16 %v520
        %v1020 = vunpack.c.h.b16 %v520
        %v1021 = vunpack.c.l.b16 %v521
        %v1022 = vunpack.c.h.b16 %v521
        %v1023 = vunpack.c.l.b16 %v522
        %v1024 = vunpack.c.h.b16 %v522
        %v1025 = vunpack.c.l.b16 %v523
        %v1026 = vunpack.c.h.b16 %v523
        %v1027 = vunpack.c.l.b16 %v524
        %v1028 = vunpack.c.h.b16 %v524
        %v1029 = vunpack.c.l.b16 %v525
        %v1030 = vunpack.c.h.b16 %v525
        %v1031 = vunpack.c.l.b16 %v526
        %v1032 = vunpack.c.h.b16 %v526
        %v1033 = vunpack.c.l.b16 %v527
        %v1034 = vunpack.c.h.b16 %v527
        %v1035 = vunpack.c.l.b16 %v528
        %v1036 = vunpack.c.h.b16 %v528
        %v1037 = vunpack.c.l.b16 %v529
        %v1038 = vunpack.c.h.b16 %v529
        %v1039 = vunpack.c.l.b16 %v530
        %v1040 = vunpack.c.h.b16 %v530
        %v1041 = vunpack.c.l.b16 %v531
        %v1042 = vunpack.c.h.b16 %v531
        %v1043 = vunpack.c.l.b16 %v532
        %v1044 = vunpack.c.h.b16 %v532
        %v1045 = vpack.c.b16 %v919, %v917
        %v1046 = vpack.c.b16 %v920, %v918
        %v1047 = vpack.c.b16 %v923, %v921
        %v1048 = vpack.c.b16 %v924, %v922
        %v1049 = vpack.c.b16 %v927, %v925
        %v1050 = vpack.c.b16 %v928, %v926
        %v1051 = vpack.c.b16 %v931, %v929
        %v1052 = vpack.c.b16 %v932, %v930
        %v1053 = vpack.c.b16 %v935, %v933
        %v1054 = vpack.c.b16 %v936, %v934
        %v1055 = vpack.c.b16 %v939, %v937
        %v1056 = vpack.c.b16 %v940, %v938
        %v1057 = vpack.c.b16 %v943, %v941
        %v1058 = vpack.c.b16 %v944, %v942
        %v1059 = vpack.c.b16 %v947, %v945
        %v1060 = vpack.c.b16 %v948, %v946
        %v1061 = vpack.c.b16 %v951, %v949
        %v1062 = vpack.c.b16 %v952, %v950
        %v1063 = vpack.c.b16 %v955, %v953
        %v1064 = vpack.c.b16 %v956, %v954
        %v1065 = vpack.c.b16 %v959, %v957
        %v1066 = vpack.c.b16 %v960, %v958
        %v1067 = vpack.c.b16 %v963, %v961
        %v1068 = vpack.c.b16 %v964, %v962
        %v1069 = vpack.c.b16 %v967, %v965
        %v1070 = vpack.c.b16 %v968, %v966
        %v1071 = vpack.c.b16 %v971, %v969
        %v1072 = vpack.c.b16 %v972, %v970
        %v1073 = vpack.c.b16 %v975, %v973
        %v1074 = vpack.c.b16 %v976, %v974
        %v1075 = vpack.c.b16 %v979, %v977
        %v1076 = vpack.c.b16 %v980, %v978
        %v1077 = vpack.c.b16 %v983, %v981
        %v1078 = vpack.c.b16 %v984, %v982
        %v1079 = vpack.c.b16 %v987, %v985
        %v1080 = vpack.c.b16 %v988, %v986
        %v1081 = vpack.c.b16 %v991, %v989
        %v1082 = vpack.c.b16 %v992, %v990
        %v1083 = vpack.c.b16 %v995, %v993
        %v1084 = vpack.c.b16 %v996, %v994
        %v1085 = vpack.c.b16 %v999, %v997
        %v1086 = vpack.c.b16 %v1000, %v998
        %v1087 = vpack.c.b16 %v1003, %v1001
        %v1088 = vpack.c.b16 %v1004, %v1002
        %v1089 = vpack.c.b16 %v1007, %v1005
        %v1090 = vpack.c.b16 %v1008, %v1006
        %v1091 = vpack.c.b16 %v1011, %v1009
        %v1092 = vpack.c.b16 %v1012, %v1010
        %v1093 = vpack.c.b16 %v1015, %v1013
        %v1094 = vpack.c.b16 %v1016, %v1014
        %v1095 = vpack.c.b16 %v1019, %v1017
        %v1096 = vpack.c.b16 %v1020, %v1018
        %v1097 = vpack.c.b16 %v1023, %v1021
        %v1098 = vpack.c.b16 %v1024, %v1022
        %v1099 = vpack.c.b16 %v1027, %v1025
        %v1100 = vpack.c.b16 %v1028, %v1026
        %v1101 = vpack.c.b16 %v1031, %v1029
        %v1102 = vpack.c.b16 %v1032, %v1030
        %v1103 = vpack.c.b16 %v1035, %v1033
        %v1104 = vpack.c.b16 %v1036, %v1034
        %v1105 = vpack.c.b16 %v1039, %v1037
        %v1106 = vpack.c.b16 %v1040, %v1038
        %v1107 = vpack.c.b16 %v1043, %v1041
        %v1108 = vpack.c.b16 %v1044, %v1042
        %1173 = vmatprep.subr.bf16.mxu0 %v1046
        %1174 = vmatpush1.bf16.msra.mxu0 %v1045
        %1175 = vmatprep.subr.bf16.mxu0 %v1048
        %1176 = vmatpush1.bf16.msra.mxu0 %v1047
        %1177 = vmatprep.subr.bf16.mxu0 %v1050
        %1178 = vmatpush1.bf16.msra.mxu0 %v1049
        %1179 = vmatprep.subr.bf16.mxu0 %v1052
        %1180 = vmatpush1.bf16.msra.mxu0 %v1051
        %1181 = vmatprep.subr.bf16.mxu0 %v1054
        %1182 = vmatpush1.bf16.msra.mxu0 %v1053
        %1183 = vmatprep.subr.bf16.mxu0 %v1056
        %1184 = vmatpush1.bf16.msra.mxu0 %v1055
        %1185 = vmatprep.subr.bf16.mxu0 %v1058
        %1186 = vmatpush1.bf16.msra.mxu0 %v1057
        %1187 = vmatprep.subr.bf16.mxu0 %v1060
        %1188 = vmatpush1.bf16.msra.mxu0 %v1059
        %1189 = vmatprep.subr.bf16.mxu0 %v1062
        %1190 = vmatpush1.bf16.msra.mxu0 %v1061
        %1191 = vmatprep.subr.bf16.mxu0 %v1064
        %1192 = vmatpush1.bf16.msra.mxu0 %v1063
        %1193 = vmatprep.subr.bf16.mxu0 %v1066
        %1194 = vmatpush1.bf16.msra.mxu0 %v1065
        %1195 = vmatprep.subr.bf16.mxu0 %v1068
        %1196 = vmatpush1.bf16.msra.mxu0 %v1067
        %1197 = vmatprep.subr.bf16.mxu0 %v1070
        %1198 = vmatpush1.bf16.msra.mxu0 %v1069
        %1199 = vmatprep.subr.bf16.mxu0 %v1072
        %1200 = vmatpush1.bf16.msra.mxu0 %v1071
        %1201 = vmatprep.subr.bf16.mxu0 %v1074
        %1202 = vmatpush1.bf16.msra.mxu0 %v1073
        %1203 = vmatprep.subr.bf16.mxu0 %v1076
        %1204 = vmatpush1.bf16.msra.mxu0 %v1075
        %1205 = vmatprep.mubr.bf16.mxu0 %v726
        %1206 = vmatmul.mubr.bf16.gmra.mrb[0].mxu0 %v725
        %v1207 = vpop.f32.mrb[0].mxu0
        %v1208 = vadd.f32 0.0, %v1207
        %v1209 = vpop.f32.mrb[0].mxu0
        %v1210 = vadd.f32 0.0, %v1209
        %v1211 = vpop.f32.mrb[0].mxu0
        %v1212 = vadd.f32 0.0, %v1211
        %v1213 = vpop.f32.mrb[0].mxu0
        %v1214 = vadd.f32 0.0, %v1213
        %1215 = vmatprep.mubr.bf16.mxu0 %v730
        %1216 = vmatmul.mubr.bf16.gmra.mrb[0].mxu0 %v729
        %v1217 = vpop.f32.mrb[0].mxu0
        %v1218 = vadd.f32 0.0, %v1217
        %v1219 = vpop.f32.mrb[0].mxu0
        %v1220 = vadd.f32 0.0, %v1219
        %v1221 = vpop.f32.mrb[0].mxu0
        %v1222 = vadd.f32 0.0, %v1221
        %v1223 = vpop.f32.mrb[0].mxu0
        %v1224 = vadd.f32 0.0, %v1223
        %1225 = vmatprep.mubr.bf16.mxu0 %v734
        %1226 = vmatmul.mubr.bf16.gmra.mrb[0].mxu0 %v733
        %v1227 = vpop.f32.mrb[0].mxu0
        %v1228 = vadd.f32 0.0, %v1227
        %v1229 = vpop.f32.mrb[0].mxu0
        %v1230 = vadd.f32 0.0, %v1229
        %v1231 = vpop.f32.mrb[0].mxu0
        %v1232 = vadd.f32 0.0, %v1231
        %v1233 = vpop.f32.mrb[0].mxu0
        %v1234 = vadd.f32 0.0, %v1233
        %1235 = vmatprep.mubr.bf16.mxu0 %v738
        %1236 = vmatmul.mubr.bf16.gmra.mrb[0].mxu0 %v737
        %v1237 = vpop.f32.mrb[0].mxu0
        %v1238 = vadd.f32 0.0, %v1237
        %v1239 = vpop.f32.mrb[0].mxu0
        %v1240 = vadd.f32 0.0, %v1239
        %v1241 = vpop.f32.mrb[0].mxu0
        %v1242 = vadd.f32 0.0, %v1241
        %v1243 = vpop.f32.mrb[0].mxu0
        %v1244 = vadd.f32 0.0, %v1243
        %1245 = vmatprep.mubr.bf16.mxu0 %v742
        %1246 = vmatmul.mubr.bf16.gmra.mrb[0].mxu0 %v741
        %v1247 = vpop.f32.mrb[0].mxu0
        %v1248 = vadd.f32 0.0, %v1247
        %v1249 = vpop.f32.mrb[0].mxu0
        %v1250 = vadd.f32 0.0, %v1249
        %v1251 = vpop.f32.mrb[0].mxu0
        %v1252 = vadd.f32 0.0, %v1251
        %v1253 = vpop.f32.mrb[0].mxu0
        %v1254 = vadd.f32 0.0, %v1253
        %1255 = vmatprep.mubr.bf16.mxu0 %v746
        %1256 = vmatmul.mubr.bf16.gmra.mrb[0].mxu0 %v745
        %v1257 = vpop.f32.mrb[0].mxu0
        %v1258 = vadd.f32 0.0, %v1257
        %v1259 = vpop.f32.mrb[0].mxu0
        %v1260 = vadd.f32 0.0, %v1259
        %v1261 = vpop.f32.mrb[0].mxu0
        %v1262 = vadd.f32 0.0, %v1261
        %v1263 = vpop.f32.mrb[0].mxu0
        %v1264 = vadd.f32 0.0, %v1263
        %1265 = vmatprep.mubr.bf16.mxu0 %v750
        %1266 = vmatmul.mubr.bf16.gmra.mrb[0].mxu0 %v749
        %v1267 = vpop.f32.mrb[0].mxu0
        %v1268 = vadd.f32 0.0, %v1267
        %v1269 = vpop.f32.mrb[0].mxu0
        %v1270 = vadd.f32 0.0, %v1269
        %v1271 = vpop.f32.mrb[0].mxu0
        %v1272 = vadd.f32 0.0, %v1271
        %v1273 = vpop.f32.mrb[0].mxu0
        %v1274 = vadd.f32 0.0, %v1273
        %1275 = vmatprep.mubr.bf16.mxu0 %v754
        %1276 = vmatmul.mubr.bf16.gmra.mrb[0].mxu0 %v753
        %v1277 = vpop.f32.mrb[0].mxu0
        %v1278 = vadd.f32 0.0, %v1277
        %v1279 = vpop.f32.mrb[0].mxu0
        %v1280 = vadd.f32 0.0, %v1279
        %v1281 = vpop.f32.mrb[0].mxu0
        %v1282 = vadd.f32 0.0, %v1281
        %v1283 = vpop.f32.mrb[0].mxu0
        %v1284 = vadd.f32 0.0, %v1283
        %1285 = vmatprep.mubr.bf16.mxu0 %v758
        %1286 = vmatmul.mubr.bf16.gmra.mrb[0].mxu0 %v757
        %v1287 = vpop.f32.mrb[0].mxu0
        %v1288 = vadd.f32 0.0, %v1287
        %v1289 = vpop.f32.mrb[0].mxu0
        %v1290 = vadd.f32 0.0, %v1289
        %v1291 = vpop.f32.mrb[0].mxu0
        %v1292 = vadd.f32 0.0, %v1291
        %v1293 = vpop.f32.mrb[0].mxu0
        %v1294 = vadd.f32 0.0, %v1293
        %1295 = vmatprep.mubr.bf16.mxu0 %v762
        %1296 = vmatmul.mubr.bf16.gmra.mrb[0].mxu0 %v761
        %v1297 = vpop.f32.mrb[0].mxu0
        %v1298 = vadd.f32 0.0, %v1297
        %v1299 = vpop.f32.mrb[0].mxu0
        %v1300 = vadd.f32 0.0, %v1299
        %v1301 = vpop.f32.mrb[0].mxu0
        %v1302 = vadd.f32 0.0, %v1301
        %v1303 = vpop.f32.mrb[0].mxu0
        %v1304 = vadd.f32 0.0, %v1303
        %1305 = vmatprep.mubr.bf16.mxu0 %v766
        %1306 = vmatmul.mubr.bf16.gmra.mrb[0].mxu0 %v765
        %v1307 = vpop.f32.mrb[0].mxu0
        %v1308 = vadd.f32 0.0, %v1307
        %v1309 = vpop.f32.mrb[0].mxu0
        %v1310 = vadd.f32 0.0, %v1309
        %v1311 = vpop.f32.mrb[0].mxu0
        %v1312 = vadd.f32 0.0, %v1311
        %v1313 = vpop.f32.mrb[0].mxu0
        %v1314 = vadd.f32 0.0, %v1313
        %1315 = vmatprep.mubr.bf16.mxu0 %v770
        %1316 = vmatmul.mubr.bf16.gmra.mrb[0].mxu0 %v769
        %v1317 = vpop.f32.mrb[0].mxu0
        %v1318 = vadd.f32 0.0, %v1317
        %v1319 = vpop.f32.mrb[0].mxu0
        %v1320 = vadd.f32 0.0, %v1319
        %v1321 = vpop.f32.mrb[0].mxu0
        %v1322 = vadd.f32 0.0, %v1321
        %v1323 = vpop.f32.mrb[0].mxu0
        %v1324 = vadd.f32 0.0, %v1323
        %1325 = vmatprep.mubr.bf16.mxu0 %v774
        %1326 = vmatmul.mubr.bf16.gmra.mrb[0].mxu0 %v773
        %v1327 = vpop.f32.mrb[0].mxu0
        %v1328 = vadd.f32 0.0, %v1327
        %v1329 = vpop.f32.mrb[0].mxu0
        %v1330 = vadd.f32 0.0, %v1329
        %v1331 = vpop.f32.mrb[0].mxu0
        %v1332 = vadd.f32 0.0, %v1331
        %v1333 = vpop.f32.mrb[0].mxu0
        %v1334 = vadd.f32 0.0, %v1333
        %1335 = vmatprep.mubr.bf16.mxu0 %v778
        %1336 = vmatmul.mubr.bf16.gmra.mrb[0].mxu0 %v777
        %v1337 = vpop.f32.mrb[0].mxu0
        %v1338 = vadd.f32 0.0, %v1337
        %v1339 = vpop.f32.mrb[0].mxu0
        %v1340 = vadd.f32 0.0, %v1339
        %v1341 = vpop.f32.mrb[0].mxu0
        %v1342 = vadd.f32 0.0, %v1341
        %v1343 = vpop.f32.mrb[0].mxu0
        %v1344 = vadd.f32 0.0, %v1343
        %1345 = vmatprep.mubr.bf16.mxu0 %v782
        %1346 = vmatmul.mubr.bf16.gmra.mrb[0].mxu0 %v781
        %v1347 = vpop.f32.mrb[0].mxu0
        %v1348 = vadd.f32 0.0, %v1347
        %v1349 = vpop.f32.mrb[0].mxu0
        %v1350 = vadd.f32 0.0, %v1349
        %v1351 = vpop.f32.mrb[0].mxu0
        %v1352 = vadd.f32 0.0, %v1351
        %v1353 = vpop.f32.mrb[0].mxu0
        %v1354 = vadd.f32 0.0, %v1353
        %1355 = vmatprep.mubr.bf16.mxu0 %v786
        %1356 = vmatmul.mubr.bf16.gmra.mrb[0].mxu0 %v785
        %v1357 = vpop.f32.mrb[0].mxu0
        %v1358 = vadd.f32 0.0, %v1357
        %v1359 = vpop.f32.mrb[0].mxu0
        %v1360 = vadd.f32 0.0, %v1359
        %v1361 = vpop.f32.mrb[0].mxu0
        %v1362 = vadd.f32 0.0, %v1361
        %v1363 = vpop.f32.mrb[0].mxu0
        %v1364 = vadd.f32 0.0, %v1363
        %1365 = vdwg.mxu0
        %1366 = vmatprep.subr.bf16.mxu0 %v1078
        %1367 = vmatpush1.bf16.msra.mxu0 %v1077
        %1368 = vmatprep.subr.bf16.mxu0 %v1080
        %1369 = vmatpush1.bf16.msra.mxu0 %v1079
        %1370 = vmatprep.subr.bf16.mxu0 %v1082
        %1371 = vmatpush1.bf16.msra.mxu0 %v1081
        %1372 = vmatprep.subr.bf16.mxu0 %v1084
        %1373 = vmatpush1.bf16.msra.mxu0 %v1083
        %1374 = vmatprep.subr.bf16.mxu0 %v1086
        %1375 = vmatpush1.bf16.msra.mxu0 %v1085
        %1376 = vmatprep.subr.bf16.mxu0 %v1088
        %1377 = vmatpush1.bf16.msra.mxu0 %v1087
        %1378 = vmatprep.subr.bf16.mxu0 %v1090
        %1379 = vmatpush1.bf16.msra.mxu0 %v1089
        %1380 = vmatprep.subr.bf16.mxu0 %v1092
        %1381 = vmatpush1.bf16.msra.mxu0 %v1091
        %1382 = vmatprep.subr.bf16.mxu0 %v1094
        %1383 = vmatpush1.bf16.msra.mxu0 %v1093
        %1384 = vmatprep.subr.bf16.mxu0 %v1096
        %1385 = vmatpush1.bf16.msra.mxu0 %v1095
        %1386 = vmatprep.subr.bf16.mxu0 %v1098
        %1387 = vmatpush1.bf16.msra.mxu0 %v1097
        %1388 = vmatprep.subr.bf16.mxu0 %v1100
        %1389 = vmatpush1.bf16.msra.mxu0 %v1099
        %1390 = vmatprep.subr.bf16.mxu0 %v1102
        %1391 = vmatpush1.bf16.msra.mxu0 %v1101
        %1392 = vmatprep.subr.bf16.mxu0 %v1104
        %1393 = vmatpush1.bf16.msra.mxu0 %v1103
        %1394 = vmatprep.subr.bf16.mxu0 %v1106
        %1395 = vmatpush1.bf16.msra.mxu0 %v1105
        %1396 = vmatprep.subr.bf16.mxu0 %v1108
        %1397 = vmatpush1.bf16.msra.mxu0 %v1107
        %1398 = vmatprep.mubr.bf16.mxu0 %v728
        %1399 = vmatmul.mubr.bf16.gmra.mrb[0].mxu0 %v727
        %v1400 = vpop.f32.mrb[0].mxu0
        %v1401 = vadd.f32 %v1208, %v1400
        %v1402 = vpop.f32.mrb[0].mxu0
        %v1403 = vadd.f32 %v1210, %v1402
        %v1404 = vpop.f32.mrb[0].mxu0
        %v1405 = vadd.f32 %v1212, %v1404
        %v1406 = vpop.f32.mrb[0].mxu0
        %v1407 = vadd.f32 %v1214, %v1406
        %1408 = vmatprep.mubr.bf16.mxu0 %v732
        %1409 = vmatmul.mubr.bf16.gmra.mrb[0].mxu0 %v731
        %v1410 = vpop.f32.mrb[0].mxu0
        %v1411 = vadd.f32 %v1218, %v1410
        %v1412 = vpop.f32.mrb[0].mxu0
        %v1413 = vadd.f32 %v1220, %v1412
        %v1414 = vpop.f32.mrb[0].mxu0
        %v1415 = vadd.f32 %v1222, %v1414
        %v1416 = vpop.f32.mrb[0].mxu0
        %v1417 = vadd.f32 %v1224, %v1416
        %1418 = vmatprep.mubr.bf16.mxu0 %v736
        %1419 = vmatmul.mubr.bf16.gmra.mrb[0].mxu0 %v735
        %v1420 = vpop.f32.mrb[0].mxu0
        %v1421 = vadd.f32 %v1228, %v1420
        %v1422 = vpop.f32.mrb[0].mxu0
        %v1423 = vadd.f32 %v1230, %v1422
        %v1424 = vpop.f32.mrb[0].mxu0
        %v1425 = vadd.f32 %v1232, %v1424
        %v1426 = vpop.f32.mrb[0].mxu0
        %v1427 = vadd.f32 %v1234, %v1426
        %1428 = vmatprep.mubr.bf16.mxu0 %v740
        %1429 = vmatmul.mubr.bf16.gmra.mrb[0].mxu0 %v739
        %v1430 = vpop.f32.mrb[0].mxu0
        %v1431 = vadd.f32 %v1238, %v1430
        %v1432 = vpop.f32.mrb[0].mxu0
        %v1433 = vadd.f32 %v1240, %v1432
        %v1434 = vpop.f32.mrb[0].mxu0
        %v1435 = vadd.f32 %v1242, %v1434
        %v1436 = vpop.f32.mrb[0].mxu0
        %v1437 = vadd.f32 %v1244, %v1436
        %1438 = vmatprep.mubr.bf16.mxu0 %v744
        %1439 = vmatmul.mubr.bf16.gmra.mrb[0].mxu0 %v743
        %v1440 = vpop.f32.mrb[0].mxu0
        %v1441 = vadd.f32 %v1248, %v1440
        %v1442 = vpop.f32.mrb[0].mxu0
        %v1443 = vadd.f32 %v1250, %v1442
        %v1444 = vpop.f32.mrb[0].mxu0
        %v1445 = vadd.f32 %v1252, %v1444
        %v1446 = vpop.f32.mrb[0].mxu0
        %v1447 = vadd.f32 %v1254, %v1446
        %1448 = vmatprep.mubr.bf16.mxu0 %v748
        %1449 = vmatmul.mubr.bf16.gmra.mrb[0].mxu0 %v747
        %v1450 = vpop.f32.mrb[0].mxu0
        %v1451 = vadd.f32 %v1258, %v1450
        %v1452 = vpop.f32.mrb[0].mxu0
        %v1453 = vadd.f32 %v1260, %v1452
        %v1454 = vpop.f32.mrb[0].mxu0
        %v1455 = vadd.f32 %v1262, %v1454
        %v1456 = vpop.f32.mrb[0].mxu0
        %v1457 = vadd.f32 %v1264, %v1456
        %1458 = vmatprep.mubr.bf16.mxu0 %v752
        %1459 = vmatmul.mubr.bf16.gmra.mrb[0].mxu0 %v751
        %v1460 = vpop.f32.mrb[0].mxu0
        %v1461 = vadd.f32 %v1268, %v1460
        %v1462 = vpop.f32.mrb[0].mxu0
        %v1463 = vadd.f32 %v1270, %v1462
        %v1464 = vpop.f32.mrb[0].mxu0
        %v1465 = vadd.f32 %v1272, %v1464
        %v1466 = vpop.f32.mrb[0].mxu0
        %v1467 = vadd.f32 %v1274, %v1466
        %1468 = vmatprep.mubr.bf16.mxu0 %v756
        %1469 = vmatmul.mubr.bf16.gmra.mrb[0].mxu0 %v755
        %v1470 = vpop.f32.mrb[0].mxu0
        %v1471 = vadd.f32 %v1278, %v1470
        %v1472 = vpop.f32.mrb[0].mxu0
        %v1473 = vadd.f32 %v1280, %v1472
        %v1474 = vpop.f32.mrb[0].mxu0
        %v1475 = vadd.f32 %v1282, %v1474
        %v1476 = vpop.f32.mrb[0].mxu0
        %v1477 = vadd.f32 %v1284, %v1476
        %1478 = vmatprep.mubr.bf16.mxu0 %v760
        %1479 = vmatmul.mubr.bf16.gmra.mrb[0].mxu0 %v759
        %v1480 = vpop.f32.mrb[0].mxu0
        %v1481 = vadd.f32 %v1288, %v1480
        %v1482 = vpop.f32.mrb[0].mxu0
        %v1483 = vadd.f32 %v1290, %v1482
        %v1484 = vpop.f32.mrb[0].mxu0
        %v1485 = vadd.f32 %v1292, %v1484
        %v1486 = vpop.f32.mrb[0].mxu0
        %v1487 = vadd.f32 %v1294, %v1486
        %1488 = vmatprep.mubr.bf16.mxu0 %v764
        %1489 = vmatmul.mubr.bf16.gmra.mrb[0].mxu0 %v763
        %v1490 = vpop.f32.mrb[0].mxu0
        %v1491 = vadd.f32 %v1298, %v1490
        %v1492 = vpop.f32.mrb[0].mxu0
        %v1493 = vadd.f32 %v1300, %v1492
        %v1494 = vpop.f32.mrb[0].mxu0
        %v1495 = vadd.f32 %v1302, %v1494
        %v1496 = vpop.f32.mrb[0].mxu0
        %v1497 = vadd.f32 %v1304, %v1496
        %1498 = vmatprep.mubr.bf16.mxu0 %v768
        %1499 = vmatmul.mubr.bf16.gmra.mrb[0].mxu0 %v767
        %v1500 = vpop.f32.mrb[0].mxu0
        %v1501 = vadd.f32 %v1308, %v1500
        %v1502 = vpop.f32.mrb[0].mxu0
        %v1503 = vadd.f32 %v1310, %v1502
        %v1504 = vpop.f32.mrb[0].mxu0
        %v1505 = vadd.f32 %v1312, %v1504
        %v1506 = vpop.f32.mrb[0].mxu0
        %v1507 = vadd.f32 %v1314, %v1506
        %1508 = vmatprep.mubr.bf16.mxu0 %v772
        %1509 = vmatmul.mubr.bf16.gmra.mrb[0].mxu0 %v771
        %v1510 = vpop.f32.mrb[0].mxu0
        %v1511 = vadd.f32 %v1318, %v1510
        %v1512 = vpop.f32.mrb[0].mxu0
        %v1513 = vadd.f32 %v1320, %v1512
        %v1514 = vpop.f32.mrb[0].mxu0
        %v1515 = vadd.f32 %v1322, %v1514
        %v1516 = vpop.f32.mrb[0].mxu0
        %v1517 = vadd.f32 %v1324, %v1516
        %1518 = vmatprep.mubr.bf16.mxu0 %v776
        %1519 = vmatmul.mubr.bf16.gmra.mrb[0].mxu0 %v775
        %v1520 = vpop.f32.mrb[0].mxu0
        %v1521 = vadd.f32 %v1328, %v1520
        %v1522 = vpop.f32.mrb[0].mxu0
        %v1523 = vadd.f32 %v1330, %v1522
        %v1524 = vpop.f32.mrb[0].mxu0
        %v1525 = vadd.f32 %v1332, %v1524
        %v1526 = vpop.f32.mrb[0].mxu0
        %v1527 = vadd.f32 %v1334, %v1526
        %1528 = vmatprep.mubr.bf16.mxu0 %v780
        %1529 = vmatmul.mubr.bf16.gmra.mrb[0].mxu0 %v779
        %v1530 = vpop.f32.mrb[0].mxu0
        %v1531 = vadd.f32 %v1338, %v1530
        %v1532 = vpop.f32.mrb[0].mxu0
        %v1533 = vadd.f32 %v1340, %v1532
        %v1534 = vpop.f32.mrb[0].mxu0
        %v1535 = vadd.f32 %v1342, %v1534
        %v1536 = vpop.f32.mrb[0].mxu0
        %v1537 = vadd.f32 %v1344, %v1536
        %1538 = vmatprep.mubr.bf16.mxu0 %v784
        %1539 = vmatmul.mubr.bf16.gmra.mrb[0].mxu0 %v783
        %v1540 = vpop.f32.mrb[0].mxu0
        %v1541 = vadd.f32 %v1348, %v1540
        %v1542 = vpop.f32.mrb[0].mxu0
        %v1543 = vadd.f32 %v1350, %v1542
        %v1544 = vpop.f32.mrb[0].mxu0
        %v1545 = vadd.f32 %v1352, %v1544
        %v1546 = vpop.f32.mrb[0].mxu0
        %v1547 = vadd.f32 %v1354, %v1546
        %1548 = vmatprep.mubr.bf16.mxu0 %v788
        %1549 = vmatmul.mubr.bf16.gmra.mrb[0].mxu0 %v787
        %v1550 = vpop.f32.mrb[0].mxu0
        %v1551 = vadd.f32 %v1358, %v1550
        %v1552 = vpop.f32.mrb[0].mxu0
        %v1553 = vadd.f32 %v1360, %v1552
        %v1554 = vpop.f32.mrb[0].mxu0
        %v1555 = vadd.f32 %v1362, %v1554
        %v1556 = vpop.f32.mrb[0].mxu0
        %v1557 = vadd.f32 %v1364, %v1556
        %1558 = vdwg.mxu0
        %v1559 = vadd.f32 %v341, %v1401
        %v1560 = vadd.f32 %v342, %v1403
        %v1561 = vadd.f32 %v343, %v1405
        %v1562 = vadd.f32 %v344, %v1407
        %v1563 = vadd.f32 %v345, %v1411
        %v1564 = vadd.f32 %v346, %v1413
        %v1565 = vadd.f32 %v347, %v1415
        %v1566 = vadd.f32 %v348, %v1417
        %v1567 = vadd.f32 %v349, %v1421
        %v1568 = vadd.f32 %v350, %v1423
        %v1569 = vadd.f32 %v351, %v1425
        %v1570 = vadd.f32 %v352, %v1427
        %v1571 = vadd.f32 %v353, %v1431
        %v1572 = vadd.f32 %v354, %v1433
        %v1573 = vadd.f32 %v355, %v1435
        %v1574 = vadd.f32 %v356, %v1437
        %v1575 = vadd.f32 %v357, %v1441
        %v1576 = vadd.f32 %v358, %v1443
        %v1577 = vadd.f32 %v359, %v1445
        %v1578 = vadd.f32 %v360, %v1447
        %v1579 = vadd.f32 %v361, %v1451
        %v1580 = vadd.f32 %v362, %v1453
        %v1581 = vadd.f32 %v363, %v1455
        %v1582 = vadd.f32 %v364, %v1457
        %v1583 = vadd.f32 %v365, %v1461
        %v1584 = vadd.f32 %v366, %v1463
        %v1585 = vadd.f32 %v367, %v1465
        %v1586 = vadd.f32 %v368, %v1467
        %v1587 = vadd.f32 %v369, %v1471
        %v1588 = vadd.f32 %v370, %v1473
        %v1589 = vadd.f32 %v371, %v1475
        %v1590 = vadd.f32 %v372, %v1477
        %v1591 = vadd.f32 %v373, %v1481
        %v1592 = vadd.f32 %v374, %v1483
        %v1593 = vadd.f32 %v375, %v1485
        %v1594 = vadd.f32 %v376, %v1487
        %v1595 = vadd.f32 %v377, %v1491
        %v1596 = vadd.f32 %v378, %v1493
        %v1597 = vadd.f32 %v379, %v1495
        %v1598 = vadd.f32 %v380, %v1497
        %v1599 = vadd.f32 %v381, %v1501
        %v1600 = vadd.f32 %v382, %v1503
        %v1601 = vadd.f32 %v383, %v1505
        %v1602 = vadd.f32 %v384, %v1507
        %v1603 = vadd.f32 %v385, %v1511
        %v1604 = vadd.f32 %v386, %v1513
        %v1605 = vadd.f32 %v387, %v1515
        %v1606 = vadd.f32 %v388, %v1517
        %v1607 = vadd.f32 %v389, %v1521
        %v1608 = vadd.f32 %v390, %v1523
        %v1609 = vadd.f32 %v391, %v1525
        %v1610 = vadd.f32 %v392, %v1527
        %v1611 = vadd.f32 %v393, %v1531
        %v1612 = vadd.f32 %v394, %v1533
        %v1613 = vadd.f32 %v395, %v1535
        %v1614 = vadd.f32 %v396, %v1537
        %v1615 = vadd.f32 %v397, %v1541
        %v1616 = vadd.f32 %v398, %v1543
        %v1617 = vadd.f32 %v399, %v1545
        %v1618 = vadd.f32 %v400, %v1547
        %v1619 = vadd.f32 %v401, %v1551
        %v1620 = vadd.f32 %v402, %v1553
        %v1621 = vadd.f32 %v403, %v1555
        %v1622 = vadd.f32 %v404, %v1557
        %1623 = vst [vmem:[#allocation2] sm:$0xff] %v1559
        %1624 = vst [vmem:[#allocation2 + $0x8] sm:$0xff] %v1560
        %1625 = vst [vmem:[#allocation2 + $0x10] sm:$0xff] %v1561
        %1626 = vst [vmem:[#allocation2 + $0x18] sm:$0xff] %v1562
        %1627 = vst [vmem:[#allocation2 + $0x20] sm:$0xff] %v1563
        %1628 = vst [vmem:[#allocation2 + $0x28] sm:$0xff] %v1564
        %1629 = vst [vmem:[#allocation2 + $0x30] sm:$0xff] %v1565
        %1630 = vst [vmem:[#allocation2 + $0x38] sm:$0xff] %v1566
        %1631 = vst [vmem:[#allocation2 + $0x40] sm:$0xff] %v1567
        %1632 = vst [vmem:[#allocation2 + $0x48] sm:$0xff] %v1568
        %1633 = vst [vmem:[#allocation2 + $0x50] sm:$0xff] %v1569
        %1634 = vst [vmem:[#allocation2 + $0x58] sm:$0xff] %v1570
        %1635 = vst [vmem:[#allocation2 + $0x60] sm:$0xff] %v1571
        %1636 = vst [vmem:[#allocation2 + $0x68] sm:$0xff] %v1572
        %1637 = vst [vmem:[#allocation2 + $0x70] sm:$0xff] %v1573
        %1638 = vst [vmem:[#allocation2 + $0x78] sm:$0xff] %v1574
        %1639 = vst [vmem:[#allocation2 + $0x80] sm:$0xff] %v1575
        %1640 = vst [vmem:[#allocation2 + $0x88] sm:$0xff] %v1576
        %1641 = vst [vmem:[#allocation2 + $0x90] sm:$0xff] %v1577
        %1642 = vst [vmem:[#allocation2 + $0x98] sm:$0xff] %v1578
        %1643 = vst [vmem:[#allocation2 + $0xa0] sm:$0xff] %v1579
        %1644 = vst [vmem:[#allocation2 + $0xa8] sm:$0xff] %v1580
        %1645 = vst [vmem:[#allocation2 + $0xb0] sm:$0xff] %v1581
        %1646 = vst [vmem:[#allocation2 + $0xb8] sm:$0xff] %v1582
        %1647 = vst [vmem:[#allocation2 + $0xc0] sm:$0xff] %v1583
        %1648 = vst [vmem:[#allocation2 + $0xc8] sm:$0xff] %v1584
        %1649 = vst [vmem:[#allocation2 + $0xd0] sm:$0xff] %v1585
        %1650 = vst [vmem:[#allocation2 + $0xd8] sm:$0xff] %v1586
        %1651 = vst [vmem:[#allocation2 + $0xe0] sm:$0xff] %v1587
        %1652 = vst [vmem:[#allocation2 + $0xe8] sm:$0xff] %v1588
        %1653 = vst [vmem:[#allocation2 + $0xf0] sm:$0xff] %v1589
        %1654 = vst [vmem:[#allocation2 + $0xf8] sm:$0xff] %v1590
        %1655 = vst [vmem:[#allocation2 + $0x100] sm:$0xff] %v1591
        %1656 = vst [vmem:[#allocation2 + $0x108] sm:$0xff] %v1592
        %1657 = vst [vmem:[#allocation2 + $0x110] sm:$0xff] %v1593
        %1658 = vst [vmem:[#allocation2 + $0x118] sm:$0xff] %v1594
        %1659 = vst [vmem:[#allocation2 + $0x120] sm:$0xff] %v1595
        %1660 = vst [vmem:[#allocation2 + $0x128] sm:$0xff] %v1596
        %1661 = vst [vmem:[#allocation2 + $0x130] sm:$0xff] %v1597
        %1662 = vst [vmem:[#allocation2 + $0x138] sm:$0xff] %v1598
        %1663 = vst [vmem:[#allocation2 + $0x140] sm:$0xff] %v1599
        %1664 = vst [vmem:[#allocation2 + $0x148] sm:$0xff] %v1600
        %1665 = vst [vmem:[#allocation2 + $0x150] sm:$0xff] %v1601
        %1666 = vst [vmem:[#allocation2 + $0x158] sm:$0xff] %v1602
        %1667 = vst [vmem:[#allocation2 + $0x160] sm:$0xff] %v1603
        %1668 = vst [vmem:[#allocation2 + $0x168] sm:$0xff] %v1604
        %1669 = vst [vmem:[#allocation2 + $0x170] sm:$0xff] %v1605
        %1670 = vst [vmem:[#allocation2 + $0x178] sm:$0xff] %v1606
        %1671 = vst [vmem:[#allocation2 + $0x180] sm:$0xff] %v1607
        %1672 = vst [vmem:[#allocation2 + $0x188] sm:$0xff] %v1608
        %1673 = vst [vmem:[#allocation2 + $0x190] sm:$0xff] %v1609
        %1674 = vst [vmem:[#allocation2 + $0x198] sm:$0xff] %v1610
        %1675 = vst [vmem:[#allocation2 + $0x1a0] sm:$0xff] %v1611
        %1676 = vst [vmem:[#allocation2 + $0x1a8] sm:$0xff] %v1612
        %1677 = vst [vmem:[#allocation2 + $0x1b0] sm:$0xff] %v1613
        %1678 = vst [vmem:[#allocation2 + $0x1b8] sm:$0xff] %v1614
        %1679 = vst [vmem:[#allocation2 + $0x1c0] sm:$0xff] %v1615
        %1680 = vst [vmem:[#allocation2 + $0x1c8] sm:$0xff] %v1616
        %1681 = vst [vmem:[#allocation2 + $0x1d0] sm:$0xff] %v1617
        %1682 = vst [vmem:[#allocation2 + $0x1d8] sm:$0xff] %v1618
        %1683 = vst [vmem:[#allocation2 + $0x1e0] sm:$0xff] %v1619
        %1684 = vst [vmem:[#allocation2 + $0x1e8] sm:$0xff] %v1620
        %1685 = vst [vmem:[#allocation2 + $0x1f0] sm:$0xff] %v1621
        %1686 = vst [vmem:[#allocation2 + $0x1f8] sm:$0xff] %v1622
        // Predicated region
        $region37: #{_lambda_.11} parent=31 // pred_check
          %p1687 = pneg %p273
        $region38: #{_lambda_.11} parent=31 // pred_check_branch
          %1689 = sbr.rel (%p1687) target = $region40
        $region39: #{_lambda_.11} parent=31 // pred_region
          %v1690 = vld [vmem:[#allocation2] sm:$0xff]
          %v1691 = vld [vmem:[#allocation2 + $0x8] sm:$0xff]
          %v1692 = vld [vmem:[#allocation2 + $0x10] sm:$0xff]
          %v1693 = vld [vmem:[#allocation2 + $0x18] sm:$0xff]
          %v1694 = vld [vmem:[#allocation2 + $0x20] sm:$0xff]
          %v1695 = vld [vmem:[#allocation2 + $0x28] sm:$0xff]
          %v1696 = vld [vmem:[#allocation2 + $0x30] sm:$0xff]
          %v1697 = vld [vmem:[#allocation2 + $0x38] sm:$0xff]
          %v1698 = vld [vmem:[#allocation2 + $0x40] sm:$0xff]
          %v1699 = vld [vmem:[#allocation2 + $0x48] sm:$0xff]
          %v1700 = vld [vmem:[#allocation2 + $0x50] sm:$0xff]
          %v1701 = vld [vmem:[#allocation2 + $0x58] sm:$0xff]
          %v1702 = vld [vmem:[#allocation2 + $0x60] sm:$0xff]
          %v1703 = vld [vmem:[#allocation2 + $0x68] sm:$0xff]
          %v1704 = vld [vmem:[#allocation2 + $0x70] sm:$0xff]
          %v1705 = vld [vmem:[#allocation2 + $0x78] sm:$0xff]
          %v1706 = vld [vmem:[#allocation2 + $0x80] sm:$0xff]
          %v1707 = vld [vmem:[#allocation2 + $0x88] sm:$0xff]
          %v1708 = vld [vmem:[#allocation2 + $0x90] sm:$0xff]
          %v1709 = vld [vmem:[#allocation2 + $0x98] sm:$0xff]
          %v1710 = vld [vmem:[#allocation2 + $0xa0] sm:$0xff]
          %v1711 = vld [vmem:[#allocation2 + $0xa8] sm:$0xff]
          %v1712 = vld [vmem:[#allocation2 + $0xb0] sm:$0xff]
          %v1713 = vld [vmem:[#allocation2 + $0xb8] sm:$0xff]
          %v1714 = vld [vmem:[#allocation2 + $0xc0] sm:$0xff]
          %v1715 = vld [vmem:[#allocation2 + $0xc8] sm:$0xff]
          %v1716 = vld [vmem:[#allocation2 + $0xd0] sm:$0xff]
          %v1717 = vld [vmem:[#allocation2 + $0xd8] sm:$0xff]
          %v1718 = vld [vmem:[#allocation2 + $0xe0] sm:$0xff]
          %v1719 = vld [vmem:[#allocation2 + $0xe8] sm:$0xff]
          %v1720 = vld [vmem:[#allocation2 + $0xf0] sm:$0xff]
          %v1721 = vld [vmem:[#allocation2 + $0xf8] sm:$0xff]
          %v1722 = vld [vmem:[#allocation2 + $0x100] sm:$0xff]
          %v1723 = vld [vmem:[#allocation2 + $0x108] sm:$0xff]
          %v1724 = vld [vmem:[#allocation2 + $0x110] sm:$0xff]
          %v1725 = vld [vmem:[#allocation2 + $0x118] sm:$0xff]
          %v1726 = vld [vmem:[#allocation2 + $0x120] sm:$0xff]
          %v1727 = vld [vmem:[#allocation2 + $0x128] sm:$0xff]
          %v1728 = vld [vmem:[#allocation2 + $0x130] sm:$0xff]
          %v1729 = vld [vmem:[#allocation2 + $0x138] sm:$0xff]
          %v1730 = vld [vmem:[#allocation2 + $0x140] sm:$0xff]
          %v1731 = vld [vmem:[#allocation2 + $0x148] sm:$0xff]
          %v1732 = vld [vmem:[#allocation2 + $0x150] sm:$0xff]
          %v1733 = vld [vmem:[#allocation2 + $0x158] sm:$0xff]
          %v1734 = vld [vmem:[#allocation2 + $0x160] sm:$0xff]
          %v1735 = vld [vmem:[#allocation2 + $0x168] sm:$0xff]
          %v1736 = vld [vmem:[#allocation2 + $0x170] sm:$0xff]
          %v1737 = vld [vmem:[#allocation2 + $0x178] sm:$0xff]
          %v1738 = vld [vmem:[#allocation2 + $0x180] sm:$0xff]
          %v1739 = vld [vmem:[#allocation2 + $0x188] sm:$0xff]
          %v1740 = vld [vmem:[#allocation2 + $0x190] sm:$0xff]
          %v1741 = vld [vmem:[#allocation2 + $0x198] sm:$0xff]
          %v1742 = vld [vmem:[#allocation2 + $0x1a0] sm:$0xff]
          %v1743 = vld [vmem:[#allocation2 + $0x1a8] sm:$0xff]
          %v1744 = vld [vmem:[#allocation2 + $0x1b0] sm:$0xff]
          %v1745 = vld [vmem:[#allocation2 + $0x1b8] sm:$0xff]
          %v1746 = vld [vmem:[#allocation2 + $0x1c0] sm:$0xff]
          %v1747 = vld [vmem:[#allocation2 + $0x1c8] sm:$0xff]
          %v1748 = vld [vmem:[#allocation2 + $0x1d0] sm:$0xff]
          %v1749 = vld [vmem:[#allocation2 + $0x1d8] sm:$0xff]
          %v1750 = vld [vmem:[#allocation2 + $0x1e0] sm:$0xff]
          %v1751 = vld [vmem:[#allocation2 + $0x1e8] sm:$0xff]
          %v1752 = vld [vmem:[#allocation2 + $0x1f0] sm:$0xff]
          %v1753 = vld [vmem:[#allocation2 + $0x1f8] sm:$0xff]
          %v1754 = vld [vmem:[%s269] sm:$0x3]
          %v1756 = vlaneseq
          %v1757 = vshrl.u32 %v1756, 7
          %v1758 = vsub.s32 0, %v1757
          %v1759 = vrot.slane %v1754, %v1758
          %v1760 = vlaneseq
          %v1761 = vshrl.u32 %v1760, 7
          %v1762 = vsub.s32 1, %v1761
          %v1763 = vrot.slane %v1754, %v1762
          %v1766 = vadd.f32 %v1690, %v1759
          %v1767 = vadd.f32 %v1691, %v1763
          %v1768 = vadd.f32 %v1692, %v1759
          %v1769 = vadd.f32 %v1693, %v1763
          %v1770 = vadd.f32 %v1694, %v1759
          %v1771 = vadd.f32 %v1695, %v1763
          %v1772 = vadd.f32 %v1696, %v1759
          %v1773 = vadd.f32 %v1697, %v1763
          %v1774 = vadd.f32 %v1698, %v1759
          %v1775 = vadd.f32 %v1699, %v1763
          %v1776 = vadd.f32 %v1700, %v1759
          %v1777 = vadd.f32 %v1701, %v1763
          %v1778 = vadd.f32 %v1702, %v1759
          %v1779 = vadd.f32 %v1703, %v1763
          %v1780 = vadd.f32 %v1704, %v1759
          %v1781 = vadd.f32 %v1705, %v1763
          %v1782 = vadd.f32 %v1706, %v1759
          %v1783 = vadd.f32 %v1707, %v1763
          %v1784 = vadd.f32 %v1708, %v1759
          %v1785 = vadd.f32 %v1709, %v1763
          %v1786 = vadd.f32 %v1710, %v1759
          %v1787 = vadd.f32 %v1711, %v1763
          %v1788 = vadd.f32 %v1712, %v1759
          %v1789 = vadd.f32 %v1713, %v1763
          %v1790 = vadd.f32 %v1714, %v1759
          %v1791 = vadd.f32 %v1715, %v1763
          %v1792 = vadd.f32 %v1716, %v1759
          %v1793 = vadd.f32 %v1717, %v1763
          %v1794 = vadd.f32 %v1718, %v1759
          %v1795 = vadd.f32 %v1719, %v1763
          %v1796 = vadd.f32 %v1720, %v1759
          %v1797 = vadd.f32 %v1721, %v1763
          %v1798 = vadd.f32 %v1722, %v1759
          %v1799 = vadd.f32 %v1723, %v1763
          %v1800 = vadd.f32 %v1724, %v1759
          %v1801 = vadd.f32 %v1725, %v1763
          %v1802 = vadd.f32 %v1726, %v1759
          %v1803 = vadd.f32 %v1727, %v1763
          %v1804 = vadd.f32 %v1728, %v1759
          %v1805 = vadd.f32 %v1729, %v1763
          %v1806 = vadd.f32 %v1730, %v1759
          %v1807 = vadd.f32 %v1731, %v1763
          %v1808 = vadd.f32 %v1732, %v1759
          %v1809 = vadd.f32 %v1733, %v1763
          %v1810 = vadd.f32 %v1734, %v1759
          %v1811 = vadd.f32 %v1735, %v1763
          %v1812 = vadd.f32 %v1736, %v1759
          %v1813 = vadd.f32 %v1737, %v1763
          %v1814 = vadd.f32 %v1738, %v1759
          %v1815 = vadd.f32 %v1739, %v1763
          %v1816 = vadd.f32 %v1740, %v1759
          %v1817 = vadd.f32 %v1741, %v1763
          %v1818 = vadd.f32 %v1742, %v1759
          %v1819 = vadd.f32 %v1743, %v1763
          %v1820 = vadd.f32 %v1744, %v1759
          %v1821 = vadd.f32 %v1745, %v1763
          %v1822 = vadd.f32 %v1746, %v1759
          %v1823 = vadd.f32 %v1747, %v1763
          %v1824 = vadd.f32 %v1748, %v1759
          %v1825 = vadd.f32 %v1749, %v1763
          %v1826 = vadd.f32 %v1750, %v1759
          %v1827 = vadd.f32 %v1751, %v1763
          %v1828 = vadd.f32 %v1752, %v1759
          %v1829 = vadd.f32 %v1753, %v1763
          %v1830 = vmax.f32 %v1766, 0.0
          %v1831 = vmax.f32 %v1767, 0.0
          %v1832 = vmax.f32 %v1768, 0.0
          %v1833 = vmax.f32 %v1769, 0.0
          %v1834 = vmax.f32 %v1770, 0.0
          %v1835 = vmax.f32 %v1771, 0.0
          %v1836 = vmax.f32 %v1772, 0.0
          %v1837 = vmax.f32 %v1773, 0.0
          %v1838 = vmax.f32 %v1774, 0.0
          %v1839 = vmax.f32 %v1775, 0.0
          %v1840 = vmax.f32 %v1776, 0.0
          %v1841 = vmax.f32 %v1777, 0.0
          %v1842 = vmax.f32 %v1778, 0.0
          %v1843 = vmax.f32 %v1779, 0.0
          %v1844 = vmax.f32 %v1780, 0.0
          %v1845 = vmax.f32 %v1781, 0.0
          %v1846 = vmax.f32 %v1782, 0.0
          %v1847 = vmax.f32 %v1783, 0.0
          %v1848 = vmax.f32 %v1784, 0.0
          %v1849 = vmax.f32 %v1785, 0.0
          %v1850 = vmax.f32 %v1786, 0.0
          %v1851 = vmax.f32 %v1787, 0.0
          %v1852 = vmax.f32 %v1788, 0.0
          %v1853 = vmax.f32 %v1789, 0.0
          %v1854 = vmax.f32 %v1790, 0.0
          %v1855 = vmax.f32 %v1791, 0.0
          %v1856 = vmax.f32 %v1792, 0.0
          %v1857 = vmax.f32 %v1793, 0.0
          %v1858 = vmax.f32 %v1794, 0.0
          %v1859 = vmax.f32 %v1795, 0.0
          %v1860 = vmax.f32 %v1796, 0.0
          %v1861 = vmax.f32 %v1797, 0.0
          %v1862 = vmax.f32 %v1798, 0.0
          %v1863 = vmax.f32 %v1799, 0.0
          %v1864 = vmax.f32 %v1800, 0.0
          %v1865 = vmax.f32 %v1801, 0.0
          %v1866 = vmax.f32 %v1802, 0.0
          %v1867 = vmax.f32 %v1803, 0.0
          %v1868 = vmax.f32 %v1804, 0.0
          %v1869 = vmax.f32 %v1805, 0.0
          %v1870 = vmax.f32 %v1806, 0.0
          %v1871 = vmax.f32 %v1807, 0.0
          %v1872 = vmax.f32 %v1808, 0.0
          %v1873 = vmax.f32 %v1809, 0.0
          %v1874 = vmax.f32 %v1810, 0.0
          %v1875 = vmax.f32 %v1811, 0.0
          %v1876 = vmax.f32 %v1812, 0.0
          %v1877 = vmax.f32 %v1813, 0.0
          %v1878 = vmax.f32 %v1814, 0.0
          %v1879 = vmax.f32 %v1815, 0.0
          %v1880 = vmax.f32 %v1816, 0.0
          %v1881 = vmax.f32 %v1817, 0.0
          %v1882 = vmax.f32 %v1818, 0.0
          %v1883 = vmax.f32 %v1819, 0.0
          %v1884 = vmax.f32 %v1820, 0.0
          %v1885 = vmax.f32 %v1821, 0.0
          %v1886 = vmax.f32 %v1822, 0.0
          %v1887 = vmax.f32 %v1823, 0.0
          %v1888 = vmax.f32 %v1824, 0.0
          %v1889 = vmax.f32 %v1825, 0.0
          %v1890 = vmax.f32 %v1826, 0.0
          %v1891 = vmax.f32 %v1827, 0.0
          %v1892 = vmax.f32 %v1828, 0.0
          %v1893 = vmax.f32 %v1829, 0.0
          %1894 = vst [vmem:[%s241] sm:$0xff] %v1830
          %1895 = vst [vmem:[%s241 + $0x8] sm:$0xff] %v1831
          %1896 = vst [vmem:[%s241 + $0x10] sm:$0xff] %v1832
          %1897 = vst [vmem:[%s241 + $0x18] sm:$0xff] %v1833
          %1898 = vst [vmem:[%s241 + $0x20] sm:$0xff] %v1834
          %1899 = vst [vmem:[%s241 + $0x28] sm:$0xff] %v1835
          %1900 = vst [vmem:[%s241 + $0x30] sm:$0xff] %v1836
          %1901 = vst [vmem:[%s241 + $0x38] sm:$0xff] %v1837
          %1902 = vst [vmem:[%s241 + $0x40] sm:$0xff] %v1838
          %1903 = vst [vmem:[%s241 + $0x48] sm:$0xff] %v1839
          %1904 = vst [vmem:[%s241 + $0x50] sm:$0xff] %v1840
          %1905 = vst [vmem:[%s241 + $0x58] sm:$0xff] %v1841
          %1906 = vst [vmem:[%s241 + $0x60] sm:$0xff] %v1842
          %1907 = vst [vmem:[%s241 + $0x68] sm:$0xff] %v1843
          %1908 = vst [vmem:[%s241 + $0x70] sm:$0xff] %v1844
          %1909 = vst [vmem:[%s241 + $0x78] sm:$0xff] %v1845
          %1910 = vst [vmem:[%s241 + $0x80] sm:$0xff] %v1846
          %1911 = vst [vmem:[%s241 + $0x88] sm:$0xff] %v1847
          %1912 = vst [vmem:[%s241 + $0x90] sm:$0xff] %v1848
          %1913 = vst [vmem:[%s241 + $0x98] sm:$0xff] %v1849
          %1914 = vst [vmem:[%s241 + $0xa0] sm:$0xff] %v1850
          %1915 = vst [vmem:[%s241 + $0xa8] sm:$0xff] %v1851
          %1916 = vst [vmem:[%s241 + $0xb0] sm:$0xff] %v1852
          %1917 = vst [vmem:[%s241 + $0xb8] sm:$0xff] %v1853
          %1918 = vst [vmem:[%s241 + $0xc0] sm:$0xff] %v1854
          %1919 = vst [vmem:[%s241 + $0xc8] sm:$0xff] %v1855
          %1920 = vst [vmem:[%s241 + $0xd0] sm:$0xff] %v1856
          %1921 = vst [vmem:[%s241 + $0xd8] sm:$0xff] %v1857
          %1922 = vst [vmem:[%s241 + $0xe0] sm:$0xff] %v1858
          %1923 = vst [vmem:[%s241 + $0xe8] sm:$0xff] %v1859
          %1924 = vst [vmem:[%s241 + $0xf0] sm:$0xff] %v1860
          %1925 = vst [vmem:[%s241 + $0xf8] sm:$0xff] %v1861
          %1926 = vst [vmem:[%s241 + $0x100] sm:$0xff] %v1862
          %1927 = vst [vmem:[%s241 + $0x108] sm:$0xff] %v1863
          %1928 = vst [vmem:[%s241 + $0x110] sm:$0xff] %v1864
          %1929 = vst [vmem:[%s241 + $0x118] sm:$0xff] %v1865
          %1930 = vst [vmem:[%s241 + $0x120] sm:$0xff] %v1866
          %1931 = vst [vmem:[%s241 + $0x128] sm:$0xff] %v1867
          %1932 = vst [vmem:[%s241 + $0x130] sm:$0xff] %v1868
          %1933 = vst [vmem:[%s241 + $0x138] sm:$0xff] %v1869
          %1934 = vst [vmem:[%s241 + $0x140] sm:$0xff] %v1870
          %1935 = vst [vmem:[%s241 + $0x148] sm:$0xff] %v1871
          %1936 = vst [vmem:[%s241 + $0x150] sm:$0xff] %v1872
          %1937 = vst [vmem:[%s241 + $0x158] sm:$0xff] %v1873
          %1938 = vst [vmem:[%s241 + $0x160] sm:$0xff] %v1874
          %1939 = vst [vmem:[%s241 + $0x168] sm:$0xff] %v1875
          %1940 = vst [vmem:[%s241 + $0x170] sm:$0xff] %v1876
          %1941 = vst [vmem:[%s241 + $0x178] sm:$0xff] %v1877
          %1942 = vst [vmem:[%s241 + $0x180] sm:$0xff] %v1878
          %1943 = vst [vmem:[%s241 + $0x188] sm:$0xff] %v1879
          %1944 = vst [vmem:[%s241 + $0x190] sm:$0xff] %v1880
          %1945 = vst [vmem:[%s241 + $0x198] sm:$0xff] %v1881
          %1946 = vst [vmem:[%s241 + $0x1a0] sm:$0xff] %v1882
          %1947 = vst [vmem:[%s241 + $0x1a8] sm:$0xff] %v1883
          %1948 = vst [vmem:[%s241 + $0x1b0] sm:$0xff] %v1884
          %1949 = vst [vmem:[%s241 + $0x1b8] sm:$0xff] %v1885
          %1950 = vst [vmem:[%s241 + $0x1c0] sm:$0xff] %v1886
          %1951 = vst [vmem:[%s241 + $0x1c8] sm:$0xff] %v1887
          %1952 = vst [vmem:[%s241 + $0x1d0] sm:$0xff] %v1888
          %1953 = vst [vmem:[%s241 + $0x1d8] sm:$0xff] %v1889
          %1954 = vst [vmem:[%s241 + $0x1e0] sm:$0xff] %v1890
          %1955 = vst [vmem:[%s241 + $0x1e8] sm:$0xff] %v1891
          %1956 = vst [vmem:[%s241 + $0x1f0] sm:$0xff] %v1892
          %1957 = vst [vmem:[%s241 + $0x1f8] sm:$0xff] %v1893
        $region40: #{_lambda_.11} parent=31 // pred_fallthru
          _
        %s1958 = sand.u32 %s128, 1
        %s1959 = scalar_lea.sflag [#allocation4], %s1958
        %s1960 = sand.u32 %s128, 1
        %s1961 = smul.addr %s1960, 512
        %s1962 = scalar_lea.vmem [#allocation3], %s1961
        // Predicated region
        $region41: #{_lambda_.11} parent=31 // pred_check
          %p1963 = pneg %p138
        $region42: #{_lambda_.11} parent=31 // pred_check_branch
          %1965 = sbr.rel (%p1963) target = $region44
        $region43: #{_lambda_.11} parent=31 // pred_region
          %s1966 = smul.u32 32, %s22
          %s1967 = smul.u32 2, %s23
          %s1969 = ssub.s32 8192, 8192
          %1970 = vsyncadd %s1959, %s1969
          %s1971 = smul.addr %s1966, 2
          %s1972 = sadd.s32 %s1967, %s1971
          %s1973 = smul.addr %s1972, 128
          %s1974 = scalar_lea.hbm %s3, %s1973
          %s1975 = sshll.u32 %s1962, 4
          %s1976 = int_to_ptr.vmem [resolvable:$true] %s1975
          %1981 = dma.vmem_to_hbm [thread:$0]  %s1976, 8192, %s1974, %s1959, 256, 256, 16
        $region44: #{_lambda_.11} parent=31 // pred_fallthru
          _
      $region32: #{_lambda_.11} parent=5 // pred_fallthru
        _
      %p1982 = scmp.le.s32.totalorder 2, %s12
      // Predicated region
      $region45: #{_lambda_.11} parent=5 // pred_check
        %p1983 = pneg %p1982
      $region46: #{_lambda_.11} parent=5 // pred_check_branch
        %1985 = sbr.rel (%p1983) target = $region48
      $region47: #{_lambda_.11} parent=5 // pred_region
        %s1986 = ssub.s32 %s12, 2
        // Predicated region
        $region49: #{_lambda_.11} parent=47 // pred_check
          %p1987 = pneg %p144
        $region50: #{_lambda_.11} parent=47 // pred_check_branch
          %1989 = sbr.rel (%p1987) target = $region52
        $region51: #{_lambda_.11} parent=47 // pred_region
          %s1990 = sand.u32 %s129, 1
          %s1991 = scalar_lea.sflag [#allocation4], %s1990
          %s1992 = sand.u32 %s129, 1
          %s1993 = smul.addr %s1992, 512
          %s1994 = scalar_lea.vmem [#allocation3], %s1993
          %1995 = dma.done %s1991, 8192
        $region52: #{_lambda_.11} parent=47 // pred_fallthru
          _
      $region48: #{_lambda_.11} parent=5 // pred_fallthru
        _
    $region6: #{_lambda_.11} parent=1 // loop_footer
      %s16 = sadd.s32 1, %s12
    $region7: #{_lambda_.11} parent=1 // loop_footer_branch
      %11 = sbr.rel target = $region3
    $region8: #{_lambda_.11} parent=1 // loop_exit
      _
    %1996 = vsyncpa [#allocation4], 1
    %s1997 = scalar_lea.sflag [#allocation4], 1
    %1998 = vsyncpa %s1997, 1

</llo_original>
